<compile_context>
chip_gen: v5e
topology: v5e:2x2
jax: 0.10.0
libtpu: 0.0.40
codegen_flags: <defaults>
</compile_context>

<pallas_src>
import functools

import jax
import jax.numpy as jnp
from jax import lax
from jax.experimental import pallas as pl
from jax.experimental.pallas import tpu as pltpu


_VMEM_LIMIT_BYTES = 32 * 1024 * 1024  # fits v5e/v6e (128 MiB phys) and v7x (64 MiB phys)


# ---------------------------------------------------------------------------
# Fused matmul + bias (+ ReLU) kernel, gridded over the M (row) axis.
#   x: (M, K) bf16, w: (K, N) bf16, b: (1, N) f32  ->  (M, N) out_dtype
# ---------------------------------------------------------------------------
def _matmul_bias_act_kernel(x_ref, w_ref, b_ref, o_ref, *, relu):
    acc = jnp.dot(x_ref[...].astype(jnp.bfloat16), w_ref[...],
                  preferred_element_type=jnp.float32)
    acc = acc + b_ref[...]                       # (1, N) f32 broadcast over rows
    if relu:
        acc = jnp.maximum(acc, 0.0)
    o_ref[...] = acc.astype(o_ref.dtype)


def _pick_tile_m(m, max_tile=512):
    """Largest 8-aligned even divisor of M (<= max_tile) -> no ragged masked tail,
    and >=2 tiles for megacore when M is large.  Falls back to 256."""
    if m <= max_tile:
        return m
    start = (min(max_tile, m // 2) // 8) * 8
    for t in range(start, 7, -8):
        if m % t == 0:
            return t
    return 256


def matmul_bias_act(x, w, b, *, relu, out_dtype, tile_m=None):
    """x: (M, K), w: (K, N) bf16, b: (1, N) f32 -> (M, N) out_dtype."""
    M, K = x.shape
    Kw, N = w.shape
    assert K == Kw, (K, Kw)
    assert b.shape == (1, N), b.shape
    tm = _pick_tile_m(M) if tile_m is None else min(M, tile_m)
    grid = (pl.cdiv(M, tm),)
    return pl.pallas_call(
        functools.partial(_matmul_bias_act_kernel, relu=relu),
        out_shape=jax.ShapeDtypeStruct((M, N), out_dtype),
        grid=grid,
        in_specs=[
            pl.BlockSpec((tm, K), lambda i: (i, 0)),   # row tile, double-buffered
            pl.BlockSpec((K, N), lambda i: (0, 0)),    # weight stays resident
            pl.BlockSpec((1, N), lambda i: (0, 0)),    # bias stays resident
        ],
        out_specs=pl.BlockSpec((tm, N), lambda i: (i, 0)),
        compiler_params=pltpu.CompilerParams(
            dimension_semantics=("parallel",),
            vmem_limit_bytes=_VMEM_LIMIT_BYTES,
        ),
    )(x, w, b)


# ---------------------------------------------------------------------------
# Fused tail: conv3 (as matmul) + ReLU + Linear(3136->512) + ReLU + head.
# conv3's patch matrix has (position, batch) row order, so every per-position
# fc1 block is a CONTIGUOUS `batch`-row slice -> no in-kernel reshape needed;
# the 512-wide hidden and the flattened 3136-features never leave VMEM/vregs.
# ---------------------------------------------------------------------------
def _conv3_fc_tail_kernel(p3_ref, w3_ref, b3_ref, w1_ref, b1_ref, wh_ref, bh_ref,
                          o_ref, *, batch, n_pos, c3):
    # conv3: (n_pos*batch, kh*kw*Cin) @ (kh*kw*Cin, c3) + bias, ReLU
    h3 = jnp.dot(p3_ref[...], w3_ref[...], preferred_element_type=jnp.float32)
    h3 = jnp.maximum(h3 + b3_ref[...], 0.0).astype(jnp.bfloat16)   # (n_pos*batch, c3)

    # fc1:  q1[b, :] = sum_p  h3[p*batch + b, :] @ w1[p*c3:(p+1)*c3, :]
    # (weights stream through the MXU exactly once, same as one big matmul).
    hdim = b1_ref.shape[-1]
    acc = jnp.zeros((batch, hdim), jnp.float32)
    for p in range(n_pos):
        hp = h3[p * batch:(p + 1) * batch, :]          # (batch, c3)  static slice
        wp = w1_ref[p * c3:(p + 1) * c3, :]            # (c3, 512)    static ref slice
        acc = acc + jnp.dot(hp, wp, preferred_element_type=jnp.float32)
    h = jnp.maximum(acc + b1_ref[...], 0.0).astype(jnp.bfloat16)   # (batch, 512)

    # motor head (output padded to 128 lanes -> dense store)
    q = jnp.dot(h, wh_ref[...], preferred_element_type=jnp.float32) + bh_ref[...]
    o_ref[...] = q.astype(o_ref.dtype)


def conv3_fc_tail(patches3, w3, b3, w1, b1, wh, bh, *, batch):
    m, k3 = patches3.shape
    k3w, c3 = w3.shape
    kf, hdim = w1.shape
    hd2, n_pad = wh.shape
    assert k3 == k3w and hdim == hd2
    n_pos = m // batch
    assert n_pos * batch == m and n_pos * c3 == kf
    kern = functools.partial(_conv3_fc_tail_kernel, batch=batch, n_pos=n_pos, c3=c3)
    return pl.pallas_call(
        kern,
        out_shape=jax.ShapeDtypeStruct((batch, n_pad), jnp.float32),
        in_specs=[
            pl.BlockSpec((m, k3), lambda: (0, 0)),
            pl.BlockSpec((k3, c3), lambda: (0, 0)),
            pl.BlockSpec((1, c3), lambda: (0, 0)),
            pl.BlockSpec((kf, hdim), lambda: (0, 0)),
            pl.BlockSpec((1, hdim), lambda: (0, 0)),
            pl.BlockSpec((hdim, n_pad), lambda: (0, 0)),
            pl.BlockSpec((1, n_pad), lambda: (0, 0)),
        ],
        out_specs=pl.BlockSpec((batch, n_pad), lambda: (0, 0)),
        compiler_params=pltpu.CompilerParams(vmem_limit_bytes=_VMEM_LIMIT_BYTES),
    )(patches3, w3, b3, w1, b1, wh, bh)


# ---------------------------------------------------------------------------
# im2col (XLA-side glue): NHWC slicing + channel concat; no transposes.
# ---------------------------------------------------------------------------
def _im2col_nhwc(x, kh, kw, stride):
    """x: (B,H,W,C) -> (B*OH*OW, kh*kw*C) with row order (b, oh, ow)."""
    B, H, W, C = x.shape
    oh = (H - kh) // stride + 1
    ow = (W - kw) // stride + 1
    taps = [x[:, i:i + stride * oh:stride, j:j + stride * ow:stride, :]
            for i in range(kh) for j in range(kw)]
    p = jnp.concatenate(taps, axis=-1)            # (B, oh, ow, kh*kw*C)
    return p.reshape(B * oh * ow, kh * kw * C), oh, ow


def _im2col_nhwc_pos_major(x, kh, kw, stride):
    """Same, but row order (position, batch) so the fused tail kernel can take
    contiguous per-position row blocks."""
    B, H, W, C = x.shape
    oh = (H - kh) // stride + 1
    ow = (W - kw) // stride + 1
    taps = [x[:, i:i + stride * oh:stride, j:j + stride * ow:stride, :]
            for i in range(kh) for j in range(kw)]
    p = jnp.concatenate(taps, axis=-1)            # (B, oh, ow, kh*kw*C)
    p = jnp.transpose(p, (1, 2, 0, 3))            # (oh, ow, B, K)
    return p.reshape(oh * ow * B, kh * kw * C), oh, ow


# ---------------------------------------------------------------------------
# Parameters: deterministic PyTorch-layout init + one-time repack.
# ---------------------------------------------------------------------------
def _uniform(key, shape, fan_in):
    bound = 1.0 / jnp.sqrt(jnp.asarray(fan_in, jnp.float32))
    return jax.random.uniform(key, shape, jnp.float32, -bound, bound)


def init_qnetwork_params(key, motor_action_space_size):
    """PyTorch-layout f32 parameters (same shapes as the nn.Module)."""
    keys = jax.random.split(key, 10)
    return {
        "conv1_w": _uniform(keys[0], (32, 4, 8, 8), 4 * 8 * 8),
        "conv1_b": _uniform(keys[1], (32,), 4 * 8 * 8),
        "conv2_w": _uniform(keys[2], (64, 32, 4, 4), 32 * 4 * 4),
        "conv2_b": _uniform(keys[3], (64,), 32 * 4 * 4),
        "conv3_w": _uniform(keys[4], (64, 64, 3, 3), 64 * 3 * 3),
        "conv3_b": _uniform(keys[5], (64,), 64 * 3 * 3),
        "fc1_w": _uniform(keys[6], (512, 3136), 3136),
        "fc1_b": _uniform(keys[7], (512,), 3136),
        "head_w": _uniform(keys[8], (motor_action_space_size, 512), 512),
        "head_b": _uniform(keys[9], (motor_action_space_size,), 512),
    }


def pack_params(torch_params, weight_dtype=jnp.bfloat16):
    """One-time host-side repack into matmul-ready (K, N) layouts for the NHWC
    data path.  Weights -> bf16 (documented inference-precision choice), biases
    stay f32.  Motor head is zero-padded to 128 output lanes."""
    p = torch_params

    def conv_pack(w):  # (Cout, Cin, kh, kw) -> (kh*kw*Cin, Cout)
        cout = w.shape[0]
        return jnp.transpose(w, (2, 3, 1, 0)).reshape(-1, cout).astype(weight_dtype)

    # fc1's K axis is NCHW-flattened (c, h, w) in PyTorch; permute once to the
    # NHWC flatten order (h, w, c) used by the fused tail, then lay out (K, N).
    fc1 = p["fc1_w"].reshape(512, 64, 7, 7)
    fc1 = jnp.transpose(fc1, (2, 3, 1, 0)).reshape(3136, 512).astype(weight_dtype)

    n_act = p["head_w"].shape[0]
    n_pad = ((n_act + 127) // 128) * 128
    head_w = jnp.zeros((512, n_pad), weight_dtype)
    head_w = head_w.at[:, :n_act].set(p["head_w"].T.astype(weight_dtype))
    head_b = jnp.zeros((1, n_pad), jnp.float32).at[0, :n_act].set(p["head_b"])

    return {
        "conv1_w": conv_pack(p["conv1_w"]), "conv1_b": p["conv1_b"].reshape(1, -1),
        "conv2_w": conv_pack(p["conv2_w"]), "conv2_b": p["conv2_b"].reshape(1, -1),
        "conv3_w": conv_pack(p["conv3_w"]), "conv3_b": p["conv3_b"].reshape(1, -1),
        "fc1_w": fc1, "fc1_b": p["fc1_b"].reshape(1, -1),
        "head_w": head_w, "head_b": head_b,
    }


# ---------------------------------------------------------------------------
# Forward pass (mirrors QNetwork.forward).
# ---------------------------------------------------------------------------
def qnetwork_forward(packed, x, *, n_actions):
    """x: (B, 4, 84, 84) f32 NCHW (PyTorch convention).  Returns (q, None)."""
    B = x.shape[0]
    x = jnp.transpose(x, (0, 2, 3, 1)).astype(jnp.bfloat16)      # NHWC once, bf16

    p1, oh1, ow1 = _im2col_nhwc(x, 8, 8, 4)                      # (B*400, 256)
    h1 = matmul_bias_act(p1, packed["conv1_w"], packed["conv1_b"],
                         relu=True, out_dtype=jnp.bfloat16)      # 2 even tiles at B=2
    h1 = h1.reshape(B, oh1, ow1, packed["conv1_w"].shape[1])     # (B,20,20,32) NHWC

    p2, oh2, ow2 = _im2col_nhwc(h1, 4, 4, 2)                     # (B*81, 512)
    h2 = matmul_bias_act(p2, packed["conv2_w"], packed["conv2_b"],
                         relu=True, out_dtype=jnp.bfloat16)
    h2 = h2.reshape(B, oh2, ow2, packed["conv2_w"].shape[1])     # (B,9,9,64) NHWC

    # conv3 patches in (position, batch) row order feed the fused tail kernel.
    p3, _, _ = _im2col_nhwc_pos_major(h2, 3, 3, 1)               # (49*B, 576)
    q = conv3_fc_tail(p3, packed["conv3_w"], packed["conv3_b"],
                      packed["fc1_w"], packed["fc1_b"],
                      packed["head_w"], packed["head_b"], batch=B)  # (B, 128)
    return q[:, :n_actions], None


# ---------------------------------------------------------------------------
# Pure-JAX f32 reference (PyTorch semantics) for a tolerance check.
# ---------------------------------------------------------------------------
def qnetwork_reference(params, x):
    p = params

    def conv(h, w, b, stride):
        y = lax.conv_general_dilated(h, w, (stride, stride), "VALID",
                                     dimension_numbers=("NCHW", "OIHW", "NCHW"))
        return jax.nn.relu(y + b.reshape(1, -1, 1, 1))

    h = conv(x, p["conv1_w"], p["conv1_b"], 4)
    h = conv(h, p["conv2_w"], p["conv2_b"], 2)
    h = conv(h, p["conv3_w"], p["conv3_b"], 1)
    h = h.reshape(h.shape[0], -1)                                # NCHW flatten
    h = jax.nn.relu(h @ p["fc1_w"].T + p["fc1_b"])
    return h @ p["head_w"].T + p["head_b"]


if __name__ == "__main__":
    # Linear(3136 = 64*7*7, 512) forces an 84x84 spatial input; batch=2,
    # Discrete(6) motor action space.
    MOTOR_ACTIONS = 6
    key = jax.random.PRNGKey(0)
    key_params, key_x = jax.random.split(key)

    torch_params = init_qnetwork_params(key_params, MOTOR_ACTIONS)
    packed = pack_params(torch_params)            # one-time host-side repack

    x = jax.random.normal(key_x, (2, 4, 84, 84), jnp.float32)

    fwd = jax.jit(functools.partial(qnetwork_forward, n_actions=MOTOR_ACTIONS))
    motor_action, extra = fwd(packed, x)
    motor_action = jax.block_until_ready(motor_action)

    assert extra is None
    assert motor_action.shape == (2, MOTOR_ACTIONS)
    assert motor_action.dtype == jnp.float32
    assert bool(jnp.all(jnp.isfinite(motor_action)))

    # Validate the bf16 Pallas path against the f32 XLA reference (loose
    # tolerance: bf16 weights/activations, f32 accumulation).
    q_ref = qnetwork_reference(torch_params, x)
    max_err = float(jnp.max(jnp.abs(motor_action - q_ref)))
    assert max_err < 5e-2, f"max |q - q_ref| = {max_err}"

    print("KERNEL_OK")
</pallas_src>

<mosaic_0001>
module attributes {stable_mosaic.version = 11 : i64} {
  func.func @_matmul_bias_act_kernel(%arg0: i32, %arg1: memref<400x256xbf16, #tpu.memory_space<vmem>>, %arg2: memref<256x32xbf16, #tpu.memory_space<vmem>>, %arg3: memref<1x32xf32, #tpu.memory_space<vmem>>, %arg4: memref<400x32xbf16, #tpu.memory_space<vmem>>) attributes {dimension_semantics = [#tpu.dimension_semantics<parallel>], iteration_bounds = array<i64: 2>, scalar_prefetch = 0 : i64, scratch_operands = 0 : i64, tpu.core_type = #tpu.core_type<tc>, window_params = [{transform_indices = @transform_0, window_bounds = array<i64: 400, 256>}, {pipeline_mode = #tpu.pipeline_mode<synchronous>, transform_indices = @transform_1, window_bounds = array<i64: 256, 32>}, {pipeline_mode = #tpu.pipeline_mode<synchronous>, transform_indices = @transform_2, window_bounds = array<i64: 1, 32>}, {transform_indices = @transform_3, window_bounds = array<i64: 400, 32>}]} {
    %c0 = arith.constant 0 : index
    %c0_0 = arith.constant 0 : index
    %0 = vector.load %arg1[%c0, %c0_0] : memref<400x256xbf16, #tpu.memory_space<vmem>>, vector<400x256xbf16>
    %c0_1 = arith.constant 0 : index
    %c0_2 = arith.constant 0 : index
    %1 = vector.load %arg2[%c0_1, %c0_2] : memref<256x32xbf16, #tpu.memory_space<vmem>>, vector<256x32xbf16>
    %cst = arith.constant dense<0.000000e+00> : vector<400x32xf32>
    %2 = tpu.matmul %0, %1, %cst {dimension_numbers = #tpu.dot_dimension_numbers<[1], [0], [0], [1], [0, 0, 1, 1], [], []>} : vector<400x256xbf16>, vector<256x32xbf16>, vector<400x32xf32> -> vector<400x32xf32>
    %c0_3 = arith.constant 0 : index
    %c0_4 = arith.constant 0 : index
    %3 = vector.load %arg3[%c0_3, %c0_4] : memref<1x32xf32, #tpu.memory_space<vmem>>, vector<1x32xf32>
    %4 = vector.broadcast %3 : vector<1x32xf32> to vector<400x32xf32>
    %5 = arith.addf %2, %4 : vector<400x32xf32>
    %cst_5 = arith.constant 0.000000e+00 : f32
    %6 = vector.broadcast %cst_5 : f32 to vector<400x32xf32>
    %7 = arith.maximumf %5, %6 : vector<400x32xf32>
    %8 = arith.truncf %7 : vector<400x32xf32> to vector<400x32xbf16>
    %c0_6 = arith.constant 0 : index
    %c0_7 = arith.constant 0 : index
    %9 = vector.load %arg4[%c0_6, %c0_7] : memref<400x32xbf16, #tpu.memory_space<vmem>>, vector<400x32xbf16>
    tpu.vector_store %arg4[%c0_6, %c0_7], %8 {strides = array<i32>} : memref<400x32xbf16, #tpu.memory_space<vmem>>, vector<400x32xbf16>,
    return
  }
  func.func @transform_0(%arg0: i32) -> (i32, i32) {
    %c0_i32 = arith.constant 0 : i32
    %c0_i32_0 = arith.constant 0 : i32
    return %arg0, %c0_i32 : i32, i32
  }
  func.func @transform_1(%arg0: i32) -> (i32, i32) {
    %c0_i32 = arith.constant 0 : i32
    %c0_i32_0 = arith.constant 0 : i32
    %c0_i32_1 = arith.constant 0 : i32
    return %c0_i32, %c0_i32_0 : i32, i32
  }
  func.func @transform_2(%arg0: i32) -> (i32, i32) {
    %c0_i32 = arith.constant 0 : i32
    %c0_i32_0 = arith.constant 0 : i32
    %c0_i32_1 = arith.constant 0 : i32
    return %c0_i32, %c0_i32_0 : i32, i32
  }
  func.func @transform_3(%arg0: i32) -> (i32, i32) {
    %c0_i32 = arith.constant 0 : i32
    %c0_i32_0 = arith.constant 0 : i32
    return %arg0, %c0_i32 : i32, i32
  }
}

module attributes {stable_mosaic.version = 11 : i64} {
  func.func @_matmul_bias_act_kernel(%arg0: i32, %arg1: memref<162x512xbf16, #tpu.memory_space<vmem>>, %arg2: memref<512x64xbf16, #tpu.memory_space<vmem>>, %arg3: memref<1x64xf32, #tpu.memory_space<vmem>>, %arg4: memref<162x64xbf16, #tpu.memory_space<vmem>>) attributes {dimension_semantics = [#tpu.dimension_semantics<parallel>], iteration_bounds = array<i64: 1>, scalar_prefetch = 0 : i64, scratch_operands = 0 : i64, tpu.core_type = #tpu.core_type<tc>, window_params = [{transform_indices = @transform_0, window_bounds = array<i64: 162, 512>}, {pipeline_mode = #tpu.pipeline_mode<synchronous>, transform_indices = @transform_1, window_bounds = array<i64: 512, 64>}, {pipeline_mode = #tpu.pipeline_mode<synchronous>, transform_indices = @transform_2, window_bounds = array<i64: 1, 64>}, {transform_indices = @transform_3, window_bounds = array<i64: 162, 64>}]} {
    %c0 = arith.constant 0 : index
    %c0_0 = arith.constant 0 : index
    %0 = vector.load %arg1[%c0, %c0_0] : memref<162x512xbf16, #tpu.memory_space<vmem>>, vector<162x512xbf16>
    %c0_1 = arith.constant 0 : index
    %c0_2 = arith.constant 0 : index
    %1 = vector.load %arg2[%c0_1, %c0_2] : memref<512x64xbf16, #tpu.memory_space<vmem>>, vector<512x64xbf16>
    %cst = arith.constant dense<0.000000e+00> : vector<162x64xf32>
    %2 = tpu.matmul %0, %1, %cst {dimension_numbers = #tpu.dot_dimension_numbers<[1], [0], [0], [1], [0, 0, 1, 1], [], []>} : vector<162x512xbf16>, vector<512x64xbf16>, vector<162x64xf32> -> vector<162x64xf32>
    %c0_3 = arith.constant 0 : index
    %c0_4 = arith.constant 0 : index
    %3 = vector.load %arg3[%c0_3, %c0_4] : memref<1x64xf32, #tpu.memory_space<vmem>>, vector<1x64xf32>
    %4 = vector.broadcast %3 : vector<1x64xf32> to vector<162x64xf32>
    %5 = arith.addf %2, %4 : vector<162x64xf32>
    %cst_5 = arith.constant 0.000000e+00 : f32
    %6 = vector.broadcast %cst_5 : f32 to vector<162x64xf32>
    %7 = arith.maximumf %5, %6 : vector<162x64xf32>
    %8 = arith.truncf %7 : vector<162x64xf32> to vector<162x64xbf16>
    %c0_6 = arith.constant 0 : index
    %c0_7 = arith.constant 0 : index
    %9 = vector.load %arg4[%c0_6, %c0_7] : memref<162x64xbf16, #tpu.memory_space<vmem>>, vector<162x64xbf16>
    tpu.vector_store %arg4[%c0_6, %c0_7], %8 {strides = array<i32>} : memref<162x64xbf16, #tpu.memory_space<vmem>>, vector<162x64xbf16>,
    return
  }
  func.func @transform_0(%arg0: i32) -> (i32, i32) {
    %c0_i32 = arith.constant 0 : i32
    %c0_i32_0 = arith.constant 0 : i32
    return %arg0, %c0_i32 : i32, i32
  }
  func.func @transform_1(%arg0: i32) -> (i32, i32) {
    %c0_i32 = arith.constant 0 : i32
    %c0_i32_0 = arith.constant 0 : i32
    %c0_i32_1 = arith.constant 0 : i32
    return %c0_i32, %c0_i32_0 : i32, i32
  }
  func.func @transform_2(%arg0: i32) -> (i32, i32) {
    %c0_i32 = arith.constant 0 : i32
    %c0_i32_0 = arith.constant 0 : i32
    %c0_i32_1 = arith.constant 0 : i32
    return %c0_i32, %c0_i32_0 : i32, i32
  }
  func.func @transform_3(%arg0: i32) -> (i32, i32) {
    %c0_i32 = arith.constant 0 : i32
    %c0_i32_0 = arith.constant 0 : i32
    return %arg0, %c0_i32 : i32, i32
  }
}

module attributes {stable_mosaic.version = 11 : i64} {
  func.func @_conv3_fc_tail_kernel(%arg0: memref<98x576xbf16, #tpu.memory_space<vmem>>, %arg1: memref<576x64xbf16, #tpu.memory_space<vmem>>, %arg2: memref<1x64xf32, #tpu.memory_space<vmem>>, %arg3: memref<3136x512xbf16, #tpu.memory_space<vmem>>, %arg4: memref<1x512xf32, #tpu.memory_space<vmem>>, %arg5: memref<512x128xbf16, #tpu.memory_space<vmem>>, %arg6: memref<1x128xf32, #tpu.memory_space<vmem>>, %arg7: memref<2x128xf32, #tpu.memory_space<vmem>>) attributes {dimension_semantics = [], scalar_prefetch = 0 : i64, scratch_operands = 0 : i64, tpu.core_type = #tpu.core_type<tc>} {
    %c0 = arith.constant 0 : index
    %c0_0 = arith.constant 0 : index
    %0 = vector.load %arg0[%c0, %c0_0] : memref<98x576xbf16, #tpu.memory_space<vmem>>, vector<98x576xbf16>
    %c0_1 = arith.constant 0 : index
    %c0_2 = arith.constant 0 : index
    %1 = vector.load %arg1[%c0_1, %c0_2] : memref<576x64xbf16, #tpu.memory_space<vmem>>, vector<576x64xbf16>
    %cst = arith.constant dense<0.000000e+00> : vector<98x64xf32>
    %2 = tpu.matmul %0, %1, %cst {dimension_numbers = #tpu.dot_dimension_numbers<[1], [0], [0], [1], [0, 0, 1, 1], [], []>} : vector<98x576xbf16>, vector<576x64xbf16>, vector<98x64xf32> -> vector<98x64xf32>
    %c0_3 = arith.constant 0 : index
    %c0_4 = arith.constant 0 : index
    %3 = vector.load %arg2[%c0_3, %c0_4] : memref<1x64xf32, #tpu.memory_space<vmem>>, vector<1x64xf32>
    %4 = vector.broadcast %3 : vector<1x64xf32> to vector<98x64xf32>
    %5 = arith.addf %2, %4 : vector<98x64xf32>
    %cst_5 = arith.constant 0.000000e+00 : f32
    %6 = vector.broadcast %cst_5 : f32 to vector<98x64xf32>
    %7 = arith.maximumf %5, %6 : vector<98x64xf32>
    %8 = arith.truncf %7 : vector<98x64xf32> to vector<98x64xbf16>
    %cst_6 = arith.constant 0.000000e+00 : f32
    %9 = vector.broadcast %cst_6 : f32 to vector<2x512xf32>
    %10 = vector.extract_strided_slice %8 {offsets = [0, 0], sizes = [2, 64], strides = [1, 1]} : vector<98x64xbf16> to vector<2x64xbf16>
    %c0_7 = arith.constant 0 : index
    %c0_8 = arith.constant 0 : index
    %11 = vector.load %arg3[%c0_7, %c0_8] : memref<3136x512xbf16, #tpu.memory_space<vmem>>, vector<64x512xbf16>
    %cst_9 = arith.constant dense<0.000000e+00> : vector<2x512xf32>
    %12 = tpu.matmul %10, %11, %cst_9 {dimension_numbers = #tpu.dot_dimension_numbers<[1], [0], [0], [1], [0, 0, 1, 1], [], []>} : vector<2x64xbf16>, vector<64x512xbf16>, vector<2x512xf32> -> vector<2x512xf32>
    %13 = arith.addf %9, %12 : vector<2x512xf32>
    %14 = vector.extract_strided_slice %8 {offsets = [2, 0], sizes = [2, 64], strides = [1, 1]} : vector<98x64xbf16> to vector<2x64xbf16>
    %c64 = arith.constant 64 : index
    %c0_10 = arith.constant 0 : index
    %15 = vector.load %arg3[%c64, %c0_10] : memref<3136x512xbf16, #tpu.memory_space<vmem>>, vector<64x512xbf16>
    %cst_11 = arith.constant dense<0.000000e+00> : vector<2x512xf32>
    %16 = tpu.matmul %14, %15, %cst_11 {dimension_numbers = #tpu.dot_dimension_numbers<[1], [0], [0], [1], [0, 0, 1, 1], [], []>} : vector<2x64xbf16>, vector<64x512xbf16>, vector<2x512xf32> -> vector<2x512xf32>
    %17 = arith.addf %13, %16 : vector<2x512xf32>
    %18 = vector.extract_strided_slice %8 {offsets = [4, 0], sizes = [2, 64], strides = [1, 1]} : vector<98x64xbf16> to vector<2x64xbf16>
    %c128 = arith.constant 128 : index
    %c0_12 = arith.constant 0 : index
    %19 = vector.load %arg3[%c128, %c0_12] : memref<3136x512xbf16, #tpu.memory_space<vmem>>, vector<64x512xbf16>
    %cst_13 = arith.constant dense<0.000000e+00> : vector<2x512xf32>
    %20 = tpu.matmul %18, %19, %cst_13 {dimension_numbers = #tpu.dot_dimension_numbers<[1], [0], [0], [1], [0, 0, 1, 1], [], []>} : vector<2x64xbf16>, vector<64x512xbf16>, vector<2x512xf32> -> vector<2x512xf32>
    %21 = arith.addf %17, %20 : vector<2x512xf32>
    %22 = vector.extract_strided_slice %8 {offsets = [6, 0], sizes = [2, 64], strides = [1, 1]} : vector<98x64xbf16> to vector<2x64xbf16>
    %c192 = arith.constant 192 : index
    %c0_14 = arith.constant 0 : index
    %23 = vector.load %arg3[%c192, %c0_14] : memref<3136x512xbf16, #tpu.memory_space<vmem>>, vector<64x512xbf16>
    %cst_15 = arith.constant dense<0.000000e+00> : vector<2x512xf32>
    %24 = tpu.matmul %22, %23, %cst_15 {dimension_numbers = #tpu.dot_dimension_numbers<[1], [0], [0], [1], [0, 0, 1, 1], [], []>} : vector<2x64xbf16>, vector<64x512xbf16>, vector<2x512xf32> -> vector<2x512xf32>
    %25 = arith.addf %21, %24 : vector<2x512xf32>
    %26 = vector.extract_strided_slice %8 {offsets = [8, 0], sizes = [2, 64], strides = [1, 1]} : vector<98x64xbf16> to vector<2x64xbf16>
    %c256 = arith.constant 256 : index
    %c0_16 = arith.constant 0 : index
    %27 = vector.load %arg3[%c256, %c0_16] : memref<3136x512xbf16, #tpu.memory_space<vmem>>, vector<64x512xbf16>
    %cst_17 = arith.constant dense<0.000000e+00> : vector<2x512xf32>
    %28 = tpu.matmul %26, %27, %cst_17 {dimension_numbers = #tpu.dot_dimension_numbers<[1], [0], [0], [1], [0, 0, 1, 1], [], []>} : vector<2x64xbf16>, vector<64x512xbf16>, vector<2x512xf32> -> vector<2x512xf32>
    %29 = arith.addf %25, %28 : vector<2x512xf32>
    %30 = vector.extract_strided_slice %8 {offsets = [10, 0], sizes = [2, 64], strides = [1, 1]} : vector<98x64xbf16> to vector<2x64xbf16>
    %c320 = arith.constant 320 : index
    %c0_18 = arith.constant 0 : index
    %31 = vector.load %arg3[%c320, %c0_18] : memref<3136x512xbf16, #tpu.memory_space<vmem>>, vector<64x512xbf16>
    %cst_19 = arith.constant dense<0.000000e+00> : vector<2x512xf32>
    %32 = tpu.matmul %30, %31, %cst_19 {dimension_numbers = #tpu.dot_dimension_numbers<[1], [0], [0], [1], [0, 0, 1, 1], [], []>} : vector<2x64xbf16>, vector<64x512xbf16>, vector<2x512xf32> -> vector<2x512xf32>
    %33 = arith.addf %29, %32 : vector<2x512xf32>
    %34 = vector.extract_strided_slice %8 {offsets = [12, 0], sizes = [2, 64], strides = [1, 1]} : vector<98x64xbf16> to vector<2x64xbf16>
    %c384 = arith.constant 384 : index
    %c0_20 = arith.constant 0 : index
    %35 = vector.load %arg3[%c384, %c0_20] : memref<3136x512xbf16, #tpu.memory_space<vmem>>, vector<64x512xbf16>
    %cst_21 = arith.constant dense<0.000000e+00> : vector<2x512xf32>
    %36 = tpu.matmul %34, %35, %cst_21 {dimension_numbers = #tpu.dot_dimension_numbers<[1], [0], [0], [1], [0, 0, 1, 1], [], []>} : vector<2x64xbf16>, vector<64x512xbf16>, vector<2x512xf32> -> vector<2x512xf32>
    %37 = arith.addf %33, %36 : vector<2x512xf32>
    %38 = vector.extract_strided_slice %8 {offsets = [14, 0], sizes = [2, 64], strides = [1, 1]} : vector<98x64xbf16> to vector<2x64xbf16>
    %c448 = arith.constant 448 : index
    %c0_22 = arith.constant 0 : index
    %39 = vector.load %arg3[%c448, %c0_22] : memref<3136x512xbf16, #tpu.memory_space<vmem>>, vector<64x512xbf16>
    %cst_23 = arith.constant dense<0.000000e+00> : vector<2x512xf32>
    %40 = tpu.matmul %38, %39, %cst_23 {dimension_numbers = #tpu.dot_dimension_numbers<[1], [0], [0], [1], [0, 0, 1, 1], [], []>} : vector<2x64xbf16>, vector<64x512xbf16>, vector<2x512xf32> -> vector<2x512xf32>
    %41 = arith.addf %37, %40 : vector<2x512xf32>
    %42 = vector.extract_strided_slice %8 {offsets = [16, 0], sizes = [2, 64], strides = [1, 1]} : vector<98x64xbf16> to vector<2x64xbf16>
    %c512 = arith.constant 512 : index
    %c0_24 = arith.constant 0 : index
    %43 = vector.load %arg3[%c512, %c0_24] : memref<3136x512xbf16, #tpu.memory_space<vmem>>, vector<64x512xbf16>
    %cst_25 = arith.constant dense<0.000000e+00> : vector<2x512xf32>
    %44 = tpu.matmul %42, %43, %cst_25 {dimension_numbers = #tpu.dot_dimension_numbers<[1], [0], [0], [1], [0, 0, 1, 1], [], []>} : vector<2x64xbf16>, vector<64x512xbf16>, vector<2x512xf32> -> vector<2x512xf32>
    %45 = arith.addf %41, %44 : vector<2x512xf32>
    %46 = vector.extract_strided_slice %8 {offsets = [18, 0], sizes = [2, 64], strides = [1, 1]} : vector<98x64xbf16> to vector<2x64xbf16>
    %c576 = arith.constant 576 : index
    %c0_26 = arith.constant 0 : index
    %47 = vector.load %arg3[%c576, %c0_26] : memref<3136x512xbf16, #tpu.memory_space<vmem>>, vector<64x512xbf16>
    %cst_27 = arith.constant dense<0.000000e+00> : vector<2x512xf32>
    %48 = tpu.matmul %46, %47, %cst_27 {dimension_numbers = #tpu.dot_dimension_numbers<[1], [0], [0], [1], [0, 0, 1, 1], [], []>} : vector<2x64xbf16>, vector<64x512xbf16>, vector<2x512xf32> -> vector<2x512xf32>
    %49 = arith.addf %45, %48 : vector<2x512xf32>
    %50 = vector.extract_strided_slice %8 {offsets = [20, 0], sizes = [2, 64], strides = [1, 1]} : vector<98x64xbf16> to vector<2x64xbf16>
    %c640 = arith.constant 640 : index
    %c0_28 = arith.constant 0 : index
    %51 = vector.load %arg3[%c640, %c0_28] : memref<3136x512xbf16, #tpu.memory_space<vmem>>, vector<64x512xbf16>
    %cst_29 = arith.constant dense<0.000000e+00> : vector<2x512xf32>
    %52 = tpu.matmul %50, %51, %cst_29 {dimension_numbers = #tpu.dot_dimension_numbers<[1], [0], [0], [1], [0, 0, 1, 1], [], []>} : vector<2x64xbf16>, vector<64x512xbf16>, vector<2x512xf32> -> vector<2x512xf32>
    %53 = arith.addf %49, %52 : vector<2x512xf32>
    %54 = vector.extract_strided_slice %8 {offsets = [22, 0], sizes = [2, 64], strides = [1, 1]} : vector<98x64xbf16> to vector<2x64xbf16>
    %c704 = arith.constant 704 : index
    %c0_30 = arith.constant 0 : index
    %55 = vector.load %arg3[%c704, %c0_30] : memref<3136x512xbf16, #tpu.memory_space<vmem>>, vector<64x512xbf16>
    %cst_31 = arith.constant dense<0.000000e+00> : vector<2x512xf32>
    %56 = tpu.matmul %54, %55, %cst_31 {dimension_numbers = #tpu.dot_dimension_numbers<[1], [0], [0], [1], [0, 0, 1, 1], [], []>} : vector<2x64xbf16>, vector<64x512xbf16>, vector<2x512xf32> -> vector<2x512xf32>
    %57 = arith.addf %53, %56 : vector<2x512xf32>
    %58 = vector.extract_strided_slice %8 {offsets = [24, 0], sizes = [2, 64], strides = [1, 1]} : vector<98x64xbf16> to vector<2x64xbf16>
    %c768 = arith.constant 768 : index
    %c0_32 = arith.constant 0 : index
    %59 = vector.load %arg3[%c768, %c0_32] : memref<3136x512xbf16, #tpu.memory_space<vmem>>, vector<64x512xbf16>
    %cst_33 = arith.constant dense<0.000000e+00> : vector<2x512xf32>
    %60 = tpu.matmul %58, %59, %cst_33 {dimension_numbers = #tpu.dot_dimension_numbers<[1], [0], [0], [1], [0, 0, 1, 1], [], []>} : vector<2x64xbf16>, vector<64x512xbf16>, vector<2x512xf32> -> vector<2x512xf32>
    %61 = arith.addf %57, %60 : vector<2x512xf32>
    %62 = vector.extract_strided_slice %8 {offsets = [26, 0], sizes = [2, 64], strides = [1, 1]} : vector<98x64xbf16> to vector<2x64xbf16>
    %c832 = arith.constant 832 : index
    %c0_34 = arith.constant 0 : index
    %63 = vector.load %arg3[%c832, %c0_34] : memref<3136x512xbf16, #tpu.memory_space<vmem>>, vector<64x512xbf16>
    %cst_35 = arith.constant dense<0.000000e+00> : vector<2x512xf32>
    %64 = tpu.matmul %62, %63, %cst_35 {dimension_numbers = #tpu.dot_dimension_numbers<[1], [0], [0], [1], [0, 0, 1, 1], [], []>} : vector<2x64xbf16>, vector<64x512xbf16>, vector<2x512xf32> -> vector<2x512xf32>
    %65 = arith.addf %61, %64 : vector<2x512xf32>
    %66 = vector.extract_strided_slice %8 {offsets = [28, 0], sizes = [2, 64], strides = [1, 1]} : vector<98x64xbf16> to vector<2x64xbf16>
    %c896 = arith.constant 896 : index
    %c0_36 = arith.constant 0 : index
    %67 = vector.load %arg3[%c896, %c0_36] : memref<3136x512xbf16, #tpu.memory_space<vmem>>, vector<64x512xbf16>
    %cst_37 = arith.constant dense<0.000000e+00> : vector<2x512xf32>
    %68 = tpu.matmul %66, %67, %cst_37 {dimension_numbers = #tpu.dot_dimension_numbers<[1], [0], [0], [1], [0, 0, 1, 1], [], []>} : vector<2x64xbf16>, vector<64x512xbf16>, vector<2x512xf32> -> vector<2x512xf32>
    %69 = arith.addf %65, %68 : vector<2x512xf32>
    %70 = vector.extract_strided_slice %8 {offsets = [30, 0], sizes = [2, 64], strides = [1, 1]} : vector<98x64xbf16> to vector<2x64xbf16>
    %c960 = arith.constant 960 : index
    %c0_38 = arith.constant 0 : index
    %71 = vector.load %arg3[%c960, %c0_38] : memref<3136x512xbf16, #tpu.memory_space<vmem>>, vector<64x512xbf16>
    %cst_39 = arith.constant dense<0.000000e+00> : vector<2x512xf32>
    %72 = tpu.matmul %70, %71, %cst_39 {dimension_numbers = #tpu.dot_dimension_numbers<[1], [0], [0], [1], [0, 0, 1, 1], [], []>} : vector<2x64xbf16>, vector<64x512xbf16>, vector<2x512xf32> -> vector<2x512xf32>
    %73 = arith.addf %69, %72 : vector<2x512xf32>
    %74 = vector.extract_strided_slice %8 {offsets = [32, 0], sizes = [2, 64], strides = [1, 1]} : vector<98x64xbf16> to vector<2x64xbf16>
    %c1024 = arith.constant 1024 : index
    %c0_40 = arith.constant 0 : index
    %75 = vector.load %arg3[%c1024, %c0_40] : memref<3136x512xbf16, #tpu.memory_space<vmem>>, vector<64x512xbf16>
    %cst_41 = arith.constant dense<0.000000e+00> : vector<2x512xf32>
    %76 = tpu.matmul %74, %75, %cst_41 {dimension_numbers = #tpu.dot_dimension_numbers<[1], [0], [0], [1], [0, 0, 1, 1], [], []>} : vector<2x64xbf16>, vector<64x512xbf16>, vector<2x512xf32> -> vector<2x512xf32>
    %77 = arith.addf %73, %76 : vector<2x512xf32>
    %78 = vector.extract_strided_slice %8 {offsets = [34, 0], sizes = [2, 64], strides = [1, 1]} : vector<98x64xbf16> to vector<2x64xbf16>
    %c1088 = arith.constant 1088 : index
    %c0_42 = arith.constant 0 : index
    %79 = vector.load %arg3[%c1088, %c0_42] : memref<3136x512xbf16, #tpu.memory_space<vmem>>, vector<64x512xbf16>
    %cst_43 = arith.constant dense<0.000000e+00> : vector<2x512xf32>
    %80 = tpu.matmul %78, %79, %cst_43 {dimension_numbers = #tpu.dot_dimension_numbers<[1], [0], [0], [1], [0, 0, 1, 1], [], []>} : vector<2x64xbf16>, vector<64x512xbf16>, vector<2x512xf32> -> vector<2x512xf32>
    %81 = arith.addf %77, %80 : vector<2x512xf32>
    %82 = vector.extract_strided_slice %8 {offsets = [36, 0], sizes = [2, 64], strides = [1, 1]} : vector<98x64xbf16> to vector<2x64xbf16>
    %c1152 = arith.constant 1152 : index
    %c0_44 = arith.constant 0 : index
    %83 = vector.load %arg3[%c1152, %c0_44] : memref<3136x512xbf16, #tpu.memory_space<vmem>>, vector<64x512xbf16>
    %cst_45 = arith.constant dense<0.000000e+00> : vector<2x512xf32>
    %84 = tpu.matmul %82, %83, %cst_45 {dimension_numbers = #tpu.dot_dimension_numbers<[1], [0], [0], [1], [0, 0, 1, 1], [], []>} : vector<2x64xbf16>, vector<64x512xbf16>, vector<2x512xf32> -> vector<2x512xf32>
    %85 = arith.addf %81, %84 : vector<2x512xf32>
    %86 = vector.extract_strided_slice %8 {offsets = [38, 0], sizes = [2, 64], strides = [1, 1]} : vector<98x64xbf16> to vector<2x64xbf16>
    %c1216 = arith.constant 1216 : index
    %c0_46 = arith.constant 0 : index
    %87 = vector.load %arg3[%c1216, %c0_46] : memref<3136x512xbf16, #tpu.memory_space<vmem>>, vector<64x512xbf16>
    %cst_47 = arith.constant dense<0.000000e+00> : vector<2x512xf32>
    %88 = tpu.matmul %86, %87, %cst_47 {dimension_numbers = #tpu.dot_dimension_numbers<[1], [0], [0], [1], [0, 0, 1, 1], [], []>} : vector<2x64xbf16>, vector<64x512xbf16>, vector<2x512xf32> -> vector<2x512xf32>
    %89 = arith.addf %85, %88 : vector<2x512xf32>
    %90 = vector.extract_strided_slice %8 {offsets = [40, 0], sizes = [2, 64], strides = [1, 1]} : vector<98x64xbf16> to vector<2x64xbf16>
    %c1280 = arith.constant 1280 : index
    %c0_48 = arith.constant 0 : index
    %91 = vector.load %arg3[%c1280, %c0_48] : memref<3136x512xbf16, #tpu.memory_space<vmem>>, vector<64x512xbf16>
    %cst_49 = arith.constant dense<0.000000e+00> : vector<2x512xf32>
    %92 = tpu.matmul %90, %91, %cst_49 {dimension_numbers = #tpu.dot_dimension_numbers<[1], [0], [0], [1], [0, 0, 1, 1], [], []>} : vector<2x64xbf16>, vector<64x512xbf16>, vector<2x512xf32> -> vector<2x512xf32>
    %93 = arith.addf %89, %92 : vector<2x512xf32>
    %94 = vector.extract_strided_slice %8 {offsets = [42, 0], sizes = [2, 64], strides = [1, 1]} : vector<98x64xbf16> to vector<2x64xbf16>
    %c1344 = arith.constant 1344 : index
    %c0_50 = arith.constant 0 : index
    %95 = vector.load %arg3[%c1344, %c0_50] : memref<3136x512xbf16, #tpu.memory_space<vmem>>, vector<64x512xbf16>
    %cst_51 = arith.constant dense<0.000000e+00> : vector<2x512xf32>
    %96 = tpu.matmul %94, %95, %cst_51 {dimension_numbers = #tpu.dot_dimension_numbers<[1], [0], [0], [1], [0, 0, 1, 1], [], []>} : vector<2x64xbf16>, vector<64x512xbf16>, vector<2x512xf32> -> vector<2x512xf32>
    %97 = arith.addf %93, %96 : vector<2x512xf32>
    %98 = vector.extract_strided_slice %8 {offsets = [44, 0], sizes = [2, 64], strides = [1, 1]} : vector<98x64xbf16> to vector<2x64xbf16>
    %c1408 = arith.constant 1408 : index
    %c0_52 = arith.constant 0 : index
    %99 = vector.load %arg3[%c1408, %c0_52] : memref<3136x512xbf16, #tpu.memory_space<vmem>>, vector<64x512xbf16>
    %cst_53 = arith.constant dense<0.000000e+00> : vector<2x512xf32>
    %100 = tpu.matmul %98, %99, %cst_53 {dimension_numbers = #tpu.dot_dimension_numbers<[1], [0], [0], [1], [0, 0, 1, 1], [], []>} : vector<2x64xbf16>, vector<64x512xbf16>, vector<2x512xf32> -> vector<2x512xf32>
    %101 = arith.addf %97, %100 : vector<2x512xf32>
    %102 = vector.extract_strided_slice %8 {offsets = [46, 0], sizes = [2, 64], strides = [1, 1]} : vector<98x64xbf16> to vector<2x64xbf16>
    %c1472 = arith.constant 1472 : index
    %c0_54 = arith.constant 0 : index
    %103 = vector.load %arg3[%c1472, %c0_54] : memref<3136x512xbf16, #tpu.memory_space<vmem>>, vector<64x512xbf16>
    %cst_55 = arith.constant dense<0.000000e+00> : vector<2x512xf32>
    %104 = tpu.matmul %102, %103, %cst_55 {dimension_numbers = #tpu.dot_dimension_numbers<[1], [0], [0], [1], [0, 0, 1, 1], [], []>} : vector<2x64xbf16>, vector<64x512xbf16>, vector<2x512xf32> -> vector<2x512xf32>
    %105 = arith.addf %101, %104 : vector<2x512xf32>
    %106 = vector.extract_strided_slice %8 {offsets = [48, 0], sizes = [2, 64], strides = [1, 1]} : vector<98x64xbf16> to vector<2x64xbf16>
    %c1536 = arith.constant 1536 : index
    %c0_56 = arith.constant 0 : index
    %107 = vector.load %arg3[%c1536, %c0_56] : memref<3136x512xbf16, #tpu.memory_space<vmem>>, vector<64x512xbf16>
    %cst_57 = arith.constant dense<0.000000e+00> : vector<2x512xf32>
    %108 = tpu.matmul %106, %107, %cst_57 {dimension_numbers = #tpu.dot_dimension_numbers<[1], [0], [0], [1], [0, 0, 1, 1], [], []>} : vector<2x64xbf16>, vector<64x512xbf16>, vector<2x512xf32> -> vector<2x512xf32>
    %109 = arith.addf %105, %108 : vector<2x512xf32>
    %110 = vector.extract_strided_slice %8 {offsets = [50, 0], sizes = [2, 64], strides = [1, 1]} : vector<98x64xbf16> to vector<2x64xbf16>
    %c1600 = arith.constant 1600 : index
    %c0_58 = arith.constant 0 : index
    %111 = vector.load %arg3[%c1600, %c0_58] : memref<3136x512xbf16, #tpu.memory_space<vmem>>, vector<64x512xbf16>
    %cst_59 = arith.constant dense<0.000000e+00> : vector<2x512xf32>
    %112 = tpu.matmul %110, %111, %cst_59 {dimension_numbers = #tpu.dot_dimension_numbers<[1], [0], [0], [1], [0, 0, 1, 1], [], []>} : vector<2x64xbf16>, vector<64x512xbf16>, vector<2x512xf32> -> vector<2x512xf32>
    %113 = arith.addf %109, %112 : vector<2x512xf32>
    %114 = vector.extract_strided_slice %8 {offsets = [52, 0], sizes = [2, 64], strides = [1, 1]} : vector<98x64xbf16> to vector<2x64xbf16>
    %c1664 = arith.constant 1664 : index
    %c0_60 = arith.constant 0 : index
    %115 = vector.load %arg3[%c1664, %c0_60] : memref<3136x512xbf16, #tpu.memory_space<vmem>>, vector<64x512xbf16>
    %cst_61 = arith.constant dense<0.000000e+00> : vector<2x512xf32>
    %116 = tpu.matmul %114, %115, %cst_61 {dimension_numbers = #tpu.dot_dimension_numbers<[1], [0], [0], [1], [0, 0, 1, 1], [], []>} : vector<2x64xbf16>, vector<64x512xbf16>, vector<2x512xf32> -> vector<2x512xf32>
    %117 = arith.addf %113, %116 : vector<2x512xf32>
    %118 = vector.extract_strided_slice %8 {offsets = [54, 0], sizes = [2, 64], strides = [1, 1]} : vector<98x64xbf16> to vector<2x64xbf16>
    %c1728 = arith.constant 1728 : index
    %c0_62 = arith.constant 0 : index
    %119 = vector.load %arg3[%c1728, %c0_62] : memref<3136x512xbf16, #tpu.memory_space<vmem>>, vector<64x512xbf16>
    %cst_63 = arith.constant dense<0.000000e+00> : vector<2x512xf32>
    %120 = tpu.matmul %118, %119, %cst_63 {dimension_numbers = #tpu.dot_dimension_numbers<[1], [0], [0], [1], [0, 0, 1, 1], [], []>} : vector<2x64xbf16>, vector<64x512xbf16>, vector<2x512xf32> -> vector<2x512xf32>
    %121 = arith.addf %117, %120 : vector<2x512xf32>
    %122 = vector.extract_strided_slice %8 {offsets = [56, 0], sizes = [2, 64], strides = [1, 1]} : vector<98x64xbf16> to vector<2x64xbf16>
    %c1792 = arith.constant 1792 : index
    %c0_64 = arith.constant 0 : index
    %123 = vector.load %arg3[%c1792, %c0_64] : memref<3136x512xbf16, #tpu.memory_space<vmem>>, vector<64x512xbf16>
    %cst_65 = arith.constant dense<0.000000e+00> : vector<2x512xf32>
    %124 = tpu.matmul %122, %123, %cst_65 {dimension_numbers = #tpu.dot_dimension_numbers<[1], [0], [0], [1], [0, 0, 1, 1], [], []>} : vector<2x64xbf16>, vector<64x512xbf16>, vector<2x512xf32> -> vector<2x512xf32>
    %125 = arith.addf %121, %124 : vector<2x512xf32>
    %126 = vector.extract_strided_slice %8 {offsets = [58, 0], sizes = [2, 64], strides = [1, 1]} : vector<98x64xbf16> to vector<2x64xbf16>
    %c1856 = arith.constant 1856 : index
    %c0_66 = arith.constant 0 : index
    %127 = vector.load %arg3[%c1856, %c0_66] : memref<3136x512xbf16, #tpu.memory_space<vmem>>, vector<64x512xbf16>
    %cst_67 = arith.constant dense<0.000000e+00> : vector<2x512xf32>
    %128 = tpu.matmul %126, %127, %cst_67 {dimension_numbers = #tpu.dot_dimension_numbers<[1], [0], [0], [1], [0, 0, 1, 1], [], []>} : vector<2x64xbf16>, vector<64x512xbf16>, vector<2x512xf32> -> vector<2x512xf32>
    %129 = arith.addf %125, %128 : vector<2x512xf32>
    %130 = vector.extract_strided_slice %8 {offsets = [60, 0], sizes = [2, 64], strides = [1, 1]} : vector<98x64xbf16> to vector<2x64xbf16>
    %c1920 = arith.constant 1920 : index
    %c0_68 = arith.constant 0 : index
    %131 = vector.load %arg3[%c1920, %c0_68] : memref<3136x512xbf16, #tpu.memory_space<vmem>>, vector<64x512xbf16>
    %cst_69 = arith.constant dense<0.000000e+00> : vector<2x512xf32>
    %132 = tpu.matmul %130, %131, %cst_69 {dimension_numbers = #tpu.dot_dimension_numbers<[1], [0], [0], [1], [0, 0, 1, 1], [], []>} : vector<2x64xbf16>, vector<64x512xbf16>, vector<2x512xf32> -> vector<2x512xf32>
    %133 = arith.addf %129, %132 : vector<2x512xf32>
    %134 = vector.extract_strided_slice %8 {offsets = [62, 0], sizes = [2, 64], strides = [1, 1]} : vector<98x64xbf16> to vector<2x64xbf16>
    %c1984 = arith.constant 1984 : index
    %c0_70 = arith.constant 0 : index
    %135 = vector.load %arg3[%c1984, %c0_70] : memref<3136x512xbf16, #tpu.memory_space<vmem>>, vector<64x512xbf16>
    %cst_71 = arith.constant dense<0.000000e+00> : vector<2x512xf32>
    %136 = tpu.matmul %134, %135, %cst_71 {dimension_numbers = #tpu.dot_dimension_numbers<[1], [0], [0], [1], [0, 0, 1, 1], [], []>} : vector<2x64xbf16>, vector<64x512xbf16>, vector<2x512xf32> -> vector<2x512xf32>
    %137 = arith.addf %133, %136 : vector<2x512xf32>
    %138 = vector.extract_strided_slice %8 {offsets = [64, 0], sizes = [2, 64], strides = [1, 1]} : vector<98x64xbf16> to vector<2x64xbf16>
    %c2048 = arith.constant 2048 : index
    %c0_72 = arith.constant 0 : index
    %139 = vector.load %arg3[%c2048, %c0_72] : memref<3136x512xbf16, #tpu.memory_space<vmem>>, vector<64x512xbf16>
    %cst_73 = arith.constant dense<0.000000e+00> : vector<2x512xf32>
    %140 = tpu.matmul %138, %139, %cst_73 {dimension_numbers = #tpu.dot_dimension_numbers<[1], [0], [0], [1], [0, 0, 1, 1], [], []>} : vector<2x64xbf16>, vector<64x512xbf16>, vector<2x512xf32> -> vector<2x512xf32>
    %141 = arith.addf %137, %140 : vector<2x512xf32>
    %142 = vector.extract_strided_slice %8 {offsets = [66, 0], sizes = [2, 64], strides = [1, 1]} : vector<98x64xbf16> to vector<2x64xbf16>
    %c2112 = arith.constant 2112 : index
    %c0_74 = arith.constant 0 : index
    %143 = vector.load %arg3[%c2112, %c0_74] : memref<3136x512xbf16, #tpu.memory_space<vmem>>, vector<64x512xbf16>
    %cst_75 = arith.constant dense<0.000000e+00> : vector<2x512xf32>
    %144 = tpu.matmul %142, %143, %cst_75 {dimension_numbers = #tpu.dot_dimension_numbers<[1], [0], [0], [1], [0, 0, 1, 1], [], []>} : vector<2x64xbf16>, vector<64x512xbf16>, vector<2x512xf32> -> vector<2x512xf32>
    %145 = arith.addf %141, %144 : vector<2x512xf32>
    %146 = vector.extract_strided_slice %8 {offsets = [68, 0], sizes = [2, 64], strides = [1, 1]} : vector<98x64xbf16> to vector<2x64xbf16>
    %c2176 = arith.constant 2176 : index
    %c0_76 = arith.constant 0 : index
    %147 = vector.load %arg3[%c2176, %c0_76] : memref<3136x512xbf16, #tpu.memory_space<vmem>>, vector<64x512xbf16>
    %cst_77 = arith.constant dense<0.000000e+00> : vector<2x512xf32>
    %148 = tpu.matmul %146, %147, %cst_77 {dimension_numbers = #tpu.dot_dimension_numbers<[1], [0], [0], [1], [0, 0, 1, 1], [], []>} : vector<2x64xbf16>, vector<64x512xbf16>, vector<2x512xf32> -> vector<2x512xf32>
    %149 = arith.addf %145, %148 : vector<2x512xf32>
    %150 = vector.extract_strided_slice %8 {offsets = [70, 0], sizes = [2, 64], strides = [1, 1]} : vector<98x64xbf16> to vector<2x64xbf16>
    %c2240 = arith.constant 2240 : index
    %c0_78 = arith.constant 0 : index
    %151 = vector.load %arg3[%c2240, %c0_78] : memref<3136x512xbf16, #tpu.memory_space<vmem>>, vector<64x512xbf16>
    %cst_79 = arith.constant dense<0.000000e+00> : vector<2x512xf32>
    %152 = tpu.matmul %150, %151, %cst_79 {dimension_numbers = #tpu.dot_dimension_numbers<[1], [0], [0], [1], [0, 0, 1, 1], [], []>} : vector<2x64xbf16>, vector<64x512xbf16>, vector<2x512xf32> -> vector<2x512xf32>
    %153 = arith.addf %149, %152 : vector<2x512xf32>
    %154 = vector.extract_strided_slice %8 {offsets = [72, 0], sizes = [2, 64], strides = [1, 1]} : vector<98x64xbf16> to vector<2x64xbf16>
    %c2304 = arith.constant 2304 : index
    %c0_80 = arith.constant 0 : index
    %155 = vector.load %arg3[%c2304, %c0_80] : memref<3136x512xbf16, #tpu.memory_space<vmem>>, vector<64x512xbf16>
    %cst_81 = arith.constant dense<0.000000e+00> : vector<2x512xf32>
    %156 = tpu.matmul %154, %155, %cst_81 {dimension_numbers = #tpu.dot_dimension_numbers<[1], [0], [0], [1], [0, 0, 1, 1], [], []>} : vector<2x64xbf16>, vector<64x512xbf16>, vector<2x512xf32> -> vector<2x512xf32>
    %157 = arith.addf %153, %156 : vector<2x512xf32>
    %158 = vector.extract_strided_slice %8 {offsets = [74, 0], sizes = [2, 64], strides = [1, 1]} : vector<98x64xbf16> to vector<2x64xbf16>
    %c2368 = arith.constant 2368 : index
    %c0_82 = arith.constant 0 : index
    %159 = vector.load %arg3[%c2368, %c0_82] : memref<3136x512xbf16, #tpu.memory_space<vmem>>, vector<64x512xbf16>
    %cst_83 = arith.constant dense<0.000000e+00> : vector<2x512xf32>
    %160 = tpu.matmul %158, %159, %cst_83 {dimension_numbers = #tpu.dot_dimension_numbers<[1], [0], [0], [1], [0, 0, 1, 1], [], []>} : vector<2x64xbf16>, vector<64x512xbf16>, vector<2x512xf32> -> vector<2x512xf32>
    %161 = arith.addf %157, %160 : vector<2x512xf32>
    %162 = vector.extract_strided_slice %8 {offsets = [76, 0], sizes = [2, 64], strides = [1, 1]} : vector<98x64xbf16> to vector<2x64xbf16>
    %c2432 = arith.constant 2432 : index
    %c0_84 = arith.constant 0 : index
    %163 = vector.load %arg3[%c2432, %c0_84] : memref<3136x512xbf16, #tpu.memory_space<vmem>>, vector<64x512xbf16>
    %cst_85 = arith.constant dense<0.000000e+00> : vector<2x512xf32>
    %164 = tpu.matmul %162, %163, %cst_85 {dimension_numbers = #tpu.dot_dimension_numbers<[1], [0], [0], [1], [0, 0, 1, 1], [], []>} : vector<2x64xbf16>, vector<64x512xbf16>, vector<2x512xf32> -> vector<2x512xf32>
    %165 = arith.addf %161, %164 : vector<2x512xf32>
    %166 = vector.extract_strided_slice %8 {offsets = [78, 0], sizes = [2, 64], strides = [1, 1]} : vector<98x64xbf16> to vector<2x64xbf16>
    %c2496 = arith.constant 2496 : index
    %c0_86 = arith.constant 0 : index
    %167 = vector.load %arg3[%c2496, %c0_86] : memref<3136x512xbf16, #tpu.memory_space<vmem>>, vector<64x512xbf16>
    %cst_87 = arith.constant dense<0.000000e+00> : vector<2x512xf32>
    %168 = tpu.matmul %166, %167, %cst_87 {dimension_numbers = #tpu.dot_dimension_numbers<[1], [0], [0], [1], [0, 0, 1, 1], [], []>} : vector<2x64xbf16>, vector<64x512xbf16>, vector<2x512xf32> -> vector<2x512xf32>
    %169 = arith.addf %165, %168 : vector<2x512xf32>
    %170 = vector.extract_strided_slice %8 {offsets = [80, 0], sizes = [2, 64], strides = [1, 1]} : vector<98x64xbf16> to vector<2x64xbf16>
    %c2560 = arith.constant 2560 : index
    %c0_88 = arith.constant 0 : index
    %171 = vector.load %arg3[%c2560, %c0_88] : memref<3136x512xbf16, #tpu.memory_space<vmem>>, vector<64x512xbf16>
    %cst_89 = arith.constant dense<0.000000e+00> : vector<2x512xf32>
    %172 = tpu.matmul %170, %171, %cst_89 {dimension_numbers = #tpu.dot_dimension_numbers<[1], [0], [0], [1], [0, 0, 1, 1], [], []>} : vector<2x64xbf16>, vector<64x512xbf16>, vector<2x512xf32> -> vector<2x512xf32>
    %173 = arith.addf %169, %172 : vector<2x512xf32>
    %174 = vector.extract_strided_slice %8 {offsets = [82, 0], sizes = [2, 64], strides = [1, 1]} : vector<98x64xbf16> to vector<2x64xbf16>
    %c2624 = arith.constant 2624 : index
    %c0_90 = arith.constant 0 : index
    %175 = vector.load %arg3[%c2624, %c0_90] : memref<3136x512xbf16, #tpu.memory_space<vmem>>, vector<64x512xbf16>
    %cst_91 = arith.constant dense<0.000000e+00> : vector<2x512xf32>
    %176 = tpu.matmul %174, %175, %cst_91 {dimension_numbers = #tpu.dot_dimension_numbers<[1], [0], [0], [1], [0, 0, 1, 1], [], []>} : vector<2x64xbf16>, vector<64x512xbf16>, vector<2x512xf32> -> vector<2x512xf32>
    %177 = arith.addf %173, %176 : vector<2x512xf32>
    %178 = vector.extract_strided_slice %8 {offsets = [84, 0], sizes = [2, 64], strides = [1, 1]} : vector<98x64xbf16> to vector<2x64xbf16>
    %c2688 = arith.constant 2688 : index
    %c0_92 = arith.constant 0 : index
    %179 = vector.load %arg3[%c2688, %c0_92] : memref<3136x512xbf16, #tpu.memory_space<vmem>>, vector<64x512xbf16>
    %cst_93 = arith.constant dense<0.000000e+00> : vector<2x512xf32>
    %180 = tpu.matmul %178, %179, %cst_93 {dimension_numbers = #tpu.dot_dimension_numbers<[1], [0], [0], [1], [0, 0, 1, 1], [], []>} : vector<2x64xbf16>, vector<64x512xbf16>, vector<2x512xf32> -> vector<2x512xf32>
    %181 = arith.addf %177, %180 : vector<2x512xf32>
    %182 = vector.extract_strided_slice %8 {offsets = [86, 0], sizes = [2, 64], strides = [1, 1]} : vector<98x64xbf16> to vector<2x64xbf16>
    %c2752 = arith.constant 2752 : index
    %c0_94 = arith.constant 0 : index
    %183 = vector.load %arg3[%c2752, %c0_94] : memref<3136x512xbf16, #tpu.memory_space<vmem>>, vector<64x512xbf16>
    %cst_95 = arith.constant dense<0.000000e+00> : vector<2x512xf32>
    %184 = tpu.matmul %182, %183, %cst_95 {dimension_numbers = #tpu.dot_dimension_numbers<[1], [0], [0], [1], [0, 0, 1, 1], [], []>} : vector<2x64xbf16>, vector<64x512xbf16>, vector<2x512xf32> -> vector<2x512xf32>
    %185 = arith.addf %181, %184 : vector<2x512xf32>
    %186 = vector.extract_strided_slice %8 {offsets = [88, 0], sizes = [2, 64], strides = [1, 1]} : vector<98x64xbf16> to vector<2x64xbf16>
    %c2816 = arith.constant 2816 : index
    %c0_96 = arith.constant 0 : index
    %187 = vector.load %arg3[%c2816, %c0_96] : memref<3136x512xbf16, #tpu.memory_space<vmem>>, vector<64x512xbf16>
    %cst_97 = arith.constant dense<0.000000e+00> : vector<2x512xf32>
    %188 = tpu.matmul %186, %187, %cst_97 {dimension_numbers = #tpu.dot_dimension_numbers<[1], [0], [0], [1], [0, 0, 1, 1], [], []>} : vector<2x64xbf16>, vector<64x512xbf16>, vector<2x512xf32> -> vector<2x512xf32>
    %189 = arith.addf %185, %188 : vector<2x512xf32>
    %190 = vector.extract_strided_slice %8 {offsets = [90, 0], sizes = [2, 64], strides = [1, 1]} : vector<98x64xbf16> to vector<2x64xbf16>
    %c2880 = arith.constant 2880 : index
    %c0_98 = arith.constant 0 : index
    %191 = vector.load %arg3[%c2880, %c0_98] : memref<3136x512xbf16, #tpu.memory_space<vmem>>, vector<64x512xbf16>
    %cst_99 = arith.constant dense<0.000000e+00> : vector<2x512xf32>
    %192 = tpu.matmul %190, %191, %cst_99 {dimension_numbers = #tpu.dot_dimension_numbers<[1], [0], [0], [1], [0, 0, 1, 1], [], []>} : vector<2x64xbf16>, vector<64x512xbf16>, vector<2x512xf32> -> vector<2x512xf32>
    %193 = arith.addf %189, %192 : vector<2x512xf32>
    %194 = vector.extract_strided_slice %8 {offsets = [92, 0], sizes = [2, 64], strides = [1, 1]} : vector<98x64xbf16> to vector<2x64xbf16>
    %c2944 = arith.constant 2944 : index
    %c0_100 = arith.constant 0 : index
    %195 = vector.load %arg3[%c2944, %c0_100] : memref<3136x512xbf16, #tpu.memory_space<vmem>>, vector<64x512xbf16>
    %cst_101 = arith.constant dense<0.000000e+00> : vector<2x512xf32>
    %196 = tpu.matmul %194, %195, %cst_101 {dimension_numbers = #tpu.dot_dimension_numbers<[1], [0], [0], [1], [0, 0, 1, 1], [], []>} : vector<2x64xbf16>, vector<64x512xbf16>, vector<2x512xf32> -> vector<2x512xf32>
    %197 = arith.addf %193, %196 : vector<2x512xf32>
    %198 = vector.extract_strided_slice %8 {offsets = [94, 0], sizes = [2, 64], strides = [1, 1]} : vector<98x64xbf16> to vector<2x64xbf16>
    %c3008 = arith.constant 3008 : index
    %c0_102 = arith.constant 0 : index
    %199 = vector.load %arg3[%c3008, %c0_102] : memref<3136x512xbf16, #tpu.memory_space<vmem>>, vector<64x512xbf16>
    %cst_103 = arith.constant dense<0.000000e+00> : vector<2x512xf32>
    %200 = tpu.matmul %198, %199, %cst_103 {dimension_numbers = #tpu.dot_dimension_numbers<[1], [0], [0], [1], [0, 0, 1, 1], [], []>} : vector<2x64xbf16>, vector<64x512xbf16>, vector<2x512xf32> -> vector<2x512xf32>
    %201 = arith.addf %197, %200 : vector<2x512xf32>
    %202 = vector.extract_strided_slice %8 {offsets = [96, 0], sizes = [2, 64], strides = [1, 1]} : vector<98x64xbf16> to vector<2x64xbf16>
    %c3072 = arith.constant 3072 : index
    %c0_104 = arith.constant 0 : index
    %203 = vector.load %arg3[%c3072, %c0_104] : memref<3136x512xbf16, #tpu.memory_space<vmem>>, vector<64x512xbf16>
    %cst_105 = arith.constant dense<0.000000e+00> : vector<2x512xf32>
    %204 = tpu.matmul %202, %203, %cst_105 {dimension_numbers = #tpu.dot_dimension_numbers<[1], [0], [0], [1], [0, 0, 1, 1], [], []>} : vector<2x64xbf16>, vector<64x512xbf16>, vector<2x512xf32> -> vector<2x512xf32>
    %205 = arith.addf %201, %204 : vector<2x512xf32>
    %c0_106 = arith.constant 0 : index
    %c0_107 = arith.constant 0 : index
    %206 = vector.load %arg4[%c0_106, %c0_107] : memref<1x512xf32, #tpu.memory_space<vmem>>, vector<1x512xf32>
    %207 = vector.broadcast %206 : vector<1x512xf32> to vector<2x512xf32>
    %208 = arith.addf %205, %207 : vector<2x512xf32>
    %cst_108 = arith.constant 0.000000e+00 : f32
    %209 = vector.broadcast %cst_108 : f32 to vector<2x512xf32>
    %210 = arith.maximumf %208, %209 : vector<2x512xf32>
    %211 = arith.truncf %210 : vector<2x512xf32> to vector<2x512xbf16>
    %c0_109 = arith.constant 0 : index
    %c0_110 = arith.constant 0 : index
    %212 = vector.load %arg5[%c0_109, %c0_110] : memref<512x128xbf16, #tpu.memory_space<vmem>>, vector<512x128xbf16>
    %cst_111 = arith.constant dense<0.000000e+00> : vector<2x128xf32>
    %213 = tpu.matmul %211, %212, %cst_111 {dimension_numbers = #tpu.dot_dimension_numbers<[1], [0], [0], [1], [0, 0, 1, 1], [], []>} : vector<2x512xbf16>, vector<512x128xbf16>, vector<2x128xf32> -> vector<2x128xf32>
    %c0_112 = arith.constant 0 : index
    %c0_113 = arith.constant 0 : index
    %214 = vector.load %arg6[%c0_112, %c0_113] : memref<1x128xf32, #tpu.memory_space<vmem>>, vector<1x128xf32>
    %215 = vector.broadcast %214 : vector<1x128xf32> to vector<2x128xf32>
    %216 = arith.addf %213, %215 : vector<2x128xf32>
    %c0_114 = arith.constant 0 : index
    %c0_115 = arith.constant 0 : index
    %217 = vector.load %arg7[%c0_114, %c0_115] : memref<2x128xf32, #tpu.memory_space<vmem>>, vector<2x128xf32>
    tpu.vector_store %arg7[%c0_114, %c0_115], %216 {strides = array<i32>} : memref<2x128xf32, #tpu.memory_space<vmem>>, vector<2x128xf32>,
    return
  }
}

</mosaic_0001>

<llo_original>
// kernel: qnetwork_forward.3
$region0: #{qnetwork_forward.3}
  #allocation0 [shape = 'u32[]', space=smem, size = 0x4, offset = 0x4, fixed_abs, tag = 'smem constant byte address 0x4 - core index']
  #allocation1 [shape = 'u32[72,128]{1,0:T(1,128)}', space=vmem, size = 0x9000, scoped, tag = 'internal scratch']
  %s0 = inlined_call_operand.vmem [shape: bf16[800,256], index: 0, kind: input, shape index: {}]
  %s1 = inlined_call_operand.vmem [shape: bf16[256,32], index: 1, kind: input, shape index: {}]
  %s2 = inlined_call_operand.vmem [shape: f32[1,32], index: 2, kind: input, shape index: {}]
  %s3 = inlined_call_operand.vmem [shape: bf16[800,32], index: 3, kind: output, shape index: {}]
  %s4 = sld [smem:[#allocation0]]
  $region45: #{qnetwork_forward.3} parent=0
    _
  %s6 = ssub.s32 1, %s4
  %s7 = scalar_select 0, %s6, %s4
  loop: start=0, step=1, limit=4
  $region2: #{qnetwork_forward.3} parent=0 // loop_pre_header
    _
  $region3: #{qnetwork_forward.3} parent=0 // loop_header
    %s9 = sphi 0, %s13
    %p10 = scmp.ge.s32.totalorder %s9, 4
    %s19 = sphi 0, %s21
    %s22 = sphi 0, %s19
    %s23 = sphi 0, %s22
    %s39 = sphi 0, %s23
    %s43 = sphi 0, %s43
    %s45 = sphi 0, %s43
    %s46 = sphi 0, %s45
    %s60 = sphi 0, %s46
    %s64 = sphi 0, %s64
    %s66 = sphi 0, %s64
    %s67 = sphi 0, %s66
    %s81 = sphi 0, %s67
    %s87 = sphi 0, %s89
    %s90 = sphi 0, %s87
    %s91 = sphi 0, %s90
    %s107 = sphi 0, %s91
  $region4: #{qnetwork_forward.3} parent=0 // loop_header_branch
    %12 = sbr.rel (%p10) target = $region8
  $region5: #{qnetwork_forward.3} parent=0 // loop_body
    %s14 = ssub.s32 %s9, 1
    %s15 = ssub.s32 %s9, 2
    %s16 = sadd.s32 %s9, 1
    %s17 = ssub.s32 %s9, %s16
    %p18 = scmp.eq.s32.totalorder %s17, 0
    %s20 = sadd.s32 %s19, 1
    %s21 = scalar_select %p18, %s19, %s20
    %p24 = pneg %p18
    %p25 = scmp.eq.s32.totalorder %s9, 1
    %p26 = por %p24, %p25
    %p27 = scmp.ne.s32.totalorder %s19, %s22
    %p28 = scmp.eq.s32.totalorder %s9, 0
    %p29 = por %p27, %p28
    %p30 = scmp.ne.s32.totalorder %s19, %s22
    %p31 = scmp.eq.s32.totalorder %s14, 1
    %p32 = por %p30, %p31
    %p33 = scmp.ne.s32.totalorder %s22, %s23
    %p34 = scmp.eq.s32.totalorder %s14, 0
    %p35 = por %p33, %p34
    %p36 = scmp.ne.s32.totalorder %s22, %s23
    %p37 = scmp.eq.s32.totalorder %s15, 1
    %p38 = por %p36, %p37
    %p40 = scmp.ne.s32.totalorder %s23, %s39
    %p41 = scmp.eq.s32.totalorder %s15, 0
    %p42 = por %p40, %p41
    %s44 = sadd.s32 %s43, 1
    %p47 = scmp.eq.s32.totalorder %s9, 1
    %p48 = scmp.ne.s32.totalorder %s43, %s45
    %p49 = scmp.eq.s32.totalorder %s9, 0
    %p50 = por %p48, %p49
    %p51 = scmp.ne.s32.totalorder %s43, %s45
    %p52 = scmp.eq.s32.totalorder %s14, 1
    %p53 = por %p51, %p52
    %p54 = scmp.ne.s32.totalorder %s45, %s46
    %p55 = scmp.eq.s32.totalorder %s14, 0
    %p56 = por %p54, %p55
    %p57 = scmp.ne.s32.totalorder %s45, %s46
    %p58 = scmp.eq.s32.totalorder %s15, 1
    %p59 = por %p57, %p58
    %p61 = scmp.ne.s32.totalorder %s46, %s60
    %p62 = scmp.eq.s32.totalorder %s15, 0
    %p63 = por %p61, %p62
    %s65 = sadd.s32 %s64, 1
    %p68 = scmp.eq.s32.totalorder %s9, 1
    %p69 = scmp.ne.s32.totalorder %s64, %s66
    %p70 = scmp.eq.s32.totalorder %s9, 0
    %p71 = por %p69, %p70
    %p72 = scmp.ne.s32.totalorder %s64, %s66
    %p73 = scmp.eq.s32.totalorder %s14, 1
    %p74 = por %p72, %p73
    %p75 = scmp.ne.s32.totalorder %s66, %s67
    %p76 = scmp.eq.s32.totalorder %s14, 0
    %p77 = por %p75, %p76
    %p78 = scmp.ne.s32.totalorder %s66, %s67
    %p79 = scmp.eq.s32.totalorder %s15, 1
    %p80 = por %p78, %p79
    %p82 = scmp.ne.s32.totalorder %s67, %s81
    %p83 = scmp.eq.s32.totalorder %s15, 0
    %p84 = por %p82, %p83
    %s85 = ssub.s32 %s9, %s16
    %p86 = scmp.eq.s32.totalorder %s85, 0
    %s88 = sadd.s32 %s87, 1
    %s89 = scalar_select %p86, %s87, %s88
    %p92 = pneg %p86
    %p93 = scmp.eq.s32.totalorder %s9, 1
    %p94 = por %p92, %p93
    %p95 = scmp.ne.s32.totalorder %s87, %s90
    %p96 = scmp.eq.s32.totalorder %s9, 0
    %p97 = por %p95, %p96
    %p98 = scmp.ne.s32.totalorder %s87, %s90
    %p99 = scmp.eq.s32.totalorder %s14, 1
    %p100 = por %p98, %p99
    %p101 = scmp.ne.s32.totalorder %s90, %s91
    %p102 = scmp.eq.s32.totalorder %s14, 0
    %p103 = por %p101, %p102
    %p104 = scmp.ne.s32.totalorder %s90, %s91
    %p105 = scmp.eq.s32.totalorder %s15, 1
    %p106 = por %p104, %p105
    %p108 = scmp.ne.s32.totalorder %s91, %s107
    %p109 = scmp.eq.s32.totalorder %s15, 0
    %p110 = por %p108, %p109
    %p111 = scmp.le.s32.totalorder 1, %s9
    %p112 = scmp.lt.s32.totalorder %s9, 3
    %p113 = pnand %p111, %p112
    %p114 = pneg %p113
    // Predicated region
    $region9: #{qnetwork_forward.3} parent=5 // pred_check
      _
    $region10: #{qnetwork_forward.3} parent=5 // pred_check_branch
      %116 = sbr.rel (%p113) target = $region12
    $region11: #{qnetwork_forward.3} parent=5 // pred_region
      %s117 = ssub.s32 %s9, 1
      // Predicated region
      $region13: #{qnetwork_forward.3} parent=11 // pred_check
        %p118 = pneg %p56
      $region14: #{qnetwork_forward.3} parent=11 // pred_check_branch
        %120 = sbr.rel (%p118) target = $region16
      $region15: #{qnetwork_forward.3} parent=11 // pred_region
        _
      $region16: #{qnetwork_forward.3} parent=11 // pred_fallthru
        _
      // Predicated region
      $region17: #{qnetwork_forward.3} parent=11 // pred_check
        %p121 = pneg %p77
      $region18: #{qnetwork_forward.3} parent=11 // pred_check_branch
        %123 = sbr.rel (%p121) target = $region20
      $region19: #{qnetwork_forward.3} parent=11 // pred_region
        _
      $region20: #{qnetwork_forward.3} parent=11 // pred_fallthru
        _
    $region12: #{qnetwork_forward.3} parent=5 // pred_fallthru
      _
    %p124 = scmp.lt.s32.totalorder %s9, 2
    // Predicated region
    $region21: #{qnetwork_forward.3} parent=5 // pred_check
      %p125 = pneg %p124
    $region22: #{qnetwork_forward.3} parent=5 // pred_check_branch
      %127 = sbr.rel (%p125) target = $region24
    $region23: #{qnetwork_forward.3} parent=5 // pred_region
      // Predicated region
      $region25: #{qnetwork_forward.3} parent=23 // pred_check
        %p128 = pneg %p29
      $region26: #{qnetwork_forward.3} parent=23 // pred_check_branch
        %130 = sbr.rel (%p128) target = $region28
      $region27: #{qnetwork_forward.3} parent=23 // pred_region
        %s131 = smul.u32 50, %s9
        %p132 = scmp.lt.s32.totalorder %s131, 99
        %s133 = scalar_select %p132, %s131, 99
        %s134 = smul.addr %s133, 2
        %s135 = smul.addr %s134, 4
        %s136 = scalar_lea.vmem %s0, %s135
        %s137 = smul.u32 50, %s9
      $region28: #{qnetwork_forward.3} parent=23 // pred_fallthru
        _
    $region24: #{qnetwork_forward.3} parent=5 // pred_fallthru
      _
    %p138 = scmp.le.s32.totalorder 1, %s9
    %p139 = scmp.lt.s32.totalorder %s9, 3
    %p140 = pnand %p138, %p139
    %p141 = pneg %p140
    // Predicated region
    $region29: #{qnetwork_forward.3} parent=5 // pred_check
      _
    $region30: #{qnetwork_forward.3} parent=5 // pred_check_branch
      %143 = sbr.rel (%p140) target = $region32
    $region31: #{qnetwork_forward.3} parent=5 // pred_region
      %s144 = ssub.s32 %s9, 1
      %s145 = smul.u32 50, %s14
      %p146 = scmp.lt.s32.totalorder %s145, 99
      %s147 = scalar_select %p146, %s145, 99
      %s148 = smul.addr %s147, 2
      %s149 = smul.addr %s148, 4
      %s150 = scalar_lea.vmem %s0, %s149
      %p151 = pneg %p35
      %p152 = pneg %p32
      %p153 = pneg %p56
      %p154 = pneg %p53
      %p155 = pneg %p77
      %p156 = pneg %p74
      %p157 = pneg %p103
      %p158 = pneg %p100
      %s159 = smul.u32 50, %s14
      %p160 = scmp.lt.s32.totalorder %s159, 99
      %s161 = scalar_select %p160, %s159, 99
      %s162 = smul.addr %s161, 4
      %s163 = scalar_lea.vmem %s3, %s162
      %s164 = smul.u32 50, %s14
      %p165 = scmp.lt.s32.totalorder %s164, 99
      %s166 = scalar_select %p165, %s164, 99
      %s167 = smul.addr %s166, 2
      %s168 = smul.addr %s167, 4
      %s169 = scalar_lea.vmem %s0, %s168
      %s170 = smul.u32 50, %s14
      %s171 = smul.u32 50, %s14
      %p172 = scmp.lt.s32.totalorder %s171, 99
      %s173 = scalar_select %p172, %s171, 99
      %s174 = smul.addr %s173, 4
      %s175 = scalar_lea.vmem %s3, %s174
      %s176 = smul.u32 50, %s14
      %v177 = vld [vmem:[%s169] sm:$0xff]
      %v178 = vld [vmem:[%s169 + $0x8] sm:$0xff]
      %v179 = vld [vmem:[%s169 + $0x10] sm:$0xff]
      %v180 = vld [vmem:[%s169 + $0x18] sm:$0xff]
      %v181 = vld [vmem:[%s169 + $0x20] sm:$0xff]
      %v182 = vld [vmem:[%s169 + $0x28] sm:$0xff]
      %v183 = vld [vmem:[%s169 + $0x30] sm:$0xff]
      %v184 = vld [vmem:[%s169 + $0x38] sm:$0xff]
      %v185 = vld [vmem:[%s169 + $0x40] sm:$0xff]
      %v186 = vld [vmem:[%s169 + $0x48] sm:$0xff]
      %v187 = vld [vmem:[%s169 + $0x50] sm:$0xff]
      %v188 = vld [vmem:[%s169 + $0x58] sm:$0xff]
      %v189 = vld [vmem:[%s169 + $0x60] sm:$0xff]
      %v190 = vld [vmem:[%s169 + $0x68] sm:$0xff]
      %v191 = vld [vmem:[%s169 + $0x70] sm:$0xff]
      %v192 = vld [vmem:[%s169 + $0x78] sm:$0xff]
      %v193 = vld [vmem:[%s169 + $0x80] sm:$0xff]
      %v194 = vld [vmem:[%s169 + $0x88] sm:$0xff]
      %v195 = vld [vmem:[%s169 + $0x90] sm:$0xff]
      %v196 = vld [vmem:[%s169 + $0x98] sm:$0xff]
      %v197 = vld [vmem:[%s169 + $0xa0] sm:$0xff]
      %v198 = vld [vmem:[%s169 + $0xa8] sm:$0xff]
      %v199 = vld [vmem:[%s169 + $0xb0] sm:$0xff]
      %v200 = vld [vmem:[%s169 + $0xb8] sm:$0xff]
      %v201 = vld [vmem:[%s169 + $0xc0] sm:$0xff]
      %v202 = vld [vmem:[%s169 + $0xc8] sm:$0xff]
      %v203 = vld [vmem:[%s169 + $0xd0] sm:$0xff]
      %v204 = vld [vmem:[%s169 + $0xd8] sm:$0xff]
      %v205 = vld [vmem:[%s169 + $0xe0] sm:$0xff]
      %v206 = vld [vmem:[%s169 + $0xe8] sm:$0xff]
      %v207 = vld [vmem:[%s169 + $0xf0] sm:$0xff]
      %v208 = vld [vmem:[%s169 + $0xf8] sm:$0xff]
      %v209 = vld [vmem:[%s169 + $0x100] sm:$0xff]
      %v210 = vld [vmem:[%s169 + $0x108] sm:$0xff]
      %v211 = vld [vmem:[%s169 + $0x110] sm:$0xff]
      %v212 = vld [vmem:[%s169 + $0x118] sm:$0xff]
      %v213 = vld [vmem:[%s169 + $0x120] sm:$0xff]
      %v214 = vld [vmem:[%s169 + $0x128] sm:$0xff]
      %v215 = vld [vmem:[%s169 + $0x130] sm:$0xff]
      %v216 = vld [vmem:[%s169 + $0x138] sm:$0xff]
      %v217 = vld [vmem:[%s169 + $0x140] sm:$0xff]
      %v218 = vld [vmem:[%s169 + $0x148] sm:$0xff]
      %v219 = vld [vmem:[%s169 + $0x150] sm:$0xff]
      %v220 = vld [vmem:[%s169 + $0x158] sm:$0xff]
      %v221 = vld [vmem:[%s169 + $0x160] sm:$0xff]
      %v222 = vld [vmem:[%s169 + $0x168] sm:$0xff]
      %v223 = vld [vmem:[%s169 + $0x170] sm:$0xff]
      %v224 = vld [vmem:[%s169 + $0x178] sm:$0xff]
      %v225 = vld [vmem:[%s169 + $0x180] sm:$0xff]
      %v226 = vld [vmem:[%s169 + $0x188] sm:$0xff]
      %v227 = vld [vmem:[%s1] sm:$0xf]
      %v228 = vld [vmem:[%s1 + $0x4] sm:$0xf]
      %v229 = vld [vmem:[%s1 + $0x8] sm:$0xf]
      %v230 = vld [vmem:[%s1 + $0xc] sm:$0xf]
      %v231 = vld [vmem:[%s1 + $0x10] sm:$0xf]
      %v232 = vld [vmem:[%s1 + $0x14] sm:$0xf]
      %v233 = vld [vmem:[%s1 + $0x18] sm:$0xf]
      %v234 = vld [vmem:[%s1 + $0x1c] sm:$0xf]
      %v235 = vld [vmem:[%s1 + $0x20] sm:$0xf]
      %v236 = vld [vmem:[%s1 + $0x24] sm:$0xf]
      %v237 = vld [vmem:[%s1 + $0x28] sm:$0xf]
      %v238 = vld [vmem:[%s1 + $0x2c] sm:$0xf]
      %v239 = vld [vmem:[%s1 + $0x30] sm:$0xf]
      %v240 = vld [vmem:[%s1 + $0x34] sm:$0xf]
      %v241 = vld [vmem:[%s1 + $0x38] sm:$0xf]
      %v242 = vld [vmem:[%s1 + $0x3c] sm:$0xf]
      %v243 = vld [vmem:[%s1 + $0x40] sm:$0xf]
      %v244 = vld [vmem:[%s1 + $0x44] sm:$0xf]
      %v245 = vld [vmem:[%s1 + $0x48] sm:$0xf]
      %v246 = vld [vmem:[%s1 + $0x4c] sm:$0xf]
      %v247 = vld [vmem:[%s1 + $0x50] sm:$0xf]
      %v248 = vld [vmem:[%s1 + $0x54] sm:$0xf]
      %v249 = vld [vmem:[%s1 + $0x58] sm:$0xf]
      %v250 = vld [vmem:[%s1 + $0x5c] sm:$0xf]
      %v251 = vld [vmem:[%s1 + $0x60] sm:$0xf]
      %v252 = vld [vmem:[%s1 + $0x64] sm:$0xf]
      %v253 = vld [vmem:[%s1 + $0x68] sm:$0xf]
      %v254 = vld [vmem:[%s1 + $0x6c] sm:$0xf]
      %v255 = vld [vmem:[%s1 + $0x70] sm:$0xf]
      %v256 = vld [vmem:[%s1 + $0x74] sm:$0xf]
      %v257 = vld [vmem:[%s1 + $0x78] sm:$0xf]
      %v258 = vld [vmem:[%s1 + $0x7c] sm:$0xf]
      %v259 = vld [vmem:[%s2] sm:$0x1]
      %v261 = vperm.slane %v259, 0
      %v313 = vunpack.c.l.b16 %v177
      %v314 = vunpack.c.h.b16 %v177
      %v315 = vunpack.c.l.b16 %v178
      %v316 = vunpack.c.h.b16 %v178
      %v317 = vunpack.c.l.b16 %v179
      %v318 = vunpack.c.h.b16 %v179
      %v319 = vunpack.c.l.b16 %v180
      %v320 = vunpack.c.h.b16 %v180
      %v321 = vunpack.c.l.b16 %v181
      %v322 = vunpack.c.h.b16 %v181
      %v323 = vunpack.c.l.b16 %v182
      %v324 = vunpack.c.h.b16 %v182
      %v325 = vunpack.c.l.b16 %v183
      %v326 = vunpack.c.h.b16 %v183
      %v327 = vunpack.c.l.b16 %v184
      %v328 = vunpack.c.h.b16 %v184
      %v329 = vunpack.c.l.b16 %v185
      %v330 = vunpack.c.h.b16 %v185
      %v331 = vunpack.c.l.b16 %v186
      %v332 = vunpack.c.h.b16 %v186
      %v333 = vunpack.c.l.b16 %v187
      %v334 = vunpack.c.h.b16 %v187
      %v335 = vunpack.c.l.b16 %v188
      %v336 = vunpack.c.h.b16 %v188
      %v337 = vunpack.c.l.b16 %v189
      %v338 = vunpack.c.h.b16 %v189
      %v339 = vunpack.c.l.b16 %v190
      %v340 = vunpack.c.h.b16 %v190
      %v341 = vunpack.c.l.b16 %v191
      %v342 = vunpack.c.h.b16 %v191
      %v343 = vunpack.c.l.b16 %v192
      %v344 = vunpack.c.h.b16 %v192
      %v345 = vunpack.c.l.b16 %v193
      %v346 = vunpack.c.h.b16 %v193
      %v347 = vunpack.c.l.b16 %v194
      %v348 = vunpack.c.h.b16 %v194
      %v349 = vunpack.c.l.b16 %v195
      %v350 = vunpack.c.h.b16 %v195
      %v351 = vunpack.c.l.b16 %v196
      %v352 = vunpack.c.h.b16 %v196
      %v353 = vunpack.c.l.b16 %v197
      %v354 = vunpack.c.h.b16 %v197
      %v355 = vunpack.c.l.b16 %v198
      %v356 = vunpack.c.h.b16 %v198
      %v357 = vunpack.c.l.b16 %v199
      %v358 = vunpack.c.h.b16 %v199
      %v359 = vunpack.c.l.b16 %v200
      %v360 = vunpack.c.h.b16 %v200
      %v361 = vunpack.c.l.b16 %v201
      %v362 = vunpack.c.h.b16 %v201
      %v363 = vunpack.c.l.b16 %v202
      %v364 = vunpack.c.h.b16 %v202
      %v365 = vunpack.c.l.b16 %v203
      %v366 = vunpack.c.h.b16 %v203
      %v367 = vunpack.c.l.b16 %v204
      %v368 = vunpack.c.h.b16 %v204
      %v369 = vunpack.c.l.b16 %v205
      %v370 = vunpack.c.h.b16 %v205
      %v371 = vunpack.c.l.b16 %v206
      %v372 = vunpack.c.h.b16 %v206
      %v373 = vunpack.c.l.b16 %v207
      %v374 = vunpack.c.h.b16 %v207
      %v375 = vunpack.c.l.b16 %v208
      %v376 = vunpack.c.h.b16 %v208
      %v377 = vunpack.c.l.b16 %v209
      %v378 = vunpack.c.h.b16 %v209
      %v379 = vunpack.c.l.b16 %v210
      %v380 = vunpack.c.h.b16 %v210
      %v381 = vunpack.c.l.b16 %v211
      %v382 = vunpack.c.h.b16 %v211
      %v383 = vunpack.c.l.b16 %v212
      %v384 = vunpack.c.h.b16 %v212
      %v385 = vunpack.c.l.b16 %v213
      %v386 = vunpack.c.h.b16 %v213
      %v387 = vunpack.c.l.b16 %v214
      %v388 = vunpack.c.h.b16 %v214
      %v389 = vunpack.c.l.b16 %v215
      %v390 = vunpack.c.h.b16 %v215
      %v391 = vunpack.c.l.b16 %v216
      %v392 = vunpack.c.h.b16 %v216
      %v393 = vunpack.c.l.b16 %v217
      %v394 = vunpack.c.h.b16 %v217
      %v395 = vunpack.c.l.b16 %v218
      %v396 = vunpack.c.h.b16 %v218
      %v397 = vunpack.c.l.b16 %v219
      %v398 = vunpack.c.h.b16 %v219
      %v399 = vunpack.c.l.b16 %v220
      %v400 = vunpack.c.h.b16 %v220
      %v401 = vunpack.c.l.b16 %v221
      %v402 = vunpack.c.h.b16 %v221
      %v403 = vunpack.c.l.b16 %v222
      %v404 = vunpack.c.h.b16 %v222
      %v405 = vunpack.c.l.b16 %v223
      %v406 = vunpack.c.h.b16 %v223
      %v407 = vunpack.c.l.b16 %v224
      %v408 = vunpack.c.h.b16 %v224
      %v409 = vunpack.c.l.b16 %v225
      %v410 = vunpack.c.h.b16 %v225
      %v411 = vunpack.c.l.b16 %v226
      %v412 = vunpack.c.h.b16 %v226
      %v413 = vpack.c.b16 %v315, %v313
      %v414 = vpack.c.b16 %v316, %v314
      %v415 = vpack.c.b16 %v319, %v317
      %v416 = vpack.c.b16 %v320, %v318
      %v417 = vpack.c.b16 %v323, %v321
      %v418 = vpack.c.b16 %v324, %v322
      %v419 = vpack.c.b16 %v327, %v325
      %v420 = vpack.c.b16 %v328, %v326
      %v421 = vpack.c.b16 %v331, %v329
      %v422 = vpack.c.b16 %v332, %v330
      %v423 = vpack.c.b16 %v335, %v333
      %v424 = vpack.c.b16 %v336, %v334
      %v425 = vpack.c.b16 %v339, %v337
      %v426 = vpack.c.b16 %v340, %v338
      %v427 = vpack.c.b16 %v343, %v341
      %v428 = vpack.c.b16 %v344, %v342
      %v429 = vpack.c.b16 %v347, %v345
      %v430 = vpack.c.b16 %v348, %v346
      %v431 = vpack.c.b16 %v351, %v349
      %v432 = vpack.c.b16 %v352, %v350
      %v433 = vpack.c.b16 %v355, %v353
      %v434 = vpack.c.b16 %v356, %v354
      %v435 = vpack.c.b16 %v359, %v357
      %v436 = vpack.c.b16 %v360, %v358
      %v437 = vpack.c.b16 %v363, %v361
      %v438 = vpack.c.b16 %v364, %v362
      %v439 = vpack.c.b16 %v367, %v365
      %v440 = vpack.c.b16 %v368, %v366
      %v441 = vpack.c.b16 %v371, %v369
      %v442 = vpack.c.b16 %v372, %v370
      %v443 = vpack.c.b16 %v375, %v373
      %v444 = vpack.c.b16 %v376, %v374
      %v445 = vpack.c.b16 %v379, %v377
      %v446 = vpack.c.b16 %v380, %v378
      %v447 = vpack.c.b16 %v383, %v381
      %v448 = vpack.c.b16 %v384, %v382
      %v449 = vpack.c.b16 %v387, %v385
      %v450 = vpack.c.b16 %v388, %v386
      %v451 = vpack.c.b16 %v391, %v389
      %v452 = vpack.c.b16 %v392, %v390
      %v453 = vpack.c.b16 %v395, %v393
      %v454 = vpack.c.b16 %v396, %v394
      %v455 = vpack.c.b16 %v399, %v397
      %v456 = vpack.c.b16 %v400, %v398
      %v457 = vpack.c.b16 %v403, %v401
      %v458 = vpack.c.b16 %v404, %v402
      %v459 = vpack.c.b16 %v407, %v405
      %v460 = vpack.c.b16 %v408, %v406
      %v461 = vpack.c.b16 %v411, %v409
      %v462 = vpack.c.b16 %v412, %v410
      %v545 = vunpack.c.l.b16 %v227
      %v546 = vunpack.c.l.b16 %v228
      %v547 = vunpack.c.l.b16 %v229
      %v548 = vunpack.c.l.b16 %v230
      %v549 = vunpack.c.l.b16 %v231
      %v550 = vunpack.c.l.b16 %v232
      %v551 = vunpack.c.l.b16 %v233
      %v552 = vunpack.c.l.b16 %v234
      %v553 = vunpack.c.l.b16 %v235
      %v554 = vunpack.c.l.b16 %v236
      %v555 = vunpack.c.l.b16 %v237
      %v556 = vunpack.c.l.b16 %v238
      %v557 = vunpack.c.l.b16 %v239
      %v558 = vunpack.c.l.b16 %v240
      %v559 = vunpack.c.l.b16 %v241
      %v560 = vunpack.c.l.b16 %v242
      %v561 = vunpack.c.l.b16 %v243
      %v562 = vunpack.c.l.b16 %v244
      %v563 = vunpack.c.l.b16 %v245
      %v564 = vunpack.c.l.b16 %v246
      %v565 = vunpack.c.l.b16 %v247
      %v566 = vunpack.c.l.b16 %v248
      %v567 = vunpack.c.l.b16 %v249
      %v568 = vunpack.c.l.b16 %v250
      %v569 = vunpack.c.l.b16 %v251
      %v570 = vunpack.c.l.b16 %v252
      %v571 = vunpack.c.l.b16 %v253
      %v572 = vunpack.c.l.b16 %v254
      %v573 = vunpack.c.l.b16 %v255
      %v574 = vunpack.c.l.b16 %v256
      %v575 = vunpack.c.l.b16 %v257
      %v576 = vunpack.c.l.b16 %v258
      %v577 = vpack.c.b16 %v546, %v545
      %v578 = vpack.c.b16 %v548, %v547
      %v579 = vpack.c.b16 %v550, %v549
      %v580 = vpack.c.b16 %v552, %v551
      %v581 = vpack.c.b16 %v554, %v553
      %v582 = vpack.c.b16 %v556, %v555
      %v583 = vpack.c.b16 %v558, %v557
      %v584 = vpack.c.b16 %v560, %v559
      %v585 = vpack.c.b16 %v562, %v561
      %v586 = vpack.c.b16 %v564, %v563
      %v587 = vpack.c.b16 %v566, %v565
      %v588 = vpack.c.b16 %v568, %v567
      %v589 = vpack.c.b16 %v570, %v569
      %v590 = vpack.c.b16 %v572, %v571
      %v591 = vpack.c.b16 %v574, %v573
      %v592 = vpack.c.b16 %v576, %v575
      %609 = vmatpush.bf16.msra.mxu0 %v584
      %610 = vmatpush.bf16.msra.mxu0 %v583
      %611 = vmatpush.bf16.msra.mxu0 %v582
      %612 = vmatpush.bf16.msra.mxu0 %v581
      %613 = vmatpush.bf16.msra.mxu0 %v580
      %614 = vmatpush.bf16.msra.mxu0 %v579
      %615 = vmatpush.bf16.msra.mxu0 %v578
      %616 = vmatpush.bf16.msra.mxu0 %v577
      %617 = vmatmul.bf16.gmra.mxu0 %v413
      %v618 = vpop.f32.mrf.mxu0
      %v619 = vadd.f32 %v261, %v618
      %v620 = vpop.f32.mrf.mxu0
      %v621 = vadd.f32 %v261, %v620
      %622 = vmatmul.bf16.gmra.mxu0 %v415
      %v623 = vpop.f32.mrf.mxu0
      %v624 = vadd.f32 %v261, %v623
      %v625 = vpop.f32.mrf.mxu0
      %v626 = vadd.f32 %v261, %v625
      %627 = vmatmul.bf16.gmra.mxu0 %v417
      %v628 = vpop.f32.mrf.mxu0
      %v629 = vadd.f32 %v261, %v628
      %v630 = vpop.f32.mrf.mxu0
      %v631 = vadd.f32 %v261, %v630
      %632 = vmatmul.bf16.gmra.mxu0 %v419
      %v633 = vpop.f32.mrf.mxu0
      %v634 = vadd.f32 %v261, %v633
      %v635 = vpop.f32.mrf.mxu0
      %v636 = vadd.f32 %v261, %v635
      %637 = vmatmul.bf16.gmra.mxu0 %v421
      %v638 = vpop.f32.mrf.mxu0
      %v639 = vadd.f32 %v261, %v638
      %v640 = vpop.f32.mrf.mxu0
      %v641 = vadd.f32 %v261, %v640
      %642 = vmatmul.bf16.gmra.mxu0 %v423
      %v643 = vpop.f32.mrf.mxu0
      %v644 = vadd.f32 %v261, %v643
      %v645 = vpop.f32.mrf.mxu0
      %v646 = vadd.f32 %v261, %v645
      %647 = vmatmul.bf16.gmra.mxu0 %v425
      %v648 = vpop.f32.mrf.mxu0
      %v649 = vadd.f32 %v261, %v648
      %v650 = vpop.f32.mrf.mxu0
      %v651 = vadd.f32 %v261, %v650
      %652 = vmatmul.bf16.gmra.mxu0 %v427
      %v653 = vpop.f32.mrf.mxu0
      %v654 = vadd.f32 %v261, %v653
      %v655 = vpop.f32.mrf.mxu0
      %v656 = vadd.f32 %v261, %v655
      %657 = vmatmul.bf16.gmra.mxu0 %v429
      %v658 = vpop.f32.mrf.mxu0
      %v659 = vadd.f32 %v261, %v658
      %v660 = vpop.f32.mrf.mxu0
      %v661 = vadd.f32 %v261, %v660
      %662 = vmatmul.bf16.gmra.mxu0 %v431
      %v663 = vpop.f32.mrf.mxu0
      %v664 = vadd.f32 %v261, %v663
      %v665 = vpop.f32.mrf.mxu0
      %v666 = vadd.f32 %v261, %v665
      %667 = vmatmul.bf16.gmra.mxu0 %v433
      %v668 = vpop.f32.mrf.mxu0
      %v669 = vadd.f32 %v261, %v668
      %v670 = vpop.f32.mrf.mxu0
      %v671 = vadd.f32 %v261, %v670
      %672 = vmatmul.bf16.gmra.mxu0 %v435
      %v673 = vpop.f32.mrf.mxu0
      %v674 = vadd.f32 %v261, %v673
      %v675 = vpop.f32.mrf.mxu0
      %v676 = vadd.f32 %v261, %v675
      %677 = vmatmul.bf16.gmra.mxu0 %v437
      %v678 = vpop.f32.mrf.mxu0
      %v679 = vadd.f32 %v261, %v678
      %v680 = vpop.f32.mrf.mxu0
      %v681 = vadd.f32 %v261, %v680
      %682 = vmatmul.bf16.gmra.mxu0 %v439
      %v683 = vpop.f32.mrf.mxu0
      %v684 = vadd.f32 %v261, %v683
      %v685 = vpop.f32.mrf.mxu0
      %v686 = vadd.f32 %v261, %v685
      %687 = vmatmul.bf16.gmra.mxu0 %v441
      %v688 = vpop.f32.mrf.mxu0
      %v689 = vadd.f32 %v261, %v688
      %v690 = vpop.f32.mrf.mxu0
      %v691 = vadd.f32 %v261, %v690
      %692 = vmatmul.bf16.gmra.mxu0 %v443
      %v693 = vpop.f32.mrf.mxu0
      %v694 = vadd.f32 %v261, %v693
      %v695 = vpop.f32.mrf.mxu0
      %v696 = vadd.f32 %v261, %v695
      %697 = vmatmul.bf16.gmra.mxu0 %v445
      %v698 = vpop.f32.mrf.mxu0
      %v699 = vadd.f32 %v261, %v698
      %v700 = vpop.f32.mrf.mxu0
      %v701 = vadd.f32 %v261, %v700
      %702 = vmatmul.bf16.gmra.mxu0 %v447
      %v703 = vpop.f32.mrf.mxu0
      %v704 = vadd.f32 %v261, %v703
      %v705 = vpop.f32.mrf.mxu0
      %v706 = vadd.f32 %v261, %v705
      %707 = vmatmul.bf16.gmra.mxu0 %v449
      %v708 = vpop.f32.mrf.mxu0
      %v709 = vadd.f32 %v261, %v708
      %v710 = vpop.f32.mrf.mxu0
      %v711 = vadd.f32 %v261, %v710
      %712 = vmatmul.bf16.gmra.mxu0 %v451
      %v713 = vpop.f32.mrf.mxu0
      %v714 = vadd.f32 %v261, %v713
      %v715 = vpop.f32.mrf.mxu0
      %v716 = vadd.f32 %v261, %v715
      %717 = vmatmul.bf16.gmra.mxu0 %v453
      %v718 = vpop.f32.mrf.mxu0
      %v719 = vadd.f32 %v261, %v718
      %v720 = vpop.f32.mrf.mxu0
      %v721 = vadd.f32 %v261, %v720
      %722 = vmatmul.bf16.gmra.mxu0 %v455
      %v723 = vpop.f32.mrf.mxu0
      %v724 = vadd.f32 %v261, %v723
      %v725 = vpop.f32.mrf.mxu0
      %v726 = vadd.f32 %v261, %v725
      %727 = vmatmul.bf16.gmra.mxu0 %v457
      %v728 = vpop.f32.mrf.mxu0
      %v729 = vadd.f32 %v261, %v728
      %v730 = vpop.f32.mrf.mxu0
      %v731 = vadd.f32 %v261, %v730
      %732 = vmatmul.bf16.gmra.mxu0 %v459
      %v733 = vpop.f32.mrf.mxu0
      %v734 = vadd.f32 %v261, %v733
      %v735 = vpop.f32.mrf.mxu0
      %v736 = vadd.f32 %v261, %v735
      %737 = vmatmul.bf16.gmra.mxu0 %v461
      %v738 = vpop.f32.mrf.mxu0
      %v739 = vadd.f32 %v261, %v738
      %v740 = vpop.f32.mrf.mxu0
      %v741 = vadd.f32 %v261, %v740
      %742 = vdwg.mxu0
      %743 = vmatpush.bf16.msra.mxu0 %v592
      %744 = vmatpush.bf16.msra.mxu0 %v591
      %745 = vmatpush.bf16.msra.mxu0 %v590
      %746 = vmatpush.bf16.msra.mxu0 %v589
      %747 = vmatpush.bf16.msra.mxu0 %v588
      %748 = vmatpush.bf16.msra.mxu0 %v587
      %749 = vmatpush.bf16.msra.mxu0 %v586
      %750 = vmatpush.bf16.msra.mxu0 %v585
      %751 = vmatmul.bf16.gmra.mxu0 %v414
      %v752 = vpop.f32.mrf.mxu0
      %v753 = vadd.f32 %v619, %v752
      %v754 = vpop.f32.mrf.mxu0
      %v755 = vadd.f32 %v621, %v754
      %756 = vmatmul.bf16.gmra.mxu0 %v416
      %v757 = vpop.f32.mrf.mxu0
      %v758 = vadd.f32 %v624, %v757
      %v759 = vpop.f32.mrf.mxu0
      %v760 = vadd.f32 %v626, %v759
      %761 = vmatmul.bf16.gmra.mxu0 %v418
      %v762 = vpop.f32.mrf.mxu0
      %v763 = vadd.f32 %v629, %v762
      %v764 = vpop.f32.mrf.mxu0
      %v765 = vadd.f32 %v631, %v764
      %766 = vmatmul.bf16.gmra.mxu0 %v420
      %v767 = vpop.f32.mrf.mxu0
      %v768 = vadd.f32 %v634, %v767
      %v769 = vpop.f32.mrf.mxu0
      %v770 = vadd.f32 %v636, %v769
      %771 = vmatmul.bf16.gmra.mxu0 %v422
      %v772 = vpop.f32.mrf.mxu0
      %v773 = vadd.f32 %v639, %v772
      %v774 = vpop.f32.mrf.mxu0
      %v775 = vadd.f32 %v641, %v774
      %776 = vmatmul.bf16.gmra.mxu0 %v424
      %v777 = vpop.f32.mrf.mxu0
      %v778 = vadd.f32 %v644, %v777
      %v779 = vpop.f32.mrf.mxu0
      %v780 = vadd.f32 %v646, %v779
      %781 = vmatmul.bf16.gmra.mxu0 %v426
      %v782 = vpop.f32.mrf.mxu0
      %v783 = vadd.f32 %v649, %v782
      %v784 = vpop.f32.mrf.mxu0
      %v785 = vadd.f32 %v651, %v784
      %786 = vmatmul.bf16.gmra.mxu0 %v428
      %v787 = vpop.f32.mrf.mxu0
      %v788 = vadd.f32 %v654, %v787
      %v789 = vpop.f32.mrf.mxu0
      %v790 = vadd.f32 %v656, %v789
      %791 = vmatmul.bf16.gmra.mxu0 %v430
      %v792 = vpop.f32.mrf.mxu0
      %v793 = vadd.f32 %v659, %v792
      %v794 = vpop.f32.mrf.mxu0
      %v795 = vadd.f32 %v661, %v794
      %796 = vmatmul.bf16.gmra.mxu0 %v432
      %v797 = vpop.f32.mrf.mxu0
      %v798 = vadd.f32 %v664, %v797
      %v799 = vpop.f32.mrf.mxu0
      %v800 = vadd.f32 %v666, %v799
      %801 = vmatmul.bf16.gmra.mxu0 %v434
      %v802 = vpop.f32.mrf.mxu0
      %v803 = vadd.f32 %v669, %v802
      %v804 = vpop.f32.mrf.mxu0
      %v805 = vadd.f32 %v671, %v804
      %806 = vmatmul.bf16.gmra.mxu0 %v436
      %v807 = vpop.f32.mrf.mxu0
      %v808 = vadd.f32 %v674, %v807
      %v809 = vpop.f32.mrf.mxu0
      %v810 = vadd.f32 %v676, %v809
      %811 = vmatmul.bf16.gmra.mxu0 %v438
      %v812 = vpop.f32.mrf.mxu0
      %v813 = vadd.f32 %v679, %v812
      %v814 = vpop.f32.mrf.mxu0
      %v815 = vadd.f32 %v681, %v814
      %816 = vmatmul.bf16.gmra.mxu0 %v440
      %v817 = vpop.f32.mrf.mxu0
      %v818 = vadd.f32 %v684, %v817
      %v819 = vpop.f32.mrf.mxu0
      %v820 = vadd.f32 %v686, %v819
      %821 = vmatmul.bf16.gmra.mxu0 %v442
      %v822 = vpop.f32.mrf.mxu0
      %v823 = vadd.f32 %v689, %v822
      %v824 = vpop.f32.mrf.mxu0
      %v825 = vadd.f32 %v691, %v824
      %826 = vmatmul.bf16.gmra.mxu0 %v444
      %v827 = vpop.f32.mrf.mxu0
      %v828 = vadd.f32 %v694, %v827
      %v829 = vpop.f32.mrf.mxu0
      %v830 = vadd.f32 %v696, %v829
      %831 = vmatmul.bf16.gmra.mxu0 %v446
      %v832 = vpop.f32.mrf.mxu0
      %v833 = vadd.f32 %v699, %v832
      %v834 = vpop.f32.mrf.mxu0
      %v835 = vadd.f32 %v701, %v834
      %836 = vmatmul.bf16.gmra.mxu0 %v448
      %v837 = vpop.f32.mrf.mxu0
      %v838 = vadd.f32 %v704, %v837
      %v839 = vpop.f32.mrf.mxu0
      %v840 = vadd.f32 %v706, %v839
      %841 = vmatmul.bf16.gmra.mxu0 %v450
      %v842 = vpop.f32.mrf.mxu0
      %v843 = vadd.f32 %v709, %v842
      %v844 = vpop.f32.mrf.mxu0
      %v845 = vadd.f32 %v711, %v844
      %846 = vmatmul.bf16.gmra.mxu0 %v452
      %v847 = vpop.f32.mrf.mxu0
      %v848 = vadd.f32 %v714, %v847
      %v849 = vpop.f32.mrf.mxu0
      %v850 = vadd.f32 %v716, %v849
      %851 = vmatmul.bf16.gmra.mxu0 %v454
      %v852 = vpop.f32.mrf.mxu0
      %v853 = vadd.f32 %v719, %v852
      %v854 = vpop.f32.mrf.mxu0
      %v855 = vadd.f32 %v721, %v854
      %856 = vmatmul.bf16.gmra.mxu0 %v456
      %v857 = vpop.f32.mrf.mxu0
      %v858 = vadd.f32 %v724, %v857
      %v859 = vpop.f32.mrf.mxu0
      %v860 = vadd.f32 %v726, %v859
      %861 = vmatmul.bf16.gmra.mxu0 %v458
      %v862 = vpop.f32.mrf.mxu0
      %v863 = vadd.f32 %v729, %v862
      %v864 = vpop.f32.mrf.mxu0
      %v865 = vadd.f32 %v731, %v864
      %866 = vmatmul.bf16.gmra.mxu0 %v460
      %v867 = vpop.f32.mrf.mxu0
      %v868 = vadd.f32 %v734, %v867
      %v869 = vpop.f32.mrf.mxu0
      %v870 = vadd.f32 %v736, %v869
      %871 = vmatmul.bf16.gmra.mxu0 %v462
      %v872 = vpop.f32.mrf.mxu0
      %v873 = vadd.f32 %v739, %v872
      %v874 = vpop.f32.mrf.mxu0
      %v875 = vadd.f32 %v741, %v874
      %876 = vdwg.mxu0
      %v877 = vmax.f32 %v753, 0.0
      %v878 = vmax.f32 %v755, 0.0
      %v879 = vmax.f32 %v758, 0.0
      %v880 = vmax.f32 %v760, 0.0
      %v881 = vmax.f32 %v763, 0.0
      %v882 = vmax.f32 %v765, 0.0
      %v883 = vmax.f32 %v768, 0.0
      %v884 = vmax.f32 %v770, 0.0
      %v885 = vmax.f32 %v773, 0.0
      %v886 = vmax.f32 %v775, 0.0
      %v887 = vmax.f32 %v778, 0.0
      %v888 = vmax.f32 %v780, 0.0
      %v889 = vmax.f32 %v783, 0.0
      %v890 = vmax.f32 %v785, 0.0
      %v891 = vmax.f32 %v788, 0.0
      %v892 = vmax.f32 %v790, 0.0
      %v893 = vmax.f32 %v793, 0.0
      %v894 = vmax.f32 %v795, 0.0
      %v895 = vmax.f32 %v798, 0.0
      %v896 = vmax.f32 %v800, 0.0
      %v897 = vmax.f32 %v803, 0.0
      %v898 = vmax.f32 %v805, 0.0
      %v899 = vmax.f32 %v808, 0.0
      %v900 = vmax.f32 %v810, 0.0
      %v901 = vmax.f32 %v813, 0.0
      %v902 = vmax.f32 %v815, 0.0
      %v903 = vmax.f32 %v818, 0.0
      %v904 = vmax.f32 %v820, 0.0
      %v905 = vmax.f32 %v823, 0.0
      %v906 = vmax.f32 %v825, 0.0
      %v907 = vmax.f32 %v828, 0.0
      %v908 = vmax.f32 %v830, 0.0
      %v909 = vmax.f32 %v833, 0.0
      %v910 = vmax.f32 %v835, 0.0
      %v911 = vmax.f32 %v838, 0.0
      %v912 = vmax.f32 %v840, 0.0
      %v913 = vmax.f32 %v843, 0.0
      %v914 = vmax.f32 %v845, 0.0
      %v915 = vmax.f32 %v848, 0.0
      %v916 = vmax.f32 %v850, 0.0
      %v917 = vmax.f32 %v853, 0.0
      %v918 = vmax.f32 %v855, 0.0
      %v919 = vmax.f32 %v858, 0.0
      %v920 = vmax.f32 %v860, 0.0
      %v921 = vmax.f32 %v863, 0.0
      %v922 = vmax.f32 %v865, 0.0
      %v923 = vmax.f32 %v868, 0.0
      %v924 = vmax.f32 %v870, 0.0
      %v925 = vmax.f32 %v873, 0.0
      %v926 = vmax.f32 %v875, 0.0
      %v927 = vpack.c.bf16 %v877, %v877
      %v928 = vpack.c.bf16 %v878, %v878
      %v929 = vpack.c.bf16 %v879, %v879
      %v930 = vpack.c.bf16 %v880, %v880
      %v931 = vpack.c.bf16 %v881, %v881
      %v932 = vpack.c.bf16 %v882, %v882
      %v933 = vpack.c.bf16 %v883, %v883
      %v934 = vpack.c.bf16 %v884, %v884
      %v935 = vpack.c.bf16 %v885, %v885
      %v936 = vpack.c.bf16 %v886, %v886
      %v937 = vpack.c.bf16 %v887, %v887
      %v938 = vpack.c.bf16 %v888, %v888
      %v939 = vpack.c.bf16 %v889, %v889
      %v940 = vpack.c.bf16 %v890, %v890
      %v941 = vpack.c.bf16 %v891, %v891
      %v942 = vpack.c.bf16 %v892, %v892
      %v943 = vpack.c.bf16 %v893, %v893
      %v944 = vpack.c.bf16 %v894, %v894
      %v945 = vpack.c.bf16 %v895, %v895
      %v946 = vpack.c.bf16 %v896, %v896
      %v947 = vpack.c.bf16 %v897, %v897
      %v948 = vpack.c.bf16 %v898, %v898
      %v949 = vpack.c.bf16 %v899, %v899
      %v950 = vpack.c.bf16 %v900, %v900
      %v951 = vpack.c.bf16 %v901, %v901
      %v952 = vpack.c.bf16 %v902, %v902
      %v953 = vpack.c.bf16 %v903, %v903
      %v954 = vpack.c.bf16 %v904, %v904
      %v955 = vpack.c.bf16 %v905, %v905
      %v956 = vpack.c.bf16 %v906, %v906
      %v957 = vpack.c.bf16 %v907, %v907
      %v958 = vpack.c.bf16 %v908, %v908
      %v959 = vpack.c.bf16 %v909, %v909
      %v960 = vpack.c.bf16 %v910, %v910
      %v961 = vpack.c.bf16 %v911, %v911
      %v962 = vpack.c.bf16 %v912, %v912
      %v963 = vpack.c.bf16 %v913, %v913
      %v964 = vpack.c.bf16 %v914, %v914
      %v965 = vpack.c.bf16 %v915, %v915
      %v966 = vpack.c.bf16 %v916, %v916
      %v967 = vpack.c.bf16 %v917, %v917
      %v968 = vpack.c.bf16 %v918, %v918
      %v969 = vpack.c.bf16 %v919, %v919
      %v970 = vpack.c.bf16 %v920, %v920
      %v971 = vpack.c.bf16 %v921, %v921
      %v972 = vpack.c.bf16 %v922, %v922
      %v973 = vpack.c.bf16 %v923, %v923
      %v974 = vpack.c.bf16 %v924, %v924
      %v975 = vpack.c.bf16 %v925, %v925
      %v976 = vpack.c.bf16 %v926, %v926
      %vm977 = vcmask 257024
      %978 = vst.msk [vmem:[%s175] sm:$0xf] %vm977, %v927
      %979 = vst.msk [vmem:[%s175 + $0x4] sm:$0xf] %vm977, %v928
      %980 = vst.msk [vmem:[%s175 + $0x8] sm:$0xf] %vm977, %v929
      %981 = vst.msk [vmem:[%s175 + $0xc] sm:$0xf] %vm977, %v930
      %982 = vst.msk [vmem:[%s175 + $0x10] sm:$0xf] %vm977, %v931
      %983 = vst.msk [vmem:[%s175 + $0x14] sm:$0xf] %vm977, %v932
      %984 = vst.msk [vmem:[%s175 + $0x18] sm:$0xf] %vm977, %v933
      %985 = vst.msk [vmem:[%s175 + $0x1c] sm:$0xf] %vm977, %v934
      %986 = vst.msk [vmem:[%s175 + $0x20] sm:$0xf] %vm977, %v935
      %987 = vst.msk [vmem:[%s175 + $0x24] sm:$0xf] %vm977, %v936
      %988 = vst.msk [vmem:[%s175 + $0x28] sm:$0xf] %vm977, %v937
      %989 = vst.msk [vmem:[%s175 + $0x2c] sm:$0xf] %vm977, %v938
      %990 = vst.msk [vmem:[%s175 + $0x30] sm:$0xf] %vm977, %v939
      %991 = vst.msk [vmem:[%s175 + $0x34] sm:$0xf] %vm977, %v940
      %992 = vst.msk [vmem:[%s175 + $0x38] sm:$0xf] %vm977, %v941
      %993 = vst.msk [vmem:[%s175 + $0x3c] sm:$0xf] %vm977, %v942
      %994 = vst.msk [vmem:[%s175 + $0x40] sm:$0xf] %vm977, %v943
      %995 = vst.msk [vmem:[%s175 + $0x44] sm:$0xf] %vm977, %v944
      %996 = vst.msk [vmem:[%s175 + $0x48] sm:$0xf] %vm977, %v945
      %997 = vst.msk [vmem:[%s175 + $0x4c] sm:$0xf] %vm977, %v946
      %998 = vst.msk [vmem:[%s175 + $0x50] sm:$0xf] %vm977, %v947
      %999 = vst.msk [vmem:[%s175 + $0x54] sm:$0xf] %vm977, %v948
      %1000 = vst.msk [vmem:[%s175 + $0x58] sm:$0xf] %vm977, %v949
      %1001 = vst.msk [vmem:[%s175 + $0x5c] sm:$0xf] %vm977, %v950
      %1002 = vst.msk [vmem:[%s175 + $0x60] sm:$0xf] %vm977, %v951
      %1003 = vst.msk [vmem:[%s175 + $0x64] sm:$0xf] %vm977, %v952
      %1004 = vst.msk [vmem:[%s175 + $0x68] sm:$0xf] %vm977, %v953
      %1005 = vst.msk [vmem:[%s175 + $0x6c] sm:$0xf] %vm977, %v954
      %1006 = vst.msk [vmem:[%s175 + $0x70] sm:$0xf] %vm977, %v955
      %1007 = vst.msk [vmem:[%s175 + $0x74] sm:$0xf] %vm977, %v956
      %1008 = vst.msk [vmem:[%s175 + $0x78] sm:$0xf] %vm977, %v957
      %1009 = vst.msk [vmem:[%s175 + $0x7c] sm:$0xf] %vm977, %v958
      %1010 = vst.msk [vmem:[%s175 + $0x80] sm:$0xf] %vm977, %v959
      %1011 = vst.msk [vmem:[%s175 + $0x84] sm:$0xf] %vm977, %v960
      %1012 = vst.msk [vmem:[%s175 + $0x88] sm:$0xf] %vm977, %v961
      %1013 = vst.msk [vmem:[%s175 + $0x8c] sm:$0xf] %vm977, %v962
      %1014 = vst.msk [vmem:[%s175 + $0x90] sm:$0xf] %vm977, %v963
      %1015 = vst.msk [vmem:[%s175 + $0x94] sm:$0xf] %vm977, %v964
      %1016 = vst.msk [vmem:[%s175 + $0x98] sm:$0xf] %vm977, %v965
      %1017 = vst.msk [vmem:[%s175 + $0x9c] sm:$0xf] %vm977, %v966
      %1018 = vst.msk [vmem:[%s175 + $0xa0] sm:$0xf] %vm977, %v967
      %1019 = vst.msk [vmem:[%s175 + $0xa4] sm:$0xf] %vm977, %v968
      %1020 = vst.msk [vmem:[%s175 + $0xa8] sm:$0xf] %vm977, %v969
      %1021 = vst.msk [vmem:[%s175 + $0xac] sm:$0xf] %vm977, %v970
      %1022 = vst.msk [vmem:[%s175 + $0xb0] sm:$0xf] %vm977, %v971
      %1023 = vst.msk [vmem:[%s175 + $0xb4] sm:$0xf] %vm977, %v972
      %1024 = vst.msk [vmem:[%s175 + $0xb8] sm:$0xf] %vm977, %v973
      %1025 = vst.msk [vmem:[%s175 + $0xbc] sm:$0xf] %vm977, %v974
      %1026 = vst.msk [vmem:[%s175 + $0xc0] sm:$0xf] %vm977, %v975
      %1027 = vst.msk [vmem:[%s175 + $0xc4] sm:$0xf] %vm977, %v976
      %s1028 = smul.u32 50, %s14
      %p1029 = scmp.lt.s32.totalorder %s1028, 99
      %s1030 = scalar_select %p1029, %s1028, 99
      %s1031 = smul.addr %s1030, 4
      %s1032 = scalar_lea.vmem %s3, %s1031
      // Predicated region
      $region33: #{qnetwork_forward.3} parent=31 // pred_check
        %p1033 = pneg %p100
      $region34: #{qnetwork_forward.3} parent=31 // pred_check_branch
        %1035 = sbr.rel (%p1033) target = $region36
      $region35: #{qnetwork_forward.3} parent=31 // pred_region
        %s1036 = smul.u32 50, %s14
      $region36: #{qnetwork_forward.3} parent=31 // pred_fallthru
        _
    $region32: #{qnetwork_forward.3} parent=5 // pred_fallthru
      _
    %p1037 = scmp.le.s32.totalorder 2, %s9
    // Predicated region
    $region37: #{qnetwork_forward.3} parent=5 // pred_check
      %p1038 = pneg %p1037
    $region38: #{qnetwork_forward.3} parent=5 // pred_check_branch
      %1040 = sbr.rel (%p1038) target = $region40
    $region39: #{qnetwork_forward.3} parent=5 // pred_region
      %s1041 = ssub.s32 %s9, 2
      // Predicated region
      $region41: #{qnetwork_forward.3} parent=39 // pred_check
        %p1042 = pneg %p106
      $region42: #{qnetwork_forward.3} parent=39 // pred_check_branch
        %1044 = sbr.rel (%p1042) target = $region44
      $region43: #{qnetwork_forward.3} parent=39 // pred_region
        %s1045 = smul.u32 50, %s15
        %p1046 = scmp.lt.s32.totalorder %s1045, 99
        %s1047 = scalar_select %p1046, %s1045, 99
        %s1048 = smul.addr %s1047, 4
        %s1049 = scalar_lea.vmem %s3, %s1048
      $region44: #{qnetwork_forward.3} parent=39 // pred_fallthru
        _
    $region40: #{qnetwork_forward.3} parent=5 // pred_fallthru
      _
  $region6: #{qnetwork_forward.3} parent=0 // loop_footer
    %s13 = sadd.s32 1, %s9
  $region7: #{qnetwork_forward.3} parent=0 // loop_footer_branch
    %8 = sbr.rel target = $region3
  $region8: #{qnetwork_forward.3} parent=0 // loop_exit
    _

// kernel: qnetwork_forward.4
$region0: #{qnetwork_forward.4}
  #allocation0 [shape = 'u32[]', space=smem, size = 0x4, offset = 0x4, fixed_abs, tag = 'smem constant byte address 0x4 - core index']
  #allocation1 [shape = 'u32[72,128]{1,0:T(1,128)}', space=vmem, size = 0x9000, scoped, tag = 'internal scratch']
  %s0 = inlined_call_operand.vmem [shape: bf16[162,512], index: 0, kind: input, shape index: {}]
  %s1 = inlined_call_operand.vmem [shape: bf16[512,64], index: 1, kind: input, shape index: {}]
  %s2 = inlined_call_operand.vmem [shape: f32[1,64], index: 2, kind: input, shape index: {}]
  %s3 = inlined_call_operand.vmem [shape: bf16[162,64], index: 3, kind: output, shape index: {}]
  %s4 = sld [smem:[#allocation0]]
  $region22: #{qnetwork_forward.4} parent=0
    _
  %s6 = ssub.s32 1, %s4
  %s7 = scalar_select 0, %s6, %s4
  // Predicated region
  $region2: #{qnetwork_forward.4} parent=0 // pred_check
    _
  $region3: #{qnetwork_forward.4} parent=0 // pred_check_branch
    %9 = sbr.rel (0) target = $region5
  $region4: #{qnetwork_forward.4} parent=0 // pred_region
    _
  $region5: #{qnetwork_forward.4} parent=0 // pred_fallthru
    _
  // Predicated region
  $region6: #{qnetwork_forward.4} parent=0 // pred_check
    _
  $region7: #{qnetwork_forward.4} parent=0 // pred_check_branch
    %11 = sbr.rel (0) target = $region9
  $region8: #{qnetwork_forward.4} parent=0 // pred_region
    _
  $region9: #{qnetwork_forward.4} parent=0 // pred_fallthru
    _
  // Predicated region
  $region10: #{qnetwork_forward.4} parent=0 // pred_check
    _
  $region11: #{qnetwork_forward.4} parent=0 // pred_check_branch
    %13 = sbr.rel (0) target = $region13
  $region12: #{qnetwork_forward.4} parent=0 // pred_region
    _
  $region13: #{qnetwork_forward.4} parent=0 // pred_fallthru
    _
  %v14 = vld [vmem:[%s0] sm:$0xff]
  %v15 = vld [vmem:[%s0 + $0x8] sm:$0xff]
  %v16 = vld [vmem:[%s0 + $0x10] sm:$0xff]
  %v17 = vld [vmem:[%s0 + $0x18] sm:$0xff]
  %v18 = vld [vmem:[%s0 + $0x20] sm:$0xff]
  %v19 = vld [vmem:[%s0 + $0x28] sm:$0xff]
  %v20 = vld [vmem:[%s0 + $0x30] sm:$0xff]
  %v21 = vld [vmem:[%s0 + $0x38] sm:$0xff]
  %v22 = vld [vmem:[%s0 + $0x40] sm:$0xff]
  %v23 = vld [vmem:[%s0 + $0x48] sm:$0xff]
  %v24 = vld [vmem:[%s0 + $0x50] sm:$0xff]
  %v25 = vld [vmem:[%s0 + $0x58] sm:$0xff]
  %v26 = vld [vmem:[%s0 + $0x60] sm:$0xff]
  %v27 = vld [vmem:[%s0 + $0x68] sm:$0xff]
  %v28 = vld [vmem:[%s0 + $0x70] sm:$0xff]
  %v29 = vld [vmem:[%s0 + $0x78] sm:$0xff]
  %v30 = vld [vmem:[%s0 + $0x80] sm:$0xff]
  %v31 = vld [vmem:[%s0 + $0x88] sm:$0xff]
  %v32 = vld [vmem:[%s0 + $0x90] sm:$0xff]
  %v33 = vld [vmem:[%s0 + $0x98] sm:$0xff]
  %v34 = vld [vmem:[%s0 + $0xa0] sm:$0xff]
  %v35 = vld [vmem:[%s0 + $0xa8] sm:$0xff]
  %v36 = vld [vmem:[%s0 + $0xb0] sm:$0xff]
  %v37 = vld [vmem:[%s0 + $0xb8] sm:$0xff]
  %v38 = vld [vmem:[%s0 + $0xc0] sm:$0xff]
  %v39 = vld [vmem:[%s0 + $0xc8] sm:$0xff]
  %v40 = vld [vmem:[%s0 + $0xd0] sm:$0xff]
  %v41 = vld [vmem:[%s0 + $0xd8] sm:$0xff]
  %v42 = vld [vmem:[%s0 + $0xe0] sm:$0xff]
  %v43 = vld [vmem:[%s0 + $0xe8] sm:$0xff]
  %v44 = vld [vmem:[%s0 + $0xf0] sm:$0xff]
  %v45 = vld [vmem:[%s0 + $0xf8] sm:$0xff]
  %v46 = vld [vmem:[%s0 + $0x100] sm:$0xff]
  %v47 = vld [vmem:[%s0 + $0x108] sm:$0xff]
  %v48 = vld [vmem:[%s0 + $0x110] sm:$0xff]
  %v49 = vld [vmem:[%s0 + $0x118] sm:$0xff]
  %v50 = vld [vmem:[%s0 + $0x120] sm:$0xff]
  %v51 = vld [vmem:[%s0 + $0x128] sm:$0xff]
  %v52 = vld [vmem:[%s0 + $0x130] sm:$0xff]
  %v53 = vld [vmem:[%s0 + $0x138] sm:$0xff]
  %v54 = vld [vmem:[%s0 + $0x140] sm:$0x11]
  %v55 = vld [vmem:[%s0 + $0x148] sm:$0x11]
  %v56 = vld [vmem:[%s1] sm:$0xf]
  %v57 = vld [vmem:[%s1 + $0x4] sm:$0xf]
  %v58 = vld [vmem:[%s1 + $0x8] sm:$0xf]
  %v59 = vld [vmem:[%s1 + $0xc] sm:$0xf]
  %v60 = vld [vmem:[%s1 + $0x10] sm:$0xf]
  %v61 = vld [vmem:[%s1 + $0x14] sm:$0xf]
  %v62 = vld [vmem:[%s1 + $0x18] sm:$0xf]
  %v63 = vld [vmem:[%s1 + $0x1c] sm:$0xf]
  %v64 = vld [vmem:[%s1 + $0x20] sm:$0xf]
  %v65 = vld [vmem:[%s1 + $0x24] sm:$0xf]
  %v66 = vld [vmem:[%s1 + $0x28] sm:$0xf]
  %v67 = vld [vmem:[%s1 + $0x2c] sm:$0xf]
  %v68 = vld [vmem:[%s1 + $0x30] sm:$0xf]
  %v69 = vld [vmem:[%s1 + $0x34] sm:$0xf]
  %v70 = vld [vmem:[%s1 + $0x38] sm:$0xf]
  %v71 = vld [vmem:[%s1 + $0x3c] sm:$0xf]
  %v72 = vld [vmem:[%s1 + $0x40] sm:$0xf]
  %v73 = vld [vmem:[%s1 + $0x44] sm:$0xf]
  %v74 = vld [vmem:[%s1 + $0x48] sm:$0xf]
  %v75 = vld [vmem:[%s1 + $0x4c] sm:$0xf]
  %v76 = vld [vmem:[%s1 + $0x50] sm:$0xf]
  %v77 = vld [vmem:[%s1 + $0x54] sm:$0xf]
  %v78 = vld [vmem:[%s1 + $0x58] sm:$0xf]
  %v79 = vld [vmem:[%s1 + $0x5c] sm:$0xf]
  %v80 = vld [vmem:[%s1 + $0x60] sm:$0xf]
  %v81 = vld [vmem:[%s1 + $0x64] sm:$0xf]
  %v82 = vld [vmem:[%s1 + $0x68] sm:$0xf]
  %v83 = vld [vmem:[%s1 + $0x6c] sm:$0xf]
  %v84 = vld [vmem:[%s1 + $0x70] sm:$0xf]
  %v85 = vld [vmem:[%s1 + $0x74] sm:$0xf]
  %v86 = vld [vmem:[%s1 + $0x78] sm:$0xf]
  %v87 = vld [vmem:[%s1 + $0x7c] sm:$0xf]
  %v88 = vld [vmem:[%s1 + $0x80] sm:$0xf]
  %v89 = vld [vmem:[%s1 + $0x84] sm:$0xf]
  %v90 = vld [vmem:[%s1 + $0x88] sm:$0xf]
  %v91 = vld [vmem:[%s1 + $0x8c] sm:$0xf]
  %v92 = vld [vmem:[%s1 + $0x90] sm:$0xf]
  %v93 = vld [vmem:[%s1 + $0x94] sm:$0xf]
  %v94 = vld [vmem:[%s1 + $0x98] sm:$0xf]
  %v95 = vld [vmem:[%s1 + $0x9c] sm:$0xf]
  %v96 = vld [vmem:[%s1 + $0xa0] sm:$0xf]
  %v97 = vld [vmem:[%s1 + $0xa4] sm:$0xf]
  %v98 = vld [vmem:[%s1 + $0xa8] sm:$0xf]
  %v99 = vld [vmem:[%s1 + $0xac] sm:$0xf]
  %v100 = vld [vmem:[%s1 + $0xb0] sm:$0xf]
  %v101 = vld [vmem:[%s1 + $0xb4] sm:$0xf]
  %v102 = vld [vmem:[%s1 + $0xb8] sm:$0xf]
  %v103 = vld [vmem:[%s1 + $0xbc] sm:$0xf]
  %v104 = vld [vmem:[%s1 + $0xc0] sm:$0xf]
  %v105 = vld [vmem:[%s1 + $0xc4] sm:$0xf]
  %v106 = vld [vmem:[%s1 + $0xc8] sm:$0xf]
  %v107 = vld [vmem:[%s1 + $0xcc] sm:$0xf]
  %v108 = vld [vmem:[%s1 + $0xd0] sm:$0xf]
  %v109 = vld [vmem:[%s1 + $0xd4] sm:$0xf]
  %v110 = vld [vmem:[%s1 + $0xd8] sm:$0xf]
  %v111 = vld [vmem:[%s1 + $0xdc] sm:$0xf]
  %v112 = vld [vmem:[%s1 + $0xe0] sm:$0xf]
  %v113 = vld [vmem:[%s1 + $0xe4] sm:$0xf]
  %v114 = vld [vmem:[%s1 + $0xe8] sm:$0xf]
  %v115 = vld [vmem:[%s1 + $0xec] sm:$0xf]
  %v116 = vld [vmem:[%s1 + $0xf0] sm:$0xf]
  %v117 = vld [vmem:[%s1 + $0xf4] sm:$0xf]
  %v118 = vld [vmem:[%s1 + $0xf8] sm:$0xf]
  %v119 = vld [vmem:[%s1 + $0xfc] sm:$0xf]
  %v120 = vld [vmem:[%s2] sm:$0x1]
  %v122 = vperm.slane %v120, 0
  %v166 = vunpack.c.l.b16 %v14
  %v167 = vunpack.c.h.b16 %v14
  %v168 = vunpack.c.l.b16 %v15
  %v169 = vunpack.c.h.b16 %v15
  %v170 = vunpack.c.l.b16 %v16
  %v171 = vunpack.c.h.b16 %v16
  %v172 = vunpack.c.l.b16 %v17
  %v173 = vunpack.c.h.b16 %v17
  %v174 = vunpack.c.l.b16 %v18
  %v175 = vunpack.c.h.b16 %v18
  %v176 = vunpack.c.l.b16 %v19
  %v177 = vunpack.c.h.b16 %v19
  %v178 = vunpack.c.l.b16 %v20
  %v179 = vunpack.c.h.b16 %v20
  %v180 = vunpack.c.l.b16 %v21
  %v181 = vunpack.c.h.b16 %v21
  %v182 = vunpack.c.l.b16 %v22
  %v183 = vunpack.c.h.b16 %v22
  %v184 = vunpack.c.l.b16 %v23
  %v185 = vunpack.c.h.b16 %v23
  %v186 = vunpack.c.l.b16 %v24
  %v187 = vunpack.c.h.b16 %v24
  %v188 = vunpack.c.l.b16 %v25
  %v189 = vunpack.c.h.b16 %v25
  %v190 = vunpack.c.l.b16 %v26
  %v191 = vunpack.c.h.b16 %v26
  %v192 = vunpack.c.l.b16 %v27
  %v193 = vunpack.c.h.b16 %v27
  %v194 = vunpack.c.l.b16 %v28
  %v195 = vunpack.c.h.b16 %v28
  %v196 = vunpack.c.l.b16 %v29
  %v197 = vunpack.c.h.b16 %v29
  %v198 = vunpack.c.l.b16 %v30
  %v199 = vunpack.c.h.b16 %v30
  %v200 = vunpack.c.l.b16 %v31
  %v201 = vunpack.c.h.b16 %v31
  %v202 = vunpack.c.l.b16 %v32
  %v203 = vunpack.c.h.b16 %v32
  %v204 = vunpack.c.l.b16 %v33
  %v205 = vunpack.c.h.b16 %v33
  %v206 = vunpack.c.l.b16 %v34
  %v207 = vunpack.c.h.b16 %v34
  %v208 = vunpack.c.l.b16 %v35
  %v209 = vunpack.c.h.b16 %v35
  %v210 = vunpack.c.l.b16 %v36
  %v211 = vunpack.c.h.b16 %v36
  %v212 = vunpack.c.l.b16 %v37
  %v213 = vunpack.c.h.b16 %v37
  %v214 = vunpack.c.l.b16 %v38
  %v215 = vunpack.c.h.b16 %v38
  %v216 = vunpack.c.l.b16 %v39
  %v217 = vunpack.c.h.b16 %v39
  %v218 = vunpack.c.l.b16 %v40
  %v219 = vunpack.c.h.b16 %v40
  %v220 = vunpack.c.l.b16 %v41
  %v221 = vunpack.c.h.b16 %v41
  %v222 = vunpack.c.l.b16 %v42
  %v223 = vunpack.c.h.b16 %v42
  %v224 = vunpack.c.l.b16 %v43
  %v225 = vunpack.c.h.b16 %v43
  %v226 = vunpack.c.l.b16 %v44
  %v227 = vunpack.c.h.b16 %v44
  %v228 = vunpack.c.l.b16 %v45
  %v229 = vunpack.c.h.b16 %v45
  %v230 = vunpack.c.l.b16 %v46
  %v231 = vunpack.c.h.b16 %v46
  %v232 = vunpack.c.l.b16 %v47
  %v233 = vunpack.c.h.b16 %v47
  %v234 = vunpack.c.l.b16 %v48
  %v235 = vunpack.c.h.b16 %v48
  %v236 = vunpack.c.l.b16 %v49
  %v237 = vunpack.c.h.b16 %v49
  %v238 = vunpack.c.l.b16 %v50
  %v239 = vunpack.c.h.b16 %v50
  %v240 = vunpack.c.l.b16 %v51
  %v241 = vunpack.c.h.b16 %v51
  %v242 = vunpack.c.l.b16 %v52
  %v243 = vunpack.c.h.b16 %v52
  %v244 = vunpack.c.l.b16 %v53
  %v245 = vunpack.c.h.b16 %v53
  %v246 = vunpack.c.l.b16 %v54
  %v247 = vunpack.c.h.b16 %v54
  %v248 = vunpack.c.l.b16 %v55
  %v249 = vunpack.c.h.b16 %v55
  %v250 = vpack.c.b16 %v170, %v166
  %v251 = vpack.c.b16 %v171, %v167
  %v252 = vpack.c.b16 %v172, %v168
  %v253 = vpack.c.b16 %v173, %v169
  %v254 = vpack.c.b16 %v178, %v174
  %v255 = vpack.c.b16 %v179, %v175
  %v256 = vpack.c.b16 %v180, %v176
  %v257 = vpack.c.b16 %v181, %v177
  %v258 = vpack.c.b16 %v186, %v182
  %v259 = vpack.c.b16 %v187, %v183
  %v260 = vpack.c.b16 %v188, %v184
  %v261 = vpack.c.b16 %v189, %v185
  %v262 = vpack.c.b16 %v194, %v190
  %v263 = vpack.c.b16 %v195, %v191
  %v264 = vpack.c.b16 %v196, %v192
  %v265 = vpack.c.b16 %v197, %v193
  %v266 = vpack.c.b16 %v202, %v198
  %v267 = vpack.c.b16 %v203, %v199
  %v268 = vpack.c.b16 %v204, %v200
  %v269 = vpack.c.b16 %v205, %v201
  %v270 = vpack.c.b16 %v210, %v206
  %v271 = vpack.c.b16 %v211, %v207
  %v272 = vpack.c.b16 %v212, %v208
  %v273 = vpack.c.b16 %v213, %v209
  %v274 = vpack.c.b16 %v218, %v214
  %v275 = vpack.c.b16 %v219, %v215
  %v276 = vpack.c.b16 %v220, %v216
  %v277 = vpack.c.b16 %v221, %v217
  %v278 = vpack.c.b16 %v226, %v222
  %v279 = vpack.c.b16 %v227, %v223
  %v280 = vpack.c.b16 %v228, %v224
  %v281 = vpack.c.b16 %v229, %v225
  %v282 = vpack.c.b16 %v234, %v230
  %v283 = vpack.c.b16 %v235, %v231
  %v284 = vpack.c.b16 %v236, %v232
  %v285 = vpack.c.b16 %v237, %v233
  %v286 = vpack.c.b16 %v242, %v238
  %v287 = vpack.c.b16 %v243, %v239
  %v288 = vpack.c.b16 %v244, %v240
  %v289 = vpack.c.b16 %v245, %v241
  %v290 = vpack.c.b16 %v246, %v246
  %v291 = vpack.c.b16 %v247, %v247
  %v292 = vpack.c.b16 %v248, %v248
  %v293 = vpack.c.b16 %v249, %v249
  %v402 = vunpack.c.l.b16 %v56
  %v403 = vunpack.c.l.b16 %v57
  %v404 = vunpack.c.l.b16 %v58
  %v405 = vunpack.c.l.b16 %v59
  %v406 = vunpack.c.l.b16 %v60
  %v407 = vunpack.c.l.b16 %v61
  %v408 = vunpack.c.l.b16 %v62
  %v409 = vunpack.c.l.b16 %v63
  %v410 = vunpack.c.l.b16 %v64
  %v411 = vunpack.c.l.b16 %v65
  %v412 = vunpack.c.l.b16 %v66
  %v413 = vunpack.c.l.b16 %v67
  %v414 = vunpack.c.l.b16 %v68
  %v415 = vunpack.c.l.b16 %v69
  %v416 = vunpack.c.l.b16 %v70
  %v417 = vunpack.c.l.b16 %v71
  %v418 = vunpack.c.l.b16 %v72
  %v419 = vunpack.c.l.b16 %v73
  %v420 = vunpack.c.l.b16 %v74
  %v421 = vunpack.c.l.b16 %v75
  %v422 = vunpack.c.l.b16 %v76
  %v423 = vunpack.c.l.b16 %v77
  %v424 = vunpack.c.l.b16 %v78
  %v425 = vunpack.c.l.b16 %v79
  %v426 = vunpack.c.l.b16 %v80
  %v427 = vunpack.c.l.b16 %v81
  %v428 = vunpack.c.l.b16 %v82
  %v429 = vunpack.c.l.b16 %v83
  %v430 = vunpack.c.l.b16 %v84
  %v431 = vunpack.c.l.b16 %v85
  %v432 = vunpack.c.l.b16 %v86
  %v433 = vunpack.c.l.b16 %v87
  %v434 = vunpack.c.l.b16 %v88
  %v435 = vunpack.c.l.b16 %v89
  %v436 = vunpack.c.l.b16 %v90
  %v437 = vunpack.c.l.b16 %v91
  %v438 = vunpack.c.l.b16 %v92
  %v439 = vunpack.c.l.b16 %v93
  %v440 = vunpack.c.l.b16 %v94
  %v441 = vunpack.c.l.b16 %v95
  %v442 = vunpack.c.l.b16 %v96
  %v443 = vunpack.c.l.b16 %v97
  %v444 = vunpack.c.l.b16 %v98
  %v445 = vunpack.c.l.b16 %v99
  %v446 = vunpack.c.l.b16 %v100
  %v447 = vunpack.c.l.b16 %v101
  %v448 = vunpack.c.l.b16 %v102
  %v449 = vunpack.c.l.b16 %v103
  %v450 = vunpack.c.l.b16 %v104
  %v451 = vunpack.c.l.b16 %v105
  %v452 = vunpack.c.l.b16 %v106
  %v453 = vunpack.c.l.b16 %v107
  %v454 = vunpack.c.l.b16 %v108
  %v455 = vunpack.c.l.b16 %v109
  %v456 = vunpack.c.l.b16 %v110
  %v457 = vunpack.c.l.b16 %v111
  %v458 = vunpack.c.l.b16 %v112
  %v459 = vunpack.c.l.b16 %v113
  %v460 = vunpack.c.l.b16 %v114
  %v461 = vunpack.c.l.b16 %v115
  %v462 = vunpack.c.l.b16 %v116
  %v463 = vunpack.c.l.b16 %v117
  %v464 = vunpack.c.l.b16 %v118
  %v465 = vunpack.c.l.b16 %v119
  %v466 = vpack.c.b16 %v403, %v402
  %v467 = vpack.c.b16 %v405, %v404
  %v468 = vpack.c.b16 %v407, %v406
  %v469 = vpack.c.b16 %v409, %v408
  %v470 = vpack.c.b16 %v411, %v410
  %v471 = vpack.c.b16 %v413, %v412
  %v472 = vpack.c.b16 %v415, %v414
  %v473 = vpack.c.b16 %v417, %v416
  %v474 = vpack.c.b16 %v419, %v418
  %v475 = vpack.c.b16 %v421, %v420
  %v476 = vpack.c.b16 %v423, %v422
  %v477 = vpack.c.b16 %v425, %v424
  %v478 = vpack.c.b16 %v427, %v426
  %v479 = vpack.c.b16 %v429, %v428
  %v480 = vpack.c.b16 %v431, %v430
  %v481 = vpack.c.b16 %v433, %v432
  %v482 = vpack.c.b16 %v435, %v434
  %v483 = vpack.c.b16 %v437, %v436
  %v484 = vpack.c.b16 %v439, %v438
  %v485 = vpack.c.b16 %v441, %v440
  %v486 = vpack.c.b16 %v443, %v442
  %v487 = vpack.c.b16 %v445, %v444
  %v488 = vpack.c.b16 %v447, %v446
  %v489 = vpack.c.b16 %v449, %v448
  %v490 = vpack.c.b16 %v451, %v450
  %v491 = vpack.c.b16 %v453, %v452
  %v492 = vpack.c.b16 %v455, %v454
  %v493 = vpack.c.b16 %v457, %v456
  %v494 = vpack.c.b16 %v459, %v458
  %v495 = vpack.c.b16 %v461, %v460
  %v496 = vpack.c.b16 %v463, %v462
  %v497 = vpack.c.b16 %v465, %v464
  %530 = vmatpush.bf16.msra.mxu0 %v473
  %531 = vmatpush.bf16.msra.mxu0 %v472
  %532 = vmatpush.bf16.msra.mxu0 %v471
  %533 = vmatpush.bf16.msra.mxu0 %v470
  %534 = vmatpush.bf16.msra.mxu0 %v469
  %535 = vmatpush.bf16.msra.mxu0 %v468
  %536 = vmatpush.bf16.msra.mxu0 %v467
  %537 = vmatpush.bf16.msra.mxu0 %v466
  %538 = vmatmul.bf16.gmra.mxu0 %v250
  %v539 = vpop.f32.mrf.mxu0
  %v540 = vadd.f32 %v122, %v539
  %v541 = vpop.f32.mrf.mxu0
  %v542 = vadd.f32 %v122, %v541
  %543 = vmatmul.bf16.gmra.mxu0 %v254
  %v544 = vpop.f32.mrf.mxu0
  %v545 = vadd.f32 %v122, %v544
  %v546 = vpop.f32.mrf.mxu0
  %v547 = vadd.f32 %v122, %v546
  %548 = vmatmul.bf16.gmra.mxu0 %v258
  %v549 = vpop.f32.mrf.mxu0
  %v550 = vadd.f32 %v122, %v549
  %v551 = vpop.f32.mrf.mxu0
  %v552 = vadd.f32 %v122, %v551
  %553 = vmatmul.bf16.gmra.mxu0 %v262
  %v554 = vpop.f32.mrf.mxu0
  %v555 = vadd.f32 %v122, %v554
  %v556 = vpop.f32.mrf.mxu0
  %v557 = vadd.f32 %v122, %v556
  %558 = vmatmul.bf16.gmra.mxu0 %v266
  %v559 = vpop.f32.mrf.mxu0
  %v560 = vadd.f32 %v122, %v559
  %v561 = vpop.f32.mrf.mxu0
  %v562 = vadd.f32 %v122, %v561
  %563 = vmatmul.bf16.gmra.mxu0 %v270
  %v564 = vpop.f32.mrf.mxu0
  %v565 = vadd.f32 %v122, %v564
  %v566 = vpop.f32.mrf.mxu0
  %v567 = vadd.f32 %v122, %v566
  %568 = vmatmul.bf16.gmra.mxu0 %v274
  %v569 = vpop.f32.mrf.mxu0
  %v570 = vadd.f32 %v122, %v569
  %v571 = vpop.f32.mrf.mxu0
  %v572 = vadd.f32 %v122, %v571
  %573 = vmatmul.bf16.gmra.mxu0 %v278
  %v574 = vpop.f32.mrf.mxu0
  %v575 = vadd.f32 %v122, %v574
  %v576 = vpop.f32.mrf.mxu0
  %v577 = vadd.f32 %v122, %v576
  %578 = vmatmul.bf16.gmra.mxu0 %v282
  %v579 = vpop.f32.mrf.mxu0
  %v580 = vadd.f32 %v122, %v579
  %v581 = vpop.f32.mrf.mxu0
  %v582 = vadd.f32 %v122, %v581
  %583 = vmatmul.bf16.gmra.mxu0 %v286
  %v584 = vpop.f32.mrf.mxu0
  %v585 = vadd.f32 %v122, %v584
  %v586 = vpop.f32.mrf.mxu0
  %v587 = vadd.f32 %v122, %v586
  %588 = vmatmul.bf16.gmra.mxu0 %v290
  %v589 = vpop.f32.mrf.mxu0
  %v590 = vadd.f32 %v122, %v589
  %v591 = vpop.f32.mrf.mxu0
  %592 = vdwg.mxu0
  %593 = vmatpush.bf16.msra.mxu0 %v481
  %594 = vmatpush.bf16.msra.mxu0 %v480
  %595 = vmatpush.bf16.msra.mxu0 %v479
  %596 = vmatpush.bf16.msra.mxu0 %v478
  %597 = vmatpush.bf16.msra.mxu0 %v477
  %598 = vmatpush.bf16.msra.mxu0 %v476
  %599 = vmatpush.bf16.msra.mxu0 %v475
  %600 = vmatpush.bf16.msra.mxu0 %v474
  %601 = vmatmul.bf16.gmra.mxu0 %v251
  %v602 = vpop.f32.mrf.mxu0
  %v603 = vadd.f32 %v540, %v602
  %v604 = vpop.f32.mrf.mxu0
  %v605 = vadd.f32 %v542, %v604
  %606 = vmatmul.bf16.gmra.mxu0 %v255
  %v607 = vpop.f32.mrf.mxu0
  %v608 = vadd.f32 %v545, %v607
  %v609 = vpop.f32.mrf.mxu0
  %v610 = vadd.f32 %v547, %v609
  %611 = vmatmul.bf16.gmra.mxu0 %v259
  %v612 = vpop.f32.mrf.mxu0
  %v613 = vadd.f32 %v550, %v612
  %v614 = vpop.f32.mrf.mxu0
  %v615 = vadd.f32 %v552, %v614
  %616 = vmatmul.bf16.gmra.mxu0 %v263
  %v617 = vpop.f32.mrf.mxu0
  %v618 = vadd.f32 %v555, %v617
  %v619 = vpop.f32.mrf.mxu0
  %v620 = vadd.f32 %v557, %v619
  %621 = vmatmul.bf16.gmra.mxu0 %v267
  %v622 = vpop.f32.mrf.mxu0
  %v623 = vadd.f32 %v560, %v622
  %v624 = vpop.f32.mrf.mxu0
  %v625 = vadd.f32 %v562, %v624
  %626 = vmatmul.bf16.gmra.mxu0 %v271
  %v627 = vpop.f32.mrf.mxu0
  %v628 = vadd.f32 %v565, %v627
  %v629 = vpop.f32.mrf.mxu0
  %v630 = vadd.f32 %v567, %v629
  %631 = vmatmul.bf16.gmra.mxu0 %v275
  %v632 = vpop.f32.mrf.mxu0
  %v633 = vadd.f32 %v570, %v632
  %v634 = vpop.f32.mrf.mxu0
  %v635 = vadd.f32 %v572, %v634
  %636 = vmatmul.bf16.gmra.mxu0 %v279
  %v637 = vpop.f32.mrf.mxu0
  %v638 = vadd.f32 %v575, %v637
  %v639 = vpop.f32.mrf.mxu0
  %v640 = vadd.f32 %v577, %v639
  %641 = vmatmul.bf16.gmra.mxu0 %v283
  %v642 = vpop.f32.mrf.mxu0
  %v643 = vadd.f32 %v580, %v642
  %v644 = vpop.f32.mrf.mxu0
  %v645 = vadd.f32 %v582, %v644
  %646 = vmatmul.bf16.gmra.mxu0 %v287
  %v647 = vpop.f32.mrf.mxu0
  %v648 = vadd.f32 %v585, %v647
  %v649 = vpop.f32.mrf.mxu0
  %v650 = vadd.f32 %v587, %v649
  %651 = vmatmul.bf16.gmra.mxu0 %v291
  %v652 = vpop.f32.mrf.mxu0
  %v653 = vadd.f32 %v590, %v652
  %v654 = vpop.f32.mrf.mxu0
  %655 = vdwg.mxu0
  %656 = vmatpush.bf16.msra.mxu0 %v489
  %657 = vmatpush.bf16.msra.mxu0 %v488
  %658 = vmatpush.bf16.msra.mxu0 %v487
  %659 = vmatpush.bf16.msra.mxu0 %v486
  %660 = vmatpush.bf16.msra.mxu0 %v485
  %661 = vmatpush.bf16.msra.mxu0 %v484
  %662 = vmatpush.bf16.msra.mxu0 %v483
  %663 = vmatpush.bf16.msra.mxu0 %v482
  %664 = vmatmul.bf16.gmra.mxu0 %v252
  %v665 = vpop.f32.mrf.mxu0
  %v666 = vadd.f32 %v603, %v665
  %v667 = vpop.f32.mrf.mxu0
  %v668 = vadd.f32 %v605, %v667
  %669 = vmatmul.bf16.gmra.mxu0 %v256
  %v670 = vpop.f32.mrf.mxu0
  %v671 = vadd.f32 %v608, %v670
  %v672 = vpop.f32.mrf.mxu0
  %v673 = vadd.f32 %v610, %v672
  %674 = vmatmul.bf16.gmra.mxu0 %v260
  %v675 = vpop.f32.mrf.mxu0
  %v676 = vadd.f32 %v613, %v675
  %v677 = vpop.f32.mrf.mxu0
  %v678 = vadd.f32 %v615, %v677
  %679 = vmatmul.bf16.gmra.mxu0 %v264
  %v680 = vpop.f32.mrf.mxu0
  %v681 = vadd.f32 %v618, %v680
  %v682 = vpop.f32.mrf.mxu0
  %v683 = vadd.f32 %v620, %v682
  %684 = vmatmul.bf16.gmra.mxu0 %v268
  %v685 = vpop.f32.mrf.mxu0
  %v686 = vadd.f32 %v623, %v685
  %v687 = vpop.f32.mrf.mxu0
  %v688 = vadd.f32 %v625, %v687
  %689 = vmatmul.bf16.gmra.mxu0 %v272
  %v690 = vpop.f32.mrf.mxu0
  %v691 = vadd.f32 %v628, %v690
  %v692 = vpop.f32.mrf.mxu0
  %v693 = vadd.f32 %v630, %v692
  %694 = vmatmul.bf16.gmra.mxu0 %v276
  %v695 = vpop.f32.mrf.mxu0
  %v696 = vadd.f32 %v633, %v695
  %v697 = vpop.f32.mrf.mxu0
  %v698 = vadd.f32 %v635, %v697
  %699 = vmatmul.bf16.gmra.mxu0 %v280
  %v700 = vpop.f32.mrf.mxu0
  %v701 = vadd.f32 %v638, %v700
  %v702 = vpop.f32.mrf.mxu0
  %v703 = vadd.f32 %v640, %v702
  %704 = vmatmul.bf16.gmra.mxu0 %v284
  %v705 = vpop.f32.mrf.mxu0
  %v706 = vadd.f32 %v643, %v705
  %v707 = vpop.f32.mrf.mxu0
  %v708 = vadd.f32 %v645, %v707
  %709 = vmatmul.bf16.gmra.mxu0 %v288
  %v710 = vpop.f32.mrf.mxu0
  %v711 = vadd.f32 %v648, %v710
  %v712 = vpop.f32.mrf.mxu0
  %v713 = vadd.f32 %v650, %v712
  %714 = vmatmul.bf16.gmra.mxu0 %v292
  %v715 = vpop.f32.mrf.mxu0
  %v716 = vadd.f32 %v653, %v715
  %v717 = vpop.f32.mrf.mxu0
  %718 = vdwg.mxu0
  %719 = vmatpush.bf16.msra.mxu0 %v497
  %720 = vmatpush.bf16.msra.mxu0 %v496
  %721 = vmatpush.bf16.msra.mxu0 %v495
  %722 = vmatpush.bf16.msra.mxu0 %v494
  %723 = vmatpush.bf16.msra.mxu0 %v493
  %724 = vmatpush.bf16.msra.mxu0 %v492
  %725 = vmatpush.bf16.msra.mxu0 %v491
  %726 = vmatpush.bf16.msra.mxu0 %v490
  %727 = vmatmul.bf16.gmra.mxu0 %v253
  %v728 = vpop.f32.mrf.mxu0
  %v729 = vadd.f32 %v666, %v728
  %v730 = vpop.f32.mrf.mxu0
  %v731 = vadd.f32 %v668, %v730
  %732 = vmatmul.bf16.gmra.mxu0 %v257
  %v733 = vpop.f32.mrf.mxu0
  %v734 = vadd.f32 %v671, %v733
  %v735 = vpop.f32.mrf.mxu0
  %v736 = vadd.f32 %v673, %v735
  %737 = vmatmul.bf16.gmra.mxu0 %v261
  %v738 = vpop.f32.mrf.mxu0
  %v739 = vadd.f32 %v676, %v738
  %v740 = vpop.f32.mrf.mxu0
  %v741 = vadd.f32 %v678, %v740
  %742 = vmatmul.bf16.gmra.mxu0 %v265
  %v743 = vpop.f32.mrf.mxu0
  %v744 = vadd.f32 %v681, %v743
  %v745 = vpop.f32.mrf.mxu0
  %v746 = vadd.f32 %v683, %v745
  %747 = vmatmul.bf16.gmra.mxu0 %v269
  %v748 = vpop.f32.mrf.mxu0
  %v749 = vadd.f32 %v686, %v748
  %v750 = vpop.f32.mrf.mxu0
  %v751 = vadd.f32 %v688, %v750
  %752 = vmatmul.bf16.gmra.mxu0 %v273
  %v753 = vpop.f32.mrf.mxu0
  %v754 = vadd.f32 %v691, %v753
  %v755 = vpop.f32.mrf.mxu0
  %v756 = vadd.f32 %v693, %v755
  %757 = vmatmul.bf16.gmra.mxu0 %v277
  %v758 = vpop.f32.mrf.mxu0
  %v759 = vadd.f32 %v696, %v758
  %v760 = vpop.f32.mrf.mxu0
  %v761 = vadd.f32 %v698, %v760
  %762 = vmatmul.bf16.gmra.mxu0 %v281
  %v763 = vpop.f32.mrf.mxu0
  %v764 = vadd.f32 %v701, %v763
  %v765 = vpop.f32.mrf.mxu0
  %v766 = vadd.f32 %v703, %v765
  %767 = vmatmul.bf16.gmra.mxu0 %v285
  %v768 = vpop.f32.mrf.mxu0
  %v769 = vadd.f32 %v706, %v768
  %v770 = vpop.f32.mrf.mxu0
  %v771 = vadd.f32 %v708, %v770
  %772 = vmatmul.bf16.gmra.mxu0 %v289
  %v773 = vpop.f32.mrf.mxu0
  %v774 = vadd.f32 %v711, %v773
  %v775 = vpop.f32.mrf.mxu0
  %v776 = vadd.f32 %v713, %v775
  %777 = vmatmul.bf16.gmra.mxu0 %v293
  %v778 = vpop.f32.mrf.mxu0
  %v779 = vadd.f32 %v716, %v778
  %v780 = vpop.f32.mrf.mxu0
  %781 = vdwg.mxu0
  %v782 = vmax.f32 %v729, 0.0
  %v783 = vmax.f32 %v731, 0.0
  %v784 = vmax.f32 %v734, 0.0
  %v785 = vmax.f32 %v736, 0.0
  %v786 = vmax.f32 %v739, 0.0
  %v787 = vmax.f32 %v741, 0.0
  %v788 = vmax.f32 %v744, 0.0
  %v789 = vmax.f32 %v746, 0.0
  %v790 = vmax.f32 %v749, 0.0
  %v791 = vmax.f32 %v751, 0.0
  %v792 = vmax.f32 %v754, 0.0
  %v793 = vmax.f32 %v756, 0.0
  %v794 = vmax.f32 %v759, 0.0
  %v795 = vmax.f32 %v761, 0.0
  %v796 = vmax.f32 %v764, 0.0
  %v797 = vmax.f32 %v766, 0.0
  %v798 = vmax.f32 %v769, 0.0
  %v799 = vmax.f32 %v771, 0.0
  %v800 = vmax.f32 %v774, 0.0
  %v801 = vmax.f32 %v776, 0.0
  %v802 = vmax.f32 %v779, 0.0
  %v803 = vpack.c.bf16 %v782, %v782
  %v804 = vpack.c.bf16 %v783, %v783
  %v805 = vpack.c.bf16 %v784, %v784
  %v806 = vpack.c.bf16 %v785, %v785
  %v807 = vpack.c.bf16 %v786, %v786
  %v808 = vpack.c.bf16 %v787, %v787
  %v809 = vpack.c.bf16 %v788, %v788
  %v810 = vpack.c.bf16 %v789, %v789
  %v811 = vpack.c.bf16 %v790, %v790
  %v812 = vpack.c.bf16 %v791, %v791
  %v813 = vpack.c.bf16 %v792, %v792
  %v814 = vpack.c.bf16 %v793, %v793
  %v815 = vpack.c.bf16 %v794, %v794
  %v816 = vpack.c.bf16 %v795, %v795
  %v817 = vpack.c.bf16 %v796, %v796
  %v818 = vpack.c.bf16 %v797, %v797
  %v819 = vpack.c.bf16 %v798, %v798
  %v820 = vpack.c.bf16 %v799, %v799
  %v821 = vpack.c.bf16 %v800, %v800
  %v822 = vpack.c.bf16 %v801, %v801
  %v823 = vpack.c.bf16 %v802, %v802
  %vm824 = vcmask 519168
  %825 = vst.msk [vmem:[%s3] sm:$0xf] %vm824, %v803
  %826 = vst.msk [vmem:[%s3 + $0x4] sm:$0xf] %vm824, %v804
  %827 = vst.msk [vmem:[%s3 + $0x8] sm:$0xf] %vm824, %v805
  %828 = vst.msk [vmem:[%s3 + $0xc] sm:$0xf] %vm824, %v806
  %829 = vst.msk [vmem:[%s3 + $0x10] sm:$0xf] %vm824, %v807
  %830 = vst.msk [vmem:[%s3 + $0x14] sm:$0xf] %vm824, %v808
  %831 = vst.msk [vmem:[%s3 + $0x18] sm:$0xf] %vm824, %v809
  %832 = vst.msk [vmem:[%s3 + $0x1c] sm:$0xf] %vm824, %v810
  %833 = vst.msk [vmem:[%s3 + $0x20] sm:$0xf] %vm824, %v811
  %834 = vst.msk [vmem:[%s3 + $0x24] sm:$0xf] %vm824, %v812
  %835 = vst.msk [vmem:[%s3 + $0x28] sm:$0xf] %vm824, %v813
  %836 = vst.msk [vmem:[%s3 + $0x2c] sm:$0xf] %vm824, %v814
  %837 = vst.msk [vmem:[%s3 + $0x30] sm:$0xf] %vm824, %v815
  %838 = vst.msk [vmem:[%s3 + $0x34] sm:$0xf] %vm824, %v816
  %839 = vst.msk [vmem:[%s3 + $0x38] sm:$0xf] %vm824, %v817
  %840 = vst.msk [vmem:[%s3 + $0x3c] sm:$0xf] %vm824, %v818
  %841 = vst.msk [vmem:[%s3 + $0x40] sm:$0xf] %vm824, %v819
  %842 = vst.msk [vmem:[%s3 + $0x44] sm:$0xf] %vm824, %v820
  %843 = vst.msk [vmem:[%s3 + $0x48] sm:$0xf] %vm824, %v821
  %844 = vst.msk [vmem:[%s3 + $0x4c] sm:$0xf] %vm824, %v822
  %vm845 = vcmask 516096
  %846 = vst.msk [vmem:[%s3 + $0x50] sm:$0x1] %vm845, %v823
  // Predicated region
  $region14: #{qnetwork_forward.4} parent=0 // pred_check
    _
  $region15: #{qnetwork_forward.4} parent=0 // pred_check_branch
    %848 = sbr.rel (0) target = $region17
  $region16: #{qnetwork_forward.4} parent=0 // pred_region
    _
  $region17: #{qnetwork_forward.4} parent=0 // pred_fallthru
    _
  // Predicated region
  $region18: #{qnetwork_forward.4} parent=0 // pred_check
    _
  $region19: #{qnetwork_forward.4} parent=0 // pred_check_branch
    %850 = sbr.rel (0) target = $region21
  $region20: #{qnetwork_forward.4} parent=0 // pred_region
    _
  $region21: #{qnetwork_forward.4} parent=0 // pred_fallthru
    _

// kernel: qnetwork_forward.5
$region0: #{qnetwork_forward.5}
  #allocation0 [shape = 'u32[]', space=smem, size = 0x4, offset = 0x4, fixed_abs, tag = 'smem constant byte address 0x4 - core index']
  #allocation1 [shape = 'u32[72,128]{1,0:T(1,128)}', space=vmem, size = 0x9000, scoped, tag = 'internal scratch']
  %s0 = inlined_call_operand.vmem [shape: bf16[98,576], index: 0, kind: input, shape index: {}]
  %s1 = inlined_call_operand.vmem [shape: bf16[576,64], index: 1, kind: input, shape index: {}]
  %s2 = inlined_call_operand.vmem [shape: f32[1,64], index: 2, kind: input, shape index: {}]
  %s3 = inlined_call_operand.vmem [shape: bf16[3136,512], index: 3, kind: input, shape index: {}]
  %s4 = inlined_call_operand.vmem [shape: f32[1,512], index: 4, kind: input, shape index: {}]
  %s5 = inlined_call_operand.vmem [shape: bf16[512,128], index: 5, kind: input, shape index: {}]
  %s6 = inlined_call_operand.vmem [shape: f32[1,128], index: 6, kind: input, shape index: {}]
  %s7 = inlined_call_operand.hbm [shape: f32[2,128], index: 7, kind: output, shape index: {}]
  %s8 = sld [smem:[#allocation0]]
  $region38: #{qnetwork_forward.5} parent=0
    _
  %s10 = ssub.s32 1, %s8
  %s11 = scalar_select 0, %s10, %s8
  $region1: #{qnetwork_forward.5} parent=0
    #allocation2 [shape = 'u8[1024]{0}', space=vmem, size = 0x400, scoped, tag = 'output window, operand 0, single buffered']
    #allocation3 [shape = 's32[1]{0}', space=sflag, size = 0x4, scoped, tag = 'scoped memory for qnetwork_forward.5']
    %12 = vsyncpa [#allocation3], 0
    // Predicated region
    $region2: #{qnetwork_forward.5} parent=1 // pred_check
      _
    $region3: #{qnetwork_forward.5} parent=1 // pred_check_branch
      %14 = sbr.rel (0) target = $region5
    $region4: #{qnetwork_forward.5} parent=1 // pred_region
      _
    $region5: #{qnetwork_forward.5} parent=1 // pred_fallthru
      _
    // Predicated region
    $region6: #{qnetwork_forward.5} parent=1 // pred_check
      _
    $region7: #{qnetwork_forward.5} parent=1 // pred_check_branch
      %16 = sbr.rel (0) target = $region9
    $region8: #{qnetwork_forward.5} parent=1 // pred_region
      _
    $region9: #{qnetwork_forward.5} parent=1 // pred_fallthru
      _
    // Predicated region
    $region10: #{qnetwork_forward.5} parent=1 // pred_check
      _
    $region11: #{qnetwork_forward.5} parent=1 // pred_check_branch
      %18 = sbr.rel (0) target = $region13
    $region12: #{qnetwork_forward.5} parent=1 // pred_region
      _
    $region13: #{qnetwork_forward.5} parent=1 // pred_fallthru
      _
    // Predicated region
    $region14: #{qnetwork_forward.5} parent=1 // pred_check
      _
    $region15: #{qnetwork_forward.5} parent=1 // pred_check_branch
      %20 = sbr.rel (0) target = $region17
    $region16: #{qnetwork_forward.5} parent=1 // pred_region
      _
    $region17: #{qnetwork_forward.5} parent=1 // pred_fallthru
      _
    // Predicated region
    $region18: #{qnetwork_forward.5} parent=1 // pred_check
      _
    $region19: #{qnetwork_forward.5} parent=1 // pred_check_branch
      %22 = sbr.rel (0) target = $region21
    $region20: #{qnetwork_forward.5} parent=1 // pred_region
      _
    $region21: #{qnetwork_forward.5} parent=1 // pred_fallthru
      _
    // Predicated region
    $region22: #{qnetwork_forward.5} parent=1 // pred_check
      _
    $region23: #{qnetwork_forward.5} parent=1 // pred_check_branch
      %24 = sbr.rel (0) target = $region25
    $region24: #{qnetwork_forward.5} parent=1 // pred_region
      _
    $region25: #{qnetwork_forward.5} parent=1 // pred_fallthru
      _
    // Predicated region
    $region26: #{qnetwork_forward.5} parent=1 // pred_check
      _
    $region27: #{qnetwork_forward.5} parent=1 // pred_check_branch
      %26 = sbr.rel (0) target = $region29
    $region28: #{qnetwork_forward.5} parent=1 // pred_region
      _
    $region29: #{qnetwork_forward.5} parent=1 // pred_fallthru
      _
    %v28 = vld [vmem:[%s0] sm:$0xff]
    %v29 = vld [vmem:[%s0 + $0x8] sm:$0xff]
    %v30 = vld [vmem:[%s0 + $0x10] sm:$0xf]
    %v31 = vld [vmem:[%s0 + $0x14] sm:$0xff]
    %v32 = vld [vmem:[%s0 + $0x1c] sm:$0xff]
    %v33 = vld [vmem:[%s0 + $0x24] sm:$0xf]
    %v34 = vld [vmem:[%s0 + $0x28] sm:$0xff]
    %v35 = vld [vmem:[%s0 + $0x30] sm:$0xff]
    %v36 = vld [vmem:[%s0 + $0x38] sm:$0xf]
    %v37 = vld [vmem:[%s0 + $0x3c] sm:$0xff]
    %v38 = vld [vmem:[%s0 + $0x44] sm:$0xff]
    %v39 = vld [vmem:[%s0 + $0x4c] sm:$0xf]
    %v40 = vld [vmem:[%s0 + $0x50] sm:$0xff]
    %v41 = vld [vmem:[%s0 + $0x58] sm:$0xff]
    %v42 = vld [vmem:[%s0 + $0x60] sm:$0xf]
    %v43 = vld [vmem:[%s0 + $0x64] sm:$0xff]
    %v44 = vld [vmem:[%s0 + $0x6c] sm:$0xff]
    %v45 = vld [vmem:[%s0 + $0x74] sm:$0xf]
    %v46 = vld [vmem:[%s0 + $0x78] sm:$0xff]
    %v47 = vld [vmem:[%s0 + $0x80] sm:$0xff]
    %v48 = vld [vmem:[%s0 + $0x88] sm:$0xf]
    %v49 = vld [vmem:[%s0 + $0x8c] sm:$0xff]
    %v50 = vld [vmem:[%s0 + $0x94] sm:$0xff]
    %v51 = vld [vmem:[%s0 + $0x9c] sm:$0xf]
    %v52 = vld [vmem:[%s0 + $0xa0] sm:$0xff]
    %v53 = vld [vmem:[%s0 + $0xa8] sm:$0xff]
    %v54 = vld [vmem:[%s0 + $0xb0] sm:$0xf]
    %v55 = vld [vmem:[%s0 + $0xb4] sm:$0xff]
    %v56 = vld [vmem:[%s0 + $0xbc] sm:$0xff]
    %v57 = vld [vmem:[%s0 + $0xc4] sm:$0xf]
    %v58 = vld [vmem:[%s0 + $0xc8] sm:$0xff]
    %v59 = vld [vmem:[%s0 + $0xd0] sm:$0xff]
    %v60 = vld [vmem:[%s0 + $0xd8] sm:$0xf]
    %v61 = vld [vmem:[%s0 + $0xdc] sm:$0xff]
    %v62 = vld [vmem:[%s0 + $0xe4] sm:$0xff]
    %v63 = vld [vmem:[%s0 + $0xec] sm:$0xf]
    %v64 = vld [vmem:[%s0 + $0xf0] sm:$0x11]
    %v65 = vld [vmem:[%s0 + $0xf8] sm:$0x11]
    %v66 = vld [vmem:[%s0 + $0x100] sm:$0x1]
    %v67 = vld [vmem:[%s1] sm:$0xf]
    %v68 = vld [vmem:[%s1 + $0x4] sm:$0xf]
    %v69 = vld [vmem:[%s1 + $0x8] sm:$0xf]
    %v70 = vld [vmem:[%s1 + $0xc] sm:$0xf]
    %v71 = vld [vmem:[%s1 + $0x10] sm:$0xf]
    %v72 = vld [vmem:[%s1 + $0x14] sm:$0xf]
    %v73 = vld [vmem:[%s1 + $0x18] sm:$0xf]
    %v74 = vld [vmem:[%s1 + $0x1c] sm:$0xf]
    %v75 = vld [vmem:[%s1 + $0x20] sm:$0xf]
    %v76 = vld [vmem:[%s1 + $0x24] sm:$0xf]
    %v77 = vld [vmem:[%s1 + $0x28] sm:$0xf]
    %v78 = vld [vmem:[%s1 + $0x2c] sm:$0xf]
    %v79 = vld [vmem:[%s1 + $0x30] sm:$0xf]
    %v80 = vld [vmem:[%s1 + $0x34] sm:$0xf]
    %v81 = vld [vmem:[%s1 + $0x38] sm:$0xf]
    %v82 = vld [vmem:[%s1 + $0x3c] sm:$0xf]
    %v83 = vld [vmem:[%s1 + $0x40] sm:$0xf]
    %v84 = vld [vmem:[%s1 + $0x44] sm:$0xf]
    %v85 = vld [vmem:[%s1 + $0x48] sm:$0xf]
    %v86 = vld [vmem:[%s1 + $0x4c] sm:$0xf]
    %v87 = vld [vmem:[%s1 + $0x50] sm:$0xf]
    %v88 = vld [vmem:[%s1 + $0x54] sm:$0xf]
    %v89 = vld [vmem:[%s1 + $0x58] sm:$0xf]
    %v90 = vld [vmem:[%s1 + $0x5c] sm:$0xf]
    %v91 = vld [vmem:[%s1 + $0x60] sm:$0xf]
    %v92 = vld [vmem:[%s1 + $0x64] sm:$0xf]
    %v93 = vld [vmem:[%s1 + $0x68] sm:$0xf]
    %v94 = vld [vmem:[%s1 + $0x6c] sm:$0xf]
    %v95 = vld [vmem:[%s1 + $0x70] sm:$0xf]
    %v96 = vld [vmem:[%s1 + $0x74] sm:$0xf]
    %v97 = vld [vmem:[%s1 + $0x78] sm:$0xf]
    %v98 = vld [vmem:[%s1 + $0x7c] sm:$0xf]
    %v99 = vld [vmem:[%s1 + $0x80] sm:$0xf]
    %v100 = vld [vmem:[%s1 + $0x84] sm:$0xf]
    %v101 = vld [vmem:[%s1 + $0x88] sm:$0xf]
    %v102 = vld [vmem:[%s1 + $0x8c] sm:$0xf]
    %v103 = vld [vmem:[%s1 + $0x90] sm:$0xf]
    %v104 = vld [vmem:[%s1 + $0x94] sm:$0xf]
    %v105 = vld [vmem:[%s1 + $0x98] sm:$0xf]
    %v106 = vld [vmem:[%s1 + $0x9c] sm:$0xf]
    %v107 = vld [vmem:[%s1 + $0xa0] sm:$0xf]
    %v108 = vld [vmem:[%s1 + $0xa4] sm:$0xf]
    %v109 = vld [vmem:[%s1 + $0xa8] sm:$0xf]
    %v110 = vld [vmem:[%s1 + $0xac] sm:$0xf]
    %v111 = vld [vmem:[%s1 + $0xb0] sm:$0xf]
    %v112 = vld [vmem:[%s1 + $0xb4] sm:$0xf]
    %v113 = vld [vmem:[%s1 + $0xb8] sm:$0xf]
    %v114 = vld [vmem:[%s1 + $0xbc] sm:$0xf]
    %v115 = vld [vmem:[%s1 + $0xc0] sm:$0xf]
    %v116 = vld [vmem:[%s1 + $0xc4] sm:$0xf]
    %v117 = vld [vmem:[%s1 + $0xc8] sm:$0xf]
    %v118 = vld [vmem:[%s1 + $0xcc] sm:$0xf]
    %v119 = vld [vmem:[%s1 + $0xd0] sm:$0xf]
    %v120 = vld [vmem:[%s1 + $0xd4] sm:$0xf]
    %v121 = vld [vmem:[%s1 + $0xd8] sm:$0xf]
    %v122 = vld [vmem:[%s1 + $0xdc] sm:$0xf]
    %v123 = vld [vmem:[%s1 + $0xe0] sm:$0xf]
    %v124 = vld [vmem:[%s1 + $0xe4] sm:$0xf]
    %v125 = vld [vmem:[%s1 + $0xe8] sm:$0xf]
    %v126 = vld [vmem:[%s1 + $0xec] sm:$0xf]
    %v127 = vld [vmem:[%s1 + $0xf0] sm:$0xf]
    %v128 = vld [vmem:[%s1 + $0xf4] sm:$0xf]
    %v129 = vld [vmem:[%s1 + $0xf8] sm:$0xf]
    %v130 = vld [vmem:[%s1 + $0xfc] sm:$0xf]
    %v131 = vld [vmem:[%s1 + $0x100] sm:$0xf]
    %v132 = vld [vmem:[%s1 + $0x104] sm:$0xf]
    %v133 = vld [vmem:[%s1 + $0x108] sm:$0xf]
    %v134 = vld [vmem:[%s1 + $0x10c] sm:$0xf]
    %v135 = vld [vmem:[%s1 + $0x110] sm:$0xf]
    %v136 = vld [vmem:[%s1 + $0x114] sm:$0xf]
    %v137 = vld [vmem:[%s1 + $0x118] sm:$0xf]
    %v138 = vld [vmem:[%s1 + $0x11c] sm:$0xf]
    %v139 = vld [vmem:[%s2] sm:$0x1]
    %v141 = vperm.slane %v139, 0
    %v182 = vunpack.c.l.b16 %v28
    %v183 = vunpack.c.h.b16 %v28
    %v184 = vunpack.c.l.b16 %v29
    %v185 = vunpack.c.h.b16 %v29
    %v186 = vunpack.c.l.b16 %v30
    %v187 = vunpack.c.l.b16 %v31
    %v188 = vunpack.c.h.b16 %v31
    %v189 = vunpack.c.l.b16 %v32
    %v190 = vunpack.c.h.b16 %v32
    %v191 = vunpack.c.l.b16 %v33
    %v192 = vunpack.c.l.b16 %v34
    %v193 = vunpack.c.h.b16 %v34
    %v194 = vunpack.c.l.b16 %v35
    %v195 = vunpack.c.h.b16 %v35
    %v196 = vunpack.c.l.b16 %v36
    %v197 = vunpack.c.l.b16 %v37
    %v198 = vunpack.c.h.b16 %v37
    %v199 = vunpack.c.l.b16 %v38
    %v200 = vunpack.c.h.b16 %v38
    %v201 = vunpack.c.l.b16 %v39
    %v202 = vunpack.c.l.b16 %v40
    %v203 = vunpack.c.h.b16 %v40
    %v204 = vunpack.c.l.b16 %v41
    %v205 = vunpack.c.h.b16 %v41
    %v206 = vunpack.c.l.b16 %v42
    %v207 = vunpack.c.l.b16 %v43
    %v208 = vunpack.c.h.b16 %v43
    %v209 = vunpack.c.l.b16 %v44
    %v210 = vunpack.c.h.b16 %v44
    %v211 = vunpack.c.l.b16 %v45
    %v212 = vunpack.c.l.b16 %v46
    %v213 = vunpack.c.h.b16 %v46
    %v214 = vunpack.c.l.b16 %v47
    %v215 = vunpack.c.h.b16 %v47
    %v216 = vunpack.c.l.b16 %v48
    %v217 = vunpack.c.l.b16 %v49
    %v218 = vunpack.c.h.b16 %v49
    %v219 = vunpack.c.l.b16 %v50
    %v220 = vunpack.c.h.b16 %v50
    %v221 = vunpack.c.l.b16 %v51
    %v222 = vunpack.c.l.b16 %v52
    %v223 = vunpack.c.h.b16 %v52
    %v224 = vunpack.c.l.b16 %v53
    %v225 = vunpack.c.h.b16 %v53
    %v226 = vunpack.c.l.b16 %v54
    %v227 = vunpack.c.l.b16 %v55
    %v228 = vunpack.c.h.b16 %v55
    %v229 = vunpack.c.l.b16 %v56
    %v230 = vunpack.c.h.b16 %v56
    %v231 = vunpack.c.l.b16 %v57
    %v232 = vunpack.c.l.b16 %v58
    %v233 = vunpack.c.h.b16 %v58
    %v234 = vunpack.c.l.b16 %v59
    %v235 = vunpack.c.h.b16 %v59
    %v236 = vunpack.c.l.b16 %v60
    %v237 = vunpack.c.l.b16 %v61
    %v238 = vunpack.c.h.b16 %v61
    %v239 = vunpack.c.l.b16 %v62
    %v240 = vunpack.c.h.b16 %v62
    %v241 = vunpack.c.l.b16 %v63
    %v242 = vunpack.c.l.b16 %v64
    %v243 = vunpack.c.h.b16 %v64
    %v244 = vunpack.c.l.b16 %v65
    %v245 = vunpack.c.h.b16 %v65
    %v246 = vunpack.c.l.b16 %v66
    %v247 = vpack.c.b16 %v187, %v182
    %v248 = vpack.c.b16 %v188, %v183
    %v249 = vpack.c.b16 %v189, %v184
    %v250 = vpack.c.b16 %v190, %v185
    %v251 = vpack.c.b16 %v191, %v186
    %v252 = vpack.c.b16 %v197, %v192
    %v253 = vpack.c.b16 %v198, %v193
    %v254 = vpack.c.b16 %v199, %v194
    %v255 = vpack.c.b16 %v200, %v195
    %v256 = vpack.c.b16 %v201, %v196
    %v257 = vpack.c.b16 %v207, %v202
    %v258 = vpack.c.b16 %v208, %v203
    %v259 = vpack.c.b16 %v209, %v204
    %v260 = vpack.c.b16 %v210, %v205
    %v261 = vpack.c.b16 %v211, %v206
    %v262 = vpack.c.b16 %v217, %v212
    %v263 = vpack.c.b16 %v218, %v213
    %v264 = vpack.c.b16 %v219, %v214
    %v265 = vpack.c.b16 %v220, %v215
    %v266 = vpack.c.b16 %v221, %v216
    %v267 = vpack.c.b16 %v227, %v222
    %v268 = vpack.c.b16 %v228, %v223
    %v269 = vpack.c.b16 %v229, %v224
    %v270 = vpack.c.b16 %v230, %v225
    %v271 = vpack.c.b16 %v231, %v226
    %v272 = vpack.c.b16 %v237, %v232
    %v273 = vpack.c.b16 %v238, %v233
    %v274 = vpack.c.b16 %v239, %v234
    %v275 = vpack.c.b16 %v240, %v235
    %v276 = vpack.c.b16 %v241, %v236
    %v277 = vpack.c.b16 %v242, %v242
    %v278 = vpack.c.b16 %v243, %v243
    %v279 = vpack.c.b16 %v244, %v244
    %v280 = vpack.c.b16 %v245, %v245
    %v281 = vpack.c.b16 %v246, %v246
    %v382 = vunpack.c.l.b16 %v67
    %v383 = vunpack.c.l.b16 %v68
    %v384 = vunpack.c.l.b16 %v69
    %v385 = vunpack.c.l.b16 %v70
    %v386 = vunpack.c.l.b16 %v71
    %v387 = vunpack.c.l.b16 %v72
    %v388 = vunpack.c.l.b16 %v73
    %v389 = vunpack.c.l.b16 %v74
    %v390 = vunpack.c.l.b16 %v75
    %v391 = vunpack.c.l.b16 %v76
    %v392 = vunpack.c.l.b16 %v77
    %v393 = vunpack.c.l.b16 %v78
    %v394 = vunpack.c.l.b16 %v79
    %v395 = vunpack.c.l.b16 %v80
    %v396 = vunpack.c.l.b16 %v81
    %v397 = vunpack.c.l.b16 %v82
    %v398 = vunpack.c.l.b16 %v83
    %v399 = vunpack.c.l.b16 %v84
    %v400 = vunpack.c.l.b16 %v85
    %v401 = vunpack.c.l.b16 %v86
    %v402 = vunpack.c.l.b16 %v87
    %v403 = vunpack.c.l.b16 %v88
    %v404 = vunpack.c.l.b16 %v89
    %v405 = vunpack.c.l.b16 %v90
    %v406 = vunpack.c.l.b16 %v91
    %v407 = vunpack.c.l.b16 %v92
    %v408 = vunpack.c.l.b16 %v93
    %v409 = vunpack.c.l.b16 %v94
    %v410 = vunpack.c.l.b16 %v95
    %v411 = vunpack.c.l.b16 %v96
    %v412 = vunpack.c.l.b16 %v97
    %v413 = vunpack.c.l.b16 %v98
    %v414 = vunpack.c.l.b16 %v99
    %v415 = vunpack.c.l.b16 %v100
    %v416 = vunpack.c.l.b16 %v101
    %v417 = vunpack.c.l.b16 %v102
    %v418 = vunpack.c.l.b16 %v103
    %v419 = vunpack.c.l.b16 %v104
    %v420 = vunpack.c.l.b16 %v105
    %v421 = vunpack.c.l.b16 %v106
    %v422 = vunpack.c.l.b16 %v107
    %v423 = vunpack.c.l.b16 %v108
    %v424 = vunpack.c.l.b16 %v109
    %v425 = vunpack.c.l.b16 %v110
    %v426 = vunpack.c.l.b16 %v111
    %v427 = vunpack.c.l.b16 %v112
    %v428 = vunpack.c.l.b16 %v113
    %v429 = vunpack.c.l.b16 %v114
    %v430 = vunpack.c.l.b16 %v115
    %v431 = vunpack.c.l.b16 %v116
    %v432 = vunpack.c.l.b16 %v117
    %v433 = vunpack.c.l.b16 %v118
    %v434 = vunpack.c.l.b16 %v119
    %v435 = vunpack.c.l.b16 %v120
    %v436 = vunpack.c.l.b16 %v121
    %v437 = vunpack.c.l.b16 %v122
    %v438 = vunpack.c.l.b16 %v123
    %v439 = vunpack.c.l.b16 %v124
    %v440 = vunpack.c.l.b16 %v125
    %v441 = vunpack.c.l.b16 %v126
    %v442 = vunpack.c.l.b16 %v127
    %v443 = vunpack.c.l.b16 %v128
    %v444 = vunpack.c.l.b16 %v129
    %v445 = vunpack.c.l.b16 %v130
    %v446 = vunpack.c.l.b16 %v131
    %v447 = vunpack.c.l.b16 %v132
    %v448 = vunpack.c.l.b16 %v133
    %v449 = vunpack.c.l.b16 %v134
    %v450 = vunpack.c.l.b16 %v135
    %v451 = vunpack.c.l.b16 %v136
    %v452 = vunpack.c.l.b16 %v137
    %v453 = vunpack.c.l.b16 %v138
    %v454 = vpack.c.b16 %v383, %v382
    %v455 = vpack.c.b16 %v385, %v384
    %v456 = vpack.c.b16 %v387, %v386
    %v457 = vpack.c.b16 %v389, %v388
    %v458 = vpack.c.b16 %v391, %v390
    %v459 = vpack.c.b16 %v393, %v392
    %v460 = vpack.c.b16 %v395, %v394
    %v461 = vpack.c.b16 %v397, %v396
    %v462 = vpack.c.b16 %v399, %v398
    %v463 = vpack.c.b16 %v401, %v400
    %v464 = vpack.c.b16 %v403, %v402
    %v465 = vpack.c.b16 %v405, %v404
    %v466 = vpack.c.b16 %v407, %v406
    %v467 = vpack.c.b16 %v409, %v408
    %v468 = vpack.c.b16 %v411, %v410
    %v469 = vpack.c.b16 %v413, %v412
    %v470 = vpack.c.b16 %v415, %v414
    %v471 = vpack.c.b16 %v417, %v416
    %v472 = vpack.c.b16 %v419, %v418
    %v473 = vpack.c.b16 %v421, %v420
    %v474 = vpack.c.b16 %v423, %v422
    %v475 = vpack.c.b16 %v425, %v424
    %v476 = vpack.c.b16 %v427, %v426
    %v477 = vpack.c.b16 %v429, %v428
    %v478 = vpack.c.b16 %v431, %v430
    %v479 = vpack.c.b16 %v433, %v432
    %v480 = vpack.c.b16 %v435, %v434
    %v481 = vpack.c.b16 %v437, %v436
    %v482 = vpack.c.b16 %v439, %v438
    %v483 = vpack.c.b16 %v441, %v440
    %v484 = vpack.c.b16 %v443, %v442
    %v485 = vpack.c.b16 %v445, %v444
    %v486 = vpack.c.b16 %v447, %v446
    %v487 = vpack.c.b16 %v449, %v448
    %v488 = vpack.c.b16 %v451, %v450
    %v489 = vpack.c.b16 %v453, %v452
    %vm526 = vcmask 523264
    %v528 = vsel %vm526, %v251, 0
    %v531 = vsel %vm526, %v256, 0
    %v534 = vsel %vm526, %v261, 0
    %v537 = vsel %vm526, %v266, 0
    %v540 = vsel %vm526, %v271, 0
    %v543 = vsel %vm526, %v276, 0
    %v546 = vsel %vm526, %v281, 0
    %548 = vmatpush.bf16.msra.mxu0 %v461
    %549 = vmatpush.bf16.msra.mxu0 %v460
    %550 = vmatpush.bf16.msra.mxu0 %v459
    %551 = vmatpush.bf16.msra.mxu0 %v458
    %552 = vmatpush.bf16.msra.mxu0 %v457
    %553 = vmatpush.bf16.msra.mxu0 %v456
    %554 = vmatpush.bf16.msra.mxu0 %v455
    %555 = vmatpush.bf16.msra.mxu0 %v454
    %556 = vmatmul.bf16.gmra.mxu0 %v247
    %v557 = vpop.f32.mrf.mxu0
    %v558 = vadd.f32 %v141, %v557
    %v559 = vpop.f32.mrf.mxu0
    %v560 = vadd.f32 %v141, %v559
    %561 = vmatmul.bf16.gmra.mxu0 %v252
    %v562 = vpop.f32.mrf.mxu0
    %v563 = vadd.f32 %v141, %v562
    %v564 = vpop.f32.mrf.mxu0
    %v565 = vadd.f32 %v141, %v564
    %566 = vmatmul.bf16.gmra.mxu0 %v257
    %v567 = vpop.f32.mrf.mxu0
    %v568 = vadd.f32 %v141, %v567
    %v569 = vpop.f32.mrf.mxu0
    %v570 = vadd.f32 %v141, %v569
    %571 = vmatmul.bf16.gmra.mxu0 %v262
    %v572 = vpop.f32.mrf.mxu0
    %v573 = vadd.f32 %v141, %v572
    %v574 = vpop.f32.mrf.mxu0
    %v575 = vadd.f32 %v141, %v574
    %576 = vmatmul.bf16.gmra.mxu0 %v267
    %v577 = vpop.f32.mrf.mxu0
    %v578 = vadd.f32 %v141, %v577
    %v579 = vpop.f32.mrf.mxu0
    %v580 = vadd.f32 %v141, %v579
    %581 = vmatmul.bf16.gmra.mxu0 %v272
    %v582 = vpop.f32.mrf.mxu0
    %v583 = vadd.f32 %v141, %v582
    %v584 = vpop.f32.mrf.mxu0
    %v585 = vadd.f32 %v141, %v584
    %586 = vmatmul.bf16.gmra.mxu0 %v277
    %v587 = vpop.f32.mrf.mxu0
    %v588 = vadd.f32 %v141, %v587
    %v589 = vpop.f32.mrf.mxu0
    %590 = vdwg.mxu0
    %591 = vmatpush.bf16.msra.mxu0 %v469
    %592 = vmatpush.bf16.msra.mxu0 %v468
    %593 = vmatpush.bf16.msra.mxu0 %v467
    %594 = vmatpush.bf16.msra.mxu0 %v466
    %595 = vmatpush.bf16.msra.mxu0 %v465
    %596 = vmatpush.bf16.msra.mxu0 %v464
    %597 = vmatpush.bf16.msra.mxu0 %v463
    %598 = vmatpush.bf16.msra.mxu0 %v462
    %599 = vmatmul.bf16.gmra.mxu0 %v248
    %v600 = vpop.f32.mrf.mxu0
    %v601 = vadd.f32 %v558, %v600
    %v602 = vpop.f32.mrf.mxu0
    %v603 = vadd.f32 %v560, %v602
    %604 = vmatmul.bf16.gmra.mxu0 %v253
    %v605 = vpop.f32.mrf.mxu0
    %v606 = vadd.f32 %v563, %v605
    %v607 = vpop.f32.mrf.mxu0
    %v608 = vadd.f32 %v565, %v607
    %609 = vmatmul.bf16.gmra.mxu0 %v258
    %v610 = vpop.f32.mrf.mxu0
    %v611 = vadd.f32 %v568, %v610
    %v612 = vpop.f32.mrf.mxu0
    %v613 = vadd.f32 %v570, %v612
    %614 = vmatmul.bf16.gmra.mxu0 %v263
    %v615 = vpop.f32.mrf.mxu0
    %v616 = vadd.f32 %v573, %v615
    %v617 = vpop.f32.mrf.mxu0
    %v618 = vadd.f32 %v575, %v617
    %619 = vmatmul.bf16.gmra.mxu0 %v268
    %v620 = vpop.f32.mrf.mxu0
    %v621 = vadd.f32 %v578, %v620
    %v622 = vpop.f32.mrf.mxu0
    %v623 = vadd.f32 %v580, %v622
    %624 = vmatmul.bf16.gmra.mxu0 %v273
    %v625 = vpop.f32.mrf.mxu0
    %v626 = vadd.f32 %v583, %v625
    %v627 = vpop.f32.mrf.mxu0
    %v628 = vadd.f32 %v585, %v627
    %629 = vmatmul.bf16.gmra.mxu0 %v278
    %v630 = vpop.f32.mrf.mxu0
    %v631 = vadd.f32 %v588, %v630
    %v632 = vpop.f32.mrf.mxu0
    %633 = vdwg.mxu0
    %634 = vmatpush.bf16.msra.mxu0 %v477
    %635 = vmatpush.bf16.msra.mxu0 %v476
    %636 = vmatpush.bf16.msra.mxu0 %v475
    %637 = vmatpush.bf16.msra.mxu0 %v474
    %638 = vmatpush.bf16.msra.mxu0 %v473
    %639 = vmatpush.bf16.msra.mxu0 %v472
    %640 = vmatpush.bf16.msra.mxu0 %v471
    %641 = vmatpush.bf16.msra.mxu0 %v470
    %642 = vmatmul.bf16.gmra.mxu0 %v249
    %v643 = vpop.f32.mrf.mxu0
    %v644 = vadd.f32 %v601, %v643
    %v645 = vpop.f32.mrf.mxu0
    %v646 = vadd.f32 %v603, %v645
    %647 = vmatmul.bf16.gmra.mxu0 %v254
    %v648 = vpop.f32.mrf.mxu0
    %v649 = vadd.f32 %v606, %v648
    %v650 = vpop.f32.mrf.mxu0
    %v651 = vadd.f32 %v608, %v650
    %652 = vmatmul.bf16.gmra.mxu0 %v259
    %v653 = vpop.f32.mrf.mxu0
    %v654 = vadd.f32 %v611, %v653
    %v655 = vpop.f32.mrf.mxu0
    %v656 = vadd.f32 %v613, %v655
    %657 = vmatmul.bf16.gmra.mxu0 %v264
    %v658 = vpop.f32.mrf.mxu0
    %v659 = vadd.f32 %v616, %v658
    %v660 = vpop.f32.mrf.mxu0
    %v661 = vadd.f32 %v618, %v660
    %662 = vmatmul.bf16.gmra.mxu0 %v269
    %v663 = vpop.f32.mrf.mxu0
    %v664 = vadd.f32 %v621, %v663
    %v665 = vpop.f32.mrf.mxu0
    %v666 = vadd.f32 %v623, %v665
    %667 = vmatmul.bf16.gmra.mxu0 %v274
    %v668 = vpop.f32.mrf.mxu0
    %v669 = vadd.f32 %v626, %v668
    %v670 = vpop.f32.mrf.mxu0
    %v671 = vadd.f32 %v628, %v670
    %672 = vmatmul.bf16.gmra.mxu0 %v279
    %v673 = vpop.f32.mrf.mxu0
    %v674 = vadd.f32 %v631, %v673
    %v675 = vpop.f32.mrf.mxu0
    %676 = vdwg.mxu0
    %677 = vmatpush.bf16.msra.mxu0 %v485
    %678 = vmatpush.bf16.msra.mxu0 %v484
    %679 = vmatpush.bf16.msra.mxu0 %v483
    %680 = vmatpush.bf16.msra.mxu0 %v482
    %681 = vmatpush.bf16.msra.mxu0 %v481
    %682 = vmatpush.bf16.msra.mxu0 %v480
    %683 = vmatpush.bf16.msra.mxu0 %v479
    %684 = vmatpush.bf16.msra.mxu0 %v478
    %685 = vmatmul.bf16.gmra.mxu0 %v250
    %v686 = vpop.f32.mrf.mxu0
    %v687 = vadd.f32 %v644, %v686
    %v688 = vpop.f32.mrf.mxu0
    %v689 = vadd.f32 %v646, %v688
    %690 = vmatmul.bf16.gmra.mxu0 %v255
    %v691 = vpop.f32.mrf.mxu0
    %v692 = vadd.f32 %v649, %v691
    %v693 = vpop.f32.mrf.mxu0
    %v694 = vadd.f32 %v651, %v693
    %695 = vmatmul.bf16.gmra.mxu0 %v260
    %v696 = vpop.f32.mrf.mxu0
    %v697 = vadd.f32 %v654, %v696
    %v698 = vpop.f32.mrf.mxu0
    %v699 = vadd.f32 %v656, %v698
    %700 = vmatmul.bf16.gmra.mxu0 %v265
    %v701 = vpop.f32.mrf.mxu0
    %v702 = vadd.f32 %v659, %v701
    %v703 = vpop.f32.mrf.mxu0
    %v704 = vadd.f32 %v661, %v703
    %705 = vmatmul.bf16.gmra.mxu0 %v270
    %v706 = vpop.f32.mrf.mxu0
    %v707 = vadd.f32 %v664, %v706
    %v708 = vpop.f32.mrf.mxu0
    %v709 = vadd.f32 %v666, %v708
    %710 = vmatmul.bf16.gmra.mxu0 %v275
    %v711 = vpop.f32.mrf.mxu0
    %v712 = vadd.f32 %v669, %v711
    %v713 = vpop.f32.mrf.mxu0
    %v714 = vadd.f32 %v671, %v713
    %715 = vmatmul.bf16.gmra.mxu0 %v280
    %v716 = vpop.f32.mrf.mxu0
    %v717 = vadd.f32 %v674, %v716
    %v718 = vpop.f32.mrf.mxu0
    %719 = vdwg.mxu0
    %720 = vmatpush.bf16.msra.mxu0 0
    %721 = vmatpush.bf16.msra.mxu0 0
    %722 = vmatpush.bf16.msra.mxu0 0
    %723 = vmatpush.bf16.msra.mxu0 0
    %724 = vmatpush.bf16.msra.mxu0 %v489
    %725 = vmatpush.bf16.msra.mxu0 %v488
    %726 = vmatpush.bf16.msra.mxu0 %v487
    %727 = vmatpush.bf16.msra.mxu0 %v486
    %728 = vmatmul.bf16.gmra.mxu0 %v528
    %v729 = vpop.f32.mrf.mxu0
    %v730 = vadd.f32 %v687, %v729
    %v731 = vpop.f32.mrf.mxu0
    %v732 = vadd.f32 %v689, %v731
    %733 = vmatmul.bf16.gmra.mxu0 %v531
    %v734 = vpop.f32.mrf.mxu0
    %v735 = vadd.f32 %v692, %v734
    %v736 = vpop.f32.mrf.mxu0
    %v737 = vadd.f32 %v694, %v736
    %738 = vmatmul.bf16.gmra.mxu0 %v534
    %v739 = vpop.f32.mrf.mxu0
    %v740 = vadd.f32 %v697, %v739
    %v741 = vpop.f32.mrf.mxu0
    %v742 = vadd.f32 %v699, %v741
    %743 = vmatmul.bf16.gmra.mxu0 %v537
    %v744 = vpop.f32.mrf.mxu0
    %v745 = vadd.f32 %v702, %v744
    %v746 = vpop.f32.mrf.mxu0
    %v747 = vadd.f32 %v704, %v746
    %748 = vmatmul.bf16.gmra.mxu0 %v540
    %v749 = vpop.f32.mrf.mxu0
    %v750 = vadd.f32 %v707, %v749
    %v751 = vpop.f32.mrf.mxu0
    %v752 = vadd.f32 %v709, %v751
    %753 = vmatmul.bf16.gmra.mxu0 %v543
    %v754 = vpop.f32.mrf.mxu0
    %v755 = vadd.f32 %v712, %v754
    %v756 = vpop.f32.mrf.mxu0
    %v757 = vadd.f32 %v714, %v756
    %758 = vmatmul.bf16.gmra.mxu0 %v546
    %v759 = vpop.f32.mrf.mxu0
    %v760 = vadd.f32 %v717, %v759
    %v761 = vpop.f32.mrf.mxu0
    %762 = vdwg.mxu0
    %v763 = vmax.f32 %v730, 0.0
    %v764 = vmax.f32 %v732, 0.0
    %v765 = vmax.f32 %v735, 0.0
    %v766 = vmax.f32 %v737, 0.0
    %v767 = vmax.f32 %v740, 0.0
    %v768 = vmax.f32 %v742, 0.0
    %v769 = vmax.f32 %v745, 0.0
    %v770 = vmax.f32 %v747, 0.0
    %v771 = vmax.f32 %v750, 0.0
    %v772 = vmax.f32 %v752, 0.0
    %v773 = vmax.f32 %v755, 0.0
    %v774 = vmax.f32 %v757, 0.0
    %v775 = vmax.f32 %v760, 0.0
    %v776 = vpack.c.bf16 %v763, %v763
    %v777 = vpack.c.bf16 %v764, %v764
    %v778 = vpack.c.bf16 %v765, %v765
    %v779 = vpack.c.bf16 %v766, %v766
    %v780 = vpack.c.bf16 %v767, %v767
    %v781 = vpack.c.bf16 %v768, %v768
    %v782 = vpack.c.bf16 %v769, %v769
    %v783 = vpack.c.bf16 %v770, %v770
    %v784 = vpack.c.bf16 %v771, %v771
    %v785 = vpack.c.bf16 %v772, %v772
    %v786 = vpack.c.bf16 %v773, %v773
    %v787 = vpack.c.bf16 %v774, %v774
    %v788 = vpack.c.bf16 %v775, %v775
    %v789 = vld [vmem:[%s3] sm:$0xff]
    %v790 = vld [vmem:[%s3 + $0x8] sm:$0xff]
    %v791 = vld [vmem:[%s3 + $0x10] sm:$0xff]
    %v792 = vld [vmem:[%s3 + $0x18] sm:$0xff]
    %v793 = vld [vmem:[%s3 + $0x20] sm:$0xff]
    %v794 = vld [vmem:[%s3 + $0x28] sm:$0xff]
    %v795 = vld [vmem:[%s3 + $0x30] sm:$0xff]
    %v796 = vld [vmem:[%s3 + $0x38] sm:$0xff]
    %v797 = vld [vmem:[%s3 + $0x40] sm:$0xff]
    %v798 = vld [vmem:[%s3 + $0x48] sm:$0xff]
    %v799 = vld [vmem:[%s3 + $0x50] sm:$0xff]
    %v800 = vld [vmem:[%s3 + $0x58] sm:$0xff]
    %v801 = vld [vmem:[%s3 + $0x60] sm:$0xff]
    %v802 = vld [vmem:[%s3 + $0x68] sm:$0xff]
    %v803 = vld [vmem:[%s3 + $0x70] sm:$0xff]
    %v804 = vld [vmem:[%s3 + $0x78] sm:$0xff]
    %v805 = vld [vmem:[%s3 + $0x80] sm:$0xff]
    %v806 = vld [vmem:[%s3 + $0x88] sm:$0xff]
    %v807 = vld [vmem:[%s3 + $0x90] sm:$0xff]
    %v808 = vld [vmem:[%s3 + $0x98] sm:$0xff]
    %v809 = vld [vmem:[%s3 + $0xa0] sm:$0xff]
    %v810 = vld [vmem:[%s3 + $0xa8] sm:$0xff]
    %v811 = vld [vmem:[%s3 + $0xb0] sm:$0xff]
    %v812 = vld [vmem:[%s3 + $0xb8] sm:$0xff]
    %v813 = vld [vmem:[%s3 + $0xc0] sm:$0xff]
    %v814 = vld [vmem:[%s3 + $0xc8] sm:$0xff]
    %v815 = vld [vmem:[%s3 + $0xd0] sm:$0xff]
    %v816 = vld [vmem:[%s3 + $0xd8] sm:$0xff]
    %v817 = vld [vmem:[%s3 + $0xe0] sm:$0xff]
    %v818 = vld [vmem:[%s3 + $0xe8] sm:$0xff]
    %v819 = vld [vmem:[%s3 + $0xf0] sm:$0xff]
    %v820 = vld [vmem:[%s3 + $0xf8] sm:$0xff]
    %v822 = vunpack.c.l.b16 %v776
    %v823 = vpack.c.b16 %v822, %v822
    %v824 = vrot.slane %v823, 1
    %v841 = vunpack.c.l.b16 %v805
    %v842 = vunpack.c.h.b16 %v805
    %v843 = vunpack.c.l.b16 %v806
    %v844 = vunpack.c.h.b16 %v806
    %v845 = vunpack.c.l.b16 %v807
    %v846 = vunpack.c.h.b16 %v807
    %v847 = vunpack.c.l.b16 %v808
    %v848 = vunpack.c.h.b16 %v808
    %v849 = vunpack.c.l.b16 %v809
    %v850 = vunpack.c.h.b16 %v809
    %v851 = vunpack.c.l.b16 %v810
    %v852 = vunpack.c.h.b16 %v810
    %v853 = vunpack.c.l.b16 %v811
    %v854 = vunpack.c.h.b16 %v811
    %v855 = vunpack.c.l.b16 %v812
    %v856 = vunpack.c.h.b16 %v812
    %v857 = vunpack.c.l.b16 %v813
    %v858 = vunpack.c.h.b16 %v813
    %v859 = vunpack.c.l.b16 %v814
    %v860 = vunpack.c.h.b16 %v814
    %v861 = vunpack.c.l.b16 %v815
    %v862 = vunpack.c.h.b16 %v815
    %v863 = vunpack.c.l.b16 %v816
    %v864 = vunpack.c.h.b16 %v816
    %v865 = vunpack.c.l.b16 %v817
    %v866 = vunpack.c.h.b16 %v817
    %v867 = vunpack.c.l.b16 %v818
    %v868 = vunpack.c.h.b16 %v818
    %v869 = vunpack.c.l.b16 %v819
    %v870 = vunpack.c.h.b16 %v819
    %v871 = vunpack.c.l.b16 %v820
    %v872 = vunpack.c.h.b16 %v820
    %v873 = vpack.c.b16 %v845, %v841
    %v874 = vpack.c.b16 %v846, %v842
    %v875 = vpack.c.b16 %v847, %v843
    %v876 = vpack.c.b16 %v848, %v844
    %v877 = vpack.c.b16 %v853, %v849
    %v878 = vpack.c.b16 %v854, %v850
    %v879 = vpack.c.b16 %v855, %v851
    %v880 = vpack.c.b16 %v856, %v852
    %v881 = vpack.c.b16 %v861, %v857
    %v882 = vpack.c.b16 %v862, %v858
    %v883 = vpack.c.b16 %v863, %v859
    %v884 = vpack.c.b16 %v864, %v860
    %v885 = vpack.c.b16 %v869, %v865
    %v886 = vpack.c.b16 %v870, %v866
    %v887 = vpack.c.b16 %v871, %v867
    %v888 = vpack.c.b16 %v872, %v868
    %v906 = vsel %vm526, %v824, 0
    %908 = vmatpush.bf16.msra.mxu0 0
    %909 = vmatpush.bf16.msra.mxu0 0
    %910 = vmatpush.bf16.msra.mxu0 0
    %911 = vmatpush.bf16.msra.mxu0 0
    %912 = vmatpush.bf16.msra.mxu0 %v885
    %913 = vmatpush.bf16.msra.mxu0 %v881
    %914 = vmatpush.bf16.msra.mxu0 %v877
    %915 = vmatpush.bf16.msra.mxu0 %v873
    %916 = vmatmul.bf16.gmra.mxu0 %v906
    %v917 = vpop.f32.mrf.mxu0
    %v918 = vadd.f32 0.0, %v917
    %v919 = vpop.f32.mrf.mxu0
    %920 = vdwg.mxu0
    %921 = vmatpush.bf16.msra.mxu0 0
    %922 = vmatpush.bf16.msra.mxu0 0
    %923 = vmatpush.bf16.msra.mxu0 0
    %924 = vmatpush.bf16.msra.mxu0 0
    %925 = vmatpush.bf16.msra.mxu0 %v886
    %926 = vmatpush.bf16.msra.mxu0 %v882
    %927 = vmatpush.bf16.msra.mxu0 %v878
    %928 = vmatpush.bf16.msra.mxu0 %v874
    %929 = vmatmul.bf16.gmra.mxu0 %v906
    %v930 = vpop.f32.mrf.mxu0
    %v931 = vadd.f32 0.0, %v930
    %v932 = vpop.f32.mrf.mxu0
    %933 = vdwg.mxu0
    %934 = vmatpush.bf16.msra.mxu0 0
    %935 = vmatpush.bf16.msra.mxu0 0
    %936 = vmatpush.bf16.msra.mxu0 0
    %937 = vmatpush.bf16.msra.mxu0 0
    %938 = vmatpush.bf16.msra.mxu0 %v887
    %939 = vmatpush.bf16.msra.mxu0 %v883
    %940 = vmatpush.bf16.msra.mxu0 %v879
    %941 = vmatpush.bf16.msra.mxu0 %v875
    %942 = vmatmul.bf16.gmra.mxu0 %v906
    %v943 = vpop.f32.mrf.mxu0
    %v944 = vadd.f32 0.0, %v943
    %v945 = vpop.f32.mrf.mxu0
    %946 = vdwg.mxu0
    %947 = vmatpush.bf16.msra.mxu0 0
    %948 = vmatpush.bf16.msra.mxu0 0
    %949 = vmatpush.bf16.msra.mxu0 0
    %950 = vmatpush.bf16.msra.mxu0 0
    %951 = vmatpush.bf16.msra.mxu0 %v888
    %952 = vmatpush.bf16.msra.mxu0 %v884
    %953 = vmatpush.bf16.msra.mxu0 %v880
    %954 = vmatpush.bf16.msra.mxu0 %v876
    %955 = vmatmul.bf16.gmra.mxu0 %v906
    %v956 = vpop.f32.mrf.mxu0
    %v957 = vadd.f32 0.0, %v956
    %v958 = vpop.f32.mrf.mxu0
    %959 = vdwg.mxu0
    %v976 = vunpack.c.l.b16 %v789
    %v977 = vunpack.c.h.b16 %v789
    %v978 = vunpack.c.l.b16 %v790
    %v979 = vunpack.c.h.b16 %v790
    %v980 = vunpack.c.l.b16 %v791
    %v981 = vunpack.c.h.b16 %v791
    %v982 = vunpack.c.l.b16 %v792
    %v983 = vunpack.c.h.b16 %v792
    %v984 = vunpack.c.l.b16 %v793
    %v985 = vunpack.c.h.b16 %v793
    %v986 = vunpack.c.l.b16 %v794
    %v987 = vunpack.c.h.b16 %v794
    %v988 = vunpack.c.l.b16 %v795
    %v989 = vunpack.c.h.b16 %v795
    %v990 = vunpack.c.l.b16 %v796
    %v991 = vunpack.c.h.b16 %v796
    %v992 = vunpack.c.l.b16 %v797
    %v993 = vunpack.c.h.b16 %v797
    %v994 = vunpack.c.l.b16 %v798
    %v995 = vunpack.c.h.b16 %v798
    %v996 = vunpack.c.l.b16 %v799
    %v997 = vunpack.c.h.b16 %v799
    %v998 = vunpack.c.l.b16 %v800
    %v999 = vunpack.c.h.b16 %v800
    %v1000 = vunpack.c.l.b16 %v801
    %v1001 = vunpack.c.h.b16 %v801
    %v1002 = vunpack.c.l.b16 %v802
    %v1003 = vunpack.c.h.b16 %v802
    %v1004 = vunpack.c.l.b16 %v803
    %v1005 = vunpack.c.h.b16 %v803
    %v1006 = vunpack.c.l.b16 %v804
    %v1007 = vunpack.c.h.b16 %v804
    %v1008 = vpack.c.b16 %v980, %v976
    %v1009 = vpack.c.b16 %v981, %v977
    %v1010 = vpack.c.b16 %v982, %v978
    %v1011 = vpack.c.b16 %v983, %v979
    %v1012 = vpack.c.b16 %v988, %v984
    %v1013 = vpack.c.b16 %v989, %v985
    %v1014 = vpack.c.b16 %v990, %v986
    %v1015 = vpack.c.b16 %v991, %v987
    %v1016 = vpack.c.b16 %v996, %v992
    %v1017 = vpack.c.b16 %v997, %v993
    %v1018 = vpack.c.b16 %v998, %v994
    %v1019 = vpack.c.b16 %v999, %v995
    %v1020 = vpack.c.b16 %v1004, %v1000
    %v1021 = vpack.c.b16 %v1005, %v1001
    %v1022 = vpack.c.b16 %v1006, %v1002
    %v1023 = vpack.c.b16 %v1007, %v1003
    %v1041 = vsel %vm526, %v776, 0
    %1043 = vmatpush.bf16.msra.mxu0 0
    %1044 = vmatpush.bf16.msra.mxu0 0
    %1045 = vmatpush.bf16.msra.mxu0 0
    %1046 = vmatpush.bf16.msra.mxu0 0
    %1047 = vmatpush.bf16.msra.mxu0 %v1020
    %1048 = vmatpush.bf16.msra.mxu0 %v1016
    %1049 = vmatpush.bf16.msra.mxu0 %v1012
    %1050 = vmatpush.bf16.msra.mxu0 %v1008
    %1051 = vmatmul.bf16.gmra.mxu0 %v1041
    %v1052 = vpop.f32.mrf.mxu0
    %v1053 = vadd.f32 %v918, %v1052
    %v1054 = vpop.f32.mrf.mxu0
    %1055 = vdwg.mxu0
    %1056 = vmatpush.bf16.msra.mxu0 0
    %1057 = vmatpush.bf16.msra.mxu0 0
    %1058 = vmatpush.bf16.msra.mxu0 0
    %1059 = vmatpush.bf16.msra.mxu0 0
    %1060 = vmatpush.bf16.msra.mxu0 %v1021
    %1061 = vmatpush.bf16.msra.mxu0 %v1017
    %1062 = vmatpush.bf16.msra.mxu0 %v1013
    %1063 = vmatpush.bf16.msra.mxu0 %v1009
    %1064 = vmatmul.bf16.gmra.mxu0 %v1041
    %v1065 = vpop.f32.mrf.mxu0
    %v1066 = vadd.f32 %v931, %v1065
    %v1067 = vpop.f32.mrf.mxu0
    %1068 = vdwg.mxu0
    %1069 = vmatpush.bf16.msra.mxu0 0
    %1070 = vmatpush.bf16.msra.mxu0 0
    %1071 = vmatpush.bf16.msra.mxu0 0
    %1072 = vmatpush.bf16.msra.mxu0 0
    %1073 = vmatpush.bf16.msra.mxu0 %v1022
    %1074 = vmatpush.bf16.msra.mxu0 %v1018
    %1075 = vmatpush.bf16.msra.mxu0 %v1014
    %1076 = vmatpush.bf16.msra.mxu0 %v1010
    %1077 = vmatmul.bf16.gmra.mxu0 %v1041
    %v1078 = vpop.f32.mrf.mxu0
    %v1079 = vadd.f32 %v944, %v1078
    %v1080 = vpop.f32.mrf.mxu0
    %1081 = vdwg.mxu0
    %1082 = vmatpush.bf16.msra.mxu0 0
    %1083 = vmatpush.bf16.msra.mxu0 0
    %1084 = vmatpush.bf16.msra.mxu0 0
    %1085 = vmatpush.bf16.msra.mxu0 0
    %1086 = vmatpush.bf16.msra.mxu0 %v1023
    %1087 = vmatpush.bf16.msra.mxu0 %v1019
    %1088 = vmatpush.bf16.msra.mxu0 %v1015
    %1089 = vmatpush.bf16.msra.mxu0 %v1011
    %1090 = vmatmul.bf16.gmra.mxu0 %v1041
    %v1091 = vpop.f32.mrf.mxu0
    %v1092 = vadd.f32 %v957, %v1091
    %v1093 = vpop.f32.mrf.mxu0
    %1094 = vdwg.mxu0
    %v1095 = vld [vmem:[%s3 + $0x100] sm:$0xff]
    %v1096 = vld [vmem:[%s3 + $0x108] sm:$0xff]
    %v1097 = vld [vmem:[%s3 + $0x110] sm:$0xff]
    %v1098 = vld [vmem:[%s3 + $0x118] sm:$0xff]
    %v1099 = vld [vmem:[%s3 + $0x120] sm:$0xff]
    %v1100 = vld [vmem:[%s3 + $0x128] sm:$0xff]
    %v1101 = vld [vmem:[%s3 + $0x130] sm:$0xff]
    %v1102 = vld [vmem:[%s3 + $0x138] sm:$0xff]
    %v1103 = vld [vmem:[%s3 + $0x140] sm:$0xff]
    %v1104 = vld [vmem:[%s3 + $0x148] sm:$0xff]
    %v1105 = vld [vmem:[%s3 + $0x150] sm:$0xff]
    %v1106 = vld [vmem:[%s3 + $0x158] sm:$0xff]
    %v1107 = vld [vmem:[%s3 + $0x160] sm:$0xff]
    %v1108 = vld [vmem:[%s3 + $0x168] sm:$0xff]
    %v1109 = vld [vmem:[%s3 + $0x170] sm:$0xff]
    %v1110 = vld [vmem:[%s3 + $0x178] sm:$0xff]
    %v1111 = vrot.slane %v823, 2
    %v1128 = vunpack.c.l.b16 %v1095
    %v1129 = vunpack.c.h.b16 %v1095
    %v1130 = vunpack.c.l.b16 %v1096
    %v1131 = vunpack.c.h.b16 %v1096
    %v1132 = vunpack.c.l.b16 %v1097
    %v1133 = vunpack.c.h.b16 %v1097
    %v1134 = vunpack.c.l.b16 %v1098
    %v1135 = vunpack.c.h.b16 %v1098
    %v1136 = vunpack.c.l.b16 %v1099
    %v1137 = vunpack.c.h.b16 %v1099
    %v1138 = vunpack.c.l.b16 %v1100
    %v1139 = vunpack.c.h.b16 %v1100
    %v1140 = vunpack.c.l.b16 %v1101
    %v1141 = vunpack.c.h.b16 %v1101
    %v1142 = vunpack.c.l.b16 %v1102
    %v1143 = vunpack.c.h.b16 %v1102
    %v1144 = vunpack.c.l.b16 %v1103
    %v1145 = vunpack.c.h.b16 %v1103
    %v1146 = vunpack.c.l.b16 %v1104
    %v1147 = vunpack.c.h.b16 %v1104
    %v1148 = vunpack.c.l.b16 %v1105
    %v1149 = vunpack.c.h.b16 %v1105
    %v1150 = vunpack.c.l.b16 %v1106
    %v1151 = vunpack.c.h.b16 %v1106
    %v1152 = vunpack.c.l.b16 %v1107
    %v1153 = vunpack.c.h.b16 %v1107
    %v1154 = vunpack.c.l.b16 %v1108
    %v1155 = vunpack.c.h.b16 %v1108
    %v1156 = vunpack.c.l.b16 %v1109
    %v1157 = vunpack.c.h.b16 %v1109
    %v1158 = vunpack.c.l.b16 %v1110
    %v1159 = vunpack.c.h.b16 %v1110
    %v1160 = vpack.c.b16 %v1132, %v1128
    %v1161 = vpack.c.b16 %v1133, %v1129
    %v1162 = vpack.c.b16 %v1134, %v1130
    %v1163 = vpack.c.b16 %v1135, %v1131
    %v1164 = vpack.c.b16 %v1140, %v1136
    %v1165 = vpack.c.b16 %v1141, %v1137
    %v1166 = vpack.c.b16 %v1142, %v1138
    %v1167 = vpack.c.b16 %v1143, %v1139
    %v1168 = vpack.c.b16 %v1148, %v1144
    %v1169 = vpack.c.b16 %v1149, %v1145
    %v1170 = vpack.c.b16 %v1150, %v1146
    %v1171 = vpack.c.b16 %v1151, %v1147
    %v1172 = vpack.c.b16 %v1156, %v1152
    %v1173 = vpack.c.b16 %v1157, %v1153
    %v1174 = vpack.c.b16 %v1158, %v1154
    %v1175 = vpack.c.b16 %v1159, %v1155
    %v1193 = vsel %vm526, %v1111, 0
    %1195 = vmatpush.bf16.msra.mxu0 0
    %1196 = vmatpush.bf16.msra.mxu0 0
    %1197 = vmatpush.bf16.msra.mxu0 0
    %1198 = vmatpush.bf16.msra.mxu0 0
    %1199 = vmatpush.bf16.msra.mxu0 %v1172
    %1200 = vmatpush.bf16.msra.mxu0 %v1168
    %1201 = vmatpush.bf16.msra.mxu0 %v1164
    %1202 = vmatpush.bf16.msra.mxu0 %v1160
    %1203 = vmatmul.bf16.gmra.mxu0 %v1193
    %v1204 = vpop.f32.mrf.mxu0
    %v1205 = vadd.f32 0.0, %v1204
    %v1206 = vpop.f32.mrf.mxu0
    %1207 = vdwg.mxu0
    %1208 = vmatpush.bf16.msra.mxu0 0
    %1209 = vmatpush.bf16.msra.mxu0 0
    %1210 = vmatpush.bf16.msra.mxu0 0
    %1211 = vmatpush.bf16.msra.mxu0 0
    %1212 = vmatpush.bf16.msra.mxu0 %v1173
    %1213 = vmatpush.bf16.msra.mxu0 %v1169
    %1214 = vmatpush.bf16.msra.mxu0 %v1165
    %1215 = vmatpush.bf16.msra.mxu0 %v1161
    %1216 = vmatmul.bf16.gmra.mxu0 %v1193
    %v1217 = vpop.f32.mrf.mxu0
    %v1218 = vadd.f32 0.0, %v1217
    %v1219 = vpop.f32.mrf.mxu0
    %1220 = vdwg.mxu0
    %1221 = vmatpush.bf16.msra.mxu0 0
    %1222 = vmatpush.bf16.msra.mxu0 0
    %1223 = vmatpush.bf16.msra.mxu0 0
    %1224 = vmatpush.bf16.msra.mxu0 0
    %1225 = vmatpush.bf16.msra.mxu0 %v1174
    %1226 = vmatpush.bf16.msra.mxu0 %v1170
    %1227 = vmatpush.bf16.msra.mxu0 %v1166
    %1228 = vmatpush.bf16.msra.mxu0 %v1162
    %1229 = vmatmul.bf16.gmra.mxu0 %v1193
    %v1230 = vpop.f32.mrf.mxu0
    %v1231 = vadd.f32 0.0, %v1230
    %v1232 = vpop.f32.mrf.mxu0
    %1233 = vdwg.mxu0
    %1234 = vmatpush.bf16.msra.mxu0 0
    %1235 = vmatpush.bf16.msra.mxu0 0
    %1236 = vmatpush.bf16.msra.mxu0 0
    %1237 = vmatpush.bf16.msra.mxu0 0
    %1238 = vmatpush.bf16.msra.mxu0 %v1175
    %1239 = vmatpush.bf16.msra.mxu0 %v1171
    %1240 = vmatpush.bf16.msra.mxu0 %v1167
    %1241 = vmatpush.bf16.msra.mxu0 %v1163
    %1242 = vmatmul.bf16.gmra.mxu0 %v1193
    %v1243 = vpop.f32.mrf.mxu0
    %v1244 = vadd.f32 0.0, %v1243
    %v1245 = vpop.f32.mrf.mxu0
    %1246 = vdwg.mxu0
    %v1247 = vadd.f32 %v1053, %v1205
    %v1248 = vadd.f32 %v1066, %v1218
    %v1249 = vadd.f32 %v1079, %v1231
    %v1250 = vadd.f32 %v1092, %v1244
    %v1251 = vld [vmem:[%s3 + $0x180] sm:$0xff]
    %v1252 = vld [vmem:[%s3 + $0x188] sm:$0xff]
    %v1253 = vld [vmem:[%s3 + $0x190] sm:$0xff]
    %v1254 = vld [vmem:[%s3 + $0x198] sm:$0xff]
    %v1255 = vld [vmem:[%s3 + $0x1a0] sm:$0xff]
    %v1256 = vld [vmem:[%s3 + $0x1a8] sm:$0xff]
    %v1257 = vld [vmem:[%s3 + $0x1b0] sm:$0xff]
    %v1258 = vld [vmem:[%s3 + $0x1b8] sm:$0xff]
    %v1259 = vld [vmem:[%s3 + $0x1c0] sm:$0xff]
    %v1260 = vld [vmem:[%s3 + $0x1c8] sm:$0xff]
    %v1261 = vld [vmem:[%s3 + $0x1d0] sm:$0xff]
    %v1262 = vld [vmem:[%s3 + $0x1d8] sm:$0xff]
    %v1263 = vld [vmem:[%s3 + $0x1e0] sm:$0xff]
    %v1264 = vld [vmem:[%s3 + $0x1e8] sm:$0xff]
    %v1265 = vld [vmem:[%s3 + $0x1f0] sm:$0xff]
    %v1266 = vld [vmem:[%s3 + $0x1f8] sm:$0xff]
    %v1267 = vrot.slane %v823, 3
    %v1284 = vunpack.c.l.b16 %v1251
    %v1285 = vunpack.c.h.b16 %v1251
    %v1286 = vunpack.c.l.b16 %v1252
    %v1287 = vunpack.c.h.b16 %v1252
    %v1288 = vunpack.c.l.b16 %v1253
    %v1289 = vunpack.c.h.b16 %v1253
    %v1290 = vunpack.c.l.b16 %v1254
    %v1291 = vunpack.c.h.b16 %v1254
    %v1292 = vunpack.c.l.b16 %v1255
    %v1293 = vunpack.c.h.b16 %v1255
    %v1294 = vunpack.c.l.b16 %v1256
    %v1295 = vunpack.c.h.b16 %v1256
    %v1296 = vunpack.c.l.b16 %v1257
    %v1297 = vunpack.c.h.b16 %v1257
    %v1298 = vunpack.c.l.b16 %v1258
    %v1299 = vunpack.c.h.b16 %v1258
    %v1300 = vunpack.c.l.b16 %v1259
    %v1301 = vunpack.c.h.b16 %v1259
    %v1302 = vunpack.c.l.b16 %v1260
    %v1303 = vunpack.c.h.b16 %v1260
    %v1304 = vunpack.c.l.b16 %v1261
    %v1305 = vunpack.c.h.b16 %v1261
    %v1306 = vunpack.c.l.b16 %v1262
    %v1307 = vunpack.c.h.b16 %v1262
    %v1308 = vunpack.c.l.b16 %v1263
    %v1309 = vunpack.c.h.b16 %v1263
    %v1310 = vunpack.c.l.b16 %v1264
    %v1311 = vunpack.c.h.b16 %v1264
    %v1312 = vunpack.c.l.b16 %v1265
    %v1313 = vunpack.c.h.b16 %v1265
    %v1314 = vunpack.c.l.b16 %v1266
    %v1315 = vunpack.c.h.b16 %v1266
    %v1316 = vpack.c.b16 %v1288, %v1284
    %v1317 = vpack.c.b16 %v1289, %v1285
    %v1318 = vpack.c.b16 %v1290, %v1286
    %v1319 = vpack.c.b16 %v1291, %v1287
    %v1320 = vpack.c.b16 %v1296, %v1292
    %v1321 = vpack.c.b16 %v1297, %v1293
    %v1322 = vpack.c.b16 %v1298, %v1294
    %v1323 = vpack.c.b16 %v1299, %v1295
    %v1324 = vpack.c.b16 %v1304, %v1300
    %v1325 = vpack.c.b16 %v1305, %v1301
    %v1326 = vpack.c.b16 %v1306, %v1302
    %v1327 = vpack.c.b16 %v1307, %v1303
    %v1328 = vpack.c.b16 %v1312, %v1308
    %v1329 = vpack.c.b16 %v1313, %v1309
    %v1330 = vpack.c.b16 %v1314, %v1310
    %v1331 = vpack.c.b16 %v1315, %v1311
    %v1349 = vsel %vm526, %v1267, 0
    %1351 = vmatpush.bf16.msra.mxu0 0
    %1352 = vmatpush.bf16.msra.mxu0 0
    %1353 = vmatpush.bf16.msra.mxu0 0
    %1354 = vmatpush.bf16.msra.mxu0 0
    %1355 = vmatpush.bf16.msra.mxu0 %v1328
    %1356 = vmatpush.bf16.msra.mxu0 %v1324
    %1357 = vmatpush.bf16.msra.mxu0 %v1320
    %1358 = vmatpush.bf16.msra.mxu0 %v1316
    %1359 = vmatmul.bf16.gmra.mxu0 %v1349
    %v1360 = vpop.f32.mrf.mxu0
    %v1361 = vadd.f32 0.0, %v1360
    %v1362 = vpop.f32.mrf.mxu0
    %1363 = vdwg.mxu0
    %1364 = vmatpush.bf16.msra.mxu0 0
    %1365 = vmatpush.bf16.msra.mxu0 0
    %1366 = vmatpush.bf16.msra.mxu0 0
    %1367 = vmatpush.bf16.msra.mxu0 0
    %1368 = vmatpush.bf16.msra.mxu0 %v1329
    %1369 = vmatpush.bf16.msra.mxu0 %v1325
    %1370 = vmatpush.bf16.msra.mxu0 %v1321
    %1371 = vmatpush.bf16.msra.mxu0 %v1317
    %1372 = vmatmul.bf16.gmra.mxu0 %v1349
    %v1373 = vpop.f32.mrf.mxu0
    %v1374 = vadd.f32 0.0, %v1373
    %v1375 = vpop.f32.mrf.mxu0
    %1376 = vdwg.mxu0
    %1377 = vmatpush.bf16.msra.mxu0 0
    %1378 = vmatpush.bf16.msra.mxu0 0
    %1379 = vmatpush.bf16.msra.mxu0 0
    %1380 = vmatpush.bf16.msra.mxu0 0
    %1381 = vmatpush.bf16.msra.mxu0 %v1330
    %1382 = vmatpush.bf16.msra.mxu0 %v1326
    %1383 = vmatpush.bf16.msra.mxu0 %v1322
    %1384 = vmatpush.bf16.msra.mxu0 %v1318
    %1385 = vmatmul.bf16.gmra.mxu0 %v1349
    %v1386 = vpop.f32.mrf.mxu0
    %v1387 = vadd.f32 0.0, %v1386
    %v1388 = vpop.f32.mrf.mxu0
    %1389 = vdwg.mxu0
    %1390 = vmatpush.bf16.msra.mxu0 0
    %1391 = vmatpush.bf16.msra.mxu0 0
    %1392 = vmatpush.bf16.msra.mxu0 0
    %1393 = vmatpush.bf16.msra.mxu0 0
    %1394 = vmatpush.bf16.msra.mxu0 %v1331
    %1395 = vmatpush.bf16.msra.mxu0 %v1327
    %1396 = vmatpush.bf16.msra.mxu0 %v1323
    %1397 = vmatpush.bf16.msra.mxu0 %v1319
    %1398 = vmatmul.bf16.gmra.mxu0 %v1349
    %v1399 = vpop.f32.mrf.mxu0
    %v1400 = vadd.f32 0.0, %v1399
    %v1401 = vpop.f32.mrf.mxu0
    %1402 = vdwg.mxu0
    %v1403 = vadd.f32 %v1247, %v1361
    %v1404 = vadd.f32 %v1248, %v1374
    %v1405 = vadd.f32 %v1249, %v1387
    %v1406 = vadd.f32 %v1250, %v1400
    %v1407 = vld [vmem:[%s3 + $0x200] sm:$0xff]
    %v1408 = vld [vmem:[%s3 + $0x208] sm:$0xff]
    %v1409 = vld [vmem:[%s3 + $0x210] sm:$0xff]
    %v1410 = vld [vmem:[%s3 + $0x218] sm:$0xff]
    %v1411 = vld [vmem:[%s3 + $0x220] sm:$0xff]
    %v1412 = vld [vmem:[%s3 + $0x228] sm:$0xff]
    %v1413 = vld [vmem:[%s3 + $0x230] sm:$0xff]
    %v1414 = vld [vmem:[%s3 + $0x238] sm:$0xff]
    %v1415 = vld [vmem:[%s3 + $0x240] sm:$0xff]
    %v1416 = vld [vmem:[%s3 + $0x248] sm:$0xff]
    %v1417 = vld [vmem:[%s3 + $0x250] sm:$0xff]
    %v1418 = vld [vmem:[%s3 + $0x258] sm:$0xff]
    %v1419 = vld [vmem:[%s3 + $0x260] sm:$0xff]
    %v1420 = vld [vmem:[%s3 + $0x268] sm:$0xff]
    %v1421 = vld [vmem:[%s3 + $0x270] sm:$0xff]
    %v1422 = vld [vmem:[%s3 + $0x278] sm:$0xff]
    %v1439 = vunpack.c.l.b16 %v1407
    %v1440 = vunpack.c.h.b16 %v1407
    %v1441 = vunpack.c.l.b16 %v1408
    %v1442 = vunpack.c.h.b16 %v1408
    %v1443 = vunpack.c.l.b16 %v1409
    %v1444 = vunpack.c.h.b16 %v1409
    %v1445 = vunpack.c.l.b16 %v1410
    %v1446 = vunpack.c.h.b16 %v1410
    %v1447 = vunpack.c.l.b16 %v1411
    %v1448 = vunpack.c.h.b16 %v1411
    %v1449 = vunpack.c.l.b16 %v1412
    %v1450 = vunpack.c.h.b16 %v1412
    %v1451 = vunpack.c.l.b16 %v1413
    %v1452 = vunpack.c.h.b16 %v1413
    %v1453 = vunpack.c.l.b16 %v1414
    %v1454 = vunpack.c.h.b16 %v1414
    %v1455 = vunpack.c.l.b16 %v1415
    %v1456 = vunpack.c.h.b16 %v1415
    %v1457 = vunpack.c.l.b16 %v1416
    %v1458 = vunpack.c.h.b16 %v1416
    %v1459 = vunpack.c.l.b16 %v1417
    %v1460 = vunpack.c.h.b16 %v1417
    %v1461 = vunpack.c.l.b16 %v1418
    %v1462 = vunpack.c.h.b16 %v1418
    %v1463 = vunpack.c.l.b16 %v1419
    %v1464 = vunpack.c.h.b16 %v1419
    %v1465 = vunpack.c.l.b16 %v1420
    %v1466 = vunpack.c.h.b16 %v1420
    %v1467 = vunpack.c.l.b16 %v1421
    %v1468 = vunpack.c.h.b16 %v1421
    %v1469 = vunpack.c.l.b16 %v1422
    %v1470 = vunpack.c.h.b16 %v1422
    %v1471 = vpack.c.b16 %v1443, %v1439
    %v1472 = vpack.c.b16 %v1444, %v1440
    %v1473 = vpack.c.b16 %v1445, %v1441
    %v1474 = vpack.c.b16 %v1446, %v1442
    %v1475 = vpack.c.b16 %v1451, %v1447
    %v1476 = vpack.c.b16 %v1452, %v1448
    %v1477 = vpack.c.b16 %v1453, %v1449
    %v1478 = vpack.c.b16 %v1454, %v1450
    %v1479 = vpack.c.b16 %v1459, %v1455
    %v1480 = vpack.c.b16 %v1460, %v1456
    %v1481 = vpack.c.b16 %v1461, %v1457
    %v1482 = vpack.c.b16 %v1462, %v1458
    %v1483 = vpack.c.b16 %v1467, %v1463
    %v1484 = vpack.c.b16 %v1468, %v1464
    %v1485 = vpack.c.b16 %v1469, %v1465
    %v1486 = vpack.c.b16 %v1470, %v1466
    %v1504 = vsel %vm526, %v777, 0
    %1506 = vmatpush.bf16.msra.mxu0 0
    %1507 = vmatpush.bf16.msra.mxu0 0
    %1508 = vmatpush.bf16.msra.mxu0 0
    %1509 = vmatpush.bf16.msra.mxu0 0
    %1510 = vmatpush.bf16.msra.mxu0 %v1483
    %1511 = vmatpush.bf16.msra.mxu0 %v1479
    %1512 = vmatpush.bf16.msra.mxu0 %v1475
    %1513 = vmatpush.bf16.msra.mxu0 %v1471
    %1514 = vmatmul.bf16.gmra.mxu0 %v1504
    %v1515 = vpop.f32.mrf.mxu0
    %v1516 = vadd.f32 0.0, %v1515
    %v1517 = vpop.f32.mrf.mxu0
    %1518 = vdwg.mxu0
    %1519 = vmatpush.bf16.msra.mxu0 0
    %1520 = vmatpush.bf16.msra.mxu0 0
    %1521 = vmatpush.bf16.msra.mxu0 0
    %1522 = vmatpush.bf16.msra.mxu0 0
    %1523 = vmatpush.bf16.msra.mxu0 %v1484
    %1524 = vmatpush.bf16.msra.mxu0 %v1480
    %1525 = vmatpush.bf16.msra.mxu0 %v1476
    %1526 = vmatpush.bf16.msra.mxu0 %v1472
    %1527 = vmatmul.bf16.gmra.mxu0 %v1504
    %v1528 = vpop.f32.mrf.mxu0
    %v1529 = vadd.f32 0.0, %v1528
    %v1530 = vpop.f32.mrf.mxu0
    %1531 = vdwg.mxu0
    %1532 = vmatpush.bf16.msra.mxu0 0
    %1533 = vmatpush.bf16.msra.mxu0 0
    %1534 = vmatpush.bf16.msra.mxu0 0
    %1535 = vmatpush.bf16.msra.mxu0 0
    %1536 = vmatpush.bf16.msra.mxu0 %v1485
    %1537 = vmatpush.bf16.msra.mxu0 %v1481
    %1538 = vmatpush.bf16.msra.mxu0 %v1477
    %1539 = vmatpush.bf16.msra.mxu0 %v1473
    %1540 = vmatmul.bf16.gmra.mxu0 %v1504
    %v1541 = vpop.f32.mrf.mxu0
    %v1542 = vadd.f32 0.0, %v1541
    %v1543 = vpop.f32.mrf.mxu0
    %1544 = vdwg.mxu0
    %1545 = vmatpush.bf16.msra.mxu0 0
    %1546 = vmatpush.bf16.msra.mxu0 0
    %1547 = vmatpush.bf16.msra.mxu0 0
    %1548 = vmatpush.bf16.msra.mxu0 0
    %1549 = vmatpush.bf16.msra.mxu0 %v1486
    %1550 = vmatpush.bf16.msra.mxu0 %v1482
    %1551 = vmatpush.bf16.msra.mxu0 %v1478
    %1552 = vmatpush.bf16.msra.mxu0 %v1474
    %1553 = vmatmul.bf16.gmra.mxu0 %v1504
    %v1554 = vpop.f32.mrf.mxu0
    %v1555 = vadd.f32 0.0, %v1554
    %v1556 = vpop.f32.mrf.mxu0
    %1557 = vdwg.mxu0
    %v1558 = vadd.f32 %v1403, %v1516
    %v1559 = vadd.f32 %v1404, %v1529
    %v1560 = vadd.f32 %v1405, %v1542
    %v1561 = vadd.f32 %v1406, %v1555
    %v1562 = vld [vmem:[%s3 + $0x280] sm:$0xff]
    %v1563 = vld [vmem:[%s3 + $0x288] sm:$0xff]
    %v1564 = vld [vmem:[%s3 + $0x290] sm:$0xff]
    %v1565 = vld [vmem:[%s3 + $0x298] sm:$0xff]
    %v1566 = vld [vmem:[%s3 + $0x2a0] sm:$0xff]
    %v1567 = vld [vmem:[%s3 + $0x2a8] sm:$0xff]
    %v1568 = vld [vmem:[%s3 + $0x2b0] sm:$0xff]
    %v1569 = vld [vmem:[%s3 + $0x2b8] sm:$0xff]
    %v1570 = vld [vmem:[%s3 + $0x2c0] sm:$0xff]
    %v1571 = vld [vmem:[%s3 + $0x2c8] sm:$0xff]
    %v1572 = vld [vmem:[%s3 + $0x2d0] sm:$0xff]
    %v1573 = vld [vmem:[%s3 + $0x2d8] sm:$0xff]
    %v1574 = vld [vmem:[%s3 + $0x2e0] sm:$0xff]
    %v1575 = vld [vmem:[%s3 + $0x2e8] sm:$0xff]
    %v1576 = vld [vmem:[%s3 + $0x2f0] sm:$0xff]
    %v1577 = vld [vmem:[%s3 + $0x2f8] sm:$0xff]
    %v1579 = vunpack.c.l.b16 %v777
    %v1580 = vpack.c.b16 %v1579, %v1579
    %v1581 = vrot.slane %v1580, 1
    %v1598 = vunpack.c.l.b16 %v1562
    %v1599 = vunpack.c.h.b16 %v1562
    %v1600 = vunpack.c.l.b16 %v1563
    %v1601 = vunpack.c.h.b16 %v1563
    %v1602 = vunpack.c.l.b16 %v1564
    %v1603 = vunpack.c.h.b16 %v1564
    %v1604 = vunpack.c.l.b16 %v1565
    %v1605 = vunpack.c.h.b16 %v1565
    %v1606 = vunpack.c.l.b16 %v1566
    %v1607 = vunpack.c.h.b16 %v1566
    %v1608 = vunpack.c.l.b16 %v1567
    %v1609 = vunpack.c.h.b16 %v1567
    %v1610 = vunpack.c.l.b16 %v1568
    %v1611 = vunpack.c.h.b16 %v1568
    %v1612 = vunpack.c.l.b16 %v1569
    %v1613 = vunpack.c.h.b16 %v1569
    %v1614 = vunpack.c.l.b16 %v1570
    %v1615 = vunpack.c.h.b16 %v1570
    %v1616 = vunpack.c.l.b16 %v1571
    %v1617 = vunpack.c.h.b16 %v1571
    %v1618 = vunpack.c.l.b16 %v1572
    %v1619 = vunpack.c.h.b16 %v1572
    %v1620 = vunpack.c.l.b16 %v1573
    %v1621 = vunpack.c.h.b16 %v1573
    %v1622 = vunpack.c.l.b16 %v1574
    %v1623 = vunpack.c.h.b16 %v1574
    %v1624 = vunpack.c.l.b16 %v1575
    %v1625 = vunpack.c.h.b16 %v1575
    %v1626 = vunpack.c.l.b16 %v1576
    %v1627 = vunpack.c.h.b16 %v1576
    %v1628 = vunpack.c.l.b16 %v1577
    %v1629 = vunpack.c.h.b16 %v1577
    %v1630 = vpack.c.b16 %v1602, %v1598
    %v1631 = vpack.c.b16 %v1603, %v1599
    %v1632 = vpack.c.b16 %v1604, %v1600
    %v1633 = vpack.c.b16 %v1605, %v1601
    %v1634 = vpack.c.b16 %v1610, %v1606
    %v1635 = vpack.c.b16 %v1611, %v1607
    %v1636 = vpack.c.b16 %v1612, %v1608
    %v1637 = vpack.c.b16 %v1613, %v1609
    %v1638 = vpack.c.b16 %v1618, %v1614
    %v1639 = vpack.c.b16 %v1619, %v1615
    %v1640 = vpack.c.b16 %v1620, %v1616
    %v1641 = vpack.c.b16 %v1621, %v1617
    %v1642 = vpack.c.b16 %v1626, %v1622
    %v1643 = vpack.c.b16 %v1627, %v1623
    %v1644 = vpack.c.b16 %v1628, %v1624
    %v1645 = vpack.c.b16 %v1629, %v1625
    %v1663 = vsel %vm526, %v1581, 0
    %1665 = vmatpush.bf16.msra.mxu0 0
    %1666 = vmatpush.bf16.msra.mxu0 0
    %1667 = vmatpush.bf16.msra.mxu0 0
    %1668 = vmatpush.bf16.msra.mxu0 0
    %1669 = vmatpush.bf16.msra.mxu0 %v1642
    %1670 = vmatpush.bf16.msra.mxu0 %v1638
    %1671 = vmatpush.bf16.msra.mxu0 %v1634
    %1672 = vmatpush.bf16.msra.mxu0 %v1630
    %1673 = vmatmul.bf16.gmra.mxu0 %v1663
    %v1674 = vpop.f32.mrf.mxu0
    %v1675 = vadd.f32 0.0, %v1674
    %v1676 = vpop.f32.mrf.mxu0
    %1677 = vdwg.mxu0
    %1678 = vmatpush.bf16.msra.mxu0 0
    %1679 = vmatpush.bf16.msra.mxu0 0
    %1680 = vmatpush.bf16.msra.mxu0 0
    %1681 = vmatpush.bf16.msra.mxu0 0
    %1682 = vmatpush.bf16.msra.mxu0 %v1643
    %1683 = vmatpush.bf16.msra.mxu0 %v1639
    %1684 = vmatpush.bf16.msra.mxu0 %v1635
    %1685 = vmatpush.bf16.msra.mxu0 %v1631
    %1686 = vmatmul.bf16.gmra.mxu0 %v1663
    %v1687 = vpop.f32.mrf.mxu0
    %v1688 = vadd.f32 0.0, %v1687
    %v1689 = vpop.f32.mrf.mxu0
    %1690 = vdwg.mxu0
    %1691 = vmatpush.bf16.msra.mxu0 0
    %1692 = vmatpush.bf16.msra.mxu0 0
    %1693 = vmatpush.bf16.msra.mxu0 0
    %1694 = vmatpush.bf16.msra.mxu0 0
    %1695 = vmatpush.bf16.msra.mxu0 %v1644
    %1696 = vmatpush.bf16.msra.mxu0 %v1640
    %1697 = vmatpush.bf16.msra.mxu0 %v1636
    %1698 = vmatpush.bf16.msra.mxu0 %v1632
    %1699 = vmatmul.bf16.gmra.mxu0 %v1663
    %v1700 = vpop.f32.mrf.mxu0
    %v1701 = vadd.f32 0.0, %v1700
    %v1702 = vpop.f32.mrf.mxu0
    %1703 = vdwg.mxu0
    %1704 = vmatpush.bf16.msra.mxu0 0
    %1705 = vmatpush.bf16.msra.mxu0 0
    %1706 = vmatpush.bf16.msra.mxu0 0
    %1707 = vmatpush.bf16.msra.mxu0 0
    %1708 = vmatpush.bf16.msra.mxu0 %v1645
    %1709 = vmatpush.bf16.msra.mxu0 %v1641
    %1710 = vmatpush.bf16.msra.mxu0 %v1637
    %1711 = vmatpush.bf16.msra.mxu0 %v1633
    %1712 = vmatmul.bf16.gmra.mxu0 %v1663
    %v1713 = vpop.f32.mrf.mxu0
    %v1714 = vadd.f32 0.0, %v1713
    %v1715 = vpop.f32.mrf.mxu0
    %1716 = vdwg.mxu0
    %v1717 = vadd.f32 %v1558, %v1675
    %v1718 = vadd.f32 %v1559, %v1688
    %v1719 = vadd.f32 %v1560, %v1701
    %v1720 = vadd.f32 %v1561, %v1714
    %v1721 = vld [vmem:[%s3 + $0x300] sm:$0xff]
    %v1722 = vld [vmem:[%s3 + $0x308] sm:$0xff]
    %v1723 = vld [vmem:[%s3 + $0x310] sm:$0xff]
    %v1724 = vld [vmem:[%s3 + $0x318] sm:$0xff]
    %v1725 = vld [vmem:[%s3 + $0x320] sm:$0xff]
    %v1726 = vld [vmem:[%s3 + $0x328] sm:$0xff]
    %v1727 = vld [vmem:[%s3 + $0x330] sm:$0xff]
    %v1728 = vld [vmem:[%s3 + $0x338] sm:$0xff]
    %v1729 = vld [vmem:[%s3 + $0x340] sm:$0xff]
    %v1730 = vld [vmem:[%s3 + $0x348] sm:$0xff]
    %v1731 = vld [vmem:[%s3 + $0x350] sm:$0xff]
    %v1732 = vld [vmem:[%s3 + $0x358] sm:$0xff]
    %v1733 = vld [vmem:[%s3 + $0x360] sm:$0xff]
    %v1734 = vld [vmem:[%s3 + $0x368] sm:$0xff]
    %v1735 = vld [vmem:[%s3 + $0x370] sm:$0xff]
    %v1736 = vld [vmem:[%s3 + $0x378] sm:$0xff]
    %v1737 = vrot.slane %v1580, 2
    %v1754 = vunpack.c.l.b16 %v1721
    %v1755 = vunpack.c.h.b16 %v1721
    %v1756 = vunpack.c.l.b16 %v1722
    %v1757 = vunpack.c.h.b16 %v1722
    %v1758 = vunpack.c.l.b16 %v1723
    %v1759 = vunpack.c.h.b16 %v1723
    %v1760 = vunpack.c.l.b16 %v1724
    %v1761 = vunpack.c.h.b16 %v1724
    %v1762 = vunpack.c.l.b16 %v1725
    %v1763 = vunpack.c.h.b16 %v1725
    %v1764 = vunpack.c.l.b16 %v1726
    %v1765 = vunpack.c.h.b16 %v1726
    %v1766 = vunpack.c.l.b16 %v1727
    %v1767 = vunpack.c.h.b16 %v1727
    %v1768 = vunpack.c.l.b16 %v1728
    %v1769 = vunpack.c.h.b16 %v1728
    %v1770 = vunpack.c.l.b16 %v1729
    %v1771 = vunpack.c.h.b16 %v1729
    %v1772 = vunpack.c.l.b16 %v1730
    %v1773 = vunpack.c.h.b16 %v1730
    %v1774 = vunpack.c.l.b16 %v1731
    %v1775 = vunpack.c.h.b16 %v1731
    %v1776 = vunpack.c.l.b16 %v1732
    %v1777 = vunpack.c.h.b16 %v1732
    %v1778 = vunpack.c.l.b16 %v1733
    %v1779 = vunpack.c.h.b16 %v1733
    %v1780 = vunpack.c.l.b16 %v1734
    %v1781 = vunpack.c.h.b16 %v1734
    %v1782 = vunpack.c.l.b16 %v1735
    %v1783 = vunpack.c.h.b16 %v1735
    %v1784 = vunpack.c.l.b16 %v1736
    %v1785 = vunpack.c.h.b16 %v1736
    %v1786 = vpack.c.b16 %v1758, %v1754
    %v1787 = vpack.c.b16 %v1759, %v1755
    %v1788 = vpack.c.b16 %v1760, %v1756
    %v1789 = vpack.c.b16 %v1761, %v1757
    %v1790 = vpack.c.b16 %v1766, %v1762
    %v1791 = vpack.c.b16 %v1767, %v1763
    %v1792 = vpack.c.b16 %v1768, %v1764
    %v1793 = vpack.c.b16 %v1769, %v1765
    %v1794 = vpack.c.b16 %v1774, %v1770
    %v1795 = vpack.c.b16 %v1775, %v1771
    %v1796 = vpack.c.b16 %v1776, %v1772
    %v1797 = vpack.c.b16 %v1777, %v1773
    %v1798 = vpack.c.b16 %v1782, %v1778
    %v1799 = vpack.c.b16 %v1783, %v1779
    %v1800 = vpack.c.b16 %v1784, %v1780
    %v1801 = vpack.c.b16 %v1785, %v1781
    %v1819 = vsel %vm526, %v1737, 0
    %1821 = vmatpush.bf16.msra.mxu0 0
    %1822 = vmatpush.bf16.msra.mxu0 0
    %1823 = vmatpush.bf16.msra.mxu0 0
    %1824 = vmatpush.bf16.msra.mxu0 0
    %1825 = vmatpush.bf16.msra.mxu0 %v1798
    %1826 = vmatpush.bf16.msra.mxu0 %v1794
    %1827 = vmatpush.bf16.msra.mxu0 %v1790
    %1828 = vmatpush.bf16.msra.mxu0 %v1786
    %1829 = vmatmul.bf16.gmra.mxu0 %v1819
    %v1830 = vpop.f32.mrf.mxu0
    %v1831 = vadd.f32 0.0, %v1830
    %v1832 = vpop.f32.mrf.mxu0
    %1833 = vdwg.mxu0
    %1834 = vmatpush.bf16.msra.mxu0 0
    %1835 = vmatpush.bf16.msra.mxu0 0
    %1836 = vmatpush.bf16.msra.mxu0 0
    %1837 = vmatpush.bf16.msra.mxu0 0
    %1838 = vmatpush.bf16.msra.mxu0 %v1799
    %1839 = vmatpush.bf16.msra.mxu0 %v1795
    %1840 = vmatpush.bf16.msra.mxu0 %v1791
    %1841 = vmatpush.bf16.msra.mxu0 %v1787
    %1842 = vmatmul.bf16.gmra.mxu0 %v1819
    %v1843 = vpop.f32.mrf.mxu0
    %v1844 = vadd.f32 0.0, %v1843
    %v1845 = vpop.f32.mrf.mxu0
    %1846 = vdwg.mxu0
    %1847 = vmatpush.bf16.msra.mxu0 0
    %1848 = vmatpush.bf16.msra.mxu0 0
    %1849 = vmatpush.bf16.msra.mxu0 0
    %1850 = vmatpush.bf16.msra.mxu0 0
    %1851 = vmatpush.bf16.msra.mxu0 %v1800
    %1852 = vmatpush.bf16.msra.mxu0 %v1796
    %1853 = vmatpush.bf16.msra.mxu0 %v1792
    %1854 = vmatpush.bf16.msra.mxu0 %v1788
    %1855 = vmatmul.bf16.gmra.mxu0 %v1819
    %v1856 = vpop.f32.mrf.mxu0
    %v1857 = vadd.f32 0.0, %v1856
    %v1858 = vpop.f32.mrf.mxu0
    %1859 = vdwg.mxu0
    %1860 = vmatpush.bf16.msra.mxu0 0
    %1861 = vmatpush.bf16.msra.mxu0 0
    %1862 = vmatpush.bf16.msra.mxu0 0
    %1863 = vmatpush.bf16.msra.mxu0 0
    %1864 = vmatpush.bf16.msra.mxu0 %v1801
    %1865 = vmatpush.bf16.msra.mxu0 %v1797
    %1866 = vmatpush.bf16.msra.mxu0 %v1793
    %1867 = vmatpush.bf16.msra.mxu0 %v1789
    %1868 = vmatmul.bf16.gmra.mxu0 %v1819
    %v1869 = vpop.f32.mrf.mxu0
    %v1870 = vadd.f32 0.0, %v1869
    %v1871 = vpop.f32.mrf.mxu0
    %1872 = vdwg.mxu0
    %v1873 = vadd.f32 %v1717, %v1831
    %v1874 = vadd.f32 %v1718, %v1844
    %v1875 = vadd.f32 %v1719, %v1857
    %v1876 = vadd.f32 %v1720, %v1870
    %v1877 = vld [vmem:[%s3 + $0x380] sm:$0xff]
    %v1878 = vld [vmem:[%s3 + $0x388] sm:$0xff]
    %v1879 = vld [vmem:[%s3 + $0x390] sm:$0xff]
    %v1880 = vld [vmem:[%s3 + $0x398] sm:$0xff]
    %v1881 = vld [vmem:[%s3 + $0x3a0] sm:$0xff]
    %v1882 = vld [vmem:[%s3 + $0x3a8] sm:$0xff]
    %v1883 = vld [vmem:[%s3 + $0x3b0] sm:$0xff]
    %v1884 = vld [vmem:[%s3 + $0x3b8] sm:$0xff]
    %v1885 = vld [vmem:[%s3 + $0x3c0] sm:$0xff]
    %v1886 = vld [vmem:[%s3 + $0x3c8] sm:$0xff]
    %v1887 = vld [vmem:[%s3 + $0x3d0] sm:$0xff]
    %v1888 = vld [vmem:[%s3 + $0x3d8] sm:$0xff]
    %v1889 = vld [vmem:[%s3 + $0x3e0] sm:$0xff]
    %v1890 = vld [vmem:[%s3 + $0x3e8] sm:$0xff]
    %v1891 = vld [vmem:[%s3 + $0x3f0] sm:$0xff]
    %v1892 = vld [vmem:[%s3 + $0x3f8] sm:$0xff]
    %v1893 = vrot.slane %v1580, 3
    %v1910 = vunpack.c.l.b16 %v1877
    %v1911 = vunpack.c.h.b16 %v1877
    %v1912 = vunpack.c.l.b16 %v1878
    %v1913 = vunpack.c.h.b16 %v1878
    %v1914 = vunpack.c.l.b16 %v1879
    %v1915 = vunpack.c.h.b16 %v1879
    %v1916 = vunpack.c.l.b16 %v1880
    %v1917 = vunpack.c.h.b16 %v1880
    %v1918 = vunpack.c.l.b16 %v1881
    %v1919 = vunpack.c.h.b16 %v1881
    %v1920 = vunpack.c.l.b16 %v1882
    %v1921 = vunpack.c.h.b16 %v1882
    %v1922 = vunpack.c.l.b16 %v1883
    %v1923 = vunpack.c.h.b16 %v1883
    %v1924 = vunpack.c.l.b16 %v1884
    %v1925 = vunpack.c.h.b16 %v1884
    %v1926 = vunpack.c.l.b16 %v1885
    %v1927 = vunpack.c.h.b16 %v1885
    %v1928 = vunpack.c.l.b16 %v1886
    %v1929 = vunpack.c.h.b16 %v1886
    %v1930 = vunpack.c.l.b16 %v1887
    %v1931 = vunpack.c.h.b16 %v1887
    %v1932 = vunpack.c.l.b16 %v1888
    %v1933 = vunpack.c.h.b16 %v1888
    %v1934 = vunpack.c.l.b16 %v1889
    %v1935 = vunpack.c.h.b16 %v1889
    %v1936 = vunpack.c.l.b16 %v1890
    %v1937 = vunpack.c.h.b16 %v1890
    %v1938 = vunpack.c.l.b16 %v1891
    %v1939 = vunpack.c.h.b16 %v1891
    %v1940 = vunpack.c.l.b16 %v1892
    %v1941 = vunpack.c.h.b16 %v1892
    %v1942 = vpack.c.b16 %v1914, %v1910
    %v1943 = vpack.c.b16 %v1915, %v1911
    %v1944 = vpack.c.b16 %v1916, %v1912
    %v1945 = vpack.c.b16 %v1917, %v1913
    %v1946 = vpack.c.b16 %v1922, %v1918
    %v1947 = vpack.c.b16 %v1923, %v1919
    %v1948 = vpack.c.b16 %v1924, %v1920
    %v1949 = vpack.c.b16 %v1925, %v1921
    %v1950 = vpack.c.b16 %v1930, %v1926
    %v1951 = vpack.c.b16 %v1931, %v1927
    %v1952 = vpack.c.b16 %v1932, %v1928
    %v1953 = vpack.c.b16 %v1933, %v1929
    %v1954 = vpack.c.b16 %v1938, %v1934
    %v1955 = vpack.c.b16 %v1939, %v1935
    %v1956 = vpack.c.b16 %v1940, %v1936
    %v1957 = vpack.c.b16 %v1941, %v1937
    %v1975 = vsel %vm526, %v1893, 0
    %1977 = vmatpush.bf16.msra.mxu0 0
    %1978 = vmatpush.bf16.msra.mxu0 0
    %1979 = vmatpush.bf16.msra.mxu0 0
    %1980 = vmatpush.bf16.msra.mxu0 0
    %1981 = vmatpush.bf16.msra.mxu0 %v1954
    %1982 = vmatpush.bf16.msra.mxu0 %v1950
    %1983 = vmatpush.bf16.msra.mxu0 %v1946
    %1984 = vmatpush.bf16.msra.mxu0 %v1942
    %1985 = vmatmul.bf16.gmra.mxu0 %v1975
    %v1986 = vpop.f32.mrf.mxu0
    %v1987 = vadd.f32 0.0, %v1986
    %v1988 = vpop.f32.mrf.mxu0
    %1989 = vdwg.mxu0
    %1990 = vmatpush.bf16.msra.mxu0 0
    %1991 = vmatpush.bf16.msra.mxu0 0
    %1992 = vmatpush.bf16.msra.mxu0 0
    %1993 = vmatpush.bf16.msra.mxu0 0
    %1994 = vmatpush.bf16.msra.mxu0 %v1955
    %1995 = vmatpush.bf16.msra.mxu0 %v1951
    %1996 = vmatpush.bf16.msra.mxu0 %v1947
    %1997 = vmatpush.bf16.msra.mxu0 %v1943
    %1998 = vmatmul.bf16.gmra.mxu0 %v1975
    %v1999 = vpop.f32.mrf.mxu0
    %v2000 = vadd.f32 0.0, %v1999
    %v2001 = vpop.f32.mrf.mxu0
    %2002 = vdwg.mxu0
    %2003 = vmatpush.bf16.msra.mxu0 0
    %2004 = vmatpush.bf16.msra.mxu0 0
    %2005 = vmatpush.bf16.msra.mxu0 0
    %2006 = vmatpush.bf16.msra.mxu0 0
    %2007 = vmatpush.bf16.msra.mxu0 %v1956
    %2008 = vmatpush.bf16.msra.mxu0 %v1952
    %2009 = vmatpush.bf16.msra.mxu0 %v1948
    %2010 = vmatpush.bf16.msra.mxu0 %v1944
    %2011 = vmatmul.bf16.gmra.mxu0 %v1975
    %v2012 = vpop.f32.mrf.mxu0
    %v2013 = vadd.f32 0.0, %v2012
    %v2014 = vpop.f32.mrf.mxu0
    %2015 = vdwg.mxu0
    %2016 = vmatpush.bf16.msra.mxu0 0
    %2017 = vmatpush.bf16.msra.mxu0 0
    %2018 = vmatpush.bf16.msra.mxu0 0
    %2019 = vmatpush.bf16.msra.mxu0 0
    %2020 = vmatpush.bf16.msra.mxu0 %v1957
    %2021 = vmatpush.bf16.msra.mxu0 %v1953
    %2022 = vmatpush.bf16.msra.mxu0 %v1949
    %2023 = vmatpush.bf16.msra.mxu0 %v1945
    %2024 = vmatmul.bf16.gmra.mxu0 %v1975
    %v2025 = vpop.f32.mrf.mxu0
    %v2026 = vadd.f32 0.0, %v2025
    %v2027 = vpop.f32.mrf.mxu0
    %2028 = vdwg.mxu0
    %v2029 = vadd.f32 %v1873, %v1987
    %v2030 = vadd.f32 %v1874, %v2000
    %v2031 = vadd.f32 %v1875, %v2013
    %v2032 = vadd.f32 %v1876, %v2026
    %v2033 = vld [vmem:[%s3 + $0x400] sm:$0xff]
    %v2034 = vld [vmem:[%s3 + $0x408] sm:$0xff]
    %v2035 = vld [vmem:[%s3 + $0x410] sm:$0xff]
    %v2036 = vld [vmem:[%s3 + $0x418] sm:$0xff]
    %v2037 = vld [vmem:[%s3 + $0x420] sm:$0xff]
    %v2038 = vld [vmem:[%s3 + $0x428] sm:$0xff]
    %v2039 = vld [vmem:[%s3 + $0x430] sm:$0xff]
    %v2040 = vld [vmem:[%s3 + $0x438] sm:$0xff]
    %v2041 = vld [vmem:[%s3 + $0x440] sm:$0xff]
    %v2042 = vld [vmem:[%s3 + $0x448] sm:$0xff]
    %v2043 = vld [vmem:[%s3 + $0x450] sm:$0xff]
    %v2044 = vld [vmem:[%s3 + $0x458] sm:$0xff]
    %v2045 = vld [vmem:[%s3 + $0x460] sm:$0xff]
    %v2046 = vld [vmem:[%s3 + $0x468] sm:$0xff]
    %v2047 = vld [vmem:[%s3 + $0x470] sm:$0xff]
    %v2048 = vld [vmem:[%s3 + $0x478] sm:$0xff]
    %v2065 = vunpack.c.l.b16 %v2033
    %v2066 = vunpack.c.h.b16 %v2033
    %v2067 = vunpack.c.l.b16 %v2034
    %v2068 = vunpack.c.h.b16 %v2034
    %v2069 = vunpack.c.l.b16 %v2035
    %v2070 = vunpack.c.h.b16 %v2035
    %v2071 = vunpack.c.l.b16 %v2036
    %v2072 = vunpack.c.h.b16 %v2036
    %v2073 = vunpack.c.l.b16 %v2037
    %v2074 = vunpack.c.h.b16 %v2037
    %v2075 = vunpack.c.l.b16 %v2038
    %v2076 = vunpack.c.h.b16 %v2038
    %v2077 = vunpack.c.l.b16 %v2039
    %v2078 = vunpack.c.h.b16 %v2039
    %v2079 = vunpack.c.l.b16 %v2040
    %v2080 = vunpack.c.h.b16 %v2040
    %v2081 = vunpack.c.l.b16 %v2041
    %v2082 = vunpack.c.h.b16 %v2041
    %v2083 = vunpack.c.l.b16 %v2042
    %v2084 = vunpack.c.h.b16 %v2042
    %v2085 = vunpack.c.l.b16 %v2043
    %v2086 = vunpack.c.h.b16 %v2043
    %v2087 = vunpack.c.l.b16 %v2044
    %v2088 = vunpack.c.h.b16 %v2044
    %v2089 = vunpack.c.l.b16 %v2045
    %v2090 = vunpack.c.h.b16 %v2045
    %v2091 = vunpack.c.l.b16 %v2046
    %v2092 = vunpack.c.h.b16 %v2046
    %v2093 = vunpack.c.l.b16 %v2047
    %v2094 = vunpack.c.h.b16 %v2047
    %v2095 = vunpack.c.l.b16 %v2048
    %v2096 = vunpack.c.h.b16 %v2048
    %v2097 = vpack.c.b16 %v2069, %v2065
    %v2098 = vpack.c.b16 %v2070, %v2066
    %v2099 = vpack.c.b16 %v2071, %v2067
    %v2100 = vpack.c.b16 %v2072, %v2068
    %v2101 = vpack.c.b16 %v2077, %v2073
    %v2102 = vpack.c.b16 %v2078, %v2074
    %v2103 = vpack.c.b16 %v2079, %v2075
    %v2104 = vpack.c.b16 %v2080, %v2076
    %v2105 = vpack.c.b16 %v2085, %v2081
    %v2106 = vpack.c.b16 %v2086, %v2082
    %v2107 = vpack.c.b16 %v2087, %v2083
    %v2108 = vpack.c.b16 %v2088, %v2084
    %v2109 = vpack.c.b16 %v2093, %v2089
    %v2110 = vpack.c.b16 %v2094, %v2090
    %v2111 = vpack.c.b16 %v2095, %v2091
    %v2112 = vpack.c.b16 %v2096, %v2092
    %v2130 = vsel %vm526, %v778, 0
    %2132 = vmatpush.bf16.msra.mxu0 0
    %2133 = vmatpush.bf16.msra.mxu0 0
    %2134 = vmatpush.bf16.msra.mxu0 0
    %2135 = vmatpush.bf16.msra.mxu0 0
    %2136 = vmatpush.bf16.msra.mxu0 %v2109
    %2137 = vmatpush.bf16.msra.mxu0 %v2105
    %2138 = vmatpush.bf16.msra.mxu0 %v2101
    %2139 = vmatpush.bf16.msra.mxu0 %v2097
    %2140 = vmatmul.bf16.gmra.mxu0 %v2130
    %v2141 = vpop.f32.mrf.mxu0
    %v2142 = vadd.f32 0.0, %v2141
    %v2143 = vpop.f32.mrf.mxu0
    %2144 = vdwg.mxu0
    %2145 = vmatpush.bf16.msra.mxu0 0
    %2146 = vmatpush.bf16.msra.mxu0 0
    %2147 = vmatpush.bf16.msra.mxu0 0
    %2148 = vmatpush.bf16.msra.mxu0 0
    %2149 = vmatpush.bf16.msra.mxu0 %v2110
    %2150 = vmatpush.bf16.msra.mxu0 %v2106
    %2151 = vmatpush.bf16.msra.mxu0 %v2102
    %2152 = vmatpush.bf16.msra.mxu0 %v2098
    %2153 = vmatmul.bf16.gmra.mxu0 %v2130
    %v2154 = vpop.f32.mrf.mxu0
    %v2155 = vadd.f32 0.0, %v2154
    %v2156 = vpop.f32.mrf.mxu0
    %2157 = vdwg.mxu0
    %2158 = vmatpush.bf16.msra.mxu0 0
    %2159 = vmatpush.bf16.msra.mxu0 0
    %2160 = vmatpush.bf16.msra.mxu0 0
    %2161 = vmatpush.bf16.msra.mxu0 0
    %2162 = vmatpush.bf16.msra.mxu0 %v2111
    %2163 = vmatpush.bf16.msra.mxu0 %v2107
    %2164 = vmatpush.bf16.msra.mxu0 %v2103
    %2165 = vmatpush.bf16.msra.mxu0 %v2099
    %2166 = vmatmul.bf16.gmra.mxu0 %v2130
    %v2167 = vpop.f32.mrf.mxu0
    %v2168 = vadd.f32 0.0, %v2167
    %v2169 = vpop.f32.mrf.mxu0
    %2170 = vdwg.mxu0
    %2171 = vmatpush.bf16.msra.mxu0 0
    %2172 = vmatpush.bf16.msra.mxu0 0
    %2173 = vmatpush.bf16.msra.mxu0 0
    %2174 = vmatpush.bf16.msra.mxu0 0
    %2175 = vmatpush.bf16.msra.mxu0 %v2112
    %2176 = vmatpush.bf16.msra.mxu0 %v2108
    %2177 = vmatpush.bf16.msra.mxu0 %v2104
    %2178 = vmatpush.bf16.msra.mxu0 %v2100
    %2179 = vmatmul.bf16.gmra.mxu0 %v2130
    %v2180 = vpop.f32.mrf.mxu0
    %v2181 = vadd.f32 0.0, %v2180
    %v2182 = vpop.f32.mrf.mxu0
    %2183 = vdwg.mxu0
    %v2184 = vadd.f32 %v2029, %v2142
    %v2185 = vadd.f32 %v2030, %v2155
    %v2186 = vadd.f32 %v2031, %v2168
    %v2187 = vadd.f32 %v2032, %v2181
    %v2188 = vld [vmem:[%s3 + $0x480] sm:$0xff]
    %v2189 = vld [vmem:[%s3 + $0x488] sm:$0xff]
    %v2190 = vld [vmem:[%s3 + $0x490] sm:$0xff]
    %v2191 = vld [vmem:[%s3 + $0x498] sm:$0xff]
    %v2192 = vld [vmem:[%s3 + $0x4a0] sm:$0xff]
    %v2193 = vld [vmem:[%s3 + $0x4a8] sm:$0xff]
    %v2194 = vld [vmem:[%s3 + $0x4b0] sm:$0xff]
    %v2195 = vld [vmem:[%s3 + $0x4b8] sm:$0xff]
    %v2196 = vld [vmem:[%s3 + $0x4c0] sm:$0xff]
    %v2197 = vld [vmem:[%s3 + $0x4c8] sm:$0xff]
    %v2198 = vld [vmem:[%s3 + $0x4d0] sm:$0xff]
    %v2199 = vld [vmem:[%s3 + $0x4d8] sm:$0xff]
    %v2200 = vld [vmem:[%s3 + $0x4e0] sm:$0xff]
    %v2201 = vld [vmem:[%s3 + $0x4e8] sm:$0xff]
    %v2202 = vld [vmem:[%s3 + $0x4f0] sm:$0xff]
    %v2203 = vld [vmem:[%s3 + $0x4f8] sm:$0xff]
    %v2205 = vunpack.c.l.b16 %v778
    %v2206 = vpack.c.b16 %v2205, %v2205
    %v2207 = vrot.slane %v2206, 1
    %v2224 = vunpack.c.l.b16 %v2188
    %v2225 = vunpack.c.h.b16 %v2188
    %v2226 = vunpack.c.l.b16 %v2189
    %v2227 = vunpack.c.h.b16 %v2189
    %v2228 = vunpack.c.l.b16 %v2190
    %v2229 = vunpack.c.h.b16 %v2190
    %v2230 = vunpack.c.l.b16 %v2191
    %v2231 = vunpack.c.h.b16 %v2191
    %v2232 = vunpack.c.l.b16 %v2192
    %v2233 = vunpack.c.h.b16 %v2192
    %v2234 = vunpack.c.l.b16 %v2193
    %v2235 = vunpack.c.h.b16 %v2193
    %v2236 = vunpack.c.l.b16 %v2194
    %v2237 = vunpack.c.h.b16 %v2194
    %v2238 = vunpack.c.l.b16 %v2195
    %v2239 = vunpack.c.h.b16 %v2195
    %v2240 = vunpack.c.l.b16 %v2196
    %v2241 = vunpack.c.h.b16 %v2196
    %v2242 = vunpack.c.l.b16 %v2197
    %v2243 = vunpack.c.h.b16 %v2197
    %v2244 = vunpack.c.l.b16 %v2198
    %v2245 = vunpack.c.h.b16 %v2198
    %v2246 = vunpack.c.l.b16 %v2199
    %v2247 = vunpack.c.h.b16 %v2199
    %v2248 = vunpack.c.l.b16 %v2200
    %v2249 = vunpack.c.h.b16 %v2200
    %v2250 = vunpack.c.l.b16 %v2201
    %v2251 = vunpack.c.h.b16 %v2201
    %v2252 = vunpack.c.l.b16 %v2202
    %v2253 = vunpack.c.h.b16 %v2202
    %v2254 = vunpack.c.l.b16 %v2203
    %v2255 = vunpack.c.h.b16 %v2203
    %v2256 = vpack.c.b16 %v2228, %v2224
    %v2257 = vpack.c.b16 %v2229, %v2225
    %v2258 = vpack.c.b16 %v2230, %v2226
    %v2259 = vpack.c.b16 %v2231, %v2227
    %v2260 = vpack.c.b16 %v2236, %v2232
    %v2261 = vpack.c.b16 %v2237, %v2233
    %v2262 = vpack.c.b16 %v2238, %v2234
    %v2263 = vpack.c.b16 %v2239, %v2235
    %v2264 = vpack.c.b16 %v2244, %v2240
    %v2265 = vpack.c.b16 %v2245, %v2241
    %v2266 = vpack.c.b16 %v2246, %v2242
    %v2267 = vpack.c.b16 %v2247, %v2243
    %v2268 = vpack.c.b16 %v2252, %v2248
    %v2269 = vpack.c.b16 %v2253, %v2249
    %v2270 = vpack.c.b16 %v2254, %v2250
    %v2271 = vpack.c.b16 %v2255, %v2251
    %v2289 = vsel %vm526, %v2207, 0
    %2291 = vmatpush.bf16.msra.mxu0 0
    %2292 = vmatpush.bf16.msra.mxu0 0
    %2293 = vmatpush.bf16.msra.mxu0 0
    %2294 = vmatpush.bf16.msra.mxu0 0
    %2295 = vmatpush.bf16.msra.mxu0 %v2268
    %2296 = vmatpush.bf16.msra.mxu0 %v2264
    %2297 = vmatpush.bf16.msra.mxu0 %v2260
    %2298 = vmatpush.bf16.msra.mxu0 %v2256
    %2299 = vmatmul.bf16.gmra.mxu0 %v2289
    %v2300 = vpop.f32.mrf.mxu0
    %v2301 = vadd.f32 0.0, %v2300
    %v2302 = vpop.f32.mrf.mxu0
    %2303 = vdwg.mxu0
    %2304 = vmatpush.bf16.msra.mxu0 0
    %2305 = vmatpush.bf16.msra.mxu0 0
    %2306 = vmatpush.bf16.msra.mxu0 0
    %2307 = vmatpush.bf16.msra.mxu0 0
    %2308 = vmatpush.bf16.msra.mxu0 %v2269
    %2309 = vmatpush.bf16.msra.mxu0 %v2265
    %2310 = vmatpush.bf16.msra.mxu0 %v2261
    %2311 = vmatpush.bf16.msra.mxu0 %v2257
    %2312 = vmatmul.bf16.gmra.mxu0 %v2289
    %v2313 = vpop.f32.mrf.mxu0
    %v2314 = vadd.f32 0.0, %v2313
    %v2315 = vpop.f32.mrf.mxu0
    %2316 = vdwg.mxu0
    %2317 = vmatpush.bf16.msra.mxu0 0
    %2318 = vmatpush.bf16.msra.mxu0 0
    %2319 = vmatpush.bf16.msra.mxu0 0
    %2320 = vmatpush.bf16.msra.mxu0 0
    %2321 = vmatpush.bf16.msra.mxu0 %v2270
    %2322 = vmatpush.bf16.msra.mxu0 %v2266
    %2323 = vmatpush.bf16.msra.mxu0 %v2262
    %2324 = vmatpush.bf16.msra.mxu0 %v2258
    %2325 = vmatmul.bf16.gmra.mxu0 %v2289
    %v2326 = vpop.f32.mrf.mxu0
    %v2327 = vadd.f32 0.0, %v2326
    %v2328 = vpop.f32.mrf.mxu0
    %2329 = vdwg.mxu0
    %2330 = vmatpush.bf16.msra.mxu0 0
    %2331 = vmatpush.bf16.msra.mxu0 0
    %2332 = vmatpush.bf16.msra.mxu0 0
    %2333 = vmatpush.bf16.msra.mxu0 0
    %2334 = vmatpush.bf16.msra.mxu0 %v2271
    %2335 = vmatpush.bf16.msra.mxu0 %v2267
    %2336 = vmatpush.bf16.msra.mxu0 %v2263
    %2337 = vmatpush.bf16.msra.mxu0 %v2259
    %2338 = vmatmul.bf16.gmra.mxu0 %v2289
    %v2339 = vpop.f32.mrf.mxu0
    %v2340 = vadd.f32 0.0, %v2339
    %v2341 = vpop.f32.mrf.mxu0
    %2342 = vdwg.mxu0
    %v2343 = vadd.f32 %v2184, %v2301
    %v2344 = vadd.f32 %v2185, %v2314
    %v2345 = vadd.f32 %v2186, %v2327
    %v2346 = vadd.f32 %v2187, %v2340
    %v2347 = vld [vmem:[%s3 + $0x500] sm:$0xff]
    %v2348 = vld [vmem:[%s3 + $0x508] sm:$0xff]
    %v2349 = vld [vmem:[%s3 + $0x510] sm:$0xff]
    %v2350 = vld [vmem:[%s3 + $0x518] sm:$0xff]
    %v2351 = vld [vmem:[%s3 + $0x520] sm:$0xff]
    %v2352 = vld [vmem:[%s3 + $0x528] sm:$0xff]
    %v2353 = vld [vmem:[%s3 + $0x530] sm:$0xff]
    %v2354 = vld [vmem:[%s3 + $0x538] sm:$0xff]
    %v2355 = vld [vmem:[%s3 + $0x540] sm:$0xff]
    %v2356 = vld [vmem:[%s3 + $0x548] sm:$0xff]
    %v2357 = vld [vmem:[%s3 + $0x550] sm:$0xff]
    %v2358 = vld [vmem:[%s3 + $0x558] sm:$0xff]
    %v2359 = vld [vmem:[%s3 + $0x560] sm:$0xff]
    %v2360 = vld [vmem:[%s3 + $0x568] sm:$0xff]
    %v2361 = vld [vmem:[%s3 + $0x570] sm:$0xff]
    %v2362 = vld [vmem:[%s3 + $0x578] sm:$0xff]
    %v2363 = vrot.slane %v2206, 2
    %v2380 = vunpack.c.l.b16 %v2347
    %v2381 = vunpack.c.h.b16 %v2347
    %v2382 = vunpack.c.l.b16 %v2348
    %v2383 = vunpack.c.h.b16 %v2348
    %v2384 = vunpack.c.l.b16 %v2349
    %v2385 = vunpack.c.h.b16 %v2349
    %v2386 = vunpack.c.l.b16 %v2350
    %v2387 = vunpack.c.h.b16 %v2350
    %v2388 = vunpack.c.l.b16 %v2351
    %v2389 = vunpack.c.h.b16 %v2351
    %v2390 = vunpack.c.l.b16 %v2352
    %v2391 = vunpack.c.h.b16 %v2352
    %v2392 = vunpack.c.l.b16 %v2353
    %v2393 = vunpack.c.h.b16 %v2353
    %v2394 = vunpack.c.l.b16 %v2354
    %v2395 = vunpack.c.h.b16 %v2354
    %v2396 = vunpack.c.l.b16 %v2355
    %v2397 = vunpack.c.h.b16 %v2355
    %v2398 = vunpack.c.l.b16 %v2356
    %v2399 = vunpack.c.h.b16 %v2356
    %v2400 = vunpack.c.l.b16 %v2357
    %v2401 = vunpack.c.h.b16 %v2357
    %v2402 = vunpack.c.l.b16 %v2358
    %v2403 = vunpack.c.h.b16 %v2358
    %v2404 = vunpack.c.l.b16 %v2359
    %v2405 = vunpack.c.h.b16 %v2359
    %v2406 = vunpack.c.l.b16 %v2360
    %v2407 = vunpack.c.h.b16 %v2360
    %v2408 = vunpack.c.l.b16 %v2361
    %v2409 = vunpack.c.h.b16 %v2361
    %v2410 = vunpack.c.l.b16 %v2362
    %v2411 = vunpack.c.h.b16 %v2362
    %v2412 = vpack.c.b16 %v2384, %v2380
    %v2413 = vpack.c.b16 %v2385, %v2381
    %v2414 = vpack.c.b16 %v2386, %v2382
    %v2415 = vpack.c.b16 %v2387, %v2383
    %v2416 = vpack.c.b16 %v2392, %v2388
    %v2417 = vpack.c.b16 %v2393, %v2389
    %v2418 = vpack.c.b16 %v2394, %v2390
    %v2419 = vpack.c.b16 %v2395, %v2391
    %v2420 = vpack.c.b16 %v2400, %v2396
    %v2421 = vpack.c.b16 %v2401, %v2397
    %v2422 = vpack.c.b16 %v2402, %v2398
    %v2423 = vpack.c.b16 %v2403, %v2399
    %v2424 = vpack.c.b16 %v2408, %v2404
    %v2425 = vpack.c.b16 %v2409, %v2405
    %v2426 = vpack.c.b16 %v2410, %v2406
    %v2427 = vpack.c.b16 %v2411, %v2407
    %v2445 = vsel %vm526, %v2363, 0
    %2447 = vmatpush.bf16.msra.mxu0 0
    %2448 = vmatpush.bf16.msra.mxu0 0
    %2449 = vmatpush.bf16.msra.mxu0 0
    %2450 = vmatpush.bf16.msra.mxu0 0
    %2451 = vmatpush.bf16.msra.mxu0 %v2424
    %2452 = vmatpush.bf16.msra.mxu0 %v2420
    %2453 = vmatpush.bf16.msra.mxu0 %v2416
    %2454 = vmatpush.bf16.msra.mxu0 %v2412
    %2455 = vmatmul.bf16.gmra.mxu0 %v2445
    %v2456 = vpop.f32.mrf.mxu0
    %v2457 = vadd.f32 0.0, %v2456
    %v2458 = vpop.f32.mrf.mxu0
    %2459 = vdwg.mxu0
    %2460 = vmatpush.bf16.msra.mxu0 0
    %2461 = vmatpush.bf16.msra.mxu0 0
    %2462 = vmatpush.bf16.msra.mxu0 0
    %2463 = vmatpush.bf16.msra.mxu0 0
    %2464 = vmatpush.bf16.msra.mxu0 %v2425
    %2465 = vmatpush.bf16.msra.mxu0 %v2421
    %2466 = vmatpush.bf16.msra.mxu0 %v2417
    %2467 = vmatpush.bf16.msra.mxu0 %v2413
    %2468 = vmatmul.bf16.gmra.mxu0 %v2445
    %v2469 = vpop.f32.mrf.mxu0
    %v2470 = vadd.f32 0.0, %v2469
    %v2471 = vpop.f32.mrf.mxu0
    %2472 = vdwg.mxu0
    %2473 = vmatpush.bf16.msra.mxu0 0
    %2474 = vmatpush.bf16.msra.mxu0 0
    %2475 = vmatpush.bf16.msra.mxu0 0
    %2476 = vmatpush.bf16.msra.mxu0 0
    %2477 = vmatpush.bf16.msra.mxu0 %v2426
    %2478 = vmatpush.bf16.msra.mxu0 %v2422
    %2479 = vmatpush.bf16.msra.mxu0 %v2418
    %2480 = vmatpush.bf16.msra.mxu0 %v2414
    %2481 = vmatmul.bf16.gmra.mxu0 %v2445
    %v2482 = vpop.f32.mrf.mxu0
    %v2483 = vadd.f32 0.0, %v2482
    %v2484 = vpop.f32.mrf.mxu0
    %2485 = vdwg.mxu0
    %2486 = vmatpush.bf16.msra.mxu0 0
    %2487 = vmatpush.bf16.msra.mxu0 0
    %2488 = vmatpush.bf16.msra.mxu0 0
    %2489 = vmatpush.bf16.msra.mxu0 0
    %2490 = vmatpush.bf16.msra.mxu0 %v2427
    %2491 = vmatpush.bf16.msra.mxu0 %v2423
    %2492 = vmatpush.bf16.msra.mxu0 %v2419
    %2493 = vmatpush.bf16.msra.mxu0 %v2415
    %2494 = vmatmul.bf16.gmra.mxu0 %v2445
    %v2495 = vpop.f32.mrf.mxu0
    %v2496 = vadd.f32 0.0, %v2495
    %v2497 = vpop.f32.mrf.mxu0
    %2498 = vdwg.mxu0
    %v2499 = vadd.f32 %v2343, %v2457
    %v2500 = vadd.f32 %v2344, %v2470
    %v2501 = vadd.f32 %v2345, %v2483
    %v2502 = vadd.f32 %v2346, %v2496
    %v2503 = vld [vmem:[%s3 + $0x580] sm:$0xff]
    %v2504 = vld [vmem:[%s3 + $0x588] sm:$0xff]
    %v2505 = vld [vmem:[%s3 + $0x590] sm:$0xff]
    %v2506 = vld [vmem:[%s3 + $0x598] sm:$0xff]
    %v2507 = vld [vmem:[%s3 + $0x5a0] sm:$0xff]
    %v2508 = vld [vmem:[%s3 + $0x5a8] sm:$0xff]
    %v2509 = vld [vmem:[%s3 + $0x5b0] sm:$0xff]
    %v2510 = vld [vmem:[%s3 + $0x5b8] sm:$0xff]
    %v2511 = vld [vmem:[%s3 + $0x5c0] sm:$0xff]
    %v2512 = vld [vmem:[%s3 + $0x5c8] sm:$0xff]
    %v2513 = vld [vmem:[%s3 + $0x5d0] sm:$0xff]
    %v2514 = vld [vmem:[%s3 + $0x5d8] sm:$0xff]
    %v2515 = vld [vmem:[%s3 + $0x5e0] sm:$0xff]
    %v2516 = vld [vmem:[%s3 + $0x5e8] sm:$0xff]
    %v2517 = vld [vmem:[%s3 + $0x5f0] sm:$0xff]
    %v2518 = vld [vmem:[%s3 + $0x5f8] sm:$0xff]
    %v2519 = vrot.slane %v2206, 3
    %v2536 = vunpack.c.l.b16 %v2503
    %v2537 = vunpack.c.h.b16 %v2503
    %v2538 = vunpack.c.l.b16 %v2504
    %v2539 = vunpack.c.h.b16 %v2504
    %v2540 = vunpack.c.l.b16 %v2505
    %v2541 = vunpack.c.h.b16 %v2505
    %v2542 = vunpack.c.l.b16 %v2506
    %v2543 = vunpack.c.h.b16 %v2506
    %v2544 = vunpack.c.l.b16 %v2507
    %v2545 = vunpack.c.h.b16 %v2507
    %v2546 = vunpack.c.l.b16 %v2508
    %v2547 = vunpack.c.h.b16 %v2508
    %v2548 = vunpack.c.l.b16 %v2509
    %v2549 = vunpack.c.h.b16 %v2509
    %v2550 = vunpack.c.l.b16 %v2510
    %v2551 = vunpack.c.h.b16 %v2510
    %v2552 = vunpack.c.l.b16 %v2511
    %v2553 = vunpack.c.h.b16 %v2511
    %v2554 = vunpack.c.l.b16 %v2512
    %v2555 = vunpack.c.h.b16 %v2512
    %v2556 = vunpack.c.l.b16 %v2513
    %v2557 = vunpack.c.h.b16 %v2513
    %v2558 = vunpack.c.l.b16 %v2514
    %v2559 = vunpack.c.h.b16 %v2514
    %v2560 = vunpack.c.l.b16 %v2515
    %v2561 = vunpack.c.h.b16 %v2515
    %v2562 = vunpack.c.l.b16 %v2516
    %v2563 = vunpack.c.h.b16 %v2516
    %v2564 = vunpack.c.l.b16 %v2517
    %v2565 = vunpack.c.h.b16 %v2517
    %v2566 = vunpack.c.l.b16 %v2518
    %v2567 = vunpack.c.h.b16 %v2518
    %v2568 = vpack.c.b16 %v2540, %v2536
    %v2569 = vpack.c.b16 %v2541, %v2537
    %v2570 = vpack.c.b16 %v2542, %v2538
    %v2571 = vpack.c.b16 %v2543, %v2539
    %v2572 = vpack.c.b16 %v2548, %v2544
    %v2573 = vpack.c.b16 %v2549, %v2545
    %v2574 = vpack.c.b16 %v2550, %v2546
    %v2575 = vpack.c.b16 %v2551, %v2547
    %v2576 = vpack.c.b16 %v2556, %v2552
    %v2577 = vpack.c.b16 %v2557, %v2553
    %v2578 = vpack.c.b16 %v2558, %v2554
    %v2579 = vpack.c.b16 %v2559, %v2555
    %v2580 = vpack.c.b16 %v2564, %v2560
    %v2581 = vpack.c.b16 %v2565, %v2561
    %v2582 = vpack.c.b16 %v2566, %v2562
    %v2583 = vpack.c.b16 %v2567, %v2563
    %v2601 = vsel %vm526, %v2519, 0
    %2603 = vmatpush.bf16.msra.mxu0 0
    %2604 = vmatpush.bf16.msra.mxu0 0
    %2605 = vmatpush.bf16.msra.mxu0 0
    %2606 = vmatpush.bf16.msra.mxu0 0
    %2607 = vmatpush.bf16.msra.mxu0 %v2580
    %2608 = vmatpush.bf16.msra.mxu0 %v2576
    %2609 = vmatpush.bf16.msra.mxu0 %v2572
    %2610 = vmatpush.bf16.msra.mxu0 %v2568
    %2611 = vmatmul.bf16.gmra.mxu0 %v2601
    %v2612 = vpop.f32.mrf.mxu0
    %v2613 = vadd.f32 0.0, %v2612
    %v2614 = vpop.f32.mrf.mxu0
    %2615 = vdwg.mxu0
    %2616 = vmatpush.bf16.msra.mxu0 0
    %2617 = vmatpush.bf16.msra.mxu0 0
    %2618 = vmatpush.bf16.msra.mxu0 0
    %2619 = vmatpush.bf16.msra.mxu0 0
    %2620 = vmatpush.bf16.msra.mxu0 %v2581
    %2621 = vmatpush.bf16.msra.mxu0 %v2577
    %2622 = vmatpush.bf16.msra.mxu0 %v2573
    %2623 = vmatpush.bf16.msra.mxu0 %v2569
    %2624 = vmatmul.bf16.gmra.mxu0 %v2601
    %v2625 = vpop.f32.mrf.mxu0
    %v2626 = vadd.f32 0.0, %v2625
    %v2627 = vpop.f32.mrf.mxu0
    %2628 = vdwg.mxu0
    %2629 = vmatpush.bf16.msra.mxu0 0
    %2630 = vmatpush.bf16.msra.mxu0 0
    %2631 = vmatpush.bf16.msra.mxu0 0
    %2632 = vmatpush.bf16.msra.mxu0 0
    %2633 = vmatpush.bf16.msra.mxu0 %v2582
    %2634 = vmatpush.bf16.msra.mxu0 %v2578
    %2635 = vmatpush.bf16.msra.mxu0 %v2574
    %2636 = vmatpush.bf16.msra.mxu0 %v2570
    %2637 = vmatmul.bf16.gmra.mxu0 %v2601
    %v2638 = vpop.f32.mrf.mxu0
    %v2639 = vadd.f32 0.0, %v2638
    %v2640 = vpop.f32.mrf.mxu0
    %2641 = vdwg.mxu0
    %2642 = vmatpush.bf16.msra.mxu0 0
    %2643 = vmatpush.bf16.msra.mxu0 0
    %2644 = vmatpush.bf16.msra.mxu0 0
    %2645 = vmatpush.bf16.msra.mxu0 0
    %2646 = vmatpush.bf16.msra.mxu0 %v2583
    %2647 = vmatpush.bf16.msra.mxu0 %v2579
    %2648 = vmatpush.bf16.msra.mxu0 %v2575
    %2649 = vmatpush.bf16.msra.mxu0 %v2571
    %2650 = vmatmul.bf16.gmra.mxu0 %v2601
    %v2651 = vpop.f32.mrf.mxu0
    %v2652 = vadd.f32 0.0, %v2651
    %v2653 = vpop.f32.mrf.mxu0
    %2654 = vdwg.mxu0
    %v2655 = vadd.f32 %v2499, %v2613
    %v2656 = vadd.f32 %v2500, %v2626
    %v2657 = vadd.f32 %v2501, %v2639
    %v2658 = vadd.f32 %v2502, %v2652
    %v2659 = vld [vmem:[%s3 + $0x600] sm:$0xff]
    %v2660 = vld [vmem:[%s3 + $0x608] sm:$0xff]
    %v2661 = vld [vmem:[%s3 + $0x610] sm:$0xff]
    %v2662 = vld [vmem:[%s3 + $0x618] sm:$0xff]
    %v2663 = vld [vmem:[%s3 + $0x620] sm:$0xff]
    %v2664 = vld [vmem:[%s3 + $0x628] sm:$0xff]
    %v2665 = vld [vmem:[%s3 + $0x630] sm:$0xff]
    %v2666 = vld [vmem:[%s3 + $0x638] sm:$0xff]
    %v2667 = vld [vmem:[%s3 + $0x640] sm:$0xff]
    %v2668 = vld [vmem:[%s3 + $0x648] sm:$0xff]
    %v2669 = vld [vmem:[%s3 + $0x650] sm:$0xff]
    %v2670 = vld [vmem:[%s3 + $0x658] sm:$0xff]
    %v2671 = vld [vmem:[%s3 + $0x660] sm:$0xff]
    %v2672 = vld [vmem:[%s3 + $0x668] sm:$0xff]
    %v2673 = vld [vmem:[%s3 + $0x670] sm:$0xff]
    %v2674 = vld [vmem:[%s3 + $0x678] sm:$0xff]
    %v2691 = vunpack.c.l.b16 %v2659
    %v2692 = vunpack.c.h.b16 %v2659
    %v2693 = vunpack.c.l.b16 %v2660
    %v2694 = vunpack.c.h.b16 %v2660
    %v2695 = vunpack.c.l.b16 %v2661
    %v2696 = vunpack.c.h.b16 %v2661
    %v2697 = vunpack.c.l.b16 %v2662
    %v2698 = vunpack.c.h.b16 %v2662
    %v2699 = vunpack.c.l.b16 %v2663
    %v2700 = vunpack.c.h.b16 %v2663
    %v2701 = vunpack.c.l.b16 %v2664
    %v2702 = vunpack.c.h.b16 %v2664
    %v2703 = vunpack.c.l.b16 %v2665
    %v2704 = vunpack.c.h.b16 %v2665
    %v2705 = vunpack.c.l.b16 %v2666
    %v2706 = vunpack.c.h.b16 %v2666
    %v2707 = vunpack.c.l.b16 %v2667
    %v2708 = vunpack.c.h.b16 %v2667
    %v2709 = vunpack.c.l.b16 %v2668
    %v2710 = vunpack.c.h.b16 %v2668
    %v2711 = vunpack.c.l.b16 %v2669
    %v2712 = vunpack.c.h.b16 %v2669
    %v2713 = vunpack.c.l.b16 %v2670
    %v2714 = vunpack.c.h.b16 %v2670
    %v2715 = vunpack.c.l.b16 %v2671
    %v2716 = vunpack.c.h.b16 %v2671
    %v2717 = vunpack.c.l.b16 %v2672
    %v2718 = vunpack.c.h.b16 %v2672
    %v2719 = vunpack.c.l.b16 %v2673
    %v2720 = vunpack.c.h.b16 %v2673
    %v2721 = vunpack.c.l.b16 %v2674
    %v2722 = vunpack.c.h.b16 %v2674
    %v2723 = vpack.c.b16 %v2695, %v2691
    %v2724 = vpack.c.b16 %v2696, %v2692
    %v2725 = vpack.c.b16 %v2697, %v2693
    %v2726 = vpack.c.b16 %v2698, %v2694
    %v2727 = vpack.c.b16 %v2703, %v2699
    %v2728 = vpack.c.b16 %v2704, %v2700
    %v2729 = vpack.c.b16 %v2705, %v2701
    %v2730 = vpack.c.b16 %v2706, %v2702
    %v2731 = vpack.c.b16 %v2711, %v2707
    %v2732 = vpack.c.b16 %v2712, %v2708
    %v2733 = vpack.c.b16 %v2713, %v2709
    %v2734 = vpack.c.b16 %v2714, %v2710
    %v2735 = vpack.c.b16 %v2719, %v2715
    %v2736 = vpack.c.b16 %v2720, %v2716
    %v2737 = vpack.c.b16 %v2721, %v2717
    %v2738 = vpack.c.b16 %v2722, %v2718
    %v2756 = vsel %vm526, %v779, 0
    %2758 = vmatpush.bf16.msra.mxu0 0
    %2759 = vmatpush.bf16.msra.mxu0 0
    %2760 = vmatpush.bf16.msra.mxu0 0
    %2761 = vmatpush.bf16.msra.mxu0 0
    %2762 = vmatpush.bf16.msra.mxu0 %v2735
    %2763 = vmatpush.bf16.msra.mxu0 %v2731
    %2764 = vmatpush.bf16.msra.mxu0 %v2727
    %2765 = vmatpush.bf16.msra.mxu0 %v2723
    %2766 = vmatmul.bf16.gmra.mxu0 %v2756
    %v2767 = vpop.f32.mrf.mxu0
    %v2768 = vadd.f32 0.0, %v2767
    %v2769 = vpop.f32.mrf.mxu0
    %2770 = vdwg.mxu0
    %2771 = vmatpush.bf16.msra.mxu0 0
    %2772 = vmatpush.bf16.msra.mxu0 0
    %2773 = vmatpush.bf16.msra.mxu0 0
    %2774 = vmatpush.bf16.msra.mxu0 0
    %2775 = vmatpush.bf16.msra.mxu0 %v2736
    %2776 = vmatpush.bf16.msra.mxu0 %v2732
    %2777 = vmatpush.bf16.msra.mxu0 %v2728
    %2778 = vmatpush.bf16.msra.mxu0 %v2724
    %2779 = vmatmul.bf16.gmra.mxu0 %v2756
    %v2780 = vpop.f32.mrf.mxu0
    %v2781 = vadd.f32 0.0, %v2780
    %v2782 = vpop.f32.mrf.mxu0
    %2783 = vdwg.mxu0
    %2784 = vmatpush.bf16.msra.mxu0 0
    %2785 = vmatpush.bf16.msra.mxu0 0
    %2786 = vmatpush.bf16.msra.mxu0 0
    %2787 = vmatpush.bf16.msra.mxu0 0
    %2788 = vmatpush.bf16.msra.mxu0 %v2737
    %2789 = vmatpush.bf16.msra.mxu0 %v2733
    %2790 = vmatpush.bf16.msra.mxu0 %v2729
    %2791 = vmatpush.bf16.msra.mxu0 %v2725
    %2792 = vmatmul.bf16.gmra.mxu0 %v2756
    %v2793 = vpop.f32.mrf.mxu0
    %v2794 = vadd.f32 0.0, %v2793
    %v2795 = vpop.f32.mrf.mxu0
    %2796 = vdwg.mxu0
    %2797 = vmatpush.bf16.msra.mxu0 0
    %2798 = vmatpush.bf16.msra.mxu0 0
    %2799 = vmatpush.bf16.msra.mxu0 0
    %2800 = vmatpush.bf16.msra.mxu0 0
    %2801 = vmatpush.bf16.msra.mxu0 %v2738
    %2802 = vmatpush.bf16.msra.mxu0 %v2734
    %2803 = vmatpush.bf16.msra.mxu0 %v2730
    %2804 = vmatpush.bf16.msra.mxu0 %v2726
    %2805 = vmatmul.bf16.gmra.mxu0 %v2756
    %v2806 = vpop.f32.mrf.mxu0
    %v2807 = vadd.f32 0.0, %v2806
    %v2808 = vpop.f32.mrf.mxu0
    %2809 = vdwg.mxu0
    %v2810 = vadd.f32 %v2655, %v2768
    %v2811 = vadd.f32 %v2656, %v2781
    %v2812 = vadd.f32 %v2657, %v2794
    %v2813 = vadd.f32 %v2658, %v2807
    %v2814 = vld [vmem:[%s3 + $0x680] sm:$0xff]
    %v2815 = vld [vmem:[%s3 + $0x688] sm:$0xff]
    %v2816 = vld [vmem:[%s3 + $0x690] sm:$0xff]
    %v2817 = vld [vmem:[%s3 + $0x698] sm:$0xff]
    %v2818 = vld [vmem:[%s3 + $0x6a0] sm:$0xff]
    %v2819 = vld [vmem:[%s3 + $0x6a8] sm:$0xff]
    %v2820 = vld [vmem:[%s3 + $0x6b0] sm:$0xff]
    %v2821 = vld [vmem:[%s3 + $0x6b8] sm:$0xff]
    %v2822 = vld [vmem:[%s3 + $0x6c0] sm:$0xff]
    %v2823 = vld [vmem:[%s3 + $0x6c8] sm:$0xff]
    %v2824 = vld [vmem:[%s3 + $0x6d0] sm:$0xff]
    %v2825 = vld [vmem:[%s3 + $0x6d8] sm:$0xff]
    %v2826 = vld [vmem:[%s3 + $0x6e0] sm:$0xff]
    %v2827 = vld [vmem:[%s3 + $0x6e8] sm:$0xff]
    %v2828 = vld [vmem:[%s3 + $0x6f0] sm:$0xff]
    %v2829 = vld [vmem:[%s3 + $0x6f8] sm:$0xff]
    %v2831 = vunpack.c.l.b16 %v779
    %v2832 = vpack.c.b16 %v2831, %v2831
    %v2833 = vrot.slane %v2832, 1
    %v2850 = vunpack.c.l.b16 %v2814
    %v2851 = vunpack.c.h.b16 %v2814
    %v2852 = vunpack.c.l.b16 %v2815
    %v2853 = vunpack.c.h.b16 %v2815
    %v2854 = vunpack.c.l.b16 %v2816
    %v2855 = vunpack.c.h.b16 %v2816
    %v2856 = vunpack.c.l.b16 %v2817
    %v2857 = vunpack.c.h.b16 %v2817
    %v2858 = vunpack.c.l.b16 %v2818
    %v2859 = vunpack.c.h.b16 %v2818
    %v2860 = vunpack.c.l.b16 %v2819
    %v2861 = vunpack.c.h.b16 %v2819
    %v2862 = vunpack.c.l.b16 %v2820
    %v2863 = vunpack.c.h.b16 %v2820
    %v2864 = vunpack.c.l.b16 %v2821
    %v2865 = vunpack.c.h.b16 %v2821
    %v2866 = vunpack.c.l.b16 %v2822
    %v2867 = vunpack.c.h.b16 %v2822
    %v2868 = vunpack.c.l.b16 %v2823
    %v2869 = vunpack.c.h.b16 %v2823
    %v2870 = vunpack.c.l.b16 %v2824
    %v2871 = vunpack.c.h.b16 %v2824
    %v2872 = vunpack.c.l.b16 %v2825
    %v2873 = vunpack.c.h.b16 %v2825
    %v2874 = vunpack.c.l.b16 %v2826
    %v2875 = vunpack.c.h.b16 %v2826
    %v2876 = vunpack.c.l.b16 %v2827
    %v2877 = vunpack.c.h.b16 %v2827
    %v2878 = vunpack.c.l.b16 %v2828
    %v2879 = vunpack.c.h.b16 %v2828
    %v2880 = vunpack.c.l.b16 %v2829
    %v2881 = vunpack.c.h.b16 %v2829
    %v2882 = vpack.c.b16 %v2854, %v2850
    %v2883 = vpack.c.b16 %v2855, %v2851
    %v2884 = vpack.c.b16 %v2856, %v2852
    %v2885 = vpack.c.b16 %v2857, %v2853
    %v2886 = vpack.c.b16 %v2862, %v2858
    %v2887 = vpack.c.b16 %v2863, %v2859
    %v2888 = vpack.c.b16 %v2864, %v2860
    %v2889 = vpack.c.b16 %v2865, %v2861
    %v2890 = vpack.c.b16 %v2870, %v2866
    %v2891 = vpack.c.b16 %v2871, %v2867
    %v2892 = vpack.c.b16 %v2872, %v2868
    %v2893 = vpack.c.b16 %v2873, %v2869
    %v2894 = vpack.c.b16 %v2878, %v2874
    %v2895 = vpack.c.b16 %v2879, %v2875
    %v2896 = vpack.c.b16 %v2880, %v2876
    %v2897 = vpack.c.b16 %v2881, %v2877
    %v2915 = vsel %vm526, %v2833, 0
    %2917 = vmatpush.bf16.msra.mxu0 0
    %2918 = vmatpush.bf16.msra.mxu0 0
    %2919 = vmatpush.bf16.msra.mxu0 0
    %2920 = vmatpush.bf16.msra.mxu0 0
    %2921 = vmatpush.bf16.msra.mxu0 %v2894
    %2922 = vmatpush.bf16.msra.mxu0 %v2890
    %2923 = vmatpush.bf16.msra.mxu0 %v2886
    %2924 = vmatpush.bf16.msra.mxu0 %v2882
    %2925 = vmatmul.bf16.gmra.mxu0 %v2915
    %v2926 = vpop.f32.mrf.mxu0
    %v2927 = vadd.f32 0.0, %v2926
    %v2928 = vpop.f32.mrf.mxu0
    %2929 = vdwg.mxu0
    %2930 = vmatpush.bf16.msra.mxu0 0
    %2931 = vmatpush.bf16.msra.mxu0 0
    %2932 = vmatpush.bf16.msra.mxu0 0
    %2933 = vmatpush.bf16.msra.mxu0 0
    %2934 = vmatpush.bf16.msra.mxu0 %v2895
    %2935 = vmatpush.bf16.msra.mxu0 %v2891
    %2936 = vmatpush.bf16.msra.mxu0 %v2887
    %2937 = vmatpush.bf16.msra.mxu0 %v2883
    %2938 = vmatmul.bf16.gmra.mxu0 %v2915
    %v2939 = vpop.f32.mrf.mxu0
    %v2940 = vadd.f32 0.0, %v2939
    %v2941 = vpop.f32.mrf.mxu0
    %2942 = vdwg.mxu0
    %2943 = vmatpush.bf16.msra.mxu0 0
    %2944 = vmatpush.bf16.msra.mxu0 0
    %2945 = vmatpush.bf16.msra.mxu0 0
    %2946 = vmatpush.bf16.msra.mxu0 0
    %2947 = vmatpush.bf16.msra.mxu0 %v2896
    %2948 = vmatpush.bf16.msra.mxu0 %v2892
    %2949 = vmatpush.bf16.msra.mxu0 %v2888
    %2950 = vmatpush.bf16.msra.mxu0 %v2884
    %2951 = vmatmul.bf16.gmra.mxu0 %v2915
    %v2952 = vpop.f32.mrf.mxu0
    %v2953 = vadd.f32 0.0, %v2952
    %v2954 = vpop.f32.mrf.mxu0
    %2955 = vdwg.mxu0
    %2956 = vmatpush.bf16.msra.mxu0 0
    %2957 = vmatpush.bf16.msra.mxu0 0
    %2958 = vmatpush.bf16.msra.mxu0 0
    %2959 = vmatpush.bf16.msra.mxu0 0
    %2960 = vmatpush.bf16.msra.mxu0 %v2897
    %2961 = vmatpush.bf16.msra.mxu0 %v2893
    %2962 = vmatpush.bf16.msra.mxu0 %v2889
    %2963 = vmatpush.bf16.msra.mxu0 %v2885
    %2964 = vmatmul.bf16.gmra.mxu0 %v2915
    %v2965 = vpop.f32.mrf.mxu0
    %v2966 = vadd.f32 0.0, %v2965
    %v2967 = vpop.f32.mrf.mxu0
    %2968 = vdwg.mxu0
    %v2969 = vadd.f32 %v2810, %v2927
    %v2970 = vadd.f32 %v2811, %v2940
    %v2971 = vadd.f32 %v2812, %v2953
    %v2972 = vadd.f32 %v2813, %v2966
    %v2973 = vld [vmem:[%s3 + $0x700] sm:$0xff]
    %v2974 = vld [vmem:[%s3 + $0x708] sm:$0xff]
    %v2975 = vld [vmem:[%s3 + $0x710] sm:$0xff]
    %v2976 = vld [vmem:[%s3 + $0x718] sm:$0xff]
    %v2977 = vld [vmem:[%s3 + $0x720] sm:$0xff]
    %v2978 = vld [vmem:[%s3 + $0x728] sm:$0xff]
    %v2979 = vld [vmem:[%s3 + $0x730] sm:$0xff]
    %v2980 = vld [vmem:[%s3 + $0x738] sm:$0xff]
    %v2981 = vld [vmem:[%s3 + $0x740] sm:$0xff]
    %v2982 = vld [vmem:[%s3 + $0x748] sm:$0xff]
    %v2983 = vld [vmem:[%s3 + $0x750] sm:$0xff]
    %v2984 = vld [vmem:[%s3 + $0x758] sm:$0xff]
    %v2985 = vld [vmem:[%s3 + $0x760] sm:$0xff]
    %v2986 = vld [vmem:[%s3 + $0x768] sm:$0xff]
    %v2987 = vld [vmem:[%s3 + $0x770] sm:$0xff]
    %v2988 = vld [vmem:[%s3 + $0x778] sm:$0xff]
    %v2989 = vrot.slane %v2832, 2
    %v3006 = vunpack.c.l.b16 %v2973
    %v3007 = vunpack.c.h.b16 %v2973
    %v3008 = vunpack.c.l.b16 %v2974
    %v3009 = vunpack.c.h.b16 %v2974
    %v3010 = vunpack.c.l.b16 %v2975
    %v3011 = vunpack.c.h.b16 %v2975
    %v3012 = vunpack.c.l.b16 %v2976
    %v3013 = vunpack.c.h.b16 %v2976
    %v3014 = vunpack.c.l.b16 %v2977
    %v3015 = vunpack.c.h.b16 %v2977
    %v3016 = vunpack.c.l.b16 %v2978
    %v3017 = vunpack.c.h.b16 %v2978
    %v3018 = vunpack.c.l.b16 %v2979
    %v3019 = vunpack.c.h.b16 %v2979
    %v3020 = vunpack.c.l.b16 %v2980
    %v3021 = vunpack.c.h.b16 %v2980
    %v3022 = vunpack.c.l.b16 %v2981
    %v3023 = vunpack.c.h.b16 %v2981
    %v3024 = vunpack.c.l.b16 %v2982
    %v3025 = vunpack.c.h.b16 %v2982
    %v3026 = vunpack.c.l.b16 %v2983
    %v3027 = vunpack.c.h.b16 %v2983
    %v3028 = vunpack.c.l.b16 %v2984
    %v3029 = vunpack.c.h.b16 %v2984
    %v3030 = vunpack.c.l.b16 %v2985
    %v3031 = vunpack.c.h.b16 %v2985
    %v3032 = vunpack.c.l.b16 %v2986
    %v3033 = vunpack.c.h.b16 %v2986
    %v3034 = vunpack.c.l.b16 %v2987
    %v3035 = vunpack.c.h.b16 %v2987
    %v3036 = vunpack.c.l.b16 %v2988
    %v3037 = vunpack.c.h.b16 %v2988
    %v3038 = vpack.c.b16 %v3010, %v3006
    %v3039 = vpack.c.b16 %v3011, %v3007
    %v3040 = vpack.c.b16 %v3012, %v3008
    %v3041 = vpack.c.b16 %v3013, %v3009
    %v3042 = vpack.c.b16 %v3018, %v3014
    %v3043 = vpack.c.b16 %v3019, %v3015
    %v3044 = vpack.c.b16 %v3020, %v3016
    %v3045 = vpack.c.b16 %v3021, %v3017
    %v3046 = vpack.c.b16 %v3026, %v3022
    %v3047 = vpack.c.b16 %v3027, %v3023
    %v3048 = vpack.c.b16 %v3028, %v3024
    %v3049 = vpack.c.b16 %v3029, %v3025
    %v3050 = vpack.c.b16 %v3034, %v3030
    %v3051 = vpack.c.b16 %v3035, %v3031
    %v3052 = vpack.c.b16 %v3036, %v3032
    %v3053 = vpack.c.b16 %v3037, %v3033
    %v3071 = vsel %vm526, %v2989, 0
    %3073 = vmatpush.bf16.msra.mxu0 0
    %3074 = vmatpush.bf16.msra.mxu0 0
    %3075 = vmatpush.bf16.msra.mxu0 0
    %3076 = vmatpush.bf16.msra.mxu0 0
    %3077 = vmatpush.bf16.msra.mxu0 %v3050
    %3078 = vmatpush.bf16.msra.mxu0 %v3046
    %3079 = vmatpush.bf16.msra.mxu0 %v3042
    %3080 = vmatpush.bf16.msra.mxu0 %v3038
    %3081 = vmatmul.bf16.gmra.mxu0 %v3071
    %v3082 = vpop.f32.mrf.mxu0
    %v3083 = vadd.f32 0.0, %v3082
    %v3084 = vpop.f32.mrf.mxu0
    %3085 = vdwg.mxu0
    %3086 = vmatpush.bf16.msra.mxu0 0
    %3087 = vmatpush.bf16.msra.mxu0 0
    %3088 = vmatpush.bf16.msra.mxu0 0
    %3089 = vmatpush.bf16.msra.mxu0 0
    %3090 = vmatpush.bf16.msra.mxu0 %v3051
    %3091 = vmatpush.bf16.msra.mxu0 %v3047
    %3092 = vmatpush.bf16.msra.mxu0 %v3043
    %3093 = vmatpush.bf16.msra.mxu0 %v3039
    %3094 = vmatmul.bf16.gmra.mxu0 %v3071
    %v3095 = vpop.f32.mrf.mxu0
    %v3096 = vadd.f32 0.0, %v3095
    %v3097 = vpop.f32.mrf.mxu0
    %3098 = vdwg.mxu0
    %3099 = vmatpush.bf16.msra.mxu0 0
    %3100 = vmatpush.bf16.msra.mxu0 0
    %3101 = vmatpush.bf16.msra.mxu0 0
    %3102 = vmatpush.bf16.msra.mxu0 0
    %3103 = vmatpush.bf16.msra.mxu0 %v3052
    %3104 = vmatpush.bf16.msra.mxu0 %v3048
    %3105 = vmatpush.bf16.msra.mxu0 %v3044
    %3106 = vmatpush.bf16.msra.mxu0 %v3040
    %3107 = vmatmul.bf16.gmra.mxu0 %v3071
    %v3108 = vpop.f32.mrf.mxu0
    %v3109 = vadd.f32 0.0, %v3108
    %v3110 = vpop.f32.mrf.mxu0
    %3111 = vdwg.mxu0
    %3112 = vmatpush.bf16.msra.mxu0 0
    %3113 = vmatpush.bf16.msra.mxu0 0
    %3114 = vmatpush.bf16.msra.mxu0 0
    %3115 = vmatpush.bf16.msra.mxu0 0
    %3116 = vmatpush.bf16.msra.mxu0 %v3053
    %3117 = vmatpush.bf16.msra.mxu0 %v3049
    %3118 = vmatpush.bf16.msra.mxu0 %v3045
    %3119 = vmatpush.bf16.msra.mxu0 %v3041
    %3120 = vmatmul.bf16.gmra.mxu0 %v3071
    %v3121 = vpop.f32.mrf.mxu0
    %v3122 = vadd.f32 0.0, %v3121
    %v3123 = vpop.f32.mrf.mxu0
    %3124 = vdwg.mxu0
    %v3125 = vadd.f32 %v2969, %v3083
    %v3126 = vadd.f32 %v2970, %v3096
    %v3127 = vadd.f32 %v2971, %v3109
    %v3128 = vadd.f32 %v2972, %v3122
    %v3129 = vld [vmem:[%s3 + $0x780] sm:$0xff]
    %v3130 = vld [vmem:[%s3 + $0x788] sm:$0xff]
    %v3131 = vld [vmem:[%s3 + $0x790] sm:$0xff]
    %v3132 = vld [vmem:[%s3 + $0x798] sm:$0xff]
    %v3133 = vld [vmem:[%s3 + $0x7a0] sm:$0xff]
    %v3134 = vld [vmem:[%s3 + $0x7a8] sm:$0xff]
    %v3135 = vld [vmem:[%s3 + $0x7b0] sm:$0xff]
    %v3136 = vld [vmem:[%s3 + $0x7b8] sm:$0xff]
    %v3137 = vld [vmem:[%s3 + $0x7c0] sm:$0xff]
    %v3138 = vld [vmem:[%s3 + $0x7c8] sm:$0xff]
    %v3139 = vld [vmem:[%s3 + $0x7d0] sm:$0xff]
    %v3140 = vld [vmem:[%s3 + $0x7d8] sm:$0xff]
    %v3141 = vld [vmem:[%s3 + $0x7e0] sm:$0xff]
    %v3142 = vld [vmem:[%s3 + $0x7e8] sm:$0xff]
    %v3143 = vld [vmem:[%s3 + $0x7f0] sm:$0xff]
    %v3144 = vld [vmem:[%s3 + $0x7f8] sm:$0xff]
    %v3145 = vrot.slane %v2832, 3
    %v3162 = vunpack.c.l.b16 %v3129
    %v3163 = vunpack.c.h.b16 %v3129
    %v3164 = vunpack.c.l.b16 %v3130
    %v3165 = vunpack.c.h.b16 %v3130
    %v3166 = vunpack.c.l.b16 %v3131
    %v3167 = vunpack.c.h.b16 %v3131
    %v3168 = vunpack.c.l.b16 %v3132
    %v3169 = vunpack.c.h.b16 %v3132
    %v3170 = vunpack.c.l.b16 %v3133
    %v3171 = vunpack.c.h.b16 %v3133
    %v3172 = vunpack.c.l.b16 %v3134
    %v3173 = vunpack.c.h.b16 %v3134
    %v3174 = vunpack.c.l.b16 %v3135
    %v3175 = vunpack.c.h.b16 %v3135
    %v3176 = vunpack.c.l.b16 %v3136
    %v3177 = vunpack.c.h.b16 %v3136
    %v3178 = vunpack.c.l.b16 %v3137
    %v3179 = vunpack.c.h.b16 %v3137
    %v3180 = vunpack.c.l.b16 %v3138
    %v3181 = vunpack.c.h.b16 %v3138
    %v3182 = vunpack.c.l.b16 %v3139
    %v3183 = vunpack.c.h.b16 %v3139
    %v3184 = vunpack.c.l.b16 %v3140
    %v3185 = vunpack.c.h.b16 %v3140
    %v3186 = vunpack.c.l.b16 %v3141
    %v3187 = vunpack.c.h.b16 %v3141
    %v3188 = vunpack.c.l.b16 %v3142
    %v3189 = vunpack.c.h.b16 %v3142
    %v3190 = vunpack.c.l.b16 %v3143
    %v3191 = vunpack.c.h.b16 %v3143
    %v3192 = vunpack.c.l.b16 %v3144
    %v3193 = vunpack.c.h.b16 %v3144
    %v3194 = vpack.c.b16 %v3166, %v3162
    %v3195 = vpack.c.b16 %v3167, %v3163
    %v3196 = vpack.c.b16 %v3168, %v3164
    %v3197 = vpack.c.b16 %v3169, %v3165
    %v3198 = vpack.c.b16 %v3174, %v3170
    %v3199 = vpack.c.b16 %v3175, %v3171
    %v3200 = vpack.c.b16 %v3176, %v3172
    %v3201 = vpack.c.b16 %v3177, %v3173
    %v3202 = vpack.c.b16 %v3182, %v3178
    %v3203 = vpack.c.b16 %v3183, %v3179
    %v3204 = vpack.c.b16 %v3184, %v3180
    %v3205 = vpack.c.b16 %v3185, %v3181
    %v3206 = vpack.c.b16 %v3190, %v3186
    %v3207 = vpack.c.b16 %v3191, %v3187
    %v3208 = vpack.c.b16 %v3192, %v3188
    %v3209 = vpack.c.b16 %v3193, %v3189
    %v3227 = vsel %vm526, %v3145, 0
    %3229 = vmatpush.bf16.msra.mxu0 0
    %3230 = vmatpush.bf16.msra.mxu0 0
    %3231 = vmatpush.bf16.msra.mxu0 0
    %3232 = vmatpush.bf16.msra.mxu0 0
    %3233 = vmatpush.bf16.msra.mxu0 %v3206
    %3234 = vmatpush.bf16.msra.mxu0 %v3202
    %3235 = vmatpush.bf16.msra.mxu0 %v3198
    %3236 = vmatpush.bf16.msra.mxu0 %v3194
    %3237 = vmatmul.bf16.gmra.mxu0 %v3227
    %v3238 = vpop.f32.mrf.mxu0
    %v3239 = vadd.f32 0.0, %v3238
    %v3240 = vpop.f32.mrf.mxu0
    %3241 = vdwg.mxu0
    %3242 = vmatpush.bf16.msra.mxu0 0
    %3243 = vmatpush.bf16.msra.mxu0 0
    %3244 = vmatpush.bf16.msra.mxu0 0
    %3245 = vmatpush.bf16.msra.mxu0 0
    %3246 = vmatpush.bf16.msra.mxu0 %v3207
    %3247 = vmatpush.bf16.msra.mxu0 %v3203
    %3248 = vmatpush.bf16.msra.mxu0 %v3199
    %3249 = vmatpush.bf16.msra.mxu0 %v3195
    %3250 = vmatmul.bf16.gmra.mxu0 %v3227
    %v3251 = vpop.f32.mrf.mxu0
    %v3252 = vadd.f32 0.0, %v3251
    %v3253 = vpop.f32.mrf.mxu0
    %3254 = vdwg.mxu0
    %3255 = vmatpush.bf16.msra.mxu0 0
    %3256 = vmatpush.bf16.msra.mxu0 0
    %3257 = vmatpush.bf16.msra.mxu0 0
    %3258 = vmatpush.bf16.msra.mxu0 0
    %3259 = vmatpush.bf16.msra.mxu0 %v3208
    %3260 = vmatpush.bf16.msra.mxu0 %v3204
    %3261 = vmatpush.bf16.msra.mxu0 %v3200
    %3262 = vmatpush.bf16.msra.mxu0 %v3196
    %3263 = vmatmul.bf16.gmra.mxu0 %v3227
    %v3264 = vpop.f32.mrf.mxu0
    %v3265 = vadd.f32 0.0, %v3264
    %v3266 = vpop.f32.mrf.mxu0
    %3267 = vdwg.mxu0
    %3268 = vmatpush.bf16.msra.mxu0 0
    %3269 = vmatpush.bf16.msra.mxu0 0
    %3270 = vmatpush.bf16.msra.mxu0 0
    %3271 = vmatpush.bf16.msra.mxu0 0
    %3272 = vmatpush.bf16.msra.mxu0 %v3209
    %3273 = vmatpush.bf16.msra.mxu0 %v3205
    %3274 = vmatpush.bf16.msra.mxu0 %v3201
    %3275 = vmatpush.bf16.msra.mxu0 %v3197
    %3276 = vmatmul.bf16.gmra.mxu0 %v3227
    %v3277 = vpop.f32.mrf.mxu0
    %v3278 = vadd.f32 0.0, %v3277
    %v3279 = vpop.f32.mrf.mxu0
    %3280 = vdwg.mxu0
    %v3281 = vadd.f32 %v3125, %v3239
    %v3282 = vadd.f32 %v3126, %v3252
    %v3283 = vadd.f32 %v3127, %v3265
    %v3284 = vadd.f32 %v3128, %v3278
    %v3285 = vld [vmem:[%s3 + $0x800] sm:$0xff]
    %v3286 = vld [vmem:[%s3 + $0x808] sm:$0xff]
    %v3287 = vld [vmem:[%s3 + $0x810] sm:$0xff]
    %v3288 = vld [vmem:[%s3 + $0x818] sm:$0xff]
    %v3289 = vld [vmem:[%s3 + $0x820] sm:$0xff]
    %v3290 = vld [vmem:[%s3 + $0x828] sm:$0xff]
    %v3291 = vld [vmem:[%s3 + $0x830] sm:$0xff]
    %v3292 = vld [vmem:[%s3 + $0x838] sm:$0xff]
    %v3293 = vld [vmem:[%s3 + $0x840] sm:$0xff]
    %v3294 = vld [vmem:[%s3 + $0x848] sm:$0xff]
    %v3295 = vld [vmem:[%s3 + $0x850] sm:$0xff]
    %v3296 = vld [vmem:[%s3 + $0x858] sm:$0xff]
    %v3297 = vld [vmem:[%s3 + $0x860] sm:$0xff]
    %v3298 = vld [vmem:[%s3 + $0x868] sm:$0xff]
    %v3299 = vld [vmem:[%s3 + $0x870] sm:$0xff]
    %v3300 = vld [vmem:[%s3 + $0x878] sm:$0xff]
    %v3317 = vunpack.c.l.b16 %v3285
    %v3318 = vunpack.c.h.b16 %v3285
    %v3319 = vunpack.c.l.b16 %v3286
    %v3320 = vunpack.c.h.b16 %v3286
    %v3321 = vunpack.c.l.b16 %v3287
    %v3322 = vunpack.c.h.b16 %v3287
    %v3323 = vunpack.c.l.b16 %v3288
    %v3324 = vunpack.c.h.b16 %v3288
    %v3325 = vunpack.c.l.b16 %v3289
    %v3326 = vunpack.c.h.b16 %v3289
    %v3327 = vunpack.c.l.b16 %v3290
    %v3328 = vunpack.c.h.b16 %v3290
    %v3329 = vunpack.c.l.b16 %v3291
    %v3330 = vunpack.c.h.b16 %v3291
    %v3331 = vunpack.c.l.b16 %v3292
    %v3332 = vunpack.c.h.b16 %v3292
    %v3333 = vunpack.c.l.b16 %v3293
    %v3334 = vunpack.c.h.b16 %v3293
    %v3335 = vunpack.c.l.b16 %v3294
    %v3336 = vunpack.c.h.b16 %v3294
    %v3337 = vunpack.c.l.b16 %v3295
    %v3338 = vunpack.c.h.b16 %v3295
    %v3339 = vunpack.c.l.b16 %v3296
    %v3340 = vunpack.c.h.b16 %v3296
    %v3341 = vunpack.c.l.b16 %v3297
    %v3342 = vunpack.c.h.b16 %v3297
    %v3343 = vunpack.c.l.b16 %v3298
    %v3344 = vunpack.c.h.b16 %v3298
    %v3345 = vunpack.c.l.b16 %v3299
    %v3346 = vunpack.c.h.b16 %v3299
    %v3347 = vunpack.c.l.b16 %v3300
    %v3348 = vunpack.c.h.b16 %v3300
    %v3349 = vpack.c.b16 %v3321, %v3317
    %v3350 = vpack.c.b16 %v3322, %v3318
    %v3351 = vpack.c.b16 %v3323, %v3319
    %v3352 = vpack.c.b16 %v3324, %v3320
    %v3353 = vpack.c.b16 %v3329, %v3325
    %v3354 = vpack.c.b16 %v3330, %v3326
    %v3355 = vpack.c.b16 %v3331, %v3327
    %v3356 = vpack.c.b16 %v3332, %v3328
    %v3357 = vpack.c.b16 %v3337, %v3333
    %v3358 = vpack.c.b16 %v3338, %v3334
    %v3359 = vpack.c.b16 %v3339, %v3335
    %v3360 = vpack.c.b16 %v3340, %v3336
    %v3361 = vpack.c.b16 %v3345, %v3341
    %v3362 = vpack.c.b16 %v3346, %v3342
    %v3363 = vpack.c.b16 %v3347, %v3343
    %v3364 = vpack.c.b16 %v3348, %v3344
    %v3382 = vsel %vm526, %v780, 0
    %3384 = vmatpush.bf16.msra.mxu0 0
    %3385 = vmatpush.bf16.msra.mxu0 0
    %3386 = vmatpush.bf16.msra.mxu0 0
    %3387 = vmatpush.bf16.msra.mxu0 0
    %3388 = vmatpush.bf16.msra.mxu0 %v3361
    %3389 = vmatpush.bf16.msra.mxu0 %v3357
    %3390 = vmatpush.bf16.msra.mxu0 %v3353
    %3391 = vmatpush.bf16.msra.mxu0 %v3349
    %3392 = vmatmul.bf16.gmra.mxu0 %v3382
    %v3393 = vpop.f32.mrf.mxu0
    %v3394 = vadd.f32 0.0, %v3393
    %v3395 = vpop.f32.mrf.mxu0
    %3396 = vdwg.mxu0
    %3397 = vmatpush.bf16.msra.mxu0 0
    %3398 = vmatpush.bf16.msra.mxu0 0
    %3399 = vmatpush.bf16.msra.mxu0 0
    %3400 = vmatpush.bf16.msra.mxu0 0
    %3401 = vmatpush.bf16.msra.mxu0 %v3362
    %3402 = vmatpush.bf16.msra.mxu0 %v3358
    %3403 = vmatpush.bf16.msra.mxu0 %v3354
    %3404 = vmatpush.bf16.msra.mxu0 %v3350
    %3405 = vmatmul.bf16.gmra.mxu0 %v3382
    %v3406 = vpop.f32.mrf.mxu0
    %v3407 = vadd.f32 0.0, %v3406
    %v3408 = vpop.f32.mrf.mxu0
    %3409 = vdwg.mxu0
    %3410 = vmatpush.bf16.msra.mxu0 0
    %3411 = vmatpush.bf16.msra.mxu0 0
    %3412 = vmatpush.bf16.msra.mxu0 0
    %3413 = vmatpush.bf16.msra.mxu0 0
    %3414 = vmatpush.bf16.msra.mxu0 %v3363
    %3415 = vmatpush.bf16.msra.mxu0 %v3359
    %3416 = vmatpush.bf16.msra.mxu0 %v3355
    %3417 = vmatpush.bf16.msra.mxu0 %v3351
    %3418 = vmatmul.bf16.gmra.mxu0 %v3382
    %v3419 = vpop.f32.mrf.mxu0
    %v3420 = vadd.f32 0.0, %v3419
    %v3421 = vpop.f32.mrf.mxu0
    %3422 = vdwg.mxu0
    %3423 = vmatpush.bf16.msra.mxu0 0
    %3424 = vmatpush.bf16.msra.mxu0 0
    %3425 = vmatpush.bf16.msra.mxu0 0
    %3426 = vmatpush.bf16.msra.mxu0 0
    %3427 = vmatpush.bf16.msra.mxu0 %v3364
    %3428 = vmatpush.bf16.msra.mxu0 %v3360
    %3429 = vmatpush.bf16.msra.mxu0 %v3356
    %3430 = vmatpush.bf16.msra.mxu0 %v3352
    %3431 = vmatmul.bf16.gmra.mxu0 %v3382
    %v3432 = vpop.f32.mrf.mxu0
    %v3433 = vadd.f32 0.0, %v3432
    %v3434 = vpop.f32.mrf.mxu0
    %3435 = vdwg.mxu0
    %v3436 = vadd.f32 %v3281, %v3394
    %v3437 = vadd.f32 %v3282, %v3407
    %v3438 = vadd.f32 %v3283, %v3420
    %v3439 = vadd.f32 %v3284, %v3433
    %v3440 = vld [vmem:[%s3 + $0x880] sm:$0xff]
    %v3441 = vld [vmem:[%s3 + $0x888] sm:$0xff]
    %v3442 = vld [vmem:[%s3 + $0x890] sm:$0xff]
    %v3443 = vld [vmem:[%s3 + $0x898] sm:$0xff]
    %v3444 = vld [vmem:[%s3 + $0x8a0] sm:$0xff]
    %v3445 = vld [vmem:[%s3 + $0x8a8] sm:$0xff]
    %v3446 = vld [vmem:[%s3 + $0x8b0] sm:$0xff]
    %v3447 = vld [vmem:[%s3 + $0x8b8] sm:$0xff]
    %v3448 = vld [vmem:[%s3 + $0x8c0] sm:$0xff]
    %v3449 = vld [vmem:[%s3 + $0x8c8] sm:$0xff]
    %v3450 = vld [vmem:[%s3 + $0x8d0] sm:$0xff]
    %v3451 = vld [vmem:[%s3 + $0x8d8] sm:$0xff]
    %v3452 = vld [vmem:[%s3 + $0x8e0] sm:$0xff]
    %v3453 = vld [vmem:[%s3 + $0x8e8] sm:$0xff]
    %v3454 = vld [vmem:[%s3 + $0x8f0] sm:$0xff]
    %v3455 = vld [vmem:[%s3 + $0x8f8] sm:$0xff]
    %v3457 = vunpack.c.l.b16 %v780
    %v3458 = vpack.c.b16 %v3457, %v3457
    %v3459 = vrot.slane %v3458, 1
    %v3476 = vunpack.c.l.b16 %v3440
    %v3477 = vunpack.c.h.b16 %v3440
    %v3478 = vunpack.c.l.b16 %v3441
    %v3479 = vunpack.c.h.b16 %v3441
    %v3480 = vunpack.c.l.b16 %v3442
    %v3481 = vunpack.c.h.b16 %v3442
    %v3482 = vunpack.c.l.b16 %v3443
    %v3483 = vunpack.c.h.b16 %v3443
    %v3484 = vunpack.c.l.b16 %v3444
    %v3485 = vunpack.c.h.b16 %v3444
    %v3486 = vunpack.c.l.b16 %v3445
    %v3487 = vunpack.c.h.b16 %v3445
    %v3488 = vunpack.c.l.b16 %v3446
    %v3489 = vunpack.c.h.b16 %v3446
    %v3490 = vunpack.c.l.b16 %v3447
    %v3491 = vunpack.c.h.b16 %v3447
    %v3492 = vunpack.c.l.b16 %v3448
    %v3493 = vunpack.c.h.b16 %v3448
    %v3494 = vunpack.c.l.b16 %v3449
    %v3495 = vunpack.c.h.b16 %v3449
    %v3496 = vunpack.c.l.b16 %v3450
    %v3497 = vunpack.c.h.b16 %v3450
    %v3498 = vunpack.c.l.b16 %v3451
    %v3499 = vunpack.c.h.b16 %v3451
    %v3500 = vunpack.c.l.b16 %v3452
    %v3501 = vunpack.c.h.b16 %v3452
    %v3502 = vunpack.c.l.b16 %v3453
    %v3503 = vunpack.c.h.b16 %v3453
    %v3504 = vunpack.c.l.b16 %v3454
    %v3505 = vunpack.c.h.b16 %v3454
    %v3506 = vunpack.c.l.b16 %v3455
    %v3507 = vunpack.c.h.b16 %v3455
    %v3508 = vpack.c.b16 %v3480, %v3476
    %v3509 = vpack.c.b16 %v3481, %v3477
    %v3510 = vpack.c.b16 %v3482, %v3478
    %v3511 = vpack.c.b16 %v3483, %v3479
    %v3512 = vpack.c.b16 %v3488, %v3484
    %v3513 = vpack.c.b16 %v3489, %v3485
    %v3514 = vpack.c.b16 %v3490, %v3486
    %v3515 = vpack.c.b16 %v3491, %v3487
    %v3516 = vpack.c.b16 %v3496, %v3492
    %v3517 = vpack.c.b16 %v3497, %v3493
    %v3518 = vpack.c.b16 %v3498, %v3494
    %v3519 = vpack.c.b16 %v3499, %v3495
    %v3520 = vpack.c.b16 %v3504, %v3500
    %v3521 = vpack.c.b16 %v3505, %v3501
    %v3522 = vpack.c.b16 %v3506, %v3502
    %v3523 = vpack.c.b16 %v3507, %v3503
    %v3541 = vsel %vm526, %v3459, 0
    %3543 = vmatpush.bf16.msra.mxu0 0
    %3544 = vmatpush.bf16.msra.mxu0 0
    %3545 = vmatpush.bf16.msra.mxu0 0
    %3546 = vmatpush.bf16.msra.mxu0 0
    %3547 = vmatpush.bf16.msra.mxu0 %v3520
    %3548 = vmatpush.bf16.msra.mxu0 %v3516
    %3549 = vmatpush.bf16.msra.mxu0 %v3512
    %3550 = vmatpush.bf16.msra.mxu0 %v3508
    %3551 = vmatmul.bf16.gmra.mxu0 %v3541
    %v3552 = vpop.f32.mrf.mxu0
    %v3553 = vadd.f32 0.0, %v3552
    %v3554 = vpop.f32.mrf.mxu0
    %3555 = vdwg.mxu0
    %3556 = vmatpush.bf16.msra.mxu0 0
    %3557 = vmatpush.bf16.msra.mxu0 0
    %3558 = vmatpush.bf16.msra.mxu0 0
    %3559 = vmatpush.bf16.msra.mxu0 0
    %3560 = vmatpush.bf16.msra.mxu0 %v3521
    %3561 = vmatpush.bf16.msra.mxu0 %v3517
    %3562 = vmatpush.bf16.msra.mxu0 %v3513
    %3563 = vmatpush.bf16.msra.mxu0 %v3509
    %3564 = vmatmul.bf16.gmra.mxu0 %v3541
    %v3565 = vpop.f32.mrf.mxu0
    %v3566 = vadd.f32 0.0, %v3565
    %v3567 = vpop.f32.mrf.mxu0
    %3568 = vdwg.mxu0
    %3569 = vmatpush.bf16.msra.mxu0 0
    %3570 = vmatpush.bf16.msra.mxu0 0
    %3571 = vmatpush.bf16.msra.mxu0 0
    %3572 = vmatpush.bf16.msra.mxu0 0
    %3573 = vmatpush.bf16.msra.mxu0 %v3522
    %3574 = vmatpush.bf16.msra.mxu0 %v3518
    %3575 = vmatpush.bf16.msra.mxu0 %v3514
    %3576 = vmatpush.bf16.msra.mxu0 %v3510
    %3577 = vmatmul.bf16.gmra.mxu0 %v3541
    %v3578 = vpop.f32.mrf.mxu0
    %v3579 = vadd.f32 0.0, %v3578
    %v3580 = vpop.f32.mrf.mxu0
    %3581 = vdwg.mxu0
    %3582 = vmatpush.bf16.msra.mxu0 0
    %3583 = vmatpush.bf16.msra.mxu0 0
    %3584 = vmatpush.bf16.msra.mxu0 0
    %3585 = vmatpush.bf16.msra.mxu0 0
    %3586 = vmatpush.bf16.msra.mxu0 %v3523
    %3587 = vmatpush.bf16.msra.mxu0 %v3519
    %3588 = vmatpush.bf16.msra.mxu0 %v3515
    %3589 = vmatpush.bf16.msra.mxu0 %v3511
    %3590 = vmatmul.bf16.gmra.mxu0 %v3541
    %v3591 = vpop.f32.mrf.mxu0
    %v3592 = vadd.f32 0.0, %v3591
    %v3593 = vpop.f32.mrf.mxu0
    %3594 = vdwg.mxu0
    %v3595 = vadd.f32 %v3436, %v3553
    %v3596 = vadd.f32 %v3437, %v3566
    %v3597 = vadd.f32 %v3438, %v3579
    %v3598 = vadd.f32 %v3439, %v3592
    %v3599 = vld [vmem:[%s3 + $0x900] sm:$0xff]
    %v3600 = vld [vmem:[%s3 + $0x908] sm:$0xff]
    %v3601 = vld [vmem:[%s3 + $0x910] sm:$0xff]
    %v3602 = vld [vmem:[%s3 + $0x918] sm:$0xff]
    %v3603 = vld [vmem:[%s3 + $0x920] sm:$0xff]
    %v3604 = vld [vmem:[%s3 + $0x928] sm:$0xff]
    %v3605 = vld [vmem:[%s3 + $0x930] sm:$0xff]
    %v3606 = vld [vmem:[%s3 + $0x938] sm:$0xff]
    %v3607 = vld [vmem:[%s3 + $0x940] sm:$0xff]
    %v3608 = vld [vmem:[%s3 + $0x948] sm:$0xff]
    %v3609 = vld [vmem:[%s3 + $0x950] sm:$0xff]
    %v3610 = vld [vmem:[%s3 + $0x958] sm:$0xff]
    %v3611 = vld [vmem:[%s3 + $0x960] sm:$0xff]
    %v3612 = vld [vmem:[%s3 + $0x968] sm:$0xff]
    %v3613 = vld [vmem:[%s3 + $0x970] sm:$0xff]
    %v3614 = vld [vmem:[%s3 + $0x978] sm:$0xff]
    %v3615 = vrot.slane %v3458, 2
    %v3632 = vunpack.c.l.b16 %v3599
    %v3633 = vunpack.c.h.b16 %v3599
    %v3634 = vunpack.c.l.b16 %v3600
    %v3635 = vunpack.c.h.b16 %v3600
    %v3636 = vunpack.c.l.b16 %v3601
    %v3637 = vunpack.c.h.b16 %v3601
    %v3638 = vunpack.c.l.b16 %v3602
    %v3639 = vunpack.c.h.b16 %v3602
    %v3640 = vunpack.c.l.b16 %v3603
    %v3641 = vunpack.c.h.b16 %v3603
    %v3642 = vunpack.c.l.b16 %v3604
    %v3643 = vunpack.c.h.b16 %v3604
    %v3644 = vunpack.c.l.b16 %v3605
    %v3645 = vunpack.c.h.b16 %v3605
    %v3646 = vunpack.c.l.b16 %v3606
    %v3647 = vunpack.c.h.b16 %v3606
    %v3648 = vunpack.c.l.b16 %v3607
    %v3649 = vunpack.c.h.b16 %v3607
    %v3650 = vunpack.c.l.b16 %v3608
    %v3651 = vunpack.c.h.b16 %v3608
    %v3652 = vunpack.c.l.b16 %v3609
    %v3653 = vunpack.c.h.b16 %v3609
    %v3654 = vunpack.c.l.b16 %v3610
    %v3655 = vunpack.c.h.b16 %v3610
    %v3656 = vunpack.c.l.b16 %v3611
    %v3657 = vunpack.c.h.b16 %v3611
    %v3658 = vunpack.c.l.b16 %v3612
    %v3659 = vunpack.c.h.b16 %v3612
    %v3660 = vunpack.c.l.b16 %v3613
    %v3661 = vunpack.c.h.b16 %v3613
    %v3662 = vunpack.c.l.b16 %v3614
    %v3663 = vunpack.c.h.b16 %v3614
    %v3664 = vpack.c.b16 %v3636, %v3632
    %v3665 = vpack.c.b16 %v3637, %v3633
    %v3666 = vpack.c.b16 %v3638, %v3634
    %v3667 = vpack.c.b16 %v3639, %v3635
    %v3668 = vpack.c.b16 %v3644, %v3640
    %v3669 = vpack.c.b16 %v3645, %v3641
    %v3670 = vpack.c.b16 %v3646, %v3642
    %v3671 = vpack.c.b16 %v3647, %v3643
    %v3672 = vpack.c.b16 %v3652, %v3648
    %v3673 = vpack.c.b16 %v3653, %v3649
    %v3674 = vpack.c.b16 %v3654, %v3650
    %v3675 = vpack.c.b16 %v3655, %v3651
    %v3676 = vpack.c.b16 %v3660, %v3656
    %v3677 = vpack.c.b16 %v3661, %v3657
    %v3678 = vpack.c.b16 %v3662, %v3658
    %v3679 = vpack.c.b16 %v3663, %v3659
    %v3697 = vsel %vm526, %v3615, 0
    %3699 = vmatpush.bf16.msra.mxu0 0
    %3700 = vmatpush.bf16.msra.mxu0 0
    %3701 = vmatpush.bf16.msra.mxu0 0
    %3702 = vmatpush.bf16.msra.mxu0 0
    %3703 = vmatpush.bf16.msra.mxu0 %v3676
    %3704 = vmatpush.bf16.msra.mxu0 %v3672
    %3705 = vmatpush.bf16.msra.mxu0 %v3668
    %3706 = vmatpush.bf16.msra.mxu0 %v3664
    %3707 = vmatmul.bf16.gmra.mxu0 %v3697
    %v3708 = vpop.f32.mrf.mxu0
    %v3709 = vadd.f32 0.0, %v3708
    %v3710 = vpop.f32.mrf.mxu0
    %3711 = vdwg.mxu0
    %3712 = vmatpush.bf16.msra.mxu0 0
    %3713 = vmatpush.bf16.msra.mxu0 0
    %3714 = vmatpush.bf16.msra.mxu0 0
    %3715 = vmatpush.bf16.msra.mxu0 0
    %3716 = vmatpush.bf16.msra.mxu0 %v3677
    %3717 = vmatpush.bf16.msra.mxu0 %v3673
    %3718 = vmatpush.bf16.msra.mxu0 %v3669
    %3719 = vmatpush.bf16.msra.mxu0 %v3665
    %3720 = vmatmul.bf16.gmra.mxu0 %v3697
    %v3721 = vpop.f32.mrf.mxu0
    %v3722 = vadd.f32 0.0, %v3721
    %v3723 = vpop.f32.mrf.mxu0
    %3724 = vdwg.mxu0
    %3725 = vmatpush.bf16.msra.mxu0 0
    %3726 = vmatpush.bf16.msra.mxu0 0
    %3727 = vmatpush.bf16.msra.mxu0 0
    %3728 = vmatpush.bf16.msra.mxu0 0
    %3729 = vmatpush.bf16.msra.mxu0 %v3678
    %3730 = vmatpush.bf16.msra.mxu0 %v3674
    %3731 = vmatpush.bf16.msra.mxu0 %v3670
    %3732 = vmatpush.bf16.msra.mxu0 %v3666
    %3733 = vmatmul.bf16.gmra.mxu0 %v3697
    %v3734 = vpop.f32.mrf.mxu0
    %v3735 = vadd.f32 0.0, %v3734
    %v3736 = vpop.f32.mrf.mxu0
    %3737 = vdwg.mxu0
    %3738 = vmatpush.bf16.msra.mxu0 0
    %3739 = vmatpush.bf16.msra.mxu0 0
    %3740 = vmatpush.bf16.msra.mxu0 0
    %3741 = vmatpush.bf16.msra.mxu0 0
    %3742 = vmatpush.bf16.msra.mxu0 %v3679
    %3743 = vmatpush.bf16.msra.mxu0 %v3675
    %3744 = vmatpush.bf16.msra.mxu0 %v3671
    %3745 = vmatpush.bf16.msra.mxu0 %v3667
    %3746 = vmatmul.bf16.gmra.mxu0 %v3697
    %v3747 = vpop.f32.mrf.mxu0
    %v3748 = vadd.f32 0.0, %v3747
    %v3749 = vpop.f32.mrf.mxu0
    %3750 = vdwg.mxu0
    %v3751 = vadd.f32 %v3595, %v3709
    %v3752 = vadd.f32 %v3596, %v3722
    %v3753 = vadd.f32 %v3597, %v3735
    %v3754 = vadd.f32 %v3598, %v3748
    %v3755 = vld [vmem:[%s3 + $0x980] sm:$0xff]
    %v3756 = vld [vmem:[%s3 + $0x988] sm:$0xff]
    %v3757 = vld [vmem:[%s3 + $0x990] sm:$0xff]
    %v3758 = vld [vmem:[%s3 + $0x998] sm:$0xff]
    %v3759 = vld [vmem:[%s3 + $0x9a0] sm:$0xff]
    %v3760 = vld [vmem:[%s3 + $0x9a8] sm:$0xff]
    %v3761 = vld [vmem:[%s3 + $0x9b0] sm:$0xff]
    %v3762 = vld [vmem:[%s3 + $0x9b8] sm:$0xff]
    %v3763 = vld [vmem:[%s3 + $0x9c0] sm:$0xff]
    %v3764 = vld [vmem:[%s3 + $0x9c8] sm:$0xff]
    %v3765 = vld [vmem:[%s3 + $0x9d0] sm:$0xff]
    %v3766 = vld [vmem:[%s3 + $0x9d8] sm:$0xff]
    %v3767 = vld [vmem:[%s3 + $0x9e0] sm:$0xff]
    %v3768 = vld [vmem:[%s3 + $0x9e8] sm:$0xff]
    %v3769 = vld [vmem:[%s3 + $0x9f0] sm:$0xff]
    %v3770 = vld [vmem:[%s3 + $0x9f8] sm:$0xff]
    %v3771 = vrot.slane %v3458, 3
    %v3788 = vunpack.c.l.b16 %v3755
    %v3789 = vunpack.c.h.b16 %v3755
    %v3790 = vunpack.c.l.b16 %v3756
    %v3791 = vunpack.c.h.b16 %v3756
    %v3792 = vunpack.c.l.b16 %v3757
    %v3793 = vunpack.c.h.b16 %v3757
    %v3794 = vunpack.c.l.b16 %v3758
    %v3795 = vunpack.c.h.b16 %v3758
    %v3796 = vunpack.c.l.b16 %v3759
    %v3797 = vunpack.c.h.b16 %v3759
    %v3798 = vunpack.c.l.b16 %v3760
    %v3799 = vunpack.c.h.b16 %v3760
    %v3800 = vunpack.c.l.b16 %v3761
    %v3801 = vunpack.c.h.b16 %v3761
    %v3802 = vunpack.c.l.b16 %v3762
    %v3803 = vunpack.c.h.b16 %v3762
    %v3804 = vunpack.c.l.b16 %v3763
    %v3805 = vunpack.c.h.b16 %v3763
    %v3806 = vunpack.c.l.b16 %v3764
    %v3807 = vunpack.c.h.b16 %v3764
    %v3808 = vunpack.c.l.b16 %v3765
    %v3809 = vunpack.c.h.b16 %v3765
    %v3810 = vunpack.c.l.b16 %v3766
    %v3811 = vunpack.c.h.b16 %v3766
    %v3812 = vunpack.c.l.b16 %v3767
    %v3813 = vunpack.c.h.b16 %v3767
    %v3814 = vunpack.c.l.b16 %v3768
    %v3815 = vunpack.c.h.b16 %v3768
    %v3816 = vunpack.c.l.b16 %v3769
    %v3817 = vunpack.c.h.b16 %v3769
    %v3818 = vunpack.c.l.b16 %v3770
    %v3819 = vunpack.c.h.b16 %v3770
    %v3820 = vpack.c.b16 %v3792, %v3788
    %v3821 = vpack.c.b16 %v3793, %v3789
    %v3822 = vpack.c.b16 %v3794, %v3790
    %v3823 = vpack.c.b16 %v3795, %v3791
    %v3824 = vpack.c.b16 %v3800, %v3796
    %v3825 = vpack.c.b16 %v3801, %v3797
    %v3826 = vpack.c.b16 %v3802, %v3798
    %v3827 = vpack.c.b16 %v3803, %v3799
    %v3828 = vpack.c.b16 %v3808, %v3804
    %v3829 = vpack.c.b16 %v3809, %v3805
    %v3830 = vpack.c.b16 %v3810, %v3806
    %v3831 = vpack.c.b16 %v3811, %v3807
    %v3832 = vpack.c.b16 %v3816, %v3812
    %v3833 = vpack.c.b16 %v3817, %v3813
    %v3834 = vpack.c.b16 %v3818, %v3814
    %v3835 = vpack.c.b16 %v3819, %v3815
    %v3853 = vsel %vm526, %v3771, 0
    %3855 = vmatpush.bf16.msra.mxu0 0
    %3856 = vmatpush.bf16.msra.mxu0 0
    %3857 = vmatpush.bf16.msra.mxu0 0
    %3858 = vmatpush.bf16.msra.mxu0 0
    %3859 = vmatpush.bf16.msra.mxu0 %v3832
    %3860 = vmatpush.bf16.msra.mxu0 %v3828
    %3861 = vmatpush.bf16.msra.mxu0 %v3824
    %3862 = vmatpush.bf16.msra.mxu0 %v3820
    %3863 = vmatmul.bf16.gmra.mxu0 %v3853
    %v3864 = vpop.f32.mrf.mxu0
    %v3865 = vadd.f32 0.0, %v3864
    %v3866 = vpop.f32.mrf.mxu0
    %3867 = vdwg.mxu0
    %3868 = vmatpush.bf16.msra.mxu0 0
    %3869 = vmatpush.bf16.msra.mxu0 0
    %3870 = vmatpush.bf16.msra.mxu0 0
    %3871 = vmatpush.bf16.msra.mxu0 0
    %3872 = vmatpush.bf16.msra.mxu0 %v3833
    %3873 = vmatpush.bf16.msra.mxu0 %v3829
    %3874 = vmatpush.bf16.msra.mxu0 %v3825
    %3875 = vmatpush.bf16.msra.mxu0 %v3821
    %3876 = vmatmul.bf16.gmra.mxu0 %v3853
    %v3877 = vpop.f32.mrf.mxu0
    %v3878 = vadd.f32 0.0, %v3877
    %v3879 = vpop.f32.mrf.mxu0
    %3880 = vdwg.mxu0
    %3881 = vmatpush.bf16.msra.mxu0 0
    %3882 = vmatpush.bf16.msra.mxu0 0
    %3883 = vmatpush.bf16.msra.mxu0 0
    %3884 = vmatpush.bf16.msra.mxu0 0
    %3885 = vmatpush.bf16.msra.mxu0 %v3834
    %3886 = vmatpush.bf16.msra.mxu0 %v3830
    %3887 = vmatpush.bf16.msra.mxu0 %v3826
    %3888 = vmatpush.bf16.msra.mxu0 %v3822
    %3889 = vmatmul.bf16.gmra.mxu0 %v3853
    %v3890 = vpop.f32.mrf.mxu0
    %v3891 = vadd.f32 0.0, %v3890
    %v3892 = vpop.f32.mrf.mxu0
    %3893 = vdwg.mxu0
    %3894 = vmatpush.bf16.msra.mxu0 0
    %3895 = vmatpush.bf16.msra.mxu0 0
    %3896 = vmatpush.bf16.msra.mxu0 0
    %3897 = vmatpush.bf16.msra.mxu0 0
    %3898 = vmatpush.bf16.msra.mxu0 %v3835
    %3899 = vmatpush.bf16.msra.mxu0 %v3831
    %3900 = vmatpush.bf16.msra.mxu0 %v3827
    %3901 = vmatpush.bf16.msra.mxu0 %v3823
    %3902 = vmatmul.bf16.gmra.mxu0 %v3853
    %v3903 = vpop.f32.mrf.mxu0
    %v3904 = vadd.f32 0.0, %v3903
    %v3905 = vpop.f32.mrf.mxu0
    %3906 = vdwg.mxu0
    %v3907 = vadd.f32 %v3751, %v3865
    %v3908 = vadd.f32 %v3752, %v3878
    %v3909 = vadd.f32 %v3753, %v3891
    %v3910 = vadd.f32 %v3754, %v3904
    %v3911 = vld [vmem:[%s3 + $0xa00] sm:$0xff]
    %v3912 = vld [vmem:[%s3 + $0xa08] sm:$0xff]
    %v3913 = vld [vmem:[%s3 + $0xa10] sm:$0xff]
    %v3914 = vld [vmem:[%s3 + $0xa18] sm:$0xff]
    %v3915 = vld [vmem:[%s3 + $0xa20] sm:$0xff]
    %v3916 = vld [vmem:[%s3 + $0xa28] sm:$0xff]
    %v3917 = vld [vmem:[%s3 + $0xa30] sm:$0xff]
    %v3918 = vld [vmem:[%s3 + $0xa38] sm:$0xff]
    %v3919 = vld [vmem:[%s3 + $0xa40] sm:$0xff]
    %v3920 = vld [vmem:[%s3 + $0xa48] sm:$0xff]
    %v3921 = vld [vmem:[%s3 + $0xa50] sm:$0xff]
    %v3922 = vld [vmem:[%s3 + $0xa58] sm:$0xff]
    %v3923 = vld [vmem:[%s3 + $0xa60] sm:$0xff]
    %v3924 = vld [vmem:[%s3 + $0xa68] sm:$0xff]
    %v3925 = vld [vmem:[%s3 + $0xa70] sm:$0xff]
    %v3926 = vld [vmem:[%s3 + $0xa78] sm:$0xff]
    %v3943 = vunpack.c.l.b16 %v3911
    %v3944 = vunpack.c.h.b16 %v3911
    %v3945 = vunpack.c.l.b16 %v3912
    %v3946 = vunpack.c.h.b16 %v3912
    %v3947 = vunpack.c.l.b16 %v3913
    %v3948 = vunpack.c.h.b16 %v3913
    %v3949 = vunpack.c.l.b16 %v3914
    %v3950 = vunpack.c.h.b16 %v3914
    %v3951 = vunpack.c.l.b16 %v3915
    %v3952 = vunpack.c.h.b16 %v3915
    %v3953 = vunpack.c.l.b16 %v3916
    %v3954 = vunpack.c.h.b16 %v3916
    %v3955 = vunpack.c.l.b16 %v3917
    %v3956 = vunpack.c.h.b16 %v3917
    %v3957 = vunpack.c.l.b16 %v3918
    %v3958 = vunpack.c.h.b16 %v3918
    %v3959 = vunpack.c.l.b16 %v3919
    %v3960 = vunpack.c.h.b16 %v3919
    %v3961 = vunpack.c.l.b16 %v3920
    %v3962 = vunpack.c.h.b16 %v3920
    %v3963 = vunpack.c.l.b16 %v3921
    %v3964 = vunpack.c.h.b16 %v3921
    %v3965 = vunpack.c.l.b16 %v3922
    %v3966 = vunpack.c.h.b16 %v3922
    %v3967 = vunpack.c.l.b16 %v3923
    %v3968 = vunpack.c.h.b16 %v3923
    %v3969 = vunpack.c.l.b16 %v3924
    %v3970 = vunpack.c.h.b16 %v3924
    %v3971 = vunpack.c.l.b16 %v3925
    %v3972 = vunpack.c.h.b16 %v3925
    %v3973 = vunpack.c.l.b16 %v3926
    %v3974 = vunpack.c.h.b16 %v3926
    %v3975 = vpack.c.b16 %v3947, %v3943
    %v3976 = vpack.c.b16 %v3948, %v3944
    %v3977 = vpack.c.b16 %v3949, %v3945
    %v3978 = vpack.c.b16 %v3950, %v3946
    %v3979 = vpack.c.b16 %v3955, %v3951
    %v3980 = vpack.c.b16 %v3956, %v3952
    %v3981 = vpack.c.b16 %v3957, %v3953
    %v3982 = vpack.c.b16 %v3958, %v3954
    %v3983 = vpack.c.b16 %v3963, %v3959
    %v3984 = vpack.c.b16 %v3964, %v3960
    %v3985 = vpack.c.b16 %v3965, %v3961
    %v3986 = vpack.c.b16 %v3966, %v3962
    %v3987 = vpack.c.b16 %v3971, %v3967
    %v3988 = vpack.c.b16 %v3972, %v3968
    %v3989 = vpack.c.b16 %v3973, %v3969
    %v3990 = vpack.c.b16 %v3974, %v3970
    %v4008 = vsel %vm526, %v781, 0
    %4010 = vmatpush.bf16.msra.mxu0 0
    %4011 = vmatpush.bf16.msra.mxu0 0
    %4012 = vmatpush.bf16.msra.mxu0 0
    %4013 = vmatpush.bf16.msra.mxu0 0
    %4014 = vmatpush.bf16.msra.mxu0 %v3987
    %4015 = vmatpush.bf16.msra.mxu0 %v3983
    %4016 = vmatpush.bf16.msra.mxu0 %v3979
    %4017 = vmatpush.bf16.msra.mxu0 %v3975
    %4018 = vmatmul.bf16.gmra.mxu0 %v4008
    %v4019 = vpop.f32.mrf.mxu0
    %v4020 = vadd.f32 0.0, %v4019
    %v4021 = vpop.f32.mrf.mxu0
    %4022 = vdwg.mxu0
    %4023 = vmatpush.bf16.msra.mxu0 0
    %4024 = vmatpush.bf16.msra.mxu0 0
    %4025 = vmatpush.bf16.msra.mxu0 0
    %4026 = vmatpush.bf16.msra.mxu0 0
    %4027 = vmatpush.bf16.msra.mxu0 %v3988
    %4028 = vmatpush.bf16.msra.mxu0 %v3984
    %4029 = vmatpush.bf16.msra.mxu0 %v3980
    %4030 = vmatpush.bf16.msra.mxu0 %v3976
    %4031 = vmatmul.bf16.gmra.mxu0 %v4008
    %v4032 = vpop.f32.mrf.mxu0
    %v4033 = vadd.f32 0.0, %v4032
    %v4034 = vpop.f32.mrf.mxu0
    %4035 = vdwg.mxu0
    %4036 = vmatpush.bf16.msra.mxu0 0
    %4037 = vmatpush.bf16.msra.mxu0 0
    %4038 = vmatpush.bf16.msra.mxu0 0
    %4039 = vmatpush.bf16.msra.mxu0 0
    %4040 = vmatpush.bf16.msra.mxu0 %v3989
    %4041 = vmatpush.bf16.msra.mxu0 %v3985
    %4042 = vmatpush.bf16.msra.mxu0 %v3981
    %4043 = vmatpush.bf16.msra.mxu0 %v3977
    %4044 = vmatmul.bf16.gmra.mxu0 %v4008
    %v4045 = vpop.f32.mrf.mxu0
    %v4046 = vadd.f32 0.0, %v4045
    %v4047 = vpop.f32.mrf.mxu0
    %4048 = vdwg.mxu0
    %4049 = vmatpush.bf16.msra.mxu0 0
    %4050 = vmatpush.bf16.msra.mxu0 0
    %4051 = vmatpush.bf16.msra.mxu0 0
    %4052 = vmatpush.bf16.msra.mxu0 0
    %4053 = vmatpush.bf16.msra.mxu0 %v3990
    %4054 = vmatpush.bf16.msra.mxu0 %v3986
    %4055 = vmatpush.bf16.msra.mxu0 %v3982
    %4056 = vmatpush.bf16.msra.mxu0 %v3978
    %4057 = vmatmul.bf16.gmra.mxu0 %v4008
    %v4058 = vpop.f32.mrf.mxu0
    %v4059 = vadd.f32 0.0, %v4058
    %v4060 = vpop.f32.mrf.mxu0
    %4061 = vdwg.mxu0
    %v4062 = vadd.f32 %v3907, %v4020
    %v4063 = vadd.f32 %v3908, %v4033
    %v4064 = vadd.f32 %v3909, %v4046
    %v4065 = vadd.f32 %v3910, %v4059
    %v4066 = vld [vmem:[%s3 + $0xa80] sm:$0xff]
    %v4067 = vld [vmem:[%s3 + $0xa88] sm:$0xff]
    %v4068 = vld [vmem:[%s3 + $0xa90] sm:$0xff]
    %v4069 = vld [vmem:[%s3 + $0xa98] sm:$0xff]
    %v4070 = vld [vmem:[%s3 + $0xaa0] sm:$0xff]
    %v4071 = vld [vmem:[%s3 + $0xaa8] sm:$0xff]
    %v4072 = vld [vmem:[%s3 + $0xab0] sm:$0xff]
    %v4073 = vld [vmem:[%s3 + $0xab8] sm:$0xff]
    %v4074 = vld [vmem:[%s3 + $0xac0] sm:$0xff]
    %v4075 = vld [vmem:[%s3 + $0xac8] sm:$0xff]
    %v4076 = vld [vmem:[%s3 + $0xad0] sm:$0xff]
    %v4077 = vld [vmem:[%s3 + $0xad8] sm:$0xff]
    %v4078 = vld [vmem:[%s3 + $0xae0] sm:$0xff]
    %v4079 = vld [vmem:[%s3 + $0xae8] sm:$0xff]
    %v4080 = vld [vmem:[%s3 + $0xaf0] sm:$0xff]
    %v4081 = vld [vmem:[%s3 + $0xaf8] sm:$0xff]
    %v4083 = vunpack.c.l.b16 %v781
    %v4084 = vpack.c.b16 %v4083, %v4083
    %v4085 = vrot.slane %v4084, 1
    %v4102 = vunpack.c.l.b16 %v4066
    %v4103 = vunpack.c.h.b16 %v4066
    %v4104 = vunpack.c.l.b16 %v4067
    %v4105 = vunpack.c.h.b16 %v4067
    %v4106 = vunpack.c.l.b16 %v4068
    %v4107 = vunpack.c.h.b16 %v4068
    %v4108 = vunpack.c.l.b16 %v4069
    %v4109 = vunpack.c.h.b16 %v4069
    %v4110 = vunpack.c.l.b16 %v4070
    %v4111 = vunpack.c.h.b16 %v4070
    %v4112 = vunpack.c.l.b16 %v4071
    %v4113 = vunpack.c.h.b16 %v4071
    %v4114 = vunpack.c.l.b16 %v4072
    %v4115 = vunpack.c.h.b16 %v4072
    %v4116 = vunpack.c.l.b16 %v4073
    %v4117 = vunpack.c.h.b16 %v4073
    %v4118 = vunpack.c.l.b16 %v4074
    %v4119 = vunpack.c.h.b16 %v4074
    %v4120 = vunpack.c.l.b16 %v4075
    %v4121 = vunpack.c.h.b16 %v4075
    %v4122 = vunpack.c.l.b16 %v4076
    %v4123 = vunpack.c.h.b16 %v4076
    %v4124 = vunpack.c.l.b16 %v4077
    %v4125 = vunpack.c.h.b16 %v4077
    %v4126 = vunpack.c.l.b16 %v4078
    %v4127 = vunpack.c.h.b16 %v4078
    %v4128 = vunpack.c.l.b16 %v4079
    %v4129 = vunpack.c.h.b16 %v4079
    %v4130 = vunpack.c.l.b16 %v4080
    %v4131 = vunpack.c.h.b16 %v4080
    %v4132 = vunpack.c.l.b16 %v4081
    %v4133 = vunpack.c.h.b16 %v4081
    %v4134 = vpack.c.b16 %v4106, %v4102
    %v4135 = vpack.c.b16 %v4107, %v4103
    %v4136 = vpack.c.b16 %v4108, %v4104
    %v4137 = vpack.c.b16 %v4109, %v4105
    %v4138 = vpack.c.b16 %v4114, %v4110
    %v4139 = vpack.c.b16 %v4115, %v4111
    %v4140 = vpack.c.b16 %v4116, %v4112
    %v4141 = vpack.c.b16 %v4117, %v4113
    %v4142 = vpack.c.b16 %v4122, %v4118
    %v4143 = vpack.c.b16 %v4123, %v4119
    %v4144 = vpack.c.b16 %v4124, %v4120
    %v4145 = vpack.c.b16 %v4125, %v4121
    %v4146 = vpack.c.b16 %v4130, %v4126
    %v4147 = vpack.c.b16 %v4131, %v4127
    %v4148 = vpack.c.b16 %v4132, %v4128
    %v4149 = vpack.c.b16 %v4133, %v4129
    %v4167 = vsel %vm526, %v4085, 0
    %4169 = vmatpush.bf16.msra.mxu0 0
    %4170 = vmatpush.bf16.msra.mxu0 0
    %4171 = vmatpush.bf16.msra.mxu0 0
    %4172 = vmatpush.bf16.msra.mxu0 0
    %4173 = vmatpush.bf16.msra.mxu0 %v4146
    %4174 = vmatpush.bf16.msra.mxu0 %v4142
    %4175 = vmatpush.bf16.msra.mxu0 %v4138
    %4176 = vmatpush.bf16.msra.mxu0 %v4134
    %4177 = vmatmul.bf16.gmra.mxu0 %v4167
    %v4178 = vpop.f32.mrf.mxu0
    %v4179 = vadd.f32 0.0, %v4178
    %v4180 = vpop.f32.mrf.mxu0
    %4181 = vdwg.mxu0
    %4182 = vmatpush.bf16.msra.mxu0 0
    %4183 = vmatpush.bf16.msra.mxu0 0
    %4184 = vmatpush.bf16.msra.mxu0 0
    %4185 = vmatpush.bf16.msra.mxu0 0
    %4186 = vmatpush.bf16.msra.mxu0 %v4147
    %4187 = vmatpush.bf16.msra.mxu0 %v4143
    %4188 = vmatpush.bf16.msra.mxu0 %v4139
    %4189 = vmatpush.bf16.msra.mxu0 %v4135
    %4190 = vmatmul.bf16.gmra.mxu0 %v4167
    %v4191 = vpop.f32.mrf.mxu0
    %v4192 = vadd.f32 0.0, %v4191
    %v4193 = vpop.f32.mrf.mxu0
    %4194 = vdwg.mxu0
    %4195 = vmatpush.bf16.msra.mxu0 0
    %4196 = vmatpush.bf16.msra.mxu0 0
    %4197 = vmatpush.bf16.msra.mxu0 0
    %4198 = vmatpush.bf16.msra.mxu0 0
    %4199 = vmatpush.bf16.msra.mxu0 %v4148
    %4200 = vmatpush.bf16.msra.mxu0 %v4144
    %4201 = vmatpush.bf16.msra.mxu0 %v4140
    %4202 = vmatpush.bf16.msra.mxu0 %v4136
    %4203 = vmatmul.bf16.gmra.mxu0 %v4167
    %v4204 = vpop.f32.mrf.mxu0
    %v4205 = vadd.f32 0.0, %v4204
    %v4206 = vpop.f32.mrf.mxu0
    %4207 = vdwg.mxu0
    %4208 = vmatpush.bf16.msra.mxu0 0
    %4209 = vmatpush.bf16.msra.mxu0 0
    %4210 = vmatpush.bf16.msra.mxu0 0
    %4211 = vmatpush.bf16.msra.mxu0 0
    %4212 = vmatpush.bf16.msra.mxu0 %v4149
    %4213 = vmatpush.bf16.msra.mxu0 %v4145
    %4214 = vmatpush.bf16.msra.mxu0 %v4141
    %4215 = vmatpush.bf16.msra.mxu0 %v4137
    %4216 = vmatmul.bf16.gmra.mxu0 %v4167
    %v4217 = vpop.f32.mrf.mxu0
    %v4218 = vadd.f32 0.0, %v4217
    %v4219 = vpop.f32.mrf.mxu0
    %4220 = vdwg.mxu0
    %v4221 = vadd.f32 %v4062, %v4179
    %v4222 = vadd.f32 %v4063, %v4192
    %v4223 = vadd.f32 %v4064, %v4205
    %v4224 = vadd.f32 %v4065, %v4218
    %v4225 = vld [vmem:[%s3 + $0xb00] sm:$0xff]
    %v4226 = vld [vmem:[%s3 + $0xb08] sm:$0xff]
    %v4227 = vld [vmem:[%s3 + $0xb10] sm:$0xff]
    %v4228 = vld [vmem:[%s3 + $0xb18] sm:$0xff]
    %v4229 = vld [vmem:[%s3 + $0xb20] sm:$0xff]
    %v4230 = vld [vmem:[%s3 + $0xb28] sm:$0xff]
    %v4231 = vld [vmem:[%s3 + $0xb30] sm:$0xff]
    %v4232 = vld [vmem:[%s3 + $0xb38] sm:$0xff]
    %v4233 = vld [vmem:[%s3 + $0xb40] sm:$0xff]
    %v4234 = vld [vmem:[%s3 + $0xb48] sm:$0xff]
    %v4235 = vld [vmem:[%s3 + $0xb50] sm:$0xff]
    %v4236 = vld [vmem:[%s3 + $0xb58] sm:$0xff]
    %v4237 = vld [vmem:[%s3 + $0xb60] sm:$0xff]
    %v4238 = vld [vmem:[%s3 + $0xb68] sm:$0xff]
    %v4239 = vld [vmem:[%s3 + $0xb70] sm:$0xff]
    %v4240 = vld [vmem:[%s3 + $0xb78] sm:$0xff]
    %v4241 = vrot.slane %v4084, 2
    %v4258 = vunpack.c.l.b16 %v4225
    %v4259 = vunpack.c.h.b16 %v4225
    %v4260 = vunpack.c.l.b16 %v4226
    %v4261 = vunpack.c.h.b16 %v4226
    %v4262 = vunpack.c.l.b16 %v4227
    %v4263 = vunpack.c.h.b16 %v4227
    %v4264 = vunpack.c.l.b16 %v4228
    %v4265 = vunpack.c.h.b16 %v4228
    %v4266 = vunpack.c.l.b16 %v4229
    %v4267 = vunpack.c.h.b16 %v4229
    %v4268 = vunpack.c.l.b16 %v4230
    %v4269 = vunpack.c.h.b16 %v4230
    %v4270 = vunpack.c.l.b16 %v4231
    %v4271 = vunpack.c.h.b16 %v4231
    %v4272 = vunpack.c.l.b16 %v4232
    %v4273 = vunpack.c.h.b16 %v4232
    %v4274 = vunpack.c.l.b16 %v4233
    %v4275 = vunpack.c.h.b16 %v4233
    %v4276 = vunpack.c.l.b16 %v4234
    %v4277 = vunpack.c.h.b16 %v4234
    %v4278 = vunpack.c.l.b16 %v4235
    %v4279 = vunpack.c.h.b16 %v4235
    %v4280 = vunpack.c.l.b16 %v4236
    %v4281 = vunpack.c.h.b16 %v4236
    %v4282 = vunpack.c.l.b16 %v4237
    %v4283 = vunpack.c.h.b16 %v4237
    %v4284 = vunpack.c.l.b16 %v4238
    %v4285 = vunpack.c.h.b16 %v4238
    %v4286 = vunpack.c.l.b16 %v4239
    %v4287 = vunpack.c.h.b16 %v4239
    %v4288 = vunpack.c.l.b16 %v4240
    %v4289 = vunpack.c.h.b16 %v4240
    %v4290 = vpack.c.b16 %v4262, %v4258
    %v4291 = vpack.c.b16 %v4263, %v4259
    %v4292 = vpack.c.b16 %v4264, %v4260
    %v4293 = vpack.c.b16 %v4265, %v4261
    %v4294 = vpack.c.b16 %v4270, %v4266
    %v4295 = vpack.c.b16 %v4271, %v4267
    %v4296 = vpack.c.b16 %v4272, %v4268
    %v4297 = vpack.c.b16 %v4273, %v4269
    %v4298 = vpack.c.b16 %v4278, %v4274
    %v4299 = vpack.c.b16 %v4279, %v4275
    %v4300 = vpack.c.b16 %v4280, %v4276
    %v4301 = vpack.c.b16 %v4281, %v4277
    %v4302 = vpack.c.b16 %v4286, %v4282
    %v4303 = vpack.c.b16 %v4287, %v4283
    %v4304 = vpack.c.b16 %v4288, %v4284
    %v4305 = vpack.c.b16 %v4289, %v4285
    %v4323 = vsel %vm526, %v4241, 0
    %4325 = vmatpush.bf16.msra.mxu0 0
    %4326 = vmatpush.bf16.msra.mxu0 0
    %4327 = vmatpush.bf16.msra.mxu0 0
    %4328 = vmatpush.bf16.msra.mxu0 0
    %4329 = vmatpush.bf16.msra.mxu0 %v4302
    %4330 = vmatpush.bf16.msra.mxu0 %v4298
    %4331 = vmatpush.bf16.msra.mxu0 %v4294
    %4332 = vmatpush.bf16.msra.mxu0 %v4290
    %4333 = vmatmul.bf16.gmra.mxu0 %v4323
    %v4334 = vpop.f32.mrf.mxu0
    %v4335 = vadd.f32 0.0, %v4334
    %v4336 = vpop.f32.mrf.mxu0
    %4337 = vdwg.mxu0
    %4338 = vmatpush.bf16.msra.mxu0 0
    %4339 = vmatpush.bf16.msra.mxu0 0
    %4340 = vmatpush.bf16.msra.mxu0 0
    %4341 = vmatpush.bf16.msra.mxu0 0
    %4342 = vmatpush.bf16.msra.mxu0 %v4303
    %4343 = vmatpush.bf16.msra.mxu0 %v4299
    %4344 = vmatpush.bf16.msra.mxu0 %v4295
    %4345 = vmatpush.bf16.msra.mxu0 %v4291
    %4346 = vmatmul.bf16.gmra.mxu0 %v4323
    %v4347 = vpop.f32.mrf.mxu0
    %v4348 = vadd.f32 0.0, %v4347
    %v4349 = vpop.f32.mrf.mxu0
    %4350 = vdwg.mxu0
    %4351 = vmatpush.bf16.msra.mxu0 0
    %4352 = vmatpush.bf16.msra.mxu0 0
    %4353 = vmatpush.bf16.msra.mxu0 0
    %4354 = vmatpush.bf16.msra.mxu0 0
    %4355 = vmatpush.bf16.msra.mxu0 %v4304
    %4356 = vmatpush.bf16.msra.mxu0 %v4300
    %4357 = vmatpush.bf16.msra.mxu0 %v4296
    %4358 = vmatpush.bf16.msra.mxu0 %v4292
    %4359 = vmatmul.bf16.gmra.mxu0 %v4323
    %v4360 = vpop.f32.mrf.mxu0
    %v4361 = vadd.f32 0.0, %v4360
    %v4362 = vpop.f32.mrf.mxu0
    %4363 = vdwg.mxu0
    %4364 = vmatpush.bf16.msra.mxu0 0
    %4365 = vmatpush.bf16.msra.mxu0 0
    %4366 = vmatpush.bf16.msra.mxu0 0
    %4367 = vmatpush.bf16.msra.mxu0 0
    %4368 = vmatpush.bf16.msra.mxu0 %v4305
    %4369 = vmatpush.bf16.msra.mxu0 %v4301
    %4370 = vmatpush.bf16.msra.mxu0 %v4297
    %4371 = vmatpush.bf16.msra.mxu0 %v4293
    %4372 = vmatmul.bf16.gmra.mxu0 %v4323
    %v4373 = vpop.f32.mrf.mxu0
    %v4374 = vadd.f32 0.0, %v4373
    %v4375 = vpop.f32.mrf.mxu0
    %4376 = vdwg.mxu0
    %v4377 = vadd.f32 %v4221, %v4335
    %v4378 = vadd.f32 %v4222, %v4348
    %v4379 = vadd.f32 %v4223, %v4361
    %v4380 = vadd.f32 %v4224, %v4374
    %v4381 = vld [vmem:[%s3 + $0xb80] sm:$0xff]
    %v4382 = vld [vmem:[%s3 + $0xb88] sm:$0xff]
    %v4383 = vld [vmem:[%s3 + $0xb90] sm:$0xff]
    %v4384 = vld [vmem:[%s3 + $0xb98] sm:$0xff]
    %v4385 = vld [vmem:[%s3 + $0xba0] sm:$0xff]
    %v4386 = vld [vmem:[%s3 + $0xba8] sm:$0xff]
    %v4387 = vld [vmem:[%s3 + $0xbb0] sm:$0xff]
    %v4388 = vld [vmem:[%s3 + $0xbb8] sm:$0xff]
    %v4389 = vld [vmem:[%s3 + $0xbc0] sm:$0xff]
    %v4390 = vld [vmem:[%s3 + $0xbc8] sm:$0xff]
    %v4391 = vld [vmem:[%s3 + $0xbd0] sm:$0xff]
    %v4392 = vld [vmem:[%s3 + $0xbd8] sm:$0xff]
    %v4393 = vld [vmem:[%s3 + $0xbe0] sm:$0xff]
    %v4394 = vld [vmem:[%s3 + $0xbe8] sm:$0xff]
    %v4395 = vld [vmem:[%s3 + $0xbf0] sm:$0xff]
    %v4396 = vld [vmem:[%s3 + $0xbf8] sm:$0xff]
    %v4397 = vrot.slane %v4084, 3
    %v4414 = vunpack.c.l.b16 %v4381
    %v4415 = vunpack.c.h.b16 %v4381
    %v4416 = vunpack.c.l.b16 %v4382
    %v4417 = vunpack.c.h.b16 %v4382
    %v4418 = vunpack.c.l.b16 %v4383
    %v4419 = vunpack.c.h.b16 %v4383
    %v4420 = vunpack.c.l.b16 %v4384
    %v4421 = vunpack.c.h.b16 %v4384
    %v4422 = vunpack.c.l.b16 %v4385
    %v4423 = vunpack.c.h.b16 %v4385
    %v4424 = vunpack.c.l.b16 %v4386
    %v4425 = vunpack.c.h.b16 %v4386
    %v4426 = vunpack.c.l.b16 %v4387
    %v4427 = vunpack.c.h.b16 %v4387
    %v4428 = vunpack.c.l.b16 %v4388
    %v4429 = vunpack.c.h.b16 %v4388
    %v4430 = vunpack.c.l.b16 %v4389
    %v4431 = vunpack.c.h.b16 %v4389
    %v4432 = vunpack.c.l.b16 %v4390
    %v4433 = vunpack.c.h.b16 %v4390
    %v4434 = vunpack.c.l.b16 %v4391
    %v4435 = vunpack.c.h.b16 %v4391
    %v4436 = vunpack.c.l.b16 %v4392
    %v4437 = vunpack.c.h.b16 %v4392
    %v4438 = vunpack.c.l.b16 %v4393
    %v4439 = vunpack.c.h.b16 %v4393
    %v4440 = vunpack.c.l.b16 %v4394
    %v4441 = vunpack.c.h.b16 %v4394
    %v4442 = vunpack.c.l.b16 %v4395
    %v4443 = vunpack.c.h.b16 %v4395
    %v4444 = vunpack.c.l.b16 %v4396
    %v4445 = vunpack.c.h.b16 %v4396
    %v4446 = vpack.c.b16 %v4418, %v4414
    %v4447 = vpack.c.b16 %v4419, %v4415
    %v4448 = vpack.c.b16 %v4420, %v4416
    %v4449 = vpack.c.b16 %v4421, %v4417
    %v4450 = vpack.c.b16 %v4426, %v4422
    %v4451 = vpack.c.b16 %v4427, %v4423
    %v4452 = vpack.c.b16 %v4428, %v4424
    %v4453 = vpack.c.b16 %v4429, %v4425
    %v4454 = vpack.c.b16 %v4434, %v4430
    %v4455 = vpack.c.b16 %v4435, %v4431
    %v4456 = vpack.c.b16 %v4436, %v4432
    %v4457 = vpack.c.b16 %v4437, %v4433
    %v4458 = vpack.c.b16 %v4442, %v4438
    %v4459 = vpack.c.b16 %v4443, %v4439
    %v4460 = vpack.c.b16 %v4444, %v4440
    %v4461 = vpack.c.b16 %v4445, %v4441
    %v4479 = vsel %vm526, %v4397, 0
    %4481 = vmatpush.bf16.msra.mxu0 0
    %4482 = vmatpush.bf16.msra.mxu0 0
    %4483 = vmatpush.bf16.msra.mxu0 0
    %4484 = vmatpush.bf16.msra.mxu0 0
    %4485 = vmatpush.bf16.msra.mxu0 %v4458
    %4486 = vmatpush.bf16.msra.mxu0 %v4454
    %4487 = vmatpush.bf16.msra.mxu0 %v4450
    %4488 = vmatpush.bf16.msra.mxu0 %v4446
    %4489 = vmatmul.bf16.gmra.mxu0 %v4479
    %v4490 = vpop.f32.mrf.mxu0
    %v4491 = vadd.f32 0.0, %v4490
    %v4492 = vpop.f32.mrf.mxu0
    %4493 = vdwg.mxu0
    %4494 = vmatpush.bf16.msra.mxu0 0
    %4495 = vmatpush.bf16.msra.mxu0 0
    %4496 = vmatpush.bf16.msra.mxu0 0
    %4497 = vmatpush.bf16.msra.mxu0 0
    %4498 = vmatpush.bf16.msra.mxu0 %v4459
    %4499 = vmatpush.bf16.msra.mxu0 %v4455
    %4500 = vmatpush.bf16.msra.mxu0 %v4451
    %4501 = vmatpush.bf16.msra.mxu0 %v4447
    %4502 = vmatmul.bf16.gmra.mxu0 %v4479
    %v4503 = vpop.f32.mrf.mxu0
    %v4504 = vadd.f32 0.0, %v4503
    %v4505 = vpop.f32.mrf.mxu0
    %4506 = vdwg.mxu0
    %4507 = vmatpush.bf16.msra.mxu0 0
    %4508 = vmatpush.bf16.msra.mxu0 0
    %4509 = vmatpush.bf16.msra.mxu0 0
    %4510 = vmatpush.bf16.msra.mxu0 0
    %4511 = vmatpush.bf16.msra.mxu0 %v4460
    %4512 = vmatpush.bf16.msra.mxu0 %v4456
    %4513 = vmatpush.bf16.msra.mxu0 %v4452
    %4514 = vmatpush.bf16.msra.mxu0 %v4448
    %4515 = vmatmul.bf16.gmra.mxu0 %v4479
    %v4516 = vpop.f32.mrf.mxu0
    %v4517 = vadd.f32 0.0, %v4516
    %v4518 = vpop.f32.mrf.mxu0
    %4519 = vdwg.mxu0
    %4520 = vmatpush.bf16.msra.mxu0 0
    %4521 = vmatpush.bf16.msra.mxu0 0
    %4522 = vmatpush.bf16.msra.mxu0 0
    %4523 = vmatpush.bf16.msra.mxu0 0
    %4524 = vmatpush.bf16.msra.mxu0 %v4461
    %4525 = vmatpush.bf16.msra.mxu0 %v4457
    %4526 = vmatpush.bf16.msra.mxu0 %v4453
    %4527 = vmatpush.bf16.msra.mxu0 %v4449
    %4528 = vmatmul.bf16.gmra.mxu0 %v4479
    %v4529 = vpop.f32.mrf.mxu0
    %v4530 = vadd.f32 0.0, %v4529
    %v4531 = vpop.f32.mrf.mxu0
    %4532 = vdwg.mxu0
    %v4533 = vadd.f32 %v4377, %v4491
    %v4534 = vadd.f32 %v4378, %v4504
    %v4535 = vadd.f32 %v4379, %v4517
    %v4536 = vadd.f32 %v4380, %v4530
    %v4537 = vld [vmem:[%s3 + $0xc00] sm:$0xff]
    %v4538 = vld [vmem:[%s3 + $0xc08] sm:$0xff]
    %v4539 = vld [vmem:[%s3 + $0xc10] sm:$0xff]
    %v4540 = vld [vmem:[%s3 + $0xc18] sm:$0xff]
    %v4541 = vld [vmem:[%s3 + $0xc20] sm:$0xff]
    %v4542 = vld [vmem:[%s3 + $0xc28] sm:$0xff]
    %v4543 = vld [vmem:[%s3 + $0xc30] sm:$0xff]
    %v4544 = vld [vmem:[%s3 + $0xc38] sm:$0xff]
    %v4545 = vld [vmem:[%s3 + $0xc40] sm:$0xff]
    %v4546 = vld [vmem:[%s3 + $0xc48] sm:$0xff]
    %v4547 = vld [vmem:[%s3 + $0xc50] sm:$0xff]
    %v4548 = vld [vmem:[%s3 + $0xc58] sm:$0xff]
    %v4549 = vld [vmem:[%s3 + $0xc60] sm:$0xff]
    %v4550 = vld [vmem:[%s3 + $0xc68] sm:$0xff]
    %v4551 = vld [vmem:[%s3 + $0xc70] sm:$0xff]
    %v4552 = vld [vmem:[%s3 + $0xc78] sm:$0xff]
    %v4569 = vunpack.c.l.b16 %v4537
    %v4570 = vunpack.c.h.b16 %v4537
    %v4571 = vunpack.c.l.b16 %v4538
    %v4572 = vunpack.c.h.b16 %v4538
    %v4573 = vunpack.c.l.b16 %v4539
    %v4574 = vunpack.c.h.b16 %v4539
    %v4575 = vunpack.c.l.b16 %v4540
    %v4576 = vunpack.c.h.b16 %v4540
    %v4577 = vunpack.c.l.b16 %v4541
    %v4578 = vunpack.c.h.b16 %v4541
    %v4579 = vunpack.c.l.b16 %v4542
    %v4580 = vunpack.c.h.b16 %v4542
    %v4581 = vunpack.c.l.b16 %v4543
    %v4582 = vunpack.c.h.b16 %v4543
    %v4583 = vunpack.c.l.b16 %v4544
    %v4584 = vunpack.c.h.b16 %v4544
    %v4585 = vunpack.c.l.b16 %v4545
    %v4586 = vunpack.c.h.b16 %v4545
    %v4587 = vunpack.c.l.b16 %v4546
    %v4588 = vunpack.c.h.b16 %v4546
    %v4589 = vunpack.c.l.b16 %v4547
    %v4590 = vunpack.c.h.b16 %v4547
    %v4591 = vunpack.c.l.b16 %v4548
    %v4592 = vunpack.c.h.b16 %v4548
    %v4593 = vunpack.c.l.b16 %v4549
    %v4594 = vunpack.c.h.b16 %v4549
    %v4595 = vunpack.c.l.b16 %v4550
    %v4596 = vunpack.c.h.b16 %v4550
    %v4597 = vunpack.c.l.b16 %v4551
    %v4598 = vunpack.c.h.b16 %v4551
    %v4599 = vunpack.c.l.b16 %v4552
    %v4600 = vunpack.c.h.b16 %v4552
    %v4601 = vpack.c.b16 %v4573, %v4569
    %v4602 = vpack.c.b16 %v4574, %v4570
    %v4603 = vpack.c.b16 %v4575, %v4571
    %v4604 = vpack.c.b16 %v4576, %v4572
    %v4605 = vpack.c.b16 %v4581, %v4577
    %v4606 = vpack.c.b16 %v4582, %v4578
    %v4607 = vpack.c.b16 %v4583, %v4579
    %v4608 = vpack.c.b16 %v4584, %v4580
    %v4609 = vpack.c.b16 %v4589, %v4585
    %v4610 = vpack.c.b16 %v4590, %v4586
    %v4611 = vpack.c.b16 %v4591, %v4587
    %v4612 = vpack.c.b16 %v4592, %v4588
    %v4613 = vpack.c.b16 %v4597, %v4593
    %v4614 = vpack.c.b16 %v4598, %v4594
    %v4615 = vpack.c.b16 %v4599, %v4595
    %v4616 = vpack.c.b16 %v4600, %v4596
    %v4634 = vsel %vm526, %v782, 0
    %4636 = vmatpush.bf16.msra.mxu0 0
    %4637 = vmatpush.bf16.msra.mxu0 0
    %4638 = vmatpush.bf16.msra.mxu0 0
    %4639 = vmatpush.bf16.msra.mxu0 0
    %4640 = vmatpush.bf16.msra.mxu0 %v4613
    %4641 = vmatpush.bf16.msra.mxu0 %v4609
    %4642 = vmatpush.bf16.msra.mxu0 %v4605
    %4643 = vmatpush.bf16.msra.mxu0 %v4601
    %4644 = vmatmul.bf16.gmra.mxu0 %v4634
    %v4645 = vpop.f32.mrf.mxu0
    %v4646 = vadd.f32 0.0, %v4645
    %v4647 = vpop.f32.mrf.mxu0
    %4648 = vdwg.mxu0
    %4649 = vmatpush.bf16.msra.mxu0 0
    %4650 = vmatpush.bf16.msra.mxu0 0
    %4651 = vmatpush.bf16.msra.mxu0 0
    %4652 = vmatpush.bf16.msra.mxu0 0
    %4653 = vmatpush.bf16.msra.mxu0 %v4614
    %4654 = vmatpush.bf16.msra.mxu0 %v4610
    %4655 = vmatpush.bf16.msra.mxu0 %v4606
    %4656 = vmatpush.bf16.msra.mxu0 %v4602
    %4657 = vmatmul.bf16.gmra.mxu0 %v4634
    %v4658 = vpop.f32.mrf.mxu0
    %v4659 = vadd.f32 0.0, %v4658
    %v4660 = vpop.f32.mrf.mxu0
    %4661 = vdwg.mxu0
    %4662 = vmatpush.bf16.msra.mxu0 0
    %4663 = vmatpush.bf16.msra.mxu0 0
    %4664 = vmatpush.bf16.msra.mxu0 0
    %4665 = vmatpush.bf16.msra.mxu0 0
    %4666 = vmatpush.bf16.msra.mxu0 %v4615
    %4667 = vmatpush.bf16.msra.mxu0 %v4611
    %4668 = vmatpush.bf16.msra.mxu0 %v4607
    %4669 = vmatpush.bf16.msra.mxu0 %v4603
    %4670 = vmatmul.bf16.gmra.mxu0 %v4634
    %v4671 = vpop.f32.mrf.mxu0
    %v4672 = vadd.f32 0.0, %v4671
    %v4673 = vpop.f32.mrf.mxu0
    %4674 = vdwg.mxu0
    %4675 = vmatpush.bf16.msra.mxu0 0
    %4676 = vmatpush.bf16.msra.mxu0 0
    %4677 = vmatpush.bf16.msra.mxu0 0
    %4678 = vmatpush.bf16.msra.mxu0 0
    %4679 = vmatpush.bf16.msra.mxu0 %v4616
    %4680 = vmatpush.bf16.msra.mxu0 %v4612
    %4681 = vmatpush.bf16.msra.mxu0 %v4608
    %4682 = vmatpush.bf16.msra.mxu0 %v4604
    %4683 = vmatmul.bf16.gmra.mxu0 %v4634
    %v4684 = vpop.f32.mrf.mxu0
    %v4685 = vadd.f32 0.0, %v4684
    %v4686 = vpop.f32.mrf.mxu0
    %4687 = vdwg.mxu0
    %v4688 = vadd.f32 %v4533, %v4646
    %v4689 = vadd.f32 %v4534, %v4659
    %v4690 = vadd.f32 %v4535, %v4672
    %v4691 = vadd.f32 %v4536, %v4685
    %v4692 = vld [vmem:[%s3 + $0xc80] sm:$0xff]
    %v4693 = vld [vmem:[%s3 + $0xc88] sm:$0xff]
    %v4694 = vld [vmem:[%s3 + $0xc90] sm:$0xff]
    %v4695 = vld [vmem:[%s3 + $0xc98] sm:$0xff]
    %v4696 = vld [vmem:[%s3 + $0xca0] sm:$0xff]
    %v4697 = vld [vmem:[%s3 + $0xca8] sm:$0xff]
    %v4698 = vld [vmem:[%s3 + $0xcb0] sm:$0xff]
    %v4699 = vld [vmem:[%s3 + $0xcb8] sm:$0xff]
    %v4700 = vld [vmem:[%s3 + $0xcc0] sm:$0xff]
    %v4701 = vld [vmem:[%s3 + $0xcc8] sm:$0xff]
    %v4702 = vld [vmem:[%s3 + $0xcd0] sm:$0xff]
    %v4703 = vld [vmem:[%s3 + $0xcd8] sm:$0xff]
    %v4704 = vld [vmem:[%s3 + $0xce0] sm:$0xff]
    %v4705 = vld [vmem:[%s3 + $0xce8] sm:$0xff]
    %v4706 = vld [vmem:[%s3 + $0xcf0] sm:$0xff]
    %v4707 = vld [vmem:[%s3 + $0xcf8] sm:$0xff]
    %v4709 = vunpack.c.l.b16 %v782
    %v4710 = vpack.c.b16 %v4709, %v4709
    %v4711 = vrot.slane %v4710, 1
    %v4728 = vunpack.c.l.b16 %v4692
    %v4729 = vunpack.c.h.b16 %v4692
    %v4730 = vunpack.c.l.b16 %v4693
    %v4731 = vunpack.c.h.b16 %v4693
    %v4732 = vunpack.c.l.b16 %v4694
    %v4733 = vunpack.c.h.b16 %v4694
    %v4734 = vunpack.c.l.b16 %v4695
    %v4735 = vunpack.c.h.b16 %v4695
    %v4736 = vunpack.c.l.b16 %v4696
    %v4737 = vunpack.c.h.b16 %v4696
    %v4738 = vunpack.c.l.b16 %v4697
    %v4739 = vunpack.c.h.b16 %v4697
    %v4740 = vunpack.c.l.b16 %v4698
    %v4741 = vunpack.c.h.b16 %v4698
    %v4742 = vunpack.c.l.b16 %v4699
    %v4743 = vunpack.c.h.b16 %v4699
    %v4744 = vunpack.c.l.b16 %v4700
    %v4745 = vunpack.c.h.b16 %v4700
    %v4746 = vunpack.c.l.b16 %v4701
    %v4747 = vunpack.c.h.b16 %v4701
    %v4748 = vunpack.c.l.b16 %v4702
    %v4749 = vunpack.c.h.b16 %v4702
    %v4750 = vunpack.c.l.b16 %v4703
    %v4751 = vunpack.c.h.b16 %v4703
    %v4752 = vunpack.c.l.b16 %v4704
    %v4753 = vunpack.c.h.b16 %v4704
    %v4754 = vunpack.c.l.b16 %v4705
    %v4755 = vunpack.c.h.b16 %v4705
    %v4756 = vunpack.c.l.b16 %v4706
    %v4757 = vunpack.c.h.b16 %v4706
    %v4758 = vunpack.c.l.b16 %v4707
    %v4759 = vunpack.c.h.b16 %v4707
    %v4760 = vpack.c.b16 %v4732, %v4728
    %v4761 = vpack.c.b16 %v4733, %v4729
    %v4762 = vpack.c.b16 %v4734, %v4730
    %v4763 = vpack.c.b16 %v4735, %v4731
    %v4764 = vpack.c.b16 %v4740, %v4736
    %v4765 = vpack.c.b16 %v4741, %v4737
    %v4766 = vpack.c.b16 %v4742, %v4738
    %v4767 = vpack.c.b16 %v4743, %v4739
    %v4768 = vpack.c.b16 %v4748, %v4744
    %v4769 = vpack.c.b16 %v4749, %v4745
    %v4770 = vpack.c.b16 %v4750, %v4746
    %v4771 = vpack.c.b16 %v4751, %v4747
    %v4772 = vpack.c.b16 %v4756, %v4752
    %v4773 = vpack.c.b16 %v4757, %v4753
    %v4774 = vpack.c.b16 %v4758, %v4754
    %v4775 = vpack.c.b16 %v4759, %v4755
    %v4793 = vsel %vm526, %v4711, 0
    %4795 = vmatpush.bf16.msra.mxu0 0
    %4796 = vmatpush.bf16.msra.mxu0 0
    %4797 = vmatpush.bf16.msra.mxu0 0
    %4798 = vmatpush.bf16.msra.mxu0 0
    %4799 = vmatpush.bf16.msra.mxu0 %v4772
    %4800 = vmatpush.bf16.msra.mxu0 %v4768
    %4801 = vmatpush.bf16.msra.mxu0 %v4764
    %4802 = vmatpush.bf16.msra.mxu0 %v4760
    %4803 = vmatmul.bf16.gmra.mxu0 %v4793
    %v4804 = vpop.f32.mrf.mxu0
    %v4805 = vadd.f32 0.0, %v4804
    %v4806 = vpop.f32.mrf.mxu0
    %4807 = vdwg.mxu0
    %4808 = vmatpush.bf16.msra.mxu0 0
    %4809 = vmatpush.bf16.msra.mxu0 0
    %4810 = vmatpush.bf16.msra.mxu0 0
    %4811 = vmatpush.bf16.msra.mxu0 0
    %4812 = vmatpush.bf16.msra.mxu0 %v4773
    %4813 = vmatpush.bf16.msra.mxu0 %v4769
    %4814 = vmatpush.bf16.msra.mxu0 %v4765
    %4815 = vmatpush.bf16.msra.mxu0 %v4761
    %4816 = vmatmul.bf16.gmra.mxu0 %v4793
    %v4817 = vpop.f32.mrf.mxu0
    %v4818 = vadd.f32 0.0, %v4817
    %v4819 = vpop.f32.mrf.mxu0
    %4820 = vdwg.mxu0
    %4821 = vmatpush.bf16.msra.mxu0 0
    %4822 = vmatpush.bf16.msra.mxu0 0
    %4823 = vmatpush.bf16.msra.mxu0 0
    %4824 = vmatpush.bf16.msra.mxu0 0
    %4825 = vmatpush.bf16.msra.mxu0 %v4774
    %4826 = vmatpush.bf16.msra.mxu0 %v4770
    %4827 = vmatpush.bf16.msra.mxu0 %v4766
    %4828 = vmatpush.bf16.msra.mxu0 %v4762
    %4829 = vmatmul.bf16.gmra.mxu0 %v4793
    %v4830 = vpop.f32.mrf.mxu0
    %v4831 = vadd.f32 0.0, %v4830
    %v4832 = vpop.f32.mrf.mxu0
    %4833 = vdwg.mxu0
    %4834 = vmatpush.bf16.msra.mxu0 0
    %4835 = vmatpush.bf16.msra.mxu0 0
    %4836 = vmatpush.bf16.msra.mxu0 0
    %4837 = vmatpush.bf16.msra.mxu0 0
    %4838 = vmatpush.bf16.msra.mxu0 %v4775
    %4839 = vmatpush.bf16.msra.mxu0 %v4771
    %4840 = vmatpush.bf16.msra.mxu0 %v4767
    %4841 = vmatpush.bf16.msra.mxu0 %v4763
    %4842 = vmatmul.bf16.gmra.mxu0 %v4793
    %v4843 = vpop.f32.mrf.mxu0
    %v4844 = vadd.f32 0.0, %v4843
    %v4845 = vpop.f32.mrf.mxu0
    %4846 = vdwg.mxu0
    %v4847 = vadd.f32 %v4688, %v4805
    %v4848 = vadd.f32 %v4689, %v4818
    %v4849 = vadd.f32 %v4690, %v4831
    %v4850 = vadd.f32 %v4691, %v4844
    %v4851 = vld [vmem:[%s3 + $0xd00] sm:$0xff]
    %v4852 = vld [vmem:[%s3 + $0xd08] sm:$0xff]
    %v4853 = vld [vmem:[%s3 + $0xd10] sm:$0xff]
    %v4854 = vld [vmem:[%s3 + $0xd18] sm:$0xff]
    %v4855 = vld [vmem:[%s3 + $0xd20] sm:$0xff]
    %v4856 = vld [vmem:[%s3 + $0xd28] sm:$0xff]
    %v4857 = vld [vmem:[%s3 + $0xd30] sm:$0xff]
    %v4858 = vld [vmem:[%s3 + $0xd38] sm:$0xff]
    %v4859 = vld [vmem:[%s3 + $0xd40] sm:$0xff]
    %v4860 = vld [vmem:[%s3 + $0xd48] sm:$0xff]
    %v4861 = vld [vmem:[%s3 + $0xd50] sm:$0xff]
    %v4862 = vld [vmem:[%s3 + $0xd58] sm:$0xff]
    %v4863 = vld [vmem:[%s3 + $0xd60] sm:$0xff]
    %v4864 = vld [vmem:[%s3 + $0xd68] sm:$0xff]
    %v4865 = vld [vmem:[%s3 + $0xd70] sm:$0xff]
    %v4866 = vld [vmem:[%s3 + $0xd78] sm:$0xff]
    %v4867 = vrot.slane %v4710, 2
    %v4884 = vunpack.c.l.b16 %v4851
    %v4885 = vunpack.c.h.b16 %v4851
    %v4886 = vunpack.c.l.b16 %v4852
    %v4887 = vunpack.c.h.b16 %v4852
    %v4888 = vunpack.c.l.b16 %v4853
    %v4889 = vunpack.c.h.b16 %v4853
    %v4890 = vunpack.c.l.b16 %v4854
    %v4891 = vunpack.c.h.b16 %v4854
    %v4892 = vunpack.c.l.b16 %v4855
    %v4893 = vunpack.c.h.b16 %v4855
    %v4894 = vunpack.c.l.b16 %v4856
    %v4895 = vunpack.c.h.b16 %v4856
    %v4896 = vunpack.c.l.b16 %v4857
    %v4897 = vunpack.c.h.b16 %v4857
    %v4898 = vunpack.c.l.b16 %v4858
    %v4899 = vunpack.c.h.b16 %v4858
    %v4900 = vunpack.c.l.b16 %v4859
    %v4901 = vunpack.c.h.b16 %v4859
    %v4902 = vunpack.c.l.b16 %v4860
    %v4903 = vunpack.c.h.b16 %v4860
    %v4904 = vunpack.c.l.b16 %v4861
    %v4905 = vunpack.c.h.b16 %v4861
    %v4906 = vunpack.c.l.b16 %v4862
    %v4907 = vunpack.c.h.b16 %v4862
    %v4908 = vunpack.c.l.b16 %v4863
    %v4909 = vunpack.c.h.b16 %v4863
    %v4910 = vunpack.c.l.b16 %v4864
    %v4911 = vunpack.c.h.b16 %v4864
    %v4912 = vunpack.c.l.b16 %v4865
    %v4913 = vunpack.c.h.b16 %v4865
    %v4914 = vunpack.c.l.b16 %v4866
    %v4915 = vunpack.c.h.b16 %v4866
    %v4916 = vpack.c.b16 %v4888, %v4884
    %v4917 = vpack.c.b16 %v4889, %v4885
    %v4918 = vpack.c.b16 %v4890, %v4886
    %v4919 = vpack.c.b16 %v4891, %v4887
    %v4920 = vpack.c.b16 %v4896, %v4892
    %v4921 = vpack.c.b16 %v4897, %v4893
    %v4922 = vpack.c.b16 %v4898, %v4894
    %v4923 = vpack.c.b16 %v4899, %v4895
    %v4924 = vpack.c.b16 %v4904, %v4900
    %v4925 = vpack.c.b16 %v4905, %v4901
    %v4926 = vpack.c.b16 %v4906, %v4902
    %v4927 = vpack.c.b16 %v4907, %v4903
    %v4928 = vpack.c.b16 %v4912, %v4908
    %v4929 = vpack.c.b16 %v4913, %v4909
    %v4930 = vpack.c.b16 %v4914, %v4910
    %v4931 = vpack.c.b16 %v4915, %v4911
    %v4949 = vsel %vm526, %v4867, 0
    %4951 = vmatpush.bf16.msra.mxu0 0
    %4952 = vmatpush.bf16.msra.mxu0 0
    %4953 = vmatpush.bf16.msra.mxu0 0
    %4954 = vmatpush.bf16.msra.mxu0 0
    %4955 = vmatpush.bf16.msra.mxu0 %v4928
    %4956 = vmatpush.bf16.msra.mxu0 %v4924
    %4957 = vmatpush.bf16.msra.mxu0 %v4920
    %4958 = vmatpush.bf16.msra.mxu0 %v4916
    %4959 = vmatmul.bf16.gmra.mxu0 %v4949
    %v4960 = vpop.f32.mrf.mxu0
    %v4961 = vadd.f32 0.0, %v4960
    %v4962 = vpop.f32.mrf.mxu0
    %4963 = vdwg.mxu0
    %4964 = vmatpush.bf16.msra.mxu0 0
    %4965 = vmatpush.bf16.msra.mxu0 0
    %4966 = vmatpush.bf16.msra.mxu0 0
    %4967 = vmatpush.bf16.msra.mxu0 0
    %4968 = vmatpush.bf16.msra.mxu0 %v4929
    %4969 = vmatpush.bf16.msra.mxu0 %v4925
    %4970 = vmatpush.bf16.msra.mxu0 %v4921
    %4971 = vmatpush.bf16.msra.mxu0 %v4917
    %4972 = vmatmul.bf16.gmra.mxu0 %v4949
    %v4973 = vpop.f32.mrf.mxu0
    %v4974 = vadd.f32 0.0, %v4973
    %v4975 = vpop.f32.mrf.mxu0
    %4976 = vdwg.mxu0
    %4977 = vmatpush.bf16.msra.mxu0 0
    %4978 = vmatpush.bf16.msra.mxu0 0
    %4979 = vmatpush.bf16.msra.mxu0 0
    %4980 = vmatpush.bf16.msra.mxu0 0
    %4981 = vmatpush.bf16.msra.mxu0 %v4930
    %4982 = vmatpush.bf16.msra.mxu0 %v4926
    %4983 = vmatpush.bf16.msra.mxu0 %v4922
    %4984 = vmatpush.bf16.msra.mxu0 %v4918
    %4985 = vmatmul.bf16.gmra.mxu0 %v4949
    %v4986 = vpop.f32.mrf.mxu0
    %v4987 = vadd.f32 0.0, %v4986
    %v4988 = vpop.f32.mrf.mxu0
    %4989 = vdwg.mxu0
    %4990 = vmatpush.bf16.msra.mxu0 0
    %4991 = vmatpush.bf16.msra.mxu0 0
    %4992 = vmatpush.bf16.msra.mxu0 0
    %4993 = vmatpush.bf16.msra.mxu0 0
    %4994 = vmatpush.bf16.msra.mxu0 %v4931
    %4995 = vmatpush.bf16.msra.mxu0 %v4927
    %4996 = vmatpush.bf16.msra.mxu0 %v4923
    %4997 = vmatpush.bf16.msra.mxu0 %v4919
    %4998 = vmatmul.bf16.gmra.mxu0 %v4949
    %v4999 = vpop.f32.mrf.mxu0
    %v5000 = vadd.f32 0.0, %v4999
    %v5001 = vpop.f32.mrf.mxu0
    %5002 = vdwg.mxu0
    %v5003 = vadd.f32 %v4847, %v4961
    %v5004 = vadd.f32 %v4848, %v4974
    %v5005 = vadd.f32 %v4849, %v4987
    %v5006 = vadd.f32 %v4850, %v5000
    %v5007 = vld [vmem:[%s3 + $0xd80] sm:$0xff]
    %v5008 = vld [vmem:[%s3 + $0xd88] sm:$0xff]
    %v5009 = vld [vmem:[%s3 + $0xd90] sm:$0xff]
    %v5010 = vld [vmem:[%s3 + $0xd98] sm:$0xff]
    %v5011 = vld [vmem:[%s3 + $0xda0] sm:$0xff]
    %v5012 = vld [vmem:[%s3 + $0xda8] sm:$0xff]
    %v5013 = vld [vmem:[%s3 + $0xdb0] sm:$0xff]
    %v5014 = vld [vmem:[%s3 + $0xdb8] sm:$0xff]
    %v5015 = vld [vmem:[%s3 + $0xdc0] sm:$0xff]
    %v5016 = vld [vmem:[%s3 + $0xdc8] sm:$0xff]
    %v5017 = vld [vmem:[%s3 + $0xdd0] sm:$0xff]
    %v5018 = vld [vmem:[%s3 + $0xdd8] sm:$0xff]
    %v5019 = vld [vmem:[%s3 + $0xde0] sm:$0xff]
    %v5020 = vld [vmem:[%s3 + $0xde8] sm:$0xff]
    %v5021 = vld [vmem:[%s3 + $0xdf0] sm:$0xff]
    %v5022 = vld [vmem:[%s3 + $0xdf8] sm:$0xff]
    %v5023 = vrot.slane %v4710, 3
    %v5040 = vunpack.c.l.b16 %v5007
    %v5041 = vunpack.c.h.b16 %v5007
    %v5042 = vunpack.c.l.b16 %v5008
    %v5043 = vunpack.c.h.b16 %v5008
    %v5044 = vunpack.c.l.b16 %v5009
    %v5045 = vunpack.c.h.b16 %v5009
    %v5046 = vunpack.c.l.b16 %v5010
    %v5047 = vunpack.c.h.b16 %v5010
    %v5048 = vunpack.c.l.b16 %v5011
    %v5049 = vunpack.c.h.b16 %v5011
    %v5050 = vunpack.c.l.b16 %v5012
    %v5051 = vunpack.c.h.b16 %v5012
    %v5052 = vunpack.c.l.b16 %v5013
    %v5053 = vunpack.c.h.b16 %v5013
    %v5054 = vunpack.c.l.b16 %v5014
    %v5055 = vunpack.c.h.b16 %v5014
    %v5056 = vunpack.c.l.b16 %v5015
    %v5057 = vunpack.c.h.b16 %v5015
    %v5058 = vunpack.c.l.b16 %v5016
    %v5059 = vunpack.c.h.b16 %v5016
    %v5060 = vunpack.c.l.b16 %v5017
    %v5061 = vunpack.c.h.b16 %v5017
    %v5062 = vunpack.c.l.b16 %v5018
    %v5063 = vunpack.c.h.b16 %v5018
    %v5064 = vunpack.c.l.b16 %v5019
    %v5065 = vunpack.c.h.b16 %v5019
    %v5066 = vunpack.c.l.b16 %v5020
    %v5067 = vunpack.c.h.b16 %v5020
    %v5068 = vunpack.c.l.b16 %v5021
    %v5069 = vunpack.c.h.b16 %v5021
    %v5070 = vunpack.c.l.b16 %v5022
    %v5071 = vunpack.c.h.b16 %v5022
    %v5072 = vpack.c.b16 %v5044, %v5040
    %v5073 = vpack.c.b16 %v5045, %v5041
    %v5074 = vpack.c.b16 %v5046, %v5042
    %v5075 = vpack.c.b16 %v5047, %v5043
    %v5076 = vpack.c.b16 %v5052, %v5048
    %v5077 = vpack.c.b16 %v5053, %v5049
    %v5078 = vpack.c.b16 %v5054, %v5050
    %v5079 = vpack.c.b16 %v5055, %v5051
    %v5080 = vpack.c.b16 %v5060, %v5056
    %v5081 = vpack.c.b16 %v5061, %v5057
    %v5082 = vpack.c.b16 %v5062, %v5058
    %v5083 = vpack.c.b16 %v5063, %v5059
    %v5084 = vpack.c.b16 %v5068, %v5064
    %v5085 = vpack.c.b16 %v5069, %v5065
    %v5086 = vpack.c.b16 %v5070, %v5066
    %v5087 = vpack.c.b16 %v5071, %v5067
    %v5105 = vsel %vm526, %v5023, 0
    %5107 = vmatpush.bf16.msra.mxu0 0
    %5108 = vmatpush.bf16.msra.mxu0 0
    %5109 = vmatpush.bf16.msra.mxu0 0
    %5110 = vmatpush.bf16.msra.mxu0 0
    %5111 = vmatpush.bf16.msra.mxu0 %v5084
    %5112 = vmatpush.bf16.msra.mxu0 %v5080
    %5113 = vmatpush.bf16.msra.mxu0 %v5076
    %5114 = vmatpush.bf16.msra.mxu0 %v5072
    %5115 = vmatmul.bf16.gmra.mxu0 %v5105
    %v5116 = vpop.f32.mrf.mxu0
    %v5117 = vadd.f32 0.0, %v5116
    %v5118 = vpop.f32.mrf.mxu0
    %5119 = vdwg.mxu0
    %5120 = vmatpush.bf16.msra.mxu0 0
    %5121 = vmatpush.bf16.msra.mxu0 0
    %5122 = vmatpush.bf16.msra.mxu0 0
    %5123 = vmatpush.bf16.msra.mxu0 0
    %5124 = vmatpush.bf16.msra.mxu0 %v5085
    %5125 = vmatpush.bf16.msra.mxu0 %v5081
    %5126 = vmatpush.bf16.msra.mxu0 %v5077
    %5127 = vmatpush.bf16.msra.mxu0 %v5073
    %5128 = vmatmul.bf16.gmra.mxu0 %v5105
    %v5129 = vpop.f32.mrf.mxu0
    %v5130 = vadd.f32 0.0, %v5129
    %v5131 = vpop.f32.mrf.mxu0
    %5132 = vdwg.mxu0
    %5133 = vmatpush.bf16.msra.mxu0 0
    %5134 = vmatpush.bf16.msra.mxu0 0
    %5135 = vmatpush.bf16.msra.mxu0 0
    %5136 = vmatpush.bf16.msra.mxu0 0
    %5137 = vmatpush.bf16.msra.mxu0 %v5086
    %5138 = vmatpush.bf16.msra.mxu0 %v5082
    %5139 = vmatpush.bf16.msra.mxu0 %v5078
    %5140 = vmatpush.bf16.msra.mxu0 %v5074
    %5141 = vmatmul.bf16.gmra.mxu0 %v5105
    %v5142 = vpop.f32.mrf.mxu0
    %v5143 = vadd.f32 0.0, %v5142
    %v5144 = vpop.f32.mrf.mxu0
    %5145 = vdwg.mxu0
    %5146 = vmatpush.bf16.msra.mxu0 0
    %5147 = vmatpush.bf16.msra.mxu0 0
    %5148 = vmatpush.bf16.msra.mxu0 0
    %5149 = vmatpush.bf16.msra.mxu0 0
    %5150 = vmatpush.bf16.msra.mxu0 %v5087
    %5151 = vmatpush.bf16.msra.mxu0 %v5083
    %5152 = vmatpush.bf16.msra.mxu0 %v5079
    %5153 = vmatpush.bf16.msra.mxu0 %v5075
    %5154 = vmatmul.bf16.gmra.mxu0 %v5105
    %v5155 = vpop.f32.mrf.mxu0
    %v5156 = vadd.f32 0.0, %v5155
    %v5157 = vpop.f32.mrf.mxu0
    %5158 = vdwg.mxu0
    %v5159 = vadd.f32 %v5003, %v5117
    %v5160 = vadd.f32 %v5004, %v5130
    %v5161 = vadd.f32 %v5005, %v5143
    %v5162 = vadd.f32 %v5006, %v5156
    %v5163 = vld [vmem:[%s3 + $0xe00] sm:$0xff]
    %v5164 = vld [vmem:[%s3 + $0xe08] sm:$0xff]
    %v5165 = vld [vmem:[%s3 + $0xe10] sm:$0xff]
    %v5166 = vld [vmem:[%s3 + $0xe18] sm:$0xff]
    %v5167 = vld [vmem:[%s3 + $0xe20] sm:$0xff]
    %v5168 = vld [vmem:[%s3 + $0xe28] sm:$0xff]
    %v5169 = vld [vmem:[%s3 + $0xe30] sm:$0xff]
    %v5170 = vld [vmem:[%s3 + $0xe38] sm:$0xff]
    %v5171 = vld [vmem:[%s3 + $0xe40] sm:$0xff]
    %v5172 = vld [vmem:[%s3 + $0xe48] sm:$0xff]
    %v5173 = vld [vmem:[%s3 + $0xe50] sm:$0xff]
    %v5174 = vld [vmem:[%s3 + $0xe58] sm:$0xff]
    %v5175 = vld [vmem:[%s3 + $0xe60] sm:$0xff]
    %v5176 = vld [vmem:[%s3 + $0xe68] sm:$0xff]
    %v5177 = vld [vmem:[%s3 + $0xe70] sm:$0xff]
    %v5178 = vld [vmem:[%s3 + $0xe78] sm:$0xff]
    %v5195 = vunpack.c.l.b16 %v5163
    %v5196 = vunpack.c.h.b16 %v5163
    %v5197 = vunpack.c.l.b16 %v5164
    %v5198 = vunpack.c.h.b16 %v5164
    %v5199 = vunpack.c.l.b16 %v5165
    %v5200 = vunpack.c.h.b16 %v5165
    %v5201 = vunpack.c.l.b16 %v5166
    %v5202 = vunpack.c.h.b16 %v5166
    %v5203 = vunpack.c.l.b16 %v5167
    %v5204 = vunpack.c.h.b16 %v5167
    %v5205 = vunpack.c.l.b16 %v5168
    %v5206 = vunpack.c.h.b16 %v5168
    %v5207 = vunpack.c.l.b16 %v5169
    %v5208 = vunpack.c.h.b16 %v5169
    %v5209 = vunpack.c.l.b16 %v5170
    %v5210 = vunpack.c.h.b16 %v5170
    %v5211 = vunpack.c.l.b16 %v5171
    %v5212 = vunpack.c.h.b16 %v5171
    %v5213 = vunpack.c.l.b16 %v5172
    %v5214 = vunpack.c.h.b16 %v5172
    %v5215 = vunpack.c.l.b16 %v5173
    %v5216 = vunpack.c.h.b16 %v5173
    %v5217 = vunpack.c.l.b16 %v5174
    %v5218 = vunpack.c.h.b16 %v5174
    %v5219 = vunpack.c.l.b16 %v5175
    %v5220 = vunpack.c.h.b16 %v5175
    %v5221 = vunpack.c.l.b16 %v5176
    %v5222 = vunpack.c.h.b16 %v5176
    %v5223 = vunpack.c.l.b16 %v5177
    %v5224 = vunpack.c.h.b16 %v5177
    %v5225 = vunpack.c.l.b16 %v5178
    %v5226 = vunpack.c.h.b16 %v5178
    %v5227 = vpack.c.b16 %v5199, %v5195
    %v5228 = vpack.c.b16 %v5200, %v5196
    %v5229 = vpack.c.b16 %v5201, %v5197
    %v5230 = vpack.c.b16 %v5202, %v5198
    %v5231 = vpack.c.b16 %v5207, %v5203
    %v5232 = vpack.c.b16 %v5208, %v5204
    %v5233 = vpack.c.b16 %v5209, %v5205
    %v5234 = vpack.c.b16 %v5210, %v5206
    %v5235 = vpack.c.b16 %v5215, %v5211
    %v5236 = vpack.c.b16 %v5216, %v5212
    %v5237 = vpack.c.b16 %v5217, %v5213
    %v5238 = vpack.c.b16 %v5218, %v5214
    %v5239 = vpack.c.b16 %v5223, %v5219
    %v5240 = vpack.c.b16 %v5224, %v5220
    %v5241 = vpack.c.b16 %v5225, %v5221
    %v5242 = vpack.c.b16 %v5226, %v5222
    %v5260 = vsel %vm526, %v783, 0
    %5262 = vmatpush.bf16.msra.mxu0 0
    %5263 = vmatpush.bf16.msra.mxu0 0
    %5264 = vmatpush.bf16.msra.mxu0 0
    %5265 = vmatpush.bf16.msra.mxu0 0
    %5266 = vmatpush.bf16.msra.mxu0 %v5239
    %5267 = vmatpush.bf16.msra.mxu0 %v5235
    %5268 = vmatpush.bf16.msra.mxu0 %v5231
    %5269 = vmatpush.bf16.msra.mxu0 %v5227
    %5270 = vmatmul.bf16.gmra.mxu0 %v5260
    %v5271 = vpop.f32.mrf.mxu0
    %v5272 = vadd.f32 0.0, %v5271
    %v5273 = vpop.f32.mrf.mxu0
    %5274 = vdwg.mxu0
    %5275 = vmatpush.bf16.msra.mxu0 0
    %5276 = vmatpush.bf16.msra.mxu0 0
    %5277 = vmatpush.bf16.msra.mxu0 0
    %5278 = vmatpush.bf16.msra.mxu0 0
    %5279 = vmatpush.bf16.msra.mxu0 %v5240
    %5280 = vmatpush.bf16.msra.mxu0 %v5236
    %5281 = vmatpush.bf16.msra.mxu0 %v5232
    %5282 = vmatpush.bf16.msra.mxu0 %v5228
    %5283 = vmatmul.bf16.gmra.mxu0 %v5260
    %v5284 = vpop.f32.mrf.mxu0
    %v5285 = vadd.f32 0.0, %v5284
    %v5286 = vpop.f32.mrf.mxu0
    %5287 = vdwg.mxu0
    %5288 = vmatpush.bf16.msra.mxu0 0
    %5289 = vmatpush.bf16.msra.mxu0 0
    %5290 = vmatpush.bf16.msra.mxu0 0
    %5291 = vmatpush.bf16.msra.mxu0 0
    %5292 = vmatpush.bf16.msra.mxu0 %v5241
    %5293 = vmatpush.bf16.msra.mxu0 %v5237
    %5294 = vmatpush.bf16.msra.mxu0 %v5233
    %5295 = vmatpush.bf16.msra.mxu0 %v5229
    %5296 = vmatmul.bf16.gmra.mxu0 %v5260
    %v5297 = vpop.f32.mrf.mxu0
    %v5298 = vadd.f32 0.0, %v5297
    %v5299 = vpop.f32.mrf.mxu0
    %5300 = vdwg.mxu0
    %5301 = vmatpush.bf16.msra.mxu0 0
    %5302 = vmatpush.bf16.msra.mxu0 0
    %5303 = vmatpush.bf16.msra.mxu0 0
    %5304 = vmatpush.bf16.msra.mxu0 0
    %5305 = vmatpush.bf16.msra.mxu0 %v5242
    %5306 = vmatpush.bf16.msra.mxu0 %v5238
    %5307 = vmatpush.bf16.msra.mxu0 %v5234
    %5308 = vmatpush.bf16.msra.mxu0 %v5230
    %5309 = vmatmul.bf16.gmra.mxu0 %v5260
    %v5310 = vpop.f32.mrf.mxu0
    %v5311 = vadd.f32 0.0, %v5310
    %v5312 = vpop.f32.mrf.mxu0
    %5313 = vdwg.mxu0
    %v5314 = vadd.f32 %v5159, %v5272
    %v5315 = vadd.f32 %v5160, %v5285
    %v5316 = vadd.f32 %v5161, %v5298
    %v5317 = vadd.f32 %v5162, %v5311
    %v5318 = vld [vmem:[%s3 + $0xe80] sm:$0xff]
    %v5319 = vld [vmem:[%s3 + $0xe88] sm:$0xff]
    %v5320 = vld [vmem:[%s3 + $0xe90] sm:$0xff]
    %v5321 = vld [vmem:[%s3 + $0xe98] sm:$0xff]
    %v5322 = vld [vmem:[%s3 + $0xea0] sm:$0xff]
    %v5323 = vld [vmem:[%s3 + $0xea8] sm:$0xff]
    %v5324 = vld [vmem:[%s3 + $0xeb0] sm:$0xff]
    %v5325 = vld [vmem:[%s3 + $0xeb8] sm:$0xff]
    %v5326 = vld [vmem:[%s3 + $0xec0] sm:$0xff]
    %v5327 = vld [vmem:[%s3 + $0xec8] sm:$0xff]
    %v5328 = vld [vmem:[%s3 + $0xed0] sm:$0xff]
    %v5329 = vld [vmem:[%s3 + $0xed8] sm:$0xff]
    %v5330 = vld [vmem:[%s3 + $0xee0] sm:$0xff]
    %v5331 = vld [vmem:[%s3 + $0xee8] sm:$0xff]
    %v5332 = vld [vmem:[%s3 + $0xef0] sm:$0xff]
    %v5333 = vld [vmem:[%s3 + $0xef8] sm:$0xff]
    %v5335 = vunpack.c.l.b16 %v783
    %v5336 = vpack.c.b16 %v5335, %v5335
    %v5337 = vrot.slane %v5336, 1
    %v5354 = vunpack.c.l.b16 %v5318
    %v5355 = vunpack.c.h.b16 %v5318
    %v5356 = vunpack.c.l.b16 %v5319
    %v5357 = vunpack.c.h.b16 %v5319
    %v5358 = vunpack.c.l.b16 %v5320
    %v5359 = vunpack.c.h.b16 %v5320
    %v5360 = vunpack.c.l.b16 %v5321
    %v5361 = vunpack.c.h.b16 %v5321
    %v5362 = vunpack.c.l.b16 %v5322
    %v5363 = vunpack.c.h.b16 %v5322
    %v5364 = vunpack.c.l.b16 %v5323
    %v5365 = vunpack.c.h.b16 %v5323
    %v5366 = vunpack.c.l.b16 %v5324
    %v5367 = vunpack.c.h.b16 %v5324
    %v5368 = vunpack.c.l.b16 %v5325
    %v5369 = vunpack.c.h.b16 %v5325
    %v5370 = vunpack.c.l.b16 %v5326
    %v5371 = vunpack.c.h.b16 %v5326
    %v5372 = vunpack.c.l.b16 %v5327
    %v5373 = vunpack.c.h.b16 %v5327
    %v5374 = vunpack.c.l.b16 %v5328
    %v5375 = vunpack.c.h.b16 %v5328
    %v5376 = vunpack.c.l.b16 %v5329
    %v5377 = vunpack.c.h.b16 %v5329
    %v5378 = vunpack.c.l.b16 %v5330
    %v5379 = vunpack.c.h.b16 %v5330
    %v5380 = vunpack.c.l.b16 %v5331
    %v5381 = vunpack.c.h.b16 %v5331
    %v5382 = vunpack.c.l.b16 %v5332
    %v5383 = vunpack.c.h.b16 %v5332
    %v5384 = vunpack.c.l.b16 %v5333
    %v5385 = vunpack.c.h.b16 %v5333
    %v5386 = vpack.c.b16 %v5358, %v5354
    %v5387 = vpack.c.b16 %v5359, %v5355
    %v5388 = vpack.c.b16 %v5360, %v5356
    %v5389 = vpack.c.b16 %v5361, %v5357
    %v5390 = vpack.c.b16 %v5366, %v5362
    %v5391 = vpack.c.b16 %v5367, %v5363
    %v5392 = vpack.c.b16 %v5368, %v5364
    %v5393 = vpack.c.b16 %v5369, %v5365
    %v5394 = vpack.c.b16 %v5374, %v5370
    %v5395 = vpack.c.b16 %v5375, %v5371
    %v5396 = vpack.c.b16 %v5376, %v5372
    %v5397 = vpack.c.b16 %v5377, %v5373
    %v5398 = vpack.c.b16 %v5382, %v5378
    %v5399 = vpack.c.b16 %v5383, %v5379
    %v5400 = vpack.c.b16 %v5384, %v5380
    %v5401 = vpack.c.b16 %v5385, %v5381
    %v5419 = vsel %vm526, %v5337, 0
    %5421 = vmatpush.bf16.msra.mxu0 0
    %5422 = vmatpush.bf16.msra.mxu0 0
    %5423 = vmatpush.bf16.msra.mxu0 0
    %5424 = vmatpush.bf16.msra.mxu0 0
    %5425 = vmatpush.bf16.msra.mxu0 %v5398
    %5426 = vmatpush.bf16.msra.mxu0 %v5394
    %5427 = vmatpush.bf16.msra.mxu0 %v5390
    %5428 = vmatpush.bf16.msra.mxu0 %v5386
    %5429 = vmatmul.bf16.gmra.mxu0 %v5419
    %v5430 = vpop.f32.mrf.mxu0
    %v5431 = vadd.f32 0.0, %v5430
    %v5432 = vpop.f32.mrf.mxu0
    %5433 = vdwg.mxu0
    %5434 = vmatpush.bf16.msra.mxu0 0
    %5435 = vmatpush.bf16.msra.mxu0 0
    %5436 = vmatpush.bf16.msra.mxu0 0
    %5437 = vmatpush.bf16.msra.mxu0 0
    %5438 = vmatpush.bf16.msra.mxu0 %v5399
    %5439 = vmatpush.bf16.msra.mxu0 %v5395
    %5440 = vmatpush.bf16.msra.mxu0 %v5391
    %5441 = vmatpush.bf16.msra.mxu0 %v5387
    %5442 = vmatmul.bf16.gmra.mxu0 %v5419
    %v5443 = vpop.f32.mrf.mxu0
    %v5444 = vadd.f32 0.0, %v5443
    %v5445 = vpop.f32.mrf.mxu0
    %5446 = vdwg.mxu0
    %5447 = vmatpush.bf16.msra.mxu0 0
    %5448 = vmatpush.bf16.msra.mxu0 0
    %5449 = vmatpush.bf16.msra.mxu0 0
    %5450 = vmatpush.bf16.msra.mxu0 0
    %5451 = vmatpush.bf16.msra.mxu0 %v5400
    %5452 = vmatpush.bf16.msra.mxu0 %v5396
    %5453 = vmatpush.bf16.msra.mxu0 %v5392
    %5454 = vmatpush.bf16.msra.mxu0 %v5388
    %5455 = vmatmul.bf16.gmra.mxu0 %v5419
    %v5456 = vpop.f32.mrf.mxu0
    %v5457 = vadd.f32 0.0, %v5456
    %v5458 = vpop.f32.mrf.mxu0
    %5459 = vdwg.mxu0
    %5460 = vmatpush.bf16.msra.mxu0 0
    %5461 = vmatpush.bf16.msra.mxu0 0
    %5462 = vmatpush.bf16.msra.mxu0 0
    %5463 = vmatpush.bf16.msra.mxu0 0
    %5464 = vmatpush.bf16.msra.mxu0 %v5401
    %5465 = vmatpush.bf16.msra.mxu0 %v5397
    %5466 = vmatpush.bf16.msra.mxu0 %v5393
    %5467 = vmatpush.bf16.msra.mxu0 %v5389
    %5468 = vmatmul.bf16.gmra.mxu0 %v5419
    %v5469 = vpop.f32.mrf.mxu0
    %v5470 = vadd.f32 0.0, %v5469
    %v5471 = vpop.f32.mrf.mxu0
    %5472 = vdwg.mxu0
    %v5473 = vadd.f32 %v5314, %v5431
    %v5474 = vadd.f32 %v5315, %v5444
    %v5475 = vadd.f32 %v5316, %v5457
    %v5476 = vadd.f32 %v5317, %v5470
    %v5477 = vld [vmem:[%s3 + $0xf00] sm:$0xff]
    %v5478 = vld [vmem:[%s3 + $0xf08] sm:$0xff]
    %v5479 = vld [vmem:[%s3 + $0xf10] sm:$0xff]
    %v5480 = vld [vmem:[%s3 + $0xf18] sm:$0xff]
    %v5481 = vld [vmem:[%s3 + $0xf20] sm:$0xff]
    %v5482 = vld [vmem:[%s3 + $0xf28] sm:$0xff]
    %v5483 = vld [vmem:[%s3 + $0xf30] sm:$0xff]
    %v5484 = vld [vmem:[%s3 + $0xf38] sm:$0xff]
    %v5485 = vld [vmem:[%s3 + $0xf40] sm:$0xff]
    %v5486 = vld [vmem:[%s3 + $0xf48] sm:$0xff]
    %v5487 = vld [vmem:[%s3 + $0xf50] sm:$0xff]
    %v5488 = vld [vmem:[%s3 + $0xf58] sm:$0xff]
    %v5489 = vld [vmem:[%s3 + $0xf60] sm:$0xff]
    %v5490 = vld [vmem:[%s3 + $0xf68] sm:$0xff]
    %v5491 = vld [vmem:[%s3 + $0xf70] sm:$0xff]
    %v5492 = vld [vmem:[%s3 + $0xf78] sm:$0xff]
    %v5493 = vrot.slane %v5336, 2
    %v5510 = vunpack.c.l.b16 %v5477
    %v5511 = vunpack.c.h.b16 %v5477
    %v5512 = vunpack.c.l.b16 %v5478
    %v5513 = vunpack.c.h.b16 %v5478
    %v5514 = vunpack.c.l.b16 %v5479
    %v5515 = vunpack.c.h.b16 %v5479
    %v5516 = vunpack.c.l.b16 %v5480
    %v5517 = vunpack.c.h.b16 %v5480
    %v5518 = vunpack.c.l.b16 %v5481
    %v5519 = vunpack.c.h.b16 %v5481
    %v5520 = vunpack.c.l.b16 %v5482
    %v5521 = vunpack.c.h.b16 %v5482
    %v5522 = vunpack.c.l.b16 %v5483
    %v5523 = vunpack.c.h.b16 %v5483
    %v5524 = vunpack.c.l.b16 %v5484
    %v5525 = vunpack.c.h.b16 %v5484
    %v5526 = vunpack.c.l.b16 %v5485
    %v5527 = vunpack.c.h.b16 %v5485
    %v5528 = vunpack.c.l.b16 %v5486
    %v5529 = vunpack.c.h.b16 %v5486
    %v5530 = vunpack.c.l.b16 %v5487
    %v5531 = vunpack.c.h.b16 %v5487
    %v5532 = vunpack.c.l.b16 %v5488
    %v5533 = vunpack.c.h.b16 %v5488
    %v5534 = vunpack.c.l.b16 %v5489
    %v5535 = vunpack.c.h.b16 %v5489
    %v5536 = vunpack.c.l.b16 %v5490
    %v5537 = vunpack.c.h.b16 %v5490
    %v5538 = vunpack.c.l.b16 %v5491
    %v5539 = vunpack.c.h.b16 %v5491
    %v5540 = vunpack.c.l.b16 %v5492
    %v5541 = vunpack.c.h.b16 %v5492
    %v5542 = vpack.c.b16 %v5514, %v5510
    %v5543 = vpack.c.b16 %v5515, %v5511
    %v5544 = vpack.c.b16 %v5516, %v5512
    %v5545 = vpack.c.b16 %v5517, %v5513
    %v5546 = vpack.c.b16 %v5522, %v5518
    %v5547 = vpack.c.b16 %v5523, %v5519
    %v5548 = vpack.c.b16 %v5524, %v5520
    %v5549 = vpack.c.b16 %v5525, %v5521
    %v5550 = vpack.c.b16 %v5530, %v5526
    %v5551 = vpack.c.b16 %v5531, %v5527
    %v5552 = vpack.c.b16 %v5532, %v5528
    %v5553 = vpack.c.b16 %v5533, %v5529
    %v5554 = vpack.c.b16 %v5538, %v5534
    %v5555 = vpack.c.b16 %v5539, %v5535
    %v5556 = vpack.c.b16 %v5540, %v5536
    %v5557 = vpack.c.b16 %v5541, %v5537
    %v5575 = vsel %vm526, %v5493, 0
    %5577 = vmatpush.bf16.msra.mxu0 0
    %5578 = vmatpush.bf16.msra.mxu0 0
    %5579 = vmatpush.bf16.msra.mxu0 0
    %5580 = vmatpush.bf16.msra.mxu0 0
    %5581 = vmatpush.bf16.msra.mxu0 %v5554
    %5582 = vmatpush.bf16.msra.mxu0 %v5550
    %5583 = vmatpush.bf16.msra.mxu0 %v5546
    %5584 = vmatpush.bf16.msra.mxu0 %v5542
    %5585 = vmatmul.bf16.gmra.mxu0 %v5575
    %v5586 = vpop.f32.mrf.mxu0
    %v5587 = vadd.f32 0.0, %v5586
    %v5588 = vpop.f32.mrf.mxu0
    %5589 = vdwg.mxu0
    %5590 = vmatpush.bf16.msra.mxu0 0
    %5591 = vmatpush.bf16.msra.mxu0 0
    %5592 = vmatpush.bf16.msra.mxu0 0
    %5593 = vmatpush.bf16.msra.mxu0 0
    %5594 = vmatpush.bf16.msra.mxu0 %v5555
    %5595 = vmatpush.bf16.msra.mxu0 %v5551
    %5596 = vmatpush.bf16.msra.mxu0 %v5547
    %5597 = vmatpush.bf16.msra.mxu0 %v5543
    %5598 = vmatmul.bf16.gmra.mxu0 %v5575
    %v5599 = vpop.f32.mrf.mxu0
    %v5600 = vadd.f32 0.0, %v5599
    %v5601 = vpop.f32.mrf.mxu0
    %5602 = vdwg.mxu0
    %5603 = vmatpush.bf16.msra.mxu0 0
    %5604 = vmatpush.bf16.msra.mxu0 0
    %5605 = vmatpush.bf16.msra.mxu0 0
    %5606 = vmatpush.bf16.msra.mxu0 0
    %5607 = vmatpush.bf16.msra.mxu0 %v5556
    %5608 = vmatpush.bf16.msra.mxu0 %v5552
    %5609 = vmatpush.bf16.msra.mxu0 %v5548
    %5610 = vmatpush.bf16.msra.mxu0 %v5544
    %5611 = vmatmul.bf16.gmra.mxu0 %v5575
    %v5612 = vpop.f32.mrf.mxu0
    %v5613 = vadd.f32 0.0, %v5612
    %v5614 = vpop.f32.mrf.mxu0
    %5615 = vdwg.mxu0
    %5616 = vmatpush.bf16.msra.mxu0 0
    %5617 = vmatpush.bf16.msra.mxu0 0
    %5618 = vmatpush.bf16.msra.mxu0 0
    %5619 = vmatpush.bf16.msra.mxu0 0
    %5620 = vmatpush.bf16.msra.mxu0 %v5557
    %5621 = vmatpush.bf16.msra.mxu0 %v5553
    %5622 = vmatpush.bf16.msra.mxu0 %v5549
    %5623 = vmatpush.bf16.msra.mxu0 %v5545
    %5624 = vmatmul.bf16.gmra.mxu0 %v5575
    %v5625 = vpop.f32.mrf.mxu0
    %v5626 = vadd.f32 0.0, %v5625
    %v5627 = vpop.f32.mrf.mxu0
    %5628 = vdwg.mxu0
    %v5629 = vadd.f32 %v5473, %v5587
    %v5630 = vadd.f32 %v5474, %v5600
    %v5631 = vadd.f32 %v5475, %v5613
    %v5632 = vadd.f32 %v5476, %v5626
    %v5633 = vld [vmem:[%s3 + $0xf80] sm:$0xff]
    %v5634 = vld [vmem:[%s3 + $0xf88] sm:$0xff]
    %v5635 = vld [vmem:[%s3 + $0xf90] sm:$0xff]
    %v5636 = vld [vmem:[%s3 + $0xf98] sm:$0xff]
    %v5637 = vld [vmem:[%s3 + $0xfa0] sm:$0xff]
    %v5638 = vld [vmem:[%s3 + $0xfa8] sm:$0xff]
    %v5639 = vld [vmem:[%s3 + $0xfb0] sm:$0xff]
    %v5640 = vld [vmem:[%s3 + $0xfb8] sm:$0xff]
    %v5641 = vld [vmem:[%s3 + $0xfc0] sm:$0xff]
    %v5642 = vld [vmem:[%s3 + $0xfc8] sm:$0xff]
    %v5643 = vld [vmem:[%s3 + $0xfd0] sm:$0xff]
    %v5644 = vld [vmem:[%s3 + $0xfd8] sm:$0xff]
    %v5645 = vld [vmem:[%s3 + $0xfe0] sm:$0xff]
    %v5646 = vld [vmem:[%s3 + $0xfe8] sm:$0xff]
    %v5647 = vld [vmem:[%s3 + $0xff0] sm:$0xff]
    %v5648 = vld [vmem:[%s3 + $0xff8] sm:$0xff]
    %v5649 = vrot.slane %v5336, 3
    %v5666 = vunpack.c.l.b16 %v5633
    %v5667 = vunpack.c.h.b16 %v5633
    %v5668 = vunpack.c.l.b16 %v5634
    %v5669 = vunpack.c.h.b16 %v5634
    %v5670 = vunpack.c.l.b16 %v5635
    %v5671 = vunpack.c.h.b16 %v5635
    %v5672 = vunpack.c.l.b16 %v5636
    %v5673 = vunpack.c.h.b16 %v5636
    %v5674 = vunpack.c.l.b16 %v5637
    %v5675 = vunpack.c.h.b16 %v5637
    %v5676 = vunpack.c.l.b16 %v5638
    %v5677 = vunpack.c.h.b16 %v5638
    %v5678 = vunpack.c.l.b16 %v5639
    %v5679 = vunpack.c.h.b16 %v5639
    %v5680 = vunpack.c.l.b16 %v5640
    %v5681 = vunpack.c.h.b16 %v5640
    %v5682 = vunpack.c.l.b16 %v5641
    %v5683 = vunpack.c.h.b16 %v5641
    %v5684 = vunpack.c.l.b16 %v5642
    %v5685 = vunpack.c.h.b16 %v5642
    %v5686 = vunpack.c.l.b16 %v5643
    %v5687 = vunpack.c.h.b16 %v5643
    %v5688 = vunpack.c.l.b16 %v5644
    %v5689 = vunpack.c.h.b16 %v5644
    %v5690 = vunpack.c.l.b16 %v5645
    %v5691 = vunpack.c.h.b16 %v5645
    %v5692 = vunpack.c.l.b16 %v5646
    %v5693 = vunpack.c.h.b16 %v5646
    %v5694 = vunpack.c.l.b16 %v5647
    %v5695 = vunpack.c.h.b16 %v5647
    %v5696 = vunpack.c.l.b16 %v5648
    %v5697 = vunpack.c.h.b16 %v5648
    %v5698 = vpack.c.b16 %v5670, %v5666
    %v5699 = vpack.c.b16 %v5671, %v5667
    %v5700 = vpack.c.b16 %v5672, %v5668
    %v5701 = vpack.c.b16 %v5673, %v5669
    %v5702 = vpack.c.b16 %v5678, %v5674
    %v5703 = vpack.c.b16 %v5679, %v5675
    %v5704 = vpack.c.b16 %v5680, %v5676
    %v5705 = vpack.c.b16 %v5681, %v5677
    %v5706 = vpack.c.b16 %v5686, %v5682
    %v5707 = vpack.c.b16 %v5687, %v5683
    %v5708 = vpack.c.b16 %v5688, %v5684
    %v5709 = vpack.c.b16 %v5689, %v5685
    %v5710 = vpack.c.b16 %v5694, %v5690
    %v5711 = vpack.c.b16 %v5695, %v5691
    %v5712 = vpack.c.b16 %v5696, %v5692
    %v5713 = vpack.c.b16 %v5697, %v5693
    %v5731 = vsel %vm526, %v5649, 0
    %5733 = vmatpush.bf16.msra.mxu0 0
    %5734 = vmatpush.bf16.msra.mxu0 0
    %5735 = vmatpush.bf16.msra.mxu0 0
    %5736 = vmatpush.bf16.msra.mxu0 0
    %5737 = vmatpush.bf16.msra.mxu0 %v5710
    %5738 = vmatpush.bf16.msra.mxu0 %v5706
    %5739 = vmatpush.bf16.msra.mxu0 %v5702
    %5740 = vmatpush.bf16.msra.mxu0 %v5698
    %5741 = vmatmul.bf16.gmra.mxu0 %v5731
    %v5742 = vpop.f32.mrf.mxu0
    %v5743 = vadd.f32 0.0, %v5742
    %v5744 = vpop.f32.mrf.mxu0
    %5745 = vdwg.mxu0
    %5746 = vmatpush.bf16.msra.mxu0 0
    %5747 = vmatpush.bf16.msra.mxu0 0
    %5748 = vmatpush.bf16.msra.mxu0 0
    %5749 = vmatpush.bf16.msra.mxu0 0
    %5750 = vmatpush.bf16.msra.mxu0 %v5711
    %5751 = vmatpush.bf16.msra.mxu0 %v5707
    %5752 = vmatpush.bf16.msra.mxu0 %v5703
    %5753 = vmatpush.bf16.msra.mxu0 %v5699
    %5754 = vmatmul.bf16.gmra.mxu0 %v5731
    %v5755 = vpop.f32.mrf.mxu0
    %v5756 = vadd.f32 0.0, %v5755
    %v5757 = vpop.f32.mrf.mxu0
    %5758 = vdwg.mxu0
    %5759 = vmatpush.bf16.msra.mxu0 0
    %5760 = vmatpush.bf16.msra.mxu0 0
    %5761 = vmatpush.bf16.msra.mxu0 0
    %5762 = vmatpush.bf16.msra.mxu0 0
    %5763 = vmatpush.bf16.msra.mxu0 %v5712
    %5764 = vmatpush.bf16.msra.mxu0 %v5708
    %5765 = vmatpush.bf16.msra.mxu0 %v5704
    %5766 = vmatpush.bf16.msra.mxu0 %v5700
    %5767 = vmatmul.bf16.gmra.mxu0 %v5731
    %v5768 = vpop.f32.mrf.mxu0
    %v5769 = vadd.f32 0.0, %v5768
    %v5770 = vpop.f32.mrf.mxu0
    %5771 = vdwg.mxu0
    %5772 = vmatpush.bf16.msra.mxu0 0
    %5773 = vmatpush.bf16.msra.mxu0 0
    %5774 = vmatpush.bf16.msra.mxu0 0
    %5775 = vmatpush.bf16.msra.mxu0 0
    %5776 = vmatpush.bf16.msra.mxu0 %v5713
    %5777 = vmatpush.bf16.msra.mxu0 %v5709
    %5778 = vmatpush.bf16.msra.mxu0 %v5705
    %5779 = vmatpush.bf16.msra.mxu0 %v5701
    %5780 = vmatmul.bf16.gmra.mxu0 %v5731
    %v5781 = vpop.f32.mrf.mxu0
    %v5782 = vadd.f32 0.0, %v5781
    %v5783 = vpop.f32.mrf.mxu0
    %5784 = vdwg.mxu0
    %v5785 = vadd.f32 %v5629, %v5743
    %v5786 = vadd.f32 %v5630, %v5756
    %v5787 = vadd.f32 %v5631, %v5769
    %v5788 = vadd.f32 %v5632, %v5782
    %v5789 = vld [vmem:[%s3 + $0x1000] sm:$0xff]
    %v5790 = vld [vmem:[%s3 + $0x1008] sm:$0xff]
    %v5791 = vld [vmem:[%s3 + $0x1010] sm:$0xff]
    %v5792 = vld [vmem:[%s3 + $0x1018] sm:$0xff]
    %v5793 = vld [vmem:[%s3 + $0x1020] sm:$0xff]
    %v5794 = vld [vmem:[%s3 + $0x1028] sm:$0xff]
    %v5795 = vld [vmem:[%s3 + $0x1030] sm:$0xff]
    %v5796 = vld [vmem:[%s3 + $0x1038] sm:$0xff]
    %v5797 = vld [vmem:[%s3 + $0x1040] sm:$0xff]
    %v5798 = vld [vmem:[%s3 + $0x1048] sm:$0xff]
    %v5799 = vld [vmem:[%s3 + $0x1050] sm:$0xff]
    %v5800 = vld [vmem:[%s3 + $0x1058] sm:$0xff]
    %v5801 = vld [vmem:[%s3 + $0x1060] sm:$0xff]
    %v5802 = vld [vmem:[%s3 + $0x1068] sm:$0xff]
    %v5803 = vld [vmem:[%s3 + $0x1070] sm:$0xff]
    %v5804 = vld [vmem:[%s3 + $0x1078] sm:$0xff]
    %v5821 = vunpack.c.l.b16 %v5789
    %v5822 = vunpack.c.h.b16 %v5789
    %v5823 = vunpack.c.l.b16 %v5790
    %v5824 = vunpack.c.h.b16 %v5790
    %v5825 = vunpack.c.l.b16 %v5791
    %v5826 = vunpack.c.h.b16 %v5791
    %v5827 = vunpack.c.l.b16 %v5792
    %v5828 = vunpack.c.h.b16 %v5792
    %v5829 = vunpack.c.l.b16 %v5793
    %v5830 = vunpack.c.h.b16 %v5793
    %v5831 = vunpack.c.l.b16 %v5794
    %v5832 = vunpack.c.h.b16 %v5794
    %v5833 = vunpack.c.l.b16 %v5795
    %v5834 = vunpack.c.h.b16 %v5795
    %v5835 = vunpack.c.l.b16 %v5796
    %v5836 = vunpack.c.h.b16 %v5796
    %v5837 = vunpack.c.l.b16 %v5797
    %v5838 = vunpack.c.h.b16 %v5797
    %v5839 = vunpack.c.l.b16 %v5798
    %v5840 = vunpack.c.h.b16 %v5798
    %v5841 = vunpack.c.l.b16 %v5799
    %v5842 = vunpack.c.h.b16 %v5799
    %v5843 = vunpack.c.l.b16 %v5800
    %v5844 = vunpack.c.h.b16 %v5800
    %v5845 = vunpack.c.l.b16 %v5801
    %v5846 = vunpack.c.h.b16 %v5801
    %v5847 = vunpack.c.l.b16 %v5802
    %v5848 = vunpack.c.h.b16 %v5802
    %v5849 = vunpack.c.l.b16 %v5803
    %v5850 = vunpack.c.h.b16 %v5803
    %v5851 = vunpack.c.l.b16 %v5804
    %v5852 = vunpack.c.h.b16 %v5804
    %v5853 = vpack.c.b16 %v5825, %v5821
    %v5854 = vpack.c.b16 %v5826, %v5822
    %v5855 = vpack.c.b16 %v5827, %v5823
    %v5856 = vpack.c.b16 %v5828, %v5824
    %v5857 = vpack.c.b16 %v5833, %v5829
    %v5858 = vpack.c.b16 %v5834, %v5830
    %v5859 = vpack.c.b16 %v5835, %v5831
    %v5860 = vpack.c.b16 %v5836, %v5832
    %v5861 = vpack.c.b16 %v5841, %v5837
    %v5862 = vpack.c.b16 %v5842, %v5838
    %v5863 = vpack.c.b16 %v5843, %v5839
    %v5864 = vpack.c.b16 %v5844, %v5840
    %v5865 = vpack.c.b16 %v5849, %v5845
    %v5866 = vpack.c.b16 %v5850, %v5846
    %v5867 = vpack.c.b16 %v5851, %v5847
    %v5868 = vpack.c.b16 %v5852, %v5848
    %v5886 = vsel %vm526, %v784, 0
    %5888 = vmatpush.bf16.msra.mxu0 0
    %5889 = vmatpush.bf16.msra.mxu0 0
    %5890 = vmatpush.bf16.msra.mxu0 0
    %5891 = vmatpush.bf16.msra.mxu0 0
    %5892 = vmatpush.bf16.msra.mxu0 %v5865
    %5893 = vmatpush.bf16.msra.mxu0 %v5861
    %5894 = vmatpush.bf16.msra.mxu0 %v5857
    %5895 = vmatpush.bf16.msra.mxu0 %v5853
    %5896 = vmatmul.bf16.gmra.mxu0 %v5886
    %v5897 = vpop.f32.mrf.mxu0
    %v5898 = vadd.f32 0.0, %v5897
    %v5899 = vpop.f32.mrf.mxu0
    %5900 = vdwg.mxu0
    %5901 = vmatpush.bf16.msra.mxu0 0
    %5902 = vmatpush.bf16.msra.mxu0 0
    %5903 = vmatpush.bf16.msra.mxu0 0
    %5904 = vmatpush.bf16.msra.mxu0 0
    %5905 = vmatpush.bf16.msra.mxu0 %v5866
    %5906 = vmatpush.bf16.msra.mxu0 %v5862
    %5907 = vmatpush.bf16.msra.mxu0 %v5858
    %5908 = vmatpush.bf16.msra.mxu0 %v5854
    %5909 = vmatmul.bf16.gmra.mxu0 %v5886
    %v5910 = vpop.f32.mrf.mxu0
    %v5911 = vadd.f32 0.0, %v5910
    %v5912 = vpop.f32.mrf.mxu0
    %5913 = vdwg.mxu0
    %5914 = vmatpush.bf16.msra.mxu0 0
    %5915 = vmatpush.bf16.msra.mxu0 0
    %5916 = vmatpush.bf16.msra.mxu0 0
    %5917 = vmatpush.bf16.msra.mxu0 0
    %5918 = vmatpush.bf16.msra.mxu0 %v5867
    %5919 = vmatpush.bf16.msra.mxu0 %v5863
    %5920 = vmatpush.bf16.msra.mxu0 %v5859
    %5921 = vmatpush.bf16.msra.mxu0 %v5855
    %5922 = vmatmul.bf16.gmra.mxu0 %v5886
    %v5923 = vpop.f32.mrf.mxu0
    %v5924 = vadd.f32 0.0, %v5923
    %v5925 = vpop.f32.mrf.mxu0
    %5926 = vdwg.mxu0
    %5927 = vmatpush.bf16.msra.mxu0 0
    %5928 = vmatpush.bf16.msra.mxu0 0
    %5929 = vmatpush.bf16.msra.mxu0 0
    %5930 = vmatpush.bf16.msra.mxu0 0
    %5931 = vmatpush.bf16.msra.mxu0 %v5868
    %5932 = vmatpush.bf16.msra.mxu0 %v5864
    %5933 = vmatpush.bf16.msra.mxu0 %v5860
    %5934 = vmatpush.bf16.msra.mxu0 %v5856
    %5935 = vmatmul.bf16.gmra.mxu0 %v5886
    %v5936 = vpop.f32.mrf.mxu0
    %v5937 = vadd.f32 0.0, %v5936
    %v5938 = vpop.f32.mrf.mxu0
    %5939 = vdwg.mxu0
    %v5940 = vadd.f32 %v5785, %v5898
    %v5941 = vadd.f32 %v5786, %v5911
    %v5942 = vadd.f32 %v5787, %v5924
    %v5943 = vadd.f32 %v5788, %v5937
    %v5944 = vld [vmem:[%s3 + $0x1080] sm:$0xff]
    %v5945 = vld [vmem:[%s3 + $0x1088] sm:$0xff]
    %v5946 = vld [vmem:[%s3 + $0x1090] sm:$0xff]
    %v5947 = vld [vmem:[%s3 + $0x1098] sm:$0xff]
    %v5948 = vld [vmem:[%s3 + $0x10a0] sm:$0xff]
    %v5949 = vld [vmem:[%s3 + $0x10a8] sm:$0xff]
    %v5950 = vld [vmem:[%s3 + $0x10b0] sm:$0xff]
    %v5951 = vld [vmem:[%s3 + $0x10b8] sm:$0xff]
    %v5952 = vld [vmem:[%s3 + $0x10c0] sm:$0xff]
    %v5953 = vld [vmem:[%s3 + $0x10c8] sm:$0xff]
    %v5954 = vld [vmem:[%s3 + $0x10d0] sm:$0xff]
    %v5955 = vld [vmem:[%s3 + $0x10d8] sm:$0xff]
    %v5956 = vld [vmem:[%s3 + $0x10e0] sm:$0xff]
    %v5957 = vld [vmem:[%s3 + $0x10e8] sm:$0xff]
    %v5958 = vld [vmem:[%s3 + $0x10f0] sm:$0xff]
    %v5959 = vld [vmem:[%s3 + $0x10f8] sm:$0xff]
    %v5961 = vunpack.c.l.b16 %v784
    %v5962 = vpack.c.b16 %v5961, %v5961
    %v5963 = vrot.slane %v5962, 1
    %v5980 = vunpack.c.l.b16 %v5944
    %v5981 = vunpack.c.h.b16 %v5944
    %v5982 = vunpack.c.l.b16 %v5945
    %v5983 = vunpack.c.h.b16 %v5945
    %v5984 = vunpack.c.l.b16 %v5946
    %v5985 = vunpack.c.h.b16 %v5946
    %v5986 = vunpack.c.l.b16 %v5947
    %v5987 = vunpack.c.h.b16 %v5947
    %v5988 = vunpack.c.l.b16 %v5948
    %v5989 = vunpack.c.h.b16 %v5948
    %v5990 = vunpack.c.l.b16 %v5949
    %v5991 = vunpack.c.h.b16 %v5949
    %v5992 = vunpack.c.l.b16 %v5950
    %v5993 = vunpack.c.h.b16 %v5950
    %v5994 = vunpack.c.l.b16 %v5951
    %v5995 = vunpack.c.h.b16 %v5951
    %v5996 = vunpack.c.l.b16 %v5952
    %v5997 = vunpack.c.h.b16 %v5952
    %v5998 = vunpack.c.l.b16 %v5953
    %v5999 = vunpack.c.h.b16 %v5953
    %v6000 = vunpack.c.l.b16 %v5954
    %v6001 = vunpack.c.h.b16 %v5954
    %v6002 = vunpack.c.l.b16 %v5955
    %v6003 = vunpack.c.h.b16 %v5955
    %v6004 = vunpack.c.l.b16 %v5956
    %v6005 = vunpack.c.h.b16 %v5956
    %v6006 = vunpack.c.l.b16 %v5957
    %v6007 = vunpack.c.h.b16 %v5957
    %v6008 = vunpack.c.l.b16 %v5958
    %v6009 = vunpack.c.h.b16 %v5958
    %v6010 = vunpack.c.l.b16 %v5959
    %v6011 = vunpack.c.h.b16 %v5959
    %v6012 = vpack.c.b16 %v5984, %v5980
    %v6013 = vpack.c.b16 %v5985, %v5981
    %v6014 = vpack.c.b16 %v5986, %v5982
    %v6015 = vpack.c.b16 %v5987, %v5983
    %v6016 = vpack.c.b16 %v5992, %v5988
    %v6017 = vpack.c.b16 %v5993, %v5989
    %v6018 = vpack.c.b16 %v5994, %v5990
    %v6019 = vpack.c.b16 %v5995, %v5991
    %v6020 = vpack.c.b16 %v6000, %v5996
    %v6021 = vpack.c.b16 %v6001, %v5997
    %v6022 = vpack.c.b16 %v6002, %v5998
    %v6023 = vpack.c.b16 %v6003, %v5999
    %v6024 = vpack.c.b16 %v6008, %v6004
    %v6025 = vpack.c.b16 %v6009, %v6005
    %v6026 = vpack.c.b16 %v6010, %v6006
    %v6027 = vpack.c.b16 %v6011, %v6007
    %v6045 = vsel %vm526, %v5963, 0
    %6047 = vmatpush.bf16.msra.mxu0 0
    %6048 = vmatpush.bf16.msra.mxu0 0
    %6049 = vmatpush.bf16.msra.mxu0 0
    %6050 = vmatpush.bf16.msra.mxu0 0
    %6051 = vmatpush.bf16.msra.mxu0 %v6024
    %6052 = vmatpush.bf16.msra.mxu0 %v6020
    %6053 = vmatpush.bf16.msra.mxu0 %v6016
    %6054 = vmatpush.bf16.msra.mxu0 %v6012
    %6055 = vmatmul.bf16.gmra.mxu0 %v6045
    %v6056 = vpop.f32.mrf.mxu0
    %v6057 = vadd.f32 0.0, %v6056
    %v6058 = vpop.f32.mrf.mxu0
    %6059 = vdwg.mxu0
    %6060 = vmatpush.bf16.msra.mxu0 0
    %6061 = vmatpush.bf16.msra.mxu0 0
    %6062 = vmatpush.bf16.msra.mxu0 0
    %6063 = vmatpush.bf16.msra.mxu0 0
    %6064 = vmatpush.bf16.msra.mxu0 %v6025
    %6065 = vmatpush.bf16.msra.mxu0 %v6021
    %6066 = vmatpush.bf16.msra.mxu0 %v6017
    %6067 = vmatpush.bf16.msra.mxu0 %v6013
    %6068 = vmatmul.bf16.gmra.mxu0 %v6045
    %v6069 = vpop.f32.mrf.mxu0
    %v6070 = vadd.f32 0.0, %v6069
    %v6071 = vpop.f32.mrf.mxu0
    %6072 = vdwg.mxu0
    %6073 = vmatpush.bf16.msra.mxu0 0
    %6074 = vmatpush.bf16.msra.mxu0 0
    %6075 = vmatpush.bf16.msra.mxu0 0
    %6076 = vmatpush.bf16.msra.mxu0 0
    %6077 = vmatpush.bf16.msra.mxu0 %v6026
    %6078 = vmatpush.bf16.msra.mxu0 %v6022
    %6079 = vmatpush.bf16.msra.mxu0 %v6018
    %6080 = vmatpush.bf16.msra.mxu0 %v6014
    %6081 = vmatmul.bf16.gmra.mxu0 %v6045
    %v6082 = vpop.f32.mrf.mxu0
    %v6083 = vadd.f32 0.0, %v6082
    %v6084 = vpop.f32.mrf.mxu0
    %6085 = vdwg.mxu0
    %6086 = vmatpush.bf16.msra.mxu0 0
    %6087 = vmatpush.bf16.msra.mxu0 0
    %6088 = vmatpush.bf16.msra.mxu0 0
    %6089 = vmatpush.bf16.msra.mxu0 0
    %6090 = vmatpush.bf16.msra.mxu0 %v6027
    %6091 = vmatpush.bf16.msra.mxu0 %v6023
    %6092 = vmatpush.bf16.msra.mxu0 %v6019
    %6093 = vmatpush.bf16.msra.mxu0 %v6015
    %6094 = vmatmul.bf16.gmra.mxu0 %v6045
    %v6095 = vpop.f32.mrf.mxu0
    %v6096 = vadd.f32 0.0, %v6095
    %v6097 = vpop.f32.mrf.mxu0
    %6098 = vdwg.mxu0
    %v6099 = vadd.f32 %v5940, %v6057
    %v6100 = vadd.f32 %v5941, %v6070
    %v6101 = vadd.f32 %v5942, %v6083
    %v6102 = vadd.f32 %v5943, %v6096
    %v6103 = vld [vmem:[%s3 + $0x1100] sm:$0xff]
    %v6104 = vld [vmem:[%s3 + $0x1108] sm:$0xff]
    %v6105 = vld [vmem:[%s3 + $0x1110] sm:$0xff]
    %v6106 = vld [vmem:[%s3 + $0x1118] sm:$0xff]
    %v6107 = vld [vmem:[%s3 + $0x1120] sm:$0xff]
    %v6108 = vld [vmem:[%s3 + $0x1128] sm:$0xff]
    %v6109 = vld [vmem:[%s3 + $0x1130] sm:$0xff]
    %v6110 = vld [vmem:[%s3 + $0x1138] sm:$0xff]
    %v6111 = vld [vmem:[%s3 + $0x1140] sm:$0xff]
    %v6112 = vld [vmem:[%s3 + $0x1148] sm:$0xff]
    %v6113 = vld [vmem:[%s3 + $0x1150] sm:$0xff]
    %v6114 = vld [vmem:[%s3 + $0x1158] sm:$0xff]
    %v6115 = vld [vmem:[%s3 + $0x1160] sm:$0xff]
    %v6116 = vld [vmem:[%s3 + $0x1168] sm:$0xff]
    %v6117 = vld [vmem:[%s3 + $0x1170] sm:$0xff]
    %v6118 = vld [vmem:[%s3 + $0x1178] sm:$0xff]
    %v6119 = vrot.slane %v5962, 2
    %v6136 = vunpack.c.l.b16 %v6103
    %v6137 = vunpack.c.h.b16 %v6103
    %v6138 = vunpack.c.l.b16 %v6104
    %v6139 = vunpack.c.h.b16 %v6104
    %v6140 = vunpack.c.l.b16 %v6105
    %v6141 = vunpack.c.h.b16 %v6105
    %v6142 = vunpack.c.l.b16 %v6106
    %v6143 = vunpack.c.h.b16 %v6106
    %v6144 = vunpack.c.l.b16 %v6107
    %v6145 = vunpack.c.h.b16 %v6107
    %v6146 = vunpack.c.l.b16 %v6108
    %v6147 = vunpack.c.h.b16 %v6108
    %v6148 = vunpack.c.l.b16 %v6109
    %v6149 = vunpack.c.h.b16 %v6109
    %v6150 = vunpack.c.l.b16 %v6110
    %v6151 = vunpack.c.h.b16 %v6110
    %v6152 = vunpack.c.l.b16 %v6111
    %v6153 = vunpack.c.h.b16 %v6111
    %v6154 = vunpack.c.l.b16 %v6112
    %v6155 = vunpack.c.h.b16 %v6112
    %v6156 = vunpack.c.l.b16 %v6113
    %v6157 = vunpack.c.h.b16 %v6113
    %v6158 = vunpack.c.l.b16 %v6114
    %v6159 = vunpack.c.h.b16 %v6114
    %v6160 = vunpack.c.l.b16 %v6115
    %v6161 = vunpack.c.h.b16 %v6115
    %v6162 = vunpack.c.l.b16 %v6116
    %v6163 = vunpack.c.h.b16 %v6116
    %v6164 = vunpack.c.l.b16 %v6117
    %v6165 = vunpack.c.h.b16 %v6117
    %v6166 = vunpack.c.l.b16 %v6118
    %v6167 = vunpack.c.h.b16 %v6118
    %v6168 = vpack.c.b16 %v6140, %v6136
    %v6169 = vpack.c.b16 %v6141, %v6137
    %v6170 = vpack.c.b16 %v6142, %v6138
    %v6171 = vpack.c.b16 %v6143, %v6139
    %v6172 = vpack.c.b16 %v6148, %v6144
    %v6173 = vpack.c.b16 %v6149, %v6145
    %v6174 = vpack.c.b16 %v6150, %v6146
    %v6175 = vpack.c.b16 %v6151, %v6147
    %v6176 = vpack.c.b16 %v6156, %v6152
    %v6177 = vpack.c.b16 %v6157, %v6153
    %v6178 = vpack.c.b16 %v6158, %v6154
    %v6179 = vpack.c.b16 %v6159, %v6155
    %v6180 = vpack.c.b16 %v6164, %v6160
    %v6181 = vpack.c.b16 %v6165, %v6161
    %v6182 = vpack.c.b16 %v6166, %v6162
    %v6183 = vpack.c.b16 %v6167, %v6163
    %v6201 = vsel %vm526, %v6119, 0
    %6203 = vmatpush.bf16.msra.mxu0 0
    %6204 = vmatpush.bf16.msra.mxu0 0
    %6205 = vmatpush.bf16.msra.mxu0 0
    %6206 = vmatpush.bf16.msra.mxu0 0
    %6207 = vmatpush.bf16.msra.mxu0 %v6180
    %6208 = vmatpush.bf16.msra.mxu0 %v6176
    %6209 = vmatpush.bf16.msra.mxu0 %v6172
    %6210 = vmatpush.bf16.msra.mxu0 %v6168
    %6211 = vmatmul.bf16.gmra.mxu0 %v6201
    %v6212 = vpop.f32.mrf.mxu0
    %v6213 = vadd.f32 0.0, %v6212
    %v6214 = vpop.f32.mrf.mxu0
    %6215 = vdwg.mxu0
    %6216 = vmatpush.bf16.msra.mxu0 0
    %6217 = vmatpush.bf16.msra.mxu0 0
    %6218 = vmatpush.bf16.msra.mxu0 0
    %6219 = vmatpush.bf16.msra.mxu0 0
    %6220 = vmatpush.bf16.msra.mxu0 %v6181
    %6221 = vmatpush.bf16.msra.mxu0 %v6177
    %6222 = vmatpush.bf16.msra.mxu0 %v6173
    %6223 = vmatpush.bf16.msra.mxu0 %v6169
    %6224 = vmatmul.bf16.gmra.mxu0 %v6201
    %v6225 = vpop.f32.mrf.mxu0
    %v6226 = vadd.f32 0.0, %v6225
    %v6227 = vpop.f32.mrf.mxu0
    %6228 = vdwg.mxu0
    %6229 = vmatpush.bf16.msra.mxu0 0
    %6230 = vmatpush.bf16.msra.mxu0 0
    %6231 = vmatpush.bf16.msra.mxu0 0
    %6232 = vmatpush.bf16.msra.mxu0 0
    %6233 = vmatpush.bf16.msra.mxu0 %v6182
    %6234 = vmatpush.bf16.msra.mxu0 %v6178
    %6235 = vmatpush.bf16.msra.mxu0 %v6174
    %6236 = vmatpush.bf16.msra.mxu0 %v6170
    %6237 = vmatmul.bf16.gmra.mxu0 %v6201
    %v6238 = vpop.f32.mrf.mxu0
    %v6239 = vadd.f32 0.0, %v6238
    %v6240 = vpop.f32.mrf.mxu0
    %6241 = vdwg.mxu0
    %6242 = vmatpush.bf16.msra.mxu0 0
    %6243 = vmatpush.bf16.msra.mxu0 0
    %6244 = vmatpush.bf16.msra.mxu0 0
    %6245 = vmatpush.bf16.msra.mxu0 0
    %6246 = vmatpush.bf16.msra.mxu0 %v6183
    %6247 = vmatpush.bf16.msra.mxu0 %v6179
    %6248 = vmatpush.bf16.msra.mxu0 %v6175
    %6249 = vmatpush.bf16.msra.mxu0 %v6171
    %6250 = vmatmul.bf16.gmra.mxu0 %v6201
    %v6251 = vpop.f32.mrf.mxu0
    %v6252 = vadd.f32 0.0, %v6251
    %v6253 = vpop.f32.mrf.mxu0
    %6254 = vdwg.mxu0
    %v6255 = vadd.f32 %v6099, %v6213
    %v6256 = vadd.f32 %v6100, %v6226
    %v6257 = vadd.f32 %v6101, %v6239
    %v6258 = vadd.f32 %v6102, %v6252
    %v6259 = vld [vmem:[%s3 + $0x1180] sm:$0xff]
    %v6260 = vld [vmem:[%s3 + $0x1188] sm:$0xff]
    %v6261 = vld [vmem:[%s3 + $0x1190] sm:$0xff]
    %v6262 = vld [vmem:[%s3 + $0x1198] sm:$0xff]
    %v6263 = vld [vmem:[%s3 + $0x11a0] sm:$0xff]
    %v6264 = vld [vmem:[%s3 + $0x11a8] sm:$0xff]
    %v6265 = vld [vmem:[%s3 + $0x11b0] sm:$0xff]
    %v6266 = vld [vmem:[%s3 + $0x11b8] sm:$0xff]
    %v6267 = vld [vmem:[%s3 + $0x11c0] sm:$0xff]
    %v6268 = vld [vmem:[%s3 + $0x11c8] sm:$0xff]
    %v6269 = vld [vmem:[%s3 + $0x11d0] sm:$0xff]
    %v6270 = vld [vmem:[%s3 + $0x11d8] sm:$0xff]
    %v6271 = vld [vmem:[%s3 + $0x11e0] sm:$0xff]
    %v6272 = vld [vmem:[%s3 + $0x11e8] sm:$0xff]
    %v6273 = vld [vmem:[%s3 + $0x11f0] sm:$0xff]
    %v6274 = vld [vmem:[%s3 + $0x11f8] sm:$0xff]
    %v6275 = vrot.slane %v5962, 3
    %v6292 = vunpack.c.l.b16 %v6259
    %v6293 = vunpack.c.h.b16 %v6259
    %v6294 = vunpack.c.l.b16 %v6260
    %v6295 = vunpack.c.h.b16 %v6260
    %v6296 = vunpack.c.l.b16 %v6261
    %v6297 = vunpack.c.h.b16 %v6261
    %v6298 = vunpack.c.l.b16 %v6262
    %v6299 = vunpack.c.h.b16 %v6262
    %v6300 = vunpack.c.l.b16 %v6263
    %v6301 = vunpack.c.h.b16 %v6263
    %v6302 = vunpack.c.l.b16 %v6264
    %v6303 = vunpack.c.h.b16 %v6264
    %v6304 = vunpack.c.l.b16 %v6265
    %v6305 = vunpack.c.h.b16 %v6265
    %v6306 = vunpack.c.l.b16 %v6266
    %v6307 = vunpack.c.h.b16 %v6266
    %v6308 = vunpack.c.l.b16 %v6267
    %v6309 = vunpack.c.h.b16 %v6267
    %v6310 = vunpack.c.l.b16 %v6268
    %v6311 = vunpack.c.h.b16 %v6268
    %v6312 = vunpack.c.l.b16 %v6269
    %v6313 = vunpack.c.h.b16 %v6269
    %v6314 = vunpack.c.l.b16 %v6270
    %v6315 = vunpack.c.h.b16 %v6270
    %v6316 = vunpack.c.l.b16 %v6271
    %v6317 = vunpack.c.h.b16 %v6271
    %v6318 = vunpack.c.l.b16 %v6272
    %v6319 = vunpack.c.h.b16 %v6272
    %v6320 = vunpack.c.l.b16 %v6273
    %v6321 = vunpack.c.h.b16 %v6273
    %v6322 = vunpack.c.l.b16 %v6274
    %v6323 = vunpack.c.h.b16 %v6274
    %v6324 = vpack.c.b16 %v6296, %v6292
    %v6325 = vpack.c.b16 %v6297, %v6293
    %v6326 = vpack.c.b16 %v6298, %v6294
    %v6327 = vpack.c.b16 %v6299, %v6295
    %v6328 = vpack.c.b16 %v6304, %v6300
    %v6329 = vpack.c.b16 %v6305, %v6301
    %v6330 = vpack.c.b16 %v6306, %v6302
    %v6331 = vpack.c.b16 %v6307, %v6303
    %v6332 = vpack.c.b16 %v6312, %v6308
    %v6333 = vpack.c.b16 %v6313, %v6309
    %v6334 = vpack.c.b16 %v6314, %v6310
    %v6335 = vpack.c.b16 %v6315, %v6311
    %v6336 = vpack.c.b16 %v6320, %v6316
    %v6337 = vpack.c.b16 %v6321, %v6317
    %v6338 = vpack.c.b16 %v6322, %v6318
    %v6339 = vpack.c.b16 %v6323, %v6319
    %v6357 = vsel %vm526, %v6275, 0
    %6359 = vmatpush.bf16.msra.mxu0 0
    %6360 = vmatpush.bf16.msra.mxu0 0
    %6361 = vmatpush.bf16.msra.mxu0 0
    %6362 = vmatpush.bf16.msra.mxu0 0
    %6363 = vmatpush.bf16.msra.mxu0 %v6336
    %6364 = vmatpush.bf16.msra.mxu0 %v6332
    %6365 = vmatpush.bf16.msra.mxu0 %v6328
    %6366 = vmatpush.bf16.msra.mxu0 %v6324
    %6367 = vmatmul.bf16.gmra.mxu0 %v6357
    %v6368 = vpop.f32.mrf.mxu0
    %v6369 = vadd.f32 0.0, %v6368
    %v6370 = vpop.f32.mrf.mxu0
    %6371 = vdwg.mxu0
    %6372 = vmatpush.bf16.msra.mxu0 0
    %6373 = vmatpush.bf16.msra.mxu0 0
    %6374 = vmatpush.bf16.msra.mxu0 0
    %6375 = vmatpush.bf16.msra.mxu0 0
    %6376 = vmatpush.bf16.msra.mxu0 %v6337
    %6377 = vmatpush.bf16.msra.mxu0 %v6333
    %6378 = vmatpush.bf16.msra.mxu0 %v6329
    %6379 = vmatpush.bf16.msra.mxu0 %v6325
    %6380 = vmatmul.bf16.gmra.mxu0 %v6357
    %v6381 = vpop.f32.mrf.mxu0
    %v6382 = vadd.f32 0.0, %v6381
    %v6383 = vpop.f32.mrf.mxu0
    %6384 = vdwg.mxu0
    %6385 = vmatpush.bf16.msra.mxu0 0
    %6386 = vmatpush.bf16.msra.mxu0 0
    %6387 = vmatpush.bf16.msra.mxu0 0
    %6388 = vmatpush.bf16.msra.mxu0 0
    %6389 = vmatpush.bf16.msra.mxu0 %v6338
    %6390 = vmatpush.bf16.msra.mxu0 %v6334
    %6391 = vmatpush.bf16.msra.mxu0 %v6330
    %6392 = vmatpush.bf16.msra.mxu0 %v6326
    %6393 = vmatmul.bf16.gmra.mxu0 %v6357
    %v6394 = vpop.f32.mrf.mxu0
    %v6395 = vadd.f32 0.0, %v6394
    %v6396 = vpop.f32.mrf.mxu0
    %6397 = vdwg.mxu0
    %6398 = vmatpush.bf16.msra.mxu0 0
    %6399 = vmatpush.bf16.msra.mxu0 0
    %6400 = vmatpush.bf16.msra.mxu0 0
    %6401 = vmatpush.bf16.msra.mxu0 0
    %6402 = vmatpush.bf16.msra.mxu0 %v6339
    %6403 = vmatpush.bf16.msra.mxu0 %v6335
    %6404 = vmatpush.bf16.msra.mxu0 %v6331
    %6405 = vmatpush.bf16.msra.mxu0 %v6327
    %6406 = vmatmul.bf16.gmra.mxu0 %v6357
    %v6407 = vpop.f32.mrf.mxu0
    %v6408 = vadd.f32 0.0, %v6407
    %v6409 = vpop.f32.mrf.mxu0
    %6410 = vdwg.mxu0
    %v6411 = vadd.f32 %v6255, %v6369
    %v6412 = vadd.f32 %v6256, %v6382
    %v6413 = vadd.f32 %v6257, %v6395
    %v6414 = vadd.f32 %v6258, %v6408
    %v6415 = vld [vmem:[%s3 + $0x1200] sm:$0xff]
    %v6416 = vld [vmem:[%s3 + $0x1208] sm:$0xff]
    %v6417 = vld [vmem:[%s3 + $0x1210] sm:$0xff]
    %v6418 = vld [vmem:[%s3 + $0x1218] sm:$0xff]
    %v6419 = vld [vmem:[%s3 + $0x1220] sm:$0xff]
    %v6420 = vld [vmem:[%s3 + $0x1228] sm:$0xff]
    %v6421 = vld [vmem:[%s3 + $0x1230] sm:$0xff]
    %v6422 = vld [vmem:[%s3 + $0x1238] sm:$0xff]
    %v6423 = vld [vmem:[%s3 + $0x1240] sm:$0xff]
    %v6424 = vld [vmem:[%s3 + $0x1248] sm:$0xff]
    %v6425 = vld [vmem:[%s3 + $0x1250] sm:$0xff]
    %v6426 = vld [vmem:[%s3 + $0x1258] sm:$0xff]
    %v6427 = vld [vmem:[%s3 + $0x1260] sm:$0xff]
    %v6428 = vld [vmem:[%s3 + $0x1268] sm:$0xff]
    %v6429 = vld [vmem:[%s3 + $0x1270] sm:$0xff]
    %v6430 = vld [vmem:[%s3 + $0x1278] sm:$0xff]
    %v6447 = vunpack.c.l.b16 %v6415
    %v6448 = vunpack.c.h.b16 %v6415
    %v6449 = vunpack.c.l.b16 %v6416
    %v6450 = vunpack.c.h.b16 %v6416
    %v6451 = vunpack.c.l.b16 %v6417
    %v6452 = vunpack.c.h.b16 %v6417
    %v6453 = vunpack.c.l.b16 %v6418
    %v6454 = vunpack.c.h.b16 %v6418
    %v6455 = vunpack.c.l.b16 %v6419
    %v6456 = vunpack.c.h.b16 %v6419
    %v6457 = vunpack.c.l.b16 %v6420
    %v6458 = vunpack.c.h.b16 %v6420
    %v6459 = vunpack.c.l.b16 %v6421
    %v6460 = vunpack.c.h.b16 %v6421
    %v6461 = vunpack.c.l.b16 %v6422
    %v6462 = vunpack.c.h.b16 %v6422
    %v6463 = vunpack.c.l.b16 %v6423
    %v6464 = vunpack.c.h.b16 %v6423
    %v6465 = vunpack.c.l.b16 %v6424
    %v6466 = vunpack.c.h.b16 %v6424
    %v6467 = vunpack.c.l.b16 %v6425
    %v6468 = vunpack.c.h.b16 %v6425
    %v6469 = vunpack.c.l.b16 %v6426
    %v6470 = vunpack.c.h.b16 %v6426
    %v6471 = vunpack.c.l.b16 %v6427
    %v6472 = vunpack.c.h.b16 %v6427
    %v6473 = vunpack.c.l.b16 %v6428
    %v6474 = vunpack.c.h.b16 %v6428
    %v6475 = vunpack.c.l.b16 %v6429
    %v6476 = vunpack.c.h.b16 %v6429
    %v6477 = vunpack.c.l.b16 %v6430
    %v6478 = vunpack.c.h.b16 %v6430
    %v6479 = vpack.c.b16 %v6451, %v6447
    %v6480 = vpack.c.b16 %v6452, %v6448
    %v6481 = vpack.c.b16 %v6453, %v6449
    %v6482 = vpack.c.b16 %v6454, %v6450
    %v6483 = vpack.c.b16 %v6459, %v6455
    %v6484 = vpack.c.b16 %v6460, %v6456
    %v6485 = vpack.c.b16 %v6461, %v6457
    %v6486 = vpack.c.b16 %v6462, %v6458
    %v6487 = vpack.c.b16 %v6467, %v6463
    %v6488 = vpack.c.b16 %v6468, %v6464
    %v6489 = vpack.c.b16 %v6469, %v6465
    %v6490 = vpack.c.b16 %v6470, %v6466
    %v6491 = vpack.c.b16 %v6475, %v6471
    %v6492 = vpack.c.b16 %v6476, %v6472
    %v6493 = vpack.c.b16 %v6477, %v6473
    %v6494 = vpack.c.b16 %v6478, %v6474
    %v6512 = vsel %vm526, %v785, 0
    %6514 = vmatpush.bf16.msra.mxu0 0
    %6515 = vmatpush.bf16.msra.mxu0 0
    %6516 = vmatpush.bf16.msra.mxu0 0
    %6517 = vmatpush.bf16.msra.mxu0 0
    %6518 = vmatpush.bf16.msra.mxu0 %v6491
    %6519 = vmatpush.bf16.msra.mxu0 %v6487
    %6520 = vmatpush.bf16.msra.mxu0 %v6483
    %6521 = vmatpush.bf16.msra.mxu0 %v6479
    %6522 = vmatmul.bf16.gmra.mxu0 %v6512
    %v6523 = vpop.f32.mrf.mxu0
    %v6524 = vadd.f32 0.0, %v6523
    %v6525 = vpop.f32.mrf.mxu0
    %6526 = vdwg.mxu0
    %6527 = vmatpush.bf16.msra.mxu0 0
    %6528 = vmatpush.bf16.msra.mxu0 0
    %6529 = vmatpush.bf16.msra.mxu0 0
    %6530 = vmatpush.bf16.msra.mxu0 0
    %6531 = vmatpush.bf16.msra.mxu0 %v6492
    %6532 = vmatpush.bf16.msra.mxu0 %v6488
    %6533 = vmatpush.bf16.msra.mxu0 %v6484
    %6534 = vmatpush.bf16.msra.mxu0 %v6480
    %6535 = vmatmul.bf16.gmra.mxu0 %v6512
    %v6536 = vpop.f32.mrf.mxu0
    %v6537 = vadd.f32 0.0, %v6536
    %v6538 = vpop.f32.mrf.mxu0
    %6539 = vdwg.mxu0
    %6540 = vmatpush.bf16.msra.mxu0 0
    %6541 = vmatpush.bf16.msra.mxu0 0
    %6542 = vmatpush.bf16.msra.mxu0 0
    %6543 = vmatpush.bf16.msra.mxu0 0
    %6544 = vmatpush.bf16.msra.mxu0 %v6493
    %6545 = vmatpush.bf16.msra.mxu0 %v6489
    %6546 = vmatpush.bf16.msra.mxu0 %v6485
    %6547 = vmatpush.bf16.msra.mxu0 %v6481
    %6548 = vmatmul.bf16.gmra.mxu0 %v6512
    %v6549 = vpop.f32.mrf.mxu0
    %v6550 = vadd.f32 0.0, %v6549
    %v6551 = vpop.f32.mrf.mxu0
    %6552 = vdwg.mxu0
    %6553 = vmatpush.bf16.msra.mxu0 0
    %6554 = vmatpush.bf16.msra.mxu0 0
    %6555 = vmatpush.bf16.msra.mxu0 0
    %6556 = vmatpush.bf16.msra.mxu0 0
    %6557 = vmatpush.bf16.msra.mxu0 %v6494
    %6558 = vmatpush.bf16.msra.mxu0 %v6490
    %6559 = vmatpush.bf16.msra.mxu0 %v6486
    %6560 = vmatpush.bf16.msra.mxu0 %v6482
    %6561 = vmatmul.bf16.gmra.mxu0 %v6512
    %v6562 = vpop.f32.mrf.mxu0
    %v6563 = vadd.f32 0.0, %v6562
    %v6564 = vpop.f32.mrf.mxu0
    %6565 = vdwg.mxu0
    %v6566 = vadd.f32 %v6411, %v6524
    %v6567 = vadd.f32 %v6412, %v6537
    %v6568 = vadd.f32 %v6413, %v6550
    %v6569 = vadd.f32 %v6414, %v6563
    %v6570 = vld [vmem:[%s3 + $0x1280] sm:$0xff]
    %v6571 = vld [vmem:[%s3 + $0x1288] sm:$0xff]
    %v6572 = vld [vmem:[%s3 + $0x1290] sm:$0xff]
    %v6573 = vld [vmem:[%s3 + $0x1298] sm:$0xff]
    %v6574 = vld [vmem:[%s3 + $0x12a0] sm:$0xff]
    %v6575 = vld [vmem:[%s3 + $0x12a8] sm:$0xff]
    %v6576 = vld [vmem:[%s3 + $0x12b0] sm:$0xff]
    %v6577 = vld [vmem:[%s3 + $0x12b8] sm:$0xff]
    %v6578 = vld [vmem:[%s3 + $0x12c0] sm:$0xff]
    %v6579 = vld [vmem:[%s3 + $0x12c8] sm:$0xff]
    %v6580 = vld [vmem:[%s3 + $0x12d0] sm:$0xff]
    %v6581 = vld [vmem:[%s3 + $0x12d8] sm:$0xff]
    %v6582 = vld [vmem:[%s3 + $0x12e0] sm:$0xff]
    %v6583 = vld [vmem:[%s3 + $0x12e8] sm:$0xff]
    %v6584 = vld [vmem:[%s3 + $0x12f0] sm:$0xff]
    %v6585 = vld [vmem:[%s3 + $0x12f8] sm:$0xff]
    %v6587 = vunpack.c.l.b16 %v785
    %v6588 = vpack.c.b16 %v6587, %v6587
    %v6589 = vrot.slane %v6588, 1
    %v6606 = vunpack.c.l.b16 %v6570
    %v6607 = vunpack.c.h.b16 %v6570
    %v6608 = vunpack.c.l.b16 %v6571
    %v6609 = vunpack.c.h.b16 %v6571
    %v6610 = vunpack.c.l.b16 %v6572
    %v6611 = vunpack.c.h.b16 %v6572
    %v6612 = vunpack.c.l.b16 %v6573
    %v6613 = vunpack.c.h.b16 %v6573
    %v6614 = vunpack.c.l.b16 %v6574
    %v6615 = vunpack.c.h.b16 %v6574
    %v6616 = vunpack.c.l.b16 %v6575
    %v6617 = vunpack.c.h.b16 %v6575
    %v6618 = vunpack.c.l.b16 %v6576
    %v6619 = vunpack.c.h.b16 %v6576
    %v6620 = vunpack.c.l.b16 %v6577
    %v6621 = vunpack.c.h.b16 %v6577
    %v6622 = vunpack.c.l.b16 %v6578
    %v6623 = vunpack.c.h.b16 %v6578
    %v6624 = vunpack.c.l.b16 %v6579
    %v6625 = vunpack.c.h.b16 %v6579
    %v6626 = vunpack.c.l.b16 %v6580
    %v6627 = vunpack.c.h.b16 %v6580
    %v6628 = vunpack.c.l.b16 %v6581
    %v6629 = vunpack.c.h.b16 %v6581
    %v6630 = vunpack.c.l.b16 %v6582
    %v6631 = vunpack.c.h.b16 %v6582
    %v6632 = vunpack.c.l.b16 %v6583
    %v6633 = vunpack.c.h.b16 %v6583
    %v6634 = vunpack.c.l.b16 %v6584
    %v6635 = vunpack.c.h.b16 %v6584
    %v6636 = vunpack.c.l.b16 %v6585
    %v6637 = vunpack.c.h.b16 %v6585
    %v6638 = vpack.c.b16 %v6610, %v6606
    %v6639 = vpack.c.b16 %v6611, %v6607
    %v6640 = vpack.c.b16 %v6612, %v6608
    %v6641 = vpack.c.b16 %v6613, %v6609
    %v6642 = vpack.c.b16 %v6618, %v6614
    %v6643 = vpack.c.b16 %v6619, %v6615
    %v6644 = vpack.c.b16 %v6620, %v6616
    %v6645 = vpack.c.b16 %v6621, %v6617
    %v6646 = vpack.c.b16 %v6626, %v6622
    %v6647 = vpack.c.b16 %v6627, %v6623
    %v6648 = vpack.c.b16 %v6628, %v6624
    %v6649 = vpack.c.b16 %v6629, %v6625
    %v6650 = vpack.c.b16 %v6634, %v6630
    %v6651 = vpack.c.b16 %v6635, %v6631
    %v6652 = vpack.c.b16 %v6636, %v6632
    %v6653 = vpack.c.b16 %v6637, %v6633
    %v6671 = vsel %vm526, %v6589, 0
    %6673 = vmatpush.bf16.msra.mxu0 0
    %6674 = vmatpush.bf16.msra.mxu0 0
    %6675 = vmatpush.bf16.msra.mxu0 0
    %6676 = vmatpush.bf16.msra.mxu0 0
    %6677 = vmatpush.bf16.msra.mxu0 %v6650
    %6678 = vmatpush.bf16.msra.mxu0 %v6646
    %6679 = vmatpush.bf16.msra.mxu0 %v6642
    %6680 = vmatpush.bf16.msra.mxu0 %v6638
    %6681 = vmatmul.bf16.gmra.mxu0 %v6671
    %v6682 = vpop.f32.mrf.mxu0
    %v6683 = vadd.f32 0.0, %v6682
    %v6684 = vpop.f32.mrf.mxu0
    %6685 = vdwg.mxu0
    %6686 = vmatpush.bf16.msra.mxu0 0
    %6687 = vmatpush.bf16.msra.mxu0 0
    %6688 = vmatpush.bf16.msra.mxu0 0
    %6689 = vmatpush.bf16.msra.mxu0 0
    %6690 = vmatpush.bf16.msra.mxu0 %v6651
    %6691 = vmatpush.bf16.msra.mxu0 %v6647
    %6692 = vmatpush.bf16.msra.mxu0 %v6643
    %6693 = vmatpush.bf16.msra.mxu0 %v6639
    %6694 = vmatmul.bf16.gmra.mxu0 %v6671
    %v6695 = vpop.f32.mrf.mxu0
    %v6696 = vadd.f32 0.0, %v6695
    %v6697 = vpop.f32.mrf.mxu0
    %6698 = vdwg.mxu0
    %6699 = vmatpush.bf16.msra.mxu0 0
    %6700 = vmatpush.bf16.msra.mxu0 0
    %6701 = vmatpush.bf16.msra.mxu0 0
    %6702 = vmatpush.bf16.msra.mxu0 0
    %6703 = vmatpush.bf16.msra.mxu0 %v6652
    %6704 = vmatpush.bf16.msra.mxu0 %v6648
    %6705 = vmatpush.bf16.msra.mxu0 %v6644
    %6706 = vmatpush.bf16.msra.mxu0 %v6640
    %6707 = vmatmul.bf16.gmra.mxu0 %v6671
    %v6708 = vpop.f32.mrf.mxu0
    %v6709 = vadd.f32 0.0, %v6708
    %v6710 = vpop.f32.mrf.mxu0
    %6711 = vdwg.mxu0
    %6712 = vmatpush.bf16.msra.mxu0 0
    %6713 = vmatpush.bf16.msra.mxu0 0
    %6714 = vmatpush.bf16.msra.mxu0 0
    %6715 = vmatpush.bf16.msra.mxu0 0
    %6716 = vmatpush.bf16.msra.mxu0 %v6653
    %6717 = vmatpush.bf16.msra.mxu0 %v6649
    %6718 = vmatpush.bf16.msra.mxu0 %v6645
    %6719 = vmatpush.bf16.msra.mxu0 %v6641
    %6720 = vmatmul.bf16.gmra.mxu0 %v6671
    %v6721 = vpop.f32.mrf.mxu0
    %v6722 = vadd.f32 0.0, %v6721
    %v6723 = vpop.f32.mrf.mxu0
    %6724 = vdwg.mxu0
    %v6725 = vadd.f32 %v6566, %v6683
    %v6726 = vadd.f32 %v6567, %v6696
    %v6727 = vadd.f32 %v6568, %v6709
    %v6728 = vadd.f32 %v6569, %v6722
    %v6729 = vld [vmem:[%s3 + $0x1300] sm:$0xff]
    %v6730 = vld [vmem:[%s3 + $0x1308] sm:$0xff]
    %v6731 = vld [vmem:[%s3 + $0x1310] sm:$0xff]
    %v6732 = vld [vmem:[%s3 + $0x1318] sm:$0xff]
    %v6733 = vld [vmem:[%s3 + $0x1320] sm:$0xff]
    %v6734 = vld [vmem:[%s3 + $0x1328] sm:$0xff]
    %v6735 = vld [vmem:[%s3 + $0x1330] sm:$0xff]
    %v6736 = vld [vmem:[%s3 + $0x1338] sm:$0xff]
    %v6737 = vld [vmem:[%s3 + $0x1340] sm:$0xff]
    %v6738 = vld [vmem:[%s3 + $0x1348] sm:$0xff]
    %v6739 = vld [vmem:[%s3 + $0x1350] sm:$0xff]
    %v6740 = vld [vmem:[%s3 + $0x1358] sm:$0xff]
    %v6741 = vld [vmem:[%s3 + $0x1360] sm:$0xff]
    %v6742 = vld [vmem:[%s3 + $0x1368] sm:$0xff]
    %v6743 = vld [vmem:[%s3 + $0x1370] sm:$0xff]
    %v6744 = vld [vmem:[%s3 + $0x1378] sm:$0xff]
    %v6745 = vrot.slane %v6588, 2
    %v6762 = vunpack.c.l.b16 %v6729
    %v6763 = vunpack.c.h.b16 %v6729
    %v6764 = vunpack.c.l.b16 %v6730
    %v6765 = vunpack.c.h.b16 %v6730
    %v6766 = vunpack.c.l.b16 %v6731
    %v6767 = vunpack.c.h.b16 %v6731
    %v6768 = vunpack.c.l.b16 %v6732
    %v6769 = vunpack.c.h.b16 %v6732
    %v6770 = vunpack.c.l.b16 %v6733
    %v6771 = vunpack.c.h.b16 %v6733
    %v6772 = vunpack.c.l.b16 %v6734
    %v6773 = vunpack.c.h.b16 %v6734
    %v6774 = vunpack.c.l.b16 %v6735
    %v6775 = vunpack.c.h.b16 %v6735
    %v6776 = vunpack.c.l.b16 %v6736
    %v6777 = vunpack.c.h.b16 %v6736
    %v6778 = vunpack.c.l.b16 %v6737
    %v6779 = vunpack.c.h.b16 %v6737
    %v6780 = vunpack.c.l.b16 %v6738
    %v6781 = vunpack.c.h.b16 %v6738
    %v6782 = vunpack.c.l.b16 %v6739
    %v6783 = vunpack.c.h.b16 %v6739
    %v6784 = vunpack.c.l.b16 %v6740
    %v6785 = vunpack.c.h.b16 %v6740
    %v6786 = vunpack.c.l.b16 %v6741
    %v6787 = vunpack.c.h.b16 %v6741
    %v6788 = vunpack.c.l.b16 %v6742
    %v6789 = vunpack.c.h.b16 %v6742
    %v6790 = vunpack.c.l.b16 %v6743
    %v6791 = vunpack.c.h.b16 %v6743
    %v6792 = vunpack.c.l.b16 %v6744
    %v6793 = vunpack.c.h.b16 %v6744
    %v6794 = vpack.c.b16 %v6766, %v6762
    %v6795 = vpack.c.b16 %v6767, %v6763
    %v6796 = vpack.c.b16 %v6768, %v6764
    %v6797 = vpack.c.b16 %v6769, %v6765
    %v6798 = vpack.c.b16 %v6774, %v6770
    %v6799 = vpack.c.b16 %v6775, %v6771
    %v6800 = vpack.c.b16 %v6776, %v6772
    %v6801 = vpack.c.b16 %v6777, %v6773
    %v6802 = vpack.c.b16 %v6782, %v6778
    %v6803 = vpack.c.b16 %v6783, %v6779
    %v6804 = vpack.c.b16 %v6784, %v6780
    %v6805 = vpack.c.b16 %v6785, %v6781
    %v6806 = vpack.c.b16 %v6790, %v6786
    %v6807 = vpack.c.b16 %v6791, %v6787
    %v6808 = vpack.c.b16 %v6792, %v6788
    %v6809 = vpack.c.b16 %v6793, %v6789
    %v6827 = vsel %vm526, %v6745, 0
    %6829 = vmatpush.bf16.msra.mxu0 0
    %6830 = vmatpush.bf16.msra.mxu0 0
    %6831 = vmatpush.bf16.msra.mxu0 0
    %6832 = vmatpush.bf16.msra.mxu0 0
    %6833 = vmatpush.bf16.msra.mxu0 %v6806
    %6834 = vmatpush.bf16.msra.mxu0 %v6802
    %6835 = vmatpush.bf16.msra.mxu0 %v6798
    %6836 = vmatpush.bf16.msra.mxu0 %v6794
    %6837 = vmatmul.bf16.gmra.mxu0 %v6827
    %v6838 = vpop.f32.mrf.mxu0
    %v6839 = vadd.f32 0.0, %v6838
    %v6840 = vpop.f32.mrf.mxu0
    %6841 = vdwg.mxu0
    %6842 = vmatpush.bf16.msra.mxu0 0
    %6843 = vmatpush.bf16.msra.mxu0 0
    %6844 = vmatpush.bf16.msra.mxu0 0
    %6845 = vmatpush.bf16.msra.mxu0 0
    %6846 = vmatpush.bf16.msra.mxu0 %v6807
    %6847 = vmatpush.bf16.msra.mxu0 %v6803
    %6848 = vmatpush.bf16.msra.mxu0 %v6799
    %6849 = vmatpush.bf16.msra.mxu0 %v6795
    %6850 = vmatmul.bf16.gmra.mxu0 %v6827
    %v6851 = vpop.f32.mrf.mxu0
    %v6852 = vadd.f32 0.0, %v6851
    %v6853 = vpop.f32.mrf.mxu0
    %6854 = vdwg.mxu0
    %6855 = vmatpush.bf16.msra.mxu0 0
    %6856 = vmatpush.bf16.msra.mxu0 0
    %6857 = vmatpush.bf16.msra.mxu0 0
    %6858 = vmatpush.bf16.msra.mxu0 0
    %6859 = vmatpush.bf16.msra.mxu0 %v6808
    %6860 = vmatpush.bf16.msra.mxu0 %v6804
    %6861 = vmatpush.bf16.msra.mxu0 %v6800
    %6862 = vmatpush.bf16.msra.mxu0 %v6796
    %6863 = vmatmul.bf16.gmra.mxu0 %v6827
    %v6864 = vpop.f32.mrf.mxu0
    %v6865 = vadd.f32 0.0, %v6864
    %v6866 = vpop.f32.mrf.mxu0
    %6867 = vdwg.mxu0
    %6868 = vmatpush.bf16.msra.mxu0 0
    %6869 = vmatpush.bf16.msra.mxu0 0
    %6870 = vmatpush.bf16.msra.mxu0 0
    %6871 = vmatpush.bf16.msra.mxu0 0
    %6872 = vmatpush.bf16.msra.mxu0 %v6809
    %6873 = vmatpush.bf16.msra.mxu0 %v6805
    %6874 = vmatpush.bf16.msra.mxu0 %v6801
    %6875 = vmatpush.bf16.msra.mxu0 %v6797
    %6876 = vmatmul.bf16.gmra.mxu0 %v6827
    %v6877 = vpop.f32.mrf.mxu0
    %v6878 = vadd.f32 0.0, %v6877
    %v6879 = vpop.f32.mrf.mxu0
    %6880 = vdwg.mxu0
    %v6881 = vadd.f32 %v6725, %v6839
    %v6882 = vadd.f32 %v6726, %v6852
    %v6883 = vadd.f32 %v6727, %v6865
    %v6884 = vadd.f32 %v6728, %v6878
    %v6885 = vld [vmem:[%s3 + $0x1380] sm:$0xff]
    %v6886 = vld [vmem:[%s3 + $0x1388] sm:$0xff]
    %v6887 = vld [vmem:[%s3 + $0x1390] sm:$0xff]
    %v6888 = vld [vmem:[%s3 + $0x1398] sm:$0xff]
    %v6889 = vld [vmem:[%s3 + $0x13a0] sm:$0xff]
    %v6890 = vld [vmem:[%s3 + $0x13a8] sm:$0xff]
    %v6891 = vld [vmem:[%s3 + $0x13b0] sm:$0xff]
    %v6892 = vld [vmem:[%s3 + $0x13b8] sm:$0xff]
    %v6893 = vld [vmem:[%s3 + $0x13c0] sm:$0xff]
    %v6894 = vld [vmem:[%s3 + $0x13c8] sm:$0xff]
    %v6895 = vld [vmem:[%s3 + $0x13d0] sm:$0xff]
    %v6896 = vld [vmem:[%s3 + $0x13d8] sm:$0xff]
    %v6897 = vld [vmem:[%s3 + $0x13e0] sm:$0xff]
    %v6898 = vld [vmem:[%s3 + $0x13e8] sm:$0xff]
    %v6899 = vld [vmem:[%s3 + $0x13f0] sm:$0xff]
    %v6900 = vld [vmem:[%s3 + $0x13f8] sm:$0xff]
    %v6901 = vrot.slane %v6588, 3
    %v6918 = vunpack.c.l.b16 %v6885
    %v6919 = vunpack.c.h.b16 %v6885
    %v6920 = vunpack.c.l.b16 %v6886
    %v6921 = vunpack.c.h.b16 %v6886
    %v6922 = vunpack.c.l.b16 %v6887
    %v6923 = vunpack.c.h.b16 %v6887
    %v6924 = vunpack.c.l.b16 %v6888
    %v6925 = vunpack.c.h.b16 %v6888
    %v6926 = vunpack.c.l.b16 %v6889
    %v6927 = vunpack.c.h.b16 %v6889
    %v6928 = vunpack.c.l.b16 %v6890
    %v6929 = vunpack.c.h.b16 %v6890
    %v6930 = vunpack.c.l.b16 %v6891
    %v6931 = vunpack.c.h.b16 %v6891
    %v6932 = vunpack.c.l.b16 %v6892
    %v6933 = vunpack.c.h.b16 %v6892
    %v6934 = vunpack.c.l.b16 %v6893
    %v6935 = vunpack.c.h.b16 %v6893
    %v6936 = vunpack.c.l.b16 %v6894
    %v6937 = vunpack.c.h.b16 %v6894
    %v6938 = vunpack.c.l.b16 %v6895
    %v6939 = vunpack.c.h.b16 %v6895
    %v6940 = vunpack.c.l.b16 %v6896
    %v6941 = vunpack.c.h.b16 %v6896
    %v6942 = vunpack.c.l.b16 %v6897
    %v6943 = vunpack.c.h.b16 %v6897
    %v6944 = vunpack.c.l.b16 %v6898
    %v6945 = vunpack.c.h.b16 %v6898
    %v6946 = vunpack.c.l.b16 %v6899
    %v6947 = vunpack.c.h.b16 %v6899
    %v6948 = vunpack.c.l.b16 %v6900
    %v6949 = vunpack.c.h.b16 %v6900
    %v6950 = vpack.c.b16 %v6922, %v6918
    %v6951 = vpack.c.b16 %v6923, %v6919
    %v6952 = vpack.c.b16 %v6924, %v6920
    %v6953 = vpack.c.b16 %v6925, %v6921
    %v6954 = vpack.c.b16 %v6930, %v6926
    %v6955 = vpack.c.b16 %v6931, %v6927
    %v6956 = vpack.c.b16 %v6932, %v6928
    %v6957 = vpack.c.b16 %v6933, %v6929
    %v6958 = vpack.c.b16 %v6938, %v6934
    %v6959 = vpack.c.b16 %v6939, %v6935
    %v6960 = vpack.c.b16 %v6940, %v6936
    %v6961 = vpack.c.b16 %v6941, %v6937
    %v6962 = vpack.c.b16 %v6946, %v6942
    %v6963 = vpack.c.b16 %v6947, %v6943
    %v6964 = vpack.c.b16 %v6948, %v6944
    %v6965 = vpack.c.b16 %v6949, %v6945
    %v6983 = vsel %vm526, %v6901, 0
    %6985 = vmatpush.bf16.msra.mxu0 0
    %6986 = vmatpush.bf16.msra.mxu0 0
    %6987 = vmatpush.bf16.msra.mxu0 0
    %6988 = vmatpush.bf16.msra.mxu0 0
    %6989 = vmatpush.bf16.msra.mxu0 %v6962
    %6990 = vmatpush.bf16.msra.mxu0 %v6958
    %6991 = vmatpush.bf16.msra.mxu0 %v6954
    %6992 = vmatpush.bf16.msra.mxu0 %v6950
    %6993 = vmatmul.bf16.gmra.mxu0 %v6983
    %v6994 = vpop.f32.mrf.mxu0
    %v6995 = vadd.f32 0.0, %v6994
    %v6996 = vpop.f32.mrf.mxu0
    %6997 = vdwg.mxu0
    %6998 = vmatpush.bf16.msra.mxu0 0
    %6999 = vmatpush.bf16.msra.mxu0 0
    %7000 = vmatpush.bf16.msra.mxu0 0
    %7001 = vmatpush.bf16.msra.mxu0 0
    %7002 = vmatpush.bf16.msra.mxu0 %v6963
    %7003 = vmatpush.bf16.msra.mxu0 %v6959
    %7004 = vmatpush.bf16.msra.mxu0 %v6955
    %7005 = vmatpush.bf16.msra.mxu0 %v6951
    %7006 = vmatmul.bf16.gmra.mxu0 %v6983
    %v7007 = vpop.f32.mrf.mxu0
    %v7008 = vadd.f32 0.0, %v7007
    %v7009 = vpop.f32.mrf.mxu0
    %7010 = vdwg.mxu0
    %7011 = vmatpush.bf16.msra.mxu0 0
    %7012 = vmatpush.bf16.msra.mxu0 0
    %7013 = vmatpush.bf16.msra.mxu0 0
    %7014 = vmatpush.bf16.msra.mxu0 0
    %7015 = vmatpush.bf16.msra.mxu0 %v6964
    %7016 = vmatpush.bf16.msra.mxu0 %v6960
    %7017 = vmatpush.bf16.msra.mxu0 %v6956
    %7018 = vmatpush.bf16.msra.mxu0 %v6952
    %7019 = vmatmul.bf16.gmra.mxu0 %v6983
    %v7020 = vpop.f32.mrf.mxu0
    %v7021 = vadd.f32 0.0, %v7020
    %v7022 = vpop.f32.mrf.mxu0
    %7023 = vdwg.mxu0
    %7024 = vmatpush.bf16.msra.mxu0 0
    %7025 = vmatpush.bf16.msra.mxu0 0
    %7026 = vmatpush.bf16.msra.mxu0 0
    %7027 = vmatpush.bf16.msra.mxu0 0
    %7028 = vmatpush.bf16.msra.mxu0 %v6965
    %7029 = vmatpush.bf16.msra.mxu0 %v6961
    %7030 = vmatpush.bf16.msra.mxu0 %v6957
    %7031 = vmatpush.bf16.msra.mxu0 %v6953
    %7032 = vmatmul.bf16.gmra.mxu0 %v6983
    %v7033 = vpop.f32.mrf.mxu0
    %v7034 = vadd.f32 0.0, %v7033
    %v7035 = vpop.f32.mrf.mxu0
    %7036 = vdwg.mxu0
    %v7037 = vadd.f32 %v6881, %v6995
    %v7038 = vadd.f32 %v6882, %v7008
    %v7039 = vadd.f32 %v6883, %v7021
    %v7040 = vadd.f32 %v6884, %v7034
    %v7041 = vld [vmem:[%s3 + $0x1400] sm:$0xff]
    %v7042 = vld [vmem:[%s3 + $0x1408] sm:$0xff]
    %v7043 = vld [vmem:[%s3 + $0x1410] sm:$0xff]
    %v7044 = vld [vmem:[%s3 + $0x1418] sm:$0xff]
    %v7045 = vld [vmem:[%s3 + $0x1420] sm:$0xff]
    %v7046 = vld [vmem:[%s3 + $0x1428] sm:$0xff]
    %v7047 = vld [vmem:[%s3 + $0x1430] sm:$0xff]
    %v7048 = vld [vmem:[%s3 + $0x1438] sm:$0xff]
    %v7049 = vld [vmem:[%s3 + $0x1440] sm:$0xff]
    %v7050 = vld [vmem:[%s3 + $0x1448] sm:$0xff]
    %v7051 = vld [vmem:[%s3 + $0x1450] sm:$0xff]
    %v7052 = vld [vmem:[%s3 + $0x1458] sm:$0xff]
    %v7053 = vld [vmem:[%s3 + $0x1460] sm:$0xff]
    %v7054 = vld [vmem:[%s3 + $0x1468] sm:$0xff]
    %v7055 = vld [vmem:[%s3 + $0x1470] sm:$0xff]
    %v7056 = vld [vmem:[%s3 + $0x1478] sm:$0xff]
    %v7073 = vunpack.c.l.b16 %v7041
    %v7074 = vunpack.c.h.b16 %v7041
    %v7075 = vunpack.c.l.b16 %v7042
    %v7076 = vunpack.c.h.b16 %v7042
    %v7077 = vunpack.c.l.b16 %v7043
    %v7078 = vunpack.c.h.b16 %v7043
    %v7079 = vunpack.c.l.b16 %v7044
    %v7080 = vunpack.c.h.b16 %v7044
    %v7081 = vunpack.c.l.b16 %v7045
    %v7082 = vunpack.c.h.b16 %v7045
    %v7083 = vunpack.c.l.b16 %v7046
    %v7084 = vunpack.c.h.b16 %v7046
    %v7085 = vunpack.c.l.b16 %v7047
    %v7086 = vunpack.c.h.b16 %v7047
    %v7087 = vunpack.c.l.b16 %v7048
    %v7088 = vunpack.c.h.b16 %v7048
    %v7089 = vunpack.c.l.b16 %v7049
    %v7090 = vunpack.c.h.b16 %v7049
    %v7091 = vunpack.c.l.b16 %v7050
    %v7092 = vunpack.c.h.b16 %v7050
    %v7093 = vunpack.c.l.b16 %v7051
    %v7094 = vunpack.c.h.b16 %v7051
    %v7095 = vunpack.c.l.b16 %v7052
    %v7096 = vunpack.c.h.b16 %v7052
    %v7097 = vunpack.c.l.b16 %v7053
    %v7098 = vunpack.c.h.b16 %v7053
    %v7099 = vunpack.c.l.b16 %v7054
    %v7100 = vunpack.c.h.b16 %v7054
    %v7101 = vunpack.c.l.b16 %v7055
    %v7102 = vunpack.c.h.b16 %v7055
    %v7103 = vunpack.c.l.b16 %v7056
    %v7104 = vunpack.c.h.b16 %v7056
    %v7105 = vpack.c.b16 %v7077, %v7073
    %v7106 = vpack.c.b16 %v7078, %v7074
    %v7107 = vpack.c.b16 %v7079, %v7075
    %v7108 = vpack.c.b16 %v7080, %v7076
    %v7109 = vpack.c.b16 %v7085, %v7081
    %v7110 = vpack.c.b16 %v7086, %v7082
    %v7111 = vpack.c.b16 %v7087, %v7083
    %v7112 = vpack.c.b16 %v7088, %v7084
    %v7113 = vpack.c.b16 %v7093, %v7089
    %v7114 = vpack.c.b16 %v7094, %v7090
    %v7115 = vpack.c.b16 %v7095, %v7091
    %v7116 = vpack.c.b16 %v7096, %v7092
    %v7117 = vpack.c.b16 %v7101, %v7097
    %v7118 = vpack.c.b16 %v7102, %v7098
    %v7119 = vpack.c.b16 %v7103, %v7099
    %v7120 = vpack.c.b16 %v7104, %v7100
    %v7138 = vsel %vm526, %v786, 0
    %7140 = vmatpush.bf16.msra.mxu0 0
    %7141 = vmatpush.bf16.msra.mxu0 0
    %7142 = vmatpush.bf16.msra.mxu0 0
    %7143 = vmatpush.bf16.msra.mxu0 0
    %7144 = vmatpush.bf16.msra.mxu0 %v7117
    %7145 = vmatpush.bf16.msra.mxu0 %v7113
    %7146 = vmatpush.bf16.msra.mxu0 %v7109
    %7147 = vmatpush.bf16.msra.mxu0 %v7105
    %7148 = vmatmul.bf16.gmra.mxu0 %v7138
    %v7149 = vpop.f32.mrf.mxu0
    %v7150 = vadd.f32 0.0, %v7149
    %v7151 = vpop.f32.mrf.mxu0
    %7152 = vdwg.mxu0
    %7153 = vmatpush.bf16.msra.mxu0 0
    %7154 = vmatpush.bf16.msra.mxu0 0
    %7155 = vmatpush.bf16.msra.mxu0 0
    %7156 = vmatpush.bf16.msra.mxu0 0
    %7157 = vmatpush.bf16.msra.mxu0 %v7118
    %7158 = vmatpush.bf16.msra.mxu0 %v7114
    %7159 = vmatpush.bf16.msra.mxu0 %v7110
    %7160 = vmatpush.bf16.msra.mxu0 %v7106
    %7161 = vmatmul.bf16.gmra.mxu0 %v7138
    %v7162 = vpop.f32.mrf.mxu0
    %v7163 = vadd.f32 0.0, %v7162
    %v7164 = vpop.f32.mrf.mxu0
    %7165 = vdwg.mxu0
    %7166 = vmatpush.bf16.msra.mxu0 0
    %7167 = vmatpush.bf16.msra.mxu0 0
    %7168 = vmatpush.bf16.msra.mxu0 0
    %7169 = vmatpush.bf16.msra.mxu0 0
    %7170 = vmatpush.bf16.msra.mxu0 %v7119
    %7171 = vmatpush.bf16.msra.mxu0 %v7115
    %7172 = vmatpush.bf16.msra.mxu0 %v7111
    %7173 = vmatpush.bf16.msra.mxu0 %v7107
    %7174 = vmatmul.bf16.gmra.mxu0 %v7138
    %v7175 = vpop.f32.mrf.mxu0
    %v7176 = vadd.f32 0.0, %v7175
    %v7177 = vpop.f32.mrf.mxu0
    %7178 = vdwg.mxu0
    %7179 = vmatpush.bf16.msra.mxu0 0
    %7180 = vmatpush.bf16.msra.mxu0 0
    %7181 = vmatpush.bf16.msra.mxu0 0
    %7182 = vmatpush.bf16.msra.mxu0 0
    %7183 = vmatpush.bf16.msra.mxu0 %v7120
    %7184 = vmatpush.bf16.msra.mxu0 %v7116
    %7185 = vmatpush.bf16.msra.mxu0 %v7112
    %7186 = vmatpush.bf16.msra.mxu0 %v7108
    %7187 = vmatmul.bf16.gmra.mxu0 %v7138
    %v7188 = vpop.f32.mrf.mxu0
    %v7189 = vadd.f32 0.0, %v7188
    %v7190 = vpop.f32.mrf.mxu0
    %7191 = vdwg.mxu0
    %v7192 = vadd.f32 %v7037, %v7150
    %v7193 = vadd.f32 %v7038, %v7163
    %v7194 = vadd.f32 %v7039, %v7176
    %v7195 = vadd.f32 %v7040, %v7189
    %v7196 = vld [vmem:[%s3 + $0x1480] sm:$0xff]
    %v7197 = vld [vmem:[%s3 + $0x1488] sm:$0xff]
    %v7198 = vld [vmem:[%s3 + $0x1490] sm:$0xff]
    %v7199 = vld [vmem:[%s3 + $0x1498] sm:$0xff]
    %v7200 = vld [vmem:[%s3 + $0x14a0] sm:$0xff]
    %v7201 = vld [vmem:[%s3 + $0x14a8] sm:$0xff]
    %v7202 = vld [vmem:[%s3 + $0x14b0] sm:$0xff]
    %v7203 = vld [vmem:[%s3 + $0x14b8] sm:$0xff]
    %v7204 = vld [vmem:[%s3 + $0x14c0] sm:$0xff]
    %v7205 = vld [vmem:[%s3 + $0x14c8] sm:$0xff]
    %v7206 = vld [vmem:[%s3 + $0x14d0] sm:$0xff]
    %v7207 = vld [vmem:[%s3 + $0x14d8] sm:$0xff]
    %v7208 = vld [vmem:[%s3 + $0x14e0] sm:$0xff]
    %v7209 = vld [vmem:[%s3 + $0x14e8] sm:$0xff]
    %v7210 = vld [vmem:[%s3 + $0x14f0] sm:$0xff]
    %v7211 = vld [vmem:[%s3 + $0x14f8] sm:$0xff]
    %v7213 = vunpack.c.l.b16 %v786
    %v7214 = vpack.c.b16 %v7213, %v7213
    %v7215 = vrot.slane %v7214, 1
    %v7232 = vunpack.c.l.b16 %v7196
    %v7233 = vunpack.c.h.b16 %v7196
    %v7234 = vunpack.c.l.b16 %v7197
    %v7235 = vunpack.c.h.b16 %v7197
    %v7236 = vunpack.c.l.b16 %v7198
    %v7237 = vunpack.c.h.b16 %v7198
    %v7238 = vunpack.c.l.b16 %v7199
    %v7239 = vunpack.c.h.b16 %v7199
    %v7240 = vunpack.c.l.b16 %v7200
    %v7241 = vunpack.c.h.b16 %v7200
    %v7242 = vunpack.c.l.b16 %v7201
    %v7243 = vunpack.c.h.b16 %v7201
    %v7244 = vunpack.c.l.b16 %v7202
    %v7245 = vunpack.c.h.b16 %v7202
    %v7246 = vunpack.c.l.b16 %v7203
    %v7247 = vunpack.c.h.b16 %v7203
    %v7248 = vunpack.c.l.b16 %v7204
    %v7249 = vunpack.c.h.b16 %v7204
    %v7250 = vunpack.c.l.b16 %v7205
    %v7251 = vunpack.c.h.b16 %v7205
    %v7252 = vunpack.c.l.b16 %v7206
    %v7253 = vunpack.c.h.b16 %v7206
    %v7254 = vunpack.c.l.b16 %v7207
    %v7255 = vunpack.c.h.b16 %v7207
    %v7256 = vunpack.c.l.b16 %v7208
    %v7257 = vunpack.c.h.b16 %v7208
    %v7258 = vunpack.c.l.b16 %v7209
    %v7259 = vunpack.c.h.b16 %v7209
    %v7260 = vunpack.c.l.b16 %v7210
    %v7261 = vunpack.c.h.b16 %v7210
    %v7262 = vunpack.c.l.b16 %v7211
    %v7263 = vunpack.c.h.b16 %v7211
    %v7264 = vpack.c.b16 %v7236, %v7232
    %v7265 = vpack.c.b16 %v7237, %v7233
    %v7266 = vpack.c.b16 %v7238, %v7234
    %v7267 = vpack.c.b16 %v7239, %v7235
    %v7268 = vpack.c.b16 %v7244, %v7240
    %v7269 = vpack.c.b16 %v7245, %v7241
    %v7270 = vpack.c.b16 %v7246, %v7242
    %v7271 = vpack.c.b16 %v7247, %v7243
    %v7272 = vpack.c.b16 %v7252, %v7248
    %v7273 = vpack.c.b16 %v7253, %v7249
    %v7274 = vpack.c.b16 %v7254, %v7250
    %v7275 = vpack.c.b16 %v7255, %v7251
    %v7276 = vpack.c.b16 %v7260, %v7256
    %v7277 = vpack.c.b16 %v7261, %v7257
    %v7278 = vpack.c.b16 %v7262, %v7258
    %v7279 = vpack.c.b16 %v7263, %v7259
    %v7297 = vsel %vm526, %v7215, 0
    %7299 = vmatpush.bf16.msra.mxu0 0
    %7300 = vmatpush.bf16.msra.mxu0 0
    %7301 = vmatpush.bf16.msra.mxu0 0
    %7302 = vmatpush.bf16.msra.mxu0 0
    %7303 = vmatpush.bf16.msra.mxu0 %v7276
    %7304 = vmatpush.bf16.msra.mxu0 %v7272
    %7305 = vmatpush.bf16.msra.mxu0 %v7268
    %7306 = vmatpush.bf16.msra.mxu0 %v7264
    %7307 = vmatmul.bf16.gmra.mxu0 %v7297
    %v7308 = vpop.f32.mrf.mxu0
    %v7309 = vadd.f32 0.0, %v7308
    %v7310 = vpop.f32.mrf.mxu0
    %7311 = vdwg.mxu0
    %7312 = vmatpush.bf16.msra.mxu0 0
    %7313 = vmatpush.bf16.msra.mxu0 0
    %7314 = vmatpush.bf16.msra.mxu0 0
    %7315 = vmatpush.bf16.msra.mxu0 0
    %7316 = vmatpush.bf16.msra.mxu0 %v7277
    %7317 = vmatpush.bf16.msra.mxu0 %v7273
    %7318 = vmatpush.bf16.msra.mxu0 %v7269
    %7319 = vmatpush.bf16.msra.mxu0 %v7265
    %7320 = vmatmul.bf16.gmra.mxu0 %v7297
    %v7321 = vpop.f32.mrf.mxu0
    %v7322 = vadd.f32 0.0, %v7321
    %v7323 = vpop.f32.mrf.mxu0
    %7324 = vdwg.mxu0
    %7325 = vmatpush.bf16.msra.mxu0 0
    %7326 = vmatpush.bf16.msra.mxu0 0
    %7327 = vmatpush.bf16.msra.mxu0 0
    %7328 = vmatpush.bf16.msra.mxu0 0
    %7329 = vmatpush.bf16.msra.mxu0 %v7278
    %7330 = vmatpush.bf16.msra.mxu0 %v7274
    %7331 = vmatpush.bf16.msra.mxu0 %v7270
    %7332 = vmatpush.bf16.msra.mxu0 %v7266
    %7333 = vmatmul.bf16.gmra.mxu0 %v7297
    %v7334 = vpop.f32.mrf.mxu0
    %v7335 = vadd.f32 0.0, %v7334
    %v7336 = vpop.f32.mrf.mxu0
    %7337 = vdwg.mxu0
    %7338 = vmatpush.bf16.msra.mxu0 0
    %7339 = vmatpush.bf16.msra.mxu0 0
    %7340 = vmatpush.bf16.msra.mxu0 0
    %7341 = vmatpush.bf16.msra.mxu0 0
    %7342 = vmatpush.bf16.msra.mxu0 %v7279
    %7343 = vmatpush.bf16.msra.mxu0 %v7275
    %7344 = vmatpush.bf16.msra.mxu0 %v7271
    %7345 = vmatpush.bf16.msra.mxu0 %v7267
    %7346 = vmatmul.bf16.gmra.mxu0 %v7297
    %v7347 = vpop.f32.mrf.mxu0
    %v7348 = vadd.f32 0.0, %v7347
    %v7349 = vpop.f32.mrf.mxu0
    %7350 = vdwg.mxu0
    %v7351 = vadd.f32 %v7192, %v7309
    %v7352 = vadd.f32 %v7193, %v7322
    %v7353 = vadd.f32 %v7194, %v7335
    %v7354 = vadd.f32 %v7195, %v7348
    %v7355 = vld [vmem:[%s3 + $0x1500] sm:$0xff]
    %v7356 = vld [vmem:[%s3 + $0x1508] sm:$0xff]
    %v7357 = vld [vmem:[%s3 + $0x1510] sm:$0xff]
    %v7358 = vld [vmem:[%s3 + $0x1518] sm:$0xff]
    %v7359 = vld [vmem:[%s3 + $0x1520] sm:$0xff]
    %v7360 = vld [vmem:[%s3 + $0x1528] sm:$0xff]
    %v7361 = vld [vmem:[%s3 + $0x1530] sm:$0xff]
    %v7362 = vld [vmem:[%s3 + $0x1538] sm:$0xff]
    %v7363 = vld [vmem:[%s3 + $0x1540] sm:$0xff]
    %v7364 = vld [vmem:[%s3 + $0x1548] sm:$0xff]
    %v7365 = vld [vmem:[%s3 + $0x1550] sm:$0xff]
    %v7366 = vld [vmem:[%s3 + $0x1558] sm:$0xff]
    %v7367 = vld [vmem:[%s3 + $0x1560] sm:$0xff]
    %v7368 = vld [vmem:[%s3 + $0x1568] sm:$0xff]
    %v7369 = vld [vmem:[%s3 + $0x1570] sm:$0xff]
    %v7370 = vld [vmem:[%s3 + $0x1578] sm:$0xff]
    %v7371 = vrot.slane %v7214, 2
    %v7388 = vunpack.c.l.b16 %v7355
    %v7389 = vunpack.c.h.b16 %v7355
    %v7390 = vunpack.c.l.b16 %v7356
    %v7391 = vunpack.c.h.b16 %v7356
    %v7392 = vunpack.c.l.b16 %v7357
    %v7393 = vunpack.c.h.b16 %v7357
    %v7394 = vunpack.c.l.b16 %v7358
    %v7395 = vunpack.c.h.b16 %v7358
    %v7396 = vunpack.c.l.b16 %v7359
    %v7397 = vunpack.c.h.b16 %v7359
    %v7398 = vunpack.c.l.b16 %v7360
    %v7399 = vunpack.c.h.b16 %v7360
    %v7400 = vunpack.c.l.b16 %v7361
    %v7401 = vunpack.c.h.b16 %v7361
    %v7402 = vunpack.c.l.b16 %v7362
    %v7403 = vunpack.c.h.b16 %v7362
    %v7404 = vunpack.c.l.b16 %v7363
    %v7405 = vunpack.c.h.b16 %v7363
    %v7406 = vunpack.c.l.b16 %v7364
    %v7407 = vunpack.c.h.b16 %v7364
    %v7408 = vunpack.c.l.b16 %v7365
    %v7409 = vunpack.c.h.b16 %v7365
    %v7410 = vunpack.c.l.b16 %v7366
    %v7411 = vunpack.c.h.b16 %v7366
    %v7412 = vunpack.c.l.b16 %v7367
    %v7413 = vunpack.c.h.b16 %v7367
    %v7414 = vunpack.c.l.b16 %v7368
    %v7415 = vunpack.c.h.b16 %v7368
    %v7416 = vunpack.c.l.b16 %v7369
    %v7417 = vunpack.c.h.b16 %v7369
    %v7418 = vunpack.c.l.b16 %v7370
    %v7419 = vunpack.c.h.b16 %v7370
    %v7420 = vpack.c.b16 %v7392, %v7388
    %v7421 = vpack.c.b16 %v7393, %v7389
    %v7422 = vpack.c.b16 %v7394, %v7390
    %v7423 = vpack.c.b16 %v7395, %v7391
    %v7424 = vpack.c.b16 %v7400, %v7396
    %v7425 = vpack.c.b16 %v7401, %v7397
    %v7426 = vpack.c.b16 %v7402, %v7398
    %v7427 = vpack.c.b16 %v7403, %v7399
    %v7428 = vpack.c.b16 %v7408, %v7404
    %v7429 = vpack.c.b16 %v7409, %v7405
    %v7430 = vpack.c.b16 %v7410, %v7406
    %v7431 = vpack.c.b16 %v7411, %v7407
    %v7432 = vpack.c.b16 %v7416, %v7412
    %v7433 = vpack.c.b16 %v7417, %v7413
    %v7434 = vpack.c.b16 %v7418, %v7414
    %v7435 = vpack.c.b16 %v7419, %v7415
    %v7453 = vsel %vm526, %v7371, 0
    %7455 = vmatpush.bf16.msra.mxu0 0
    %7456 = vmatpush.bf16.msra.mxu0 0
    %7457 = vmatpush.bf16.msra.mxu0 0
    %7458 = vmatpush.bf16.msra.mxu0 0
    %7459 = vmatpush.bf16.msra.mxu0 %v7432
    %7460 = vmatpush.bf16.msra.mxu0 %v7428
    %7461 = vmatpush.bf16.msra.mxu0 %v7424
    %7462 = vmatpush.bf16.msra.mxu0 %v7420
    %7463 = vmatmul.bf16.gmra.mxu0 %v7453
    %v7464 = vpop.f32.mrf.mxu0
    %v7465 = vadd.f32 0.0, %v7464
    %v7466 = vpop.f32.mrf.mxu0
    %7467 = vdwg.mxu0
    %7468 = vmatpush.bf16.msra.mxu0 0
    %7469 = vmatpush.bf16.msra.mxu0 0
    %7470 = vmatpush.bf16.msra.mxu0 0
    %7471 = vmatpush.bf16.msra.mxu0 0
    %7472 = vmatpush.bf16.msra.mxu0 %v7433
    %7473 = vmatpush.bf16.msra.mxu0 %v7429
    %7474 = vmatpush.bf16.msra.mxu0 %v7425
    %7475 = vmatpush.bf16.msra.mxu0 %v7421
    %7476 = vmatmul.bf16.gmra.mxu0 %v7453
    %v7477 = vpop.f32.mrf.mxu0
    %v7478 = vadd.f32 0.0, %v7477
    %v7479 = vpop.f32.mrf.mxu0
    %7480 = vdwg.mxu0
    %7481 = vmatpush.bf16.msra.mxu0 0
    %7482 = vmatpush.bf16.msra.mxu0 0
    %7483 = vmatpush.bf16.msra.mxu0 0
    %7484 = vmatpush.bf16.msra.mxu0 0
    %7485 = vmatpush.bf16.msra.mxu0 %v7434
    %7486 = vmatpush.bf16.msra.mxu0 %v7430
    %7487 = vmatpush.bf16.msra.mxu0 %v7426
    %7488 = vmatpush.bf16.msra.mxu0 %v7422
    %7489 = vmatmul.bf16.gmra.mxu0 %v7453
    %v7490 = vpop.f32.mrf.mxu0
    %v7491 = vadd.f32 0.0, %v7490
    %v7492 = vpop.f32.mrf.mxu0
    %7493 = vdwg.mxu0
    %7494 = vmatpush.bf16.msra.mxu0 0
    %7495 = vmatpush.bf16.msra.mxu0 0
    %7496 = vmatpush.bf16.msra.mxu0 0
    %7497 = vmatpush.bf16.msra.mxu0 0
    %7498 = vmatpush.bf16.msra.mxu0 %v7435
    %7499 = vmatpush.bf16.msra.mxu0 %v7431
    %7500 = vmatpush.bf16.msra.mxu0 %v7427
    %7501 = vmatpush.bf16.msra.mxu0 %v7423
    %7502 = vmatmul.bf16.gmra.mxu0 %v7453
    %v7503 = vpop.f32.mrf.mxu0
    %v7504 = vadd.f32 0.0, %v7503
    %v7505 = vpop.f32.mrf.mxu0
    %7506 = vdwg.mxu0
    %v7507 = vadd.f32 %v7351, %v7465
    %v7508 = vadd.f32 %v7352, %v7478
    %v7509 = vadd.f32 %v7353, %v7491
    %v7510 = vadd.f32 %v7354, %v7504
    %v7511 = vld [vmem:[%s3 + $0x1580] sm:$0xff]
    %v7512 = vld [vmem:[%s3 + $0x1588] sm:$0xff]
    %v7513 = vld [vmem:[%s3 + $0x1590] sm:$0xff]
    %v7514 = vld [vmem:[%s3 + $0x1598] sm:$0xff]
    %v7515 = vld [vmem:[%s3 + $0x15a0] sm:$0xff]
    %v7516 = vld [vmem:[%s3 + $0x15a8] sm:$0xff]
    %v7517 = vld [vmem:[%s3 + $0x15b0] sm:$0xff]
    %v7518 = vld [vmem:[%s3 + $0x15b8] sm:$0xff]
    %v7519 = vld [vmem:[%s3 + $0x15c0] sm:$0xff]
    %v7520 = vld [vmem:[%s3 + $0x15c8] sm:$0xff]
    %v7521 = vld [vmem:[%s3 + $0x15d0] sm:$0xff]
    %v7522 = vld [vmem:[%s3 + $0x15d8] sm:$0xff]
    %v7523 = vld [vmem:[%s3 + $0x15e0] sm:$0xff]
    %v7524 = vld [vmem:[%s3 + $0x15e8] sm:$0xff]
    %v7525 = vld [vmem:[%s3 + $0x15f0] sm:$0xff]
    %v7526 = vld [vmem:[%s3 + $0x15f8] sm:$0xff]
    %v7527 = vrot.slane %v7214, 3
    %v7544 = vunpack.c.l.b16 %v7511
    %v7545 = vunpack.c.h.b16 %v7511
    %v7546 = vunpack.c.l.b16 %v7512
    %v7547 = vunpack.c.h.b16 %v7512
    %v7548 = vunpack.c.l.b16 %v7513
    %v7549 = vunpack.c.h.b16 %v7513
    %v7550 = vunpack.c.l.b16 %v7514
    %v7551 = vunpack.c.h.b16 %v7514
    %v7552 = vunpack.c.l.b16 %v7515
    %v7553 = vunpack.c.h.b16 %v7515
    %v7554 = vunpack.c.l.b16 %v7516
    %v7555 = vunpack.c.h.b16 %v7516
    %v7556 = vunpack.c.l.b16 %v7517
    %v7557 = vunpack.c.h.b16 %v7517
    %v7558 = vunpack.c.l.b16 %v7518
    %v7559 = vunpack.c.h.b16 %v7518
    %v7560 = vunpack.c.l.b16 %v7519
    %v7561 = vunpack.c.h.b16 %v7519
    %v7562 = vunpack.c.l.b16 %v7520
    %v7563 = vunpack.c.h.b16 %v7520
    %v7564 = vunpack.c.l.b16 %v7521
    %v7565 = vunpack.c.h.b16 %v7521
    %v7566 = vunpack.c.l.b16 %v7522
    %v7567 = vunpack.c.h.b16 %v7522
    %v7568 = vunpack.c.l.b16 %v7523
    %v7569 = vunpack.c.h.b16 %v7523
    %v7570 = vunpack.c.l.b16 %v7524
    %v7571 = vunpack.c.h.b16 %v7524
    %v7572 = vunpack.c.l.b16 %v7525
    %v7573 = vunpack.c.h.b16 %v7525
    %v7574 = vunpack.c.l.b16 %v7526
    %v7575 = vunpack.c.h.b16 %v7526
    %v7576 = vpack.c.b16 %v7548, %v7544
    %v7577 = vpack.c.b16 %v7549, %v7545
    %v7578 = vpack.c.b16 %v7550, %v7546
    %v7579 = vpack.c.b16 %v7551, %v7547
    %v7580 = vpack.c.b16 %v7556, %v7552
    %v7581 = vpack.c.b16 %v7557, %v7553
    %v7582 = vpack.c.b16 %v7558, %v7554
    %v7583 = vpack.c.b16 %v7559, %v7555
    %v7584 = vpack.c.b16 %v7564, %v7560
    %v7585 = vpack.c.b16 %v7565, %v7561
    %v7586 = vpack.c.b16 %v7566, %v7562
    %v7587 = vpack.c.b16 %v7567, %v7563
    %v7588 = vpack.c.b16 %v7572, %v7568
    %v7589 = vpack.c.b16 %v7573, %v7569
    %v7590 = vpack.c.b16 %v7574, %v7570
    %v7591 = vpack.c.b16 %v7575, %v7571
    %v7609 = vsel %vm526, %v7527, 0
    %7611 = vmatpush.bf16.msra.mxu0 0
    %7612 = vmatpush.bf16.msra.mxu0 0
    %7613 = vmatpush.bf16.msra.mxu0 0
    %7614 = vmatpush.bf16.msra.mxu0 0
    %7615 = vmatpush.bf16.msra.mxu0 %v7588
    %7616 = vmatpush.bf16.msra.mxu0 %v7584
    %7617 = vmatpush.bf16.msra.mxu0 %v7580
    %7618 = vmatpush.bf16.msra.mxu0 %v7576
    %7619 = vmatmul.bf16.gmra.mxu0 %v7609
    %v7620 = vpop.f32.mrf.mxu0
    %v7621 = vadd.f32 0.0, %v7620
    %v7622 = vpop.f32.mrf.mxu0
    %7623 = vdwg.mxu0
    %7624 = vmatpush.bf16.msra.mxu0 0
    %7625 = vmatpush.bf16.msra.mxu0 0
    %7626 = vmatpush.bf16.msra.mxu0 0
    %7627 = vmatpush.bf16.msra.mxu0 0
    %7628 = vmatpush.bf16.msra.mxu0 %v7589
    %7629 = vmatpush.bf16.msra.mxu0 %v7585
    %7630 = vmatpush.bf16.msra.mxu0 %v7581
    %7631 = vmatpush.bf16.msra.mxu0 %v7577
    %7632 = vmatmul.bf16.gmra.mxu0 %v7609
    %v7633 = vpop.f32.mrf.mxu0
    %v7634 = vadd.f32 0.0, %v7633
    %v7635 = vpop.f32.mrf.mxu0
    %7636 = vdwg.mxu0
    %7637 = vmatpush.bf16.msra.mxu0 0
    %7638 = vmatpush.bf16.msra.mxu0 0
    %7639 = vmatpush.bf16.msra.mxu0 0
    %7640 = vmatpush.bf16.msra.mxu0 0
    %7641 = vmatpush.bf16.msra.mxu0 %v7590
    %7642 = vmatpush.bf16.msra.mxu0 %v7586
    %7643 = vmatpush.bf16.msra.mxu0 %v7582
    %7644 = vmatpush.bf16.msra.mxu0 %v7578
    %7645 = vmatmul.bf16.gmra.mxu0 %v7609
    %v7646 = vpop.f32.mrf.mxu0
    %v7647 = vadd.f32 0.0, %v7646
    %v7648 = vpop.f32.mrf.mxu0
    %7649 = vdwg.mxu0
    %7650 = vmatpush.bf16.msra.mxu0 0
    %7651 = vmatpush.bf16.msra.mxu0 0
    %7652 = vmatpush.bf16.msra.mxu0 0
    %7653 = vmatpush.bf16.msra.mxu0 0
    %7654 = vmatpush.bf16.msra.mxu0 %v7591
    %7655 = vmatpush.bf16.msra.mxu0 %v7587
    %7656 = vmatpush.bf16.msra.mxu0 %v7583
    %7657 = vmatpush.bf16.msra.mxu0 %v7579
    %7658 = vmatmul.bf16.gmra.mxu0 %v7609
    %v7659 = vpop.f32.mrf.mxu0
    %v7660 = vadd.f32 0.0, %v7659
    %v7661 = vpop.f32.mrf.mxu0
    %7662 = vdwg.mxu0
    %v7663 = vadd.f32 %v7507, %v7621
    %v7664 = vadd.f32 %v7508, %v7634
    %v7665 = vadd.f32 %v7509, %v7647
    %v7666 = vadd.f32 %v7510, %v7660
    %v7667 = vld [vmem:[%s3 + $0x1600] sm:$0xff]
    %v7668 = vld [vmem:[%s3 + $0x1608] sm:$0xff]
    %v7669 = vld [vmem:[%s3 + $0x1610] sm:$0xff]
    %v7670 = vld [vmem:[%s3 + $0x1618] sm:$0xff]
    %v7671 = vld [vmem:[%s3 + $0x1620] sm:$0xff]
    %v7672 = vld [vmem:[%s3 + $0x1628] sm:$0xff]
    %v7673 = vld [vmem:[%s3 + $0x1630] sm:$0xff]
    %v7674 = vld [vmem:[%s3 + $0x1638] sm:$0xff]
    %v7675 = vld [vmem:[%s3 + $0x1640] sm:$0xff]
    %v7676 = vld [vmem:[%s3 + $0x1648] sm:$0xff]
    %v7677 = vld [vmem:[%s3 + $0x1650] sm:$0xff]
    %v7678 = vld [vmem:[%s3 + $0x1658] sm:$0xff]
    %v7679 = vld [vmem:[%s3 + $0x1660] sm:$0xff]
    %v7680 = vld [vmem:[%s3 + $0x1668] sm:$0xff]
    %v7681 = vld [vmem:[%s3 + $0x1670] sm:$0xff]
    %v7682 = vld [vmem:[%s3 + $0x1678] sm:$0xff]
    %v7699 = vunpack.c.l.b16 %v7667
    %v7700 = vunpack.c.h.b16 %v7667
    %v7701 = vunpack.c.l.b16 %v7668
    %v7702 = vunpack.c.h.b16 %v7668
    %v7703 = vunpack.c.l.b16 %v7669
    %v7704 = vunpack.c.h.b16 %v7669
    %v7705 = vunpack.c.l.b16 %v7670
    %v7706 = vunpack.c.h.b16 %v7670
    %v7707 = vunpack.c.l.b16 %v7671
    %v7708 = vunpack.c.h.b16 %v7671
    %v7709 = vunpack.c.l.b16 %v7672
    %v7710 = vunpack.c.h.b16 %v7672
    %v7711 = vunpack.c.l.b16 %v7673
    %v7712 = vunpack.c.h.b16 %v7673
    %v7713 = vunpack.c.l.b16 %v7674
    %v7714 = vunpack.c.h.b16 %v7674
    %v7715 = vunpack.c.l.b16 %v7675
    %v7716 = vunpack.c.h.b16 %v7675
    %v7717 = vunpack.c.l.b16 %v7676
    %v7718 = vunpack.c.h.b16 %v7676
    %v7719 = vunpack.c.l.b16 %v7677
    %v7720 = vunpack.c.h.b16 %v7677
    %v7721 = vunpack.c.l.b16 %v7678
    %v7722 = vunpack.c.h.b16 %v7678
    %v7723 = vunpack.c.l.b16 %v7679
    %v7724 = vunpack.c.h.b16 %v7679
    %v7725 = vunpack.c.l.b16 %v7680
    %v7726 = vunpack.c.h.b16 %v7680
    %v7727 = vunpack.c.l.b16 %v7681
    %v7728 = vunpack.c.h.b16 %v7681
    %v7729 = vunpack.c.l.b16 %v7682
    %v7730 = vunpack.c.h.b16 %v7682
    %v7731 = vpack.c.b16 %v7703, %v7699
    %v7732 = vpack.c.b16 %v7704, %v7700
    %v7733 = vpack.c.b16 %v7705, %v7701
    %v7734 = vpack.c.b16 %v7706, %v7702
    %v7735 = vpack.c.b16 %v7711, %v7707
    %v7736 = vpack.c.b16 %v7712, %v7708
    %v7737 = vpack.c.b16 %v7713, %v7709
    %v7738 = vpack.c.b16 %v7714, %v7710
    %v7739 = vpack.c.b16 %v7719, %v7715
    %v7740 = vpack.c.b16 %v7720, %v7716
    %v7741 = vpack.c.b16 %v7721, %v7717
    %v7742 = vpack.c.b16 %v7722, %v7718
    %v7743 = vpack.c.b16 %v7727, %v7723
    %v7744 = vpack.c.b16 %v7728, %v7724
    %v7745 = vpack.c.b16 %v7729, %v7725
    %v7746 = vpack.c.b16 %v7730, %v7726
    %v7764 = vsel %vm526, %v787, 0
    %7766 = vmatpush.bf16.msra.mxu0 0
    %7767 = vmatpush.bf16.msra.mxu0 0
    %7768 = vmatpush.bf16.msra.mxu0 0
    %7769 = vmatpush.bf16.msra.mxu0 0
    %7770 = vmatpush.bf16.msra.mxu0 %v7743
    %7771 = vmatpush.bf16.msra.mxu0 %v7739
    %7772 = vmatpush.bf16.msra.mxu0 %v7735
    %7773 = vmatpush.bf16.msra.mxu0 %v7731
    %7774 = vmatmul.bf16.gmra.mxu0 %v7764
    %v7775 = vpop.f32.mrf.mxu0
    %v7776 = vadd.f32 0.0, %v7775
    %v7777 = vpop.f32.mrf.mxu0
    %7778 = vdwg.mxu0
    %7779 = vmatpush.bf16.msra.mxu0 0
    %7780 = vmatpush.bf16.msra.mxu0 0
    %7781 = vmatpush.bf16.msra.mxu0 0
    %7782 = vmatpush.bf16.msra.mxu0 0
    %7783 = vmatpush.bf16.msra.mxu0 %v7744
    %7784 = vmatpush.bf16.msra.mxu0 %v7740
    %7785 = vmatpush.bf16.msra.mxu0 %v7736
    %7786 = vmatpush.bf16.msra.mxu0 %v7732
    %7787 = vmatmul.bf16.gmra.mxu0 %v7764
    %v7788 = vpop.f32.mrf.mxu0
    %v7789 = vadd.f32 0.0, %v7788
    %v7790 = vpop.f32.mrf.mxu0
    %7791 = vdwg.mxu0
    %7792 = vmatpush.bf16.msra.mxu0 0
    %7793 = vmatpush.bf16.msra.mxu0 0
    %7794 = vmatpush.bf16.msra.mxu0 0
    %7795 = vmatpush.bf16.msra.mxu0 0
    %7796 = vmatpush.bf16.msra.mxu0 %v7745
    %7797 = vmatpush.bf16.msra.mxu0 %v7741
    %7798 = vmatpush.bf16.msra.mxu0 %v7737
    %7799 = vmatpush.bf16.msra.mxu0 %v7733
    %7800 = vmatmul.bf16.gmra.mxu0 %v7764
    %v7801 = vpop.f32.mrf.mxu0
    %v7802 = vadd.f32 0.0, %v7801
    %v7803 = vpop.f32.mrf.mxu0
    %7804 = vdwg.mxu0
    %7805 = vmatpush.bf16.msra.mxu0 0
    %7806 = vmatpush.bf16.msra.mxu0 0
    %7807 = vmatpush.bf16.msra.mxu0 0
    %7808 = vmatpush.bf16.msra.mxu0 0
    %7809 = vmatpush.bf16.msra.mxu0 %v7746
    %7810 = vmatpush.bf16.msra.mxu0 %v7742
    %7811 = vmatpush.bf16.msra.mxu0 %v7738
    %7812 = vmatpush.bf16.msra.mxu0 %v7734
    %7813 = vmatmul.bf16.gmra.mxu0 %v7764
    %v7814 = vpop.f32.mrf.mxu0
    %v7815 = vadd.f32 0.0, %v7814
    %v7816 = vpop.f32.mrf.mxu0
    %7817 = vdwg.mxu0
    %v7818 = vadd.f32 %v7663, %v7776
    %v7819 = vadd.f32 %v7664, %v7789
    %v7820 = vadd.f32 %v7665, %v7802
    %v7821 = vadd.f32 %v7666, %v7815
    %v7822 = vld [vmem:[%s3 + $0x1680] sm:$0xff]
    %v7823 = vld [vmem:[%s3 + $0x1688] sm:$0xff]
    %v7824 = vld [vmem:[%s3 + $0x1690] sm:$0xff]
    %v7825 = vld [vmem:[%s3 + $0x1698] sm:$0xff]
    %v7826 = vld [vmem:[%s3 + $0x16a0] sm:$0xff]
    %v7827 = vld [vmem:[%s3 + $0x16a8] sm:$0xff]
    %v7828 = vld [vmem:[%s3 + $0x16b0] sm:$0xff]
    %v7829 = vld [vmem:[%s3 + $0x16b8] sm:$0xff]
    %v7830 = vld [vmem:[%s3 + $0x16c0] sm:$0xff]
    %v7831 = vld [vmem:[%s3 + $0x16c8] sm:$0xff]
    %v7832 = vld [vmem:[%s3 + $0x16d0] sm:$0xff]
    %v7833 = vld [vmem:[%s3 + $0x16d8] sm:$0xff]
    %v7834 = vld [vmem:[%s3 + $0x16e0] sm:$0xff]
    %v7835 = vld [vmem:[%s3 + $0x16e8] sm:$0xff]
    %v7836 = vld [vmem:[%s3 + $0x16f0] sm:$0xff]
    %v7837 = vld [vmem:[%s3 + $0x16f8] sm:$0xff]
    %v7839 = vunpack.c.l.b16 %v787
    %v7840 = vpack.c.b16 %v7839, %v7839
    %v7841 = vrot.slane %v7840, 1
    %v7858 = vunpack.c.l.b16 %v7822
    %v7859 = vunpack.c.h.b16 %v7822
    %v7860 = vunpack.c.l.b16 %v7823
    %v7861 = vunpack.c.h.b16 %v7823
    %v7862 = vunpack.c.l.b16 %v7824
    %v7863 = vunpack.c.h.b16 %v7824
    %v7864 = vunpack.c.l.b16 %v7825
    %v7865 = vunpack.c.h.b16 %v7825
    %v7866 = vunpack.c.l.b16 %v7826
    %v7867 = vunpack.c.h.b16 %v7826
    %v7868 = vunpack.c.l.b16 %v7827
    %v7869 = vunpack.c.h.b16 %v7827
    %v7870 = vunpack.c.l.b16 %v7828
    %v7871 = vunpack.c.h.b16 %v7828
    %v7872 = vunpack.c.l.b16 %v7829
    %v7873 = vunpack.c.h.b16 %v7829
    %v7874 = vunpack.c.l.b16 %v7830
    %v7875 = vunpack.c.h.b16 %v7830
    %v7876 = vunpack.c.l.b16 %v7831
    %v7877 = vunpack.c.h.b16 %v7831
    %v7878 = vunpack.c.l.b16 %v7832
    %v7879 = vunpack.c.h.b16 %v7832
    %v7880 = vunpack.c.l.b16 %v7833
    %v7881 = vunpack.c.h.b16 %v7833
    %v7882 = vunpack.c.l.b16 %v7834
    %v7883 = vunpack.c.h.b16 %v7834
    %v7884 = vunpack.c.l.b16 %v7835
    %v7885 = vunpack.c.h.b16 %v7835
    %v7886 = vunpack.c.l.b16 %v7836
    %v7887 = vunpack.c.h.b16 %v7836
    %v7888 = vunpack.c.l.b16 %v7837
    %v7889 = vunpack.c.h.b16 %v7837
    %v7890 = vpack.c.b16 %v7862, %v7858
    %v7891 = vpack.c.b16 %v7863, %v7859
    %v7892 = vpack.c.b16 %v7864, %v7860
    %v7893 = vpack.c.b16 %v7865, %v7861
    %v7894 = vpack.c.b16 %v7870, %v7866
    %v7895 = vpack.c.b16 %v7871, %v7867
    %v7896 = vpack.c.b16 %v7872, %v7868
    %v7897 = vpack.c.b16 %v7873, %v7869
    %v7898 = vpack.c.b16 %v7878, %v7874
    %v7899 = vpack.c.b16 %v7879, %v7875
    %v7900 = vpack.c.b16 %v7880, %v7876
    %v7901 = vpack.c.b16 %v7881, %v7877
    %v7902 = vpack.c.b16 %v7886, %v7882
    %v7903 = vpack.c.b16 %v7887, %v7883
    %v7904 = vpack.c.b16 %v7888, %v7884
    %v7905 = vpack.c.b16 %v7889, %v7885
    %v7923 = vsel %vm526, %v7841, 0
    %7925 = vmatpush.bf16.msra.mxu0 0
    %7926 = vmatpush.bf16.msra.mxu0 0
    %7927 = vmatpush.bf16.msra.mxu0 0
    %7928 = vmatpush.bf16.msra.mxu0 0
    %7929 = vmatpush.bf16.msra.mxu0 %v7902
    %7930 = vmatpush.bf16.msra.mxu0 %v7898
    %7931 = vmatpush.bf16.msra.mxu0 %v7894
    %7932 = vmatpush.bf16.msra.mxu0 %v7890
    %7933 = vmatmul.bf16.gmra.mxu0 %v7923
    %v7934 = vpop.f32.mrf.mxu0
    %v7935 = vadd.f32 0.0, %v7934
    %v7936 = vpop.f32.mrf.mxu0
    %7937 = vdwg.mxu0
    %7938 = vmatpush.bf16.msra.mxu0 0
    %7939 = vmatpush.bf16.msra.mxu0 0
    %7940 = vmatpush.bf16.msra.mxu0 0
    %7941 = vmatpush.bf16.msra.mxu0 0
    %7942 = vmatpush.bf16.msra.mxu0 %v7903
    %7943 = vmatpush.bf16.msra.mxu0 %v7899
    %7944 = vmatpush.bf16.msra.mxu0 %v7895
    %7945 = vmatpush.bf16.msra.mxu0 %v7891
    %7946 = vmatmul.bf16.gmra.mxu0 %v7923
    %v7947 = vpop.f32.mrf.mxu0
    %v7948 = vadd.f32 0.0, %v7947
    %v7949 = vpop.f32.mrf.mxu0
    %7950 = vdwg.mxu0
    %7951 = vmatpush.bf16.msra.mxu0 0
    %7952 = vmatpush.bf16.msra.mxu0 0
    %7953 = vmatpush.bf16.msra.mxu0 0
    %7954 = vmatpush.bf16.msra.mxu0 0
    %7955 = vmatpush.bf16.msra.mxu0 %v7904
    %7956 = vmatpush.bf16.msra.mxu0 %v7900
    %7957 = vmatpush.bf16.msra.mxu0 %v7896
    %7958 = vmatpush.bf16.msra.mxu0 %v7892
    %7959 = vmatmul.bf16.gmra.mxu0 %v7923
    %v7960 = vpop.f32.mrf.mxu0
    %v7961 = vadd.f32 0.0, %v7960
    %v7962 = vpop.f32.mrf.mxu0
    %7963 = vdwg.mxu0
    %7964 = vmatpush.bf16.msra.mxu0 0
    %7965 = vmatpush.bf16.msra.mxu0 0
    %7966 = vmatpush.bf16.msra.mxu0 0
    %7967 = vmatpush.bf16.msra.mxu0 0
    %7968 = vmatpush.bf16.msra.mxu0 %v7905
    %7969 = vmatpush.bf16.msra.mxu0 %v7901
    %7970 = vmatpush.bf16.msra.mxu0 %v7897
    %7971 = vmatpush.bf16.msra.mxu0 %v7893
    %7972 = vmatmul.bf16.gmra.mxu0 %v7923
    %v7973 = vpop.f32.mrf.mxu0
    %v7974 = vadd.f32 0.0, %v7973
    %v7975 = vpop.f32.mrf.mxu0
    %7976 = vdwg.mxu0
    %v7977 = vadd.f32 %v7818, %v7935
    %v7978 = vadd.f32 %v7819, %v7948
    %v7979 = vadd.f32 %v7820, %v7961
    %v7980 = vadd.f32 %v7821, %v7974
    %v7981 = vld [vmem:[%s3 + $0x1700] sm:$0xff]
    %v7982 = vld [vmem:[%s3 + $0x1708] sm:$0xff]
    %v7983 = vld [vmem:[%s3 + $0x1710] sm:$0xff]
    %v7984 = vld [vmem:[%s3 + $0x1718] sm:$0xff]
    %v7985 = vld [vmem:[%s3 + $0x1720] sm:$0xff]
    %v7986 = vld [vmem:[%s3 + $0x1728] sm:$0xff]
    %v7987 = vld [vmem:[%s3 + $0x1730] sm:$0xff]
    %v7988 = vld [vmem:[%s3 + $0x1738] sm:$0xff]
    %v7989 = vld [vmem:[%s3 + $0x1740] sm:$0xff]
    %v7990 = vld [vmem:[%s3 + $0x1748] sm:$0xff]
    %v7991 = vld [vmem:[%s3 + $0x1750] sm:$0xff]
    %v7992 = vld [vmem:[%s3 + $0x1758] sm:$0xff]
    %v7993 = vld [vmem:[%s3 + $0x1760] sm:$0xff]
    %v7994 = vld [vmem:[%s3 + $0x1768] sm:$0xff]
    %v7995 = vld [vmem:[%s3 + $0x1770] sm:$0xff]
    %v7996 = vld [vmem:[%s3 + $0x1778] sm:$0xff]
    %v7997 = vrot.slane %v7840, 2
    %v8014 = vunpack.c.l.b16 %v7981
    %v8015 = vunpack.c.h.b16 %v7981
    %v8016 = vunpack.c.l.b16 %v7982
    %v8017 = vunpack.c.h.b16 %v7982
    %v8018 = vunpack.c.l.b16 %v7983
    %v8019 = vunpack.c.h.b16 %v7983
    %v8020 = vunpack.c.l.b16 %v7984
    %v8021 = vunpack.c.h.b16 %v7984
    %v8022 = vunpack.c.l.b16 %v7985
    %v8023 = vunpack.c.h.b16 %v7985
    %v8024 = vunpack.c.l.b16 %v7986
    %v8025 = vunpack.c.h.b16 %v7986
    %v8026 = vunpack.c.l.b16 %v7987
    %v8027 = vunpack.c.h.b16 %v7987
    %v8028 = vunpack.c.l.b16 %v7988
    %v8029 = vunpack.c.h.b16 %v7988
    %v8030 = vunpack.c.l.b16 %v7989
    %v8031 = vunpack.c.h.b16 %v7989
    %v8032 = vunpack.c.l.b16 %v7990
    %v8033 = vunpack.c.h.b16 %v7990
    %v8034 = vunpack.c.l.b16 %v7991
    %v8035 = vunpack.c.h.b16 %v7991
    %v8036 = vunpack.c.l.b16 %v7992
    %v8037 = vunpack.c.h.b16 %v7992
    %v8038 = vunpack.c.l.b16 %v7993
    %v8039 = vunpack.c.h.b16 %v7993
    %v8040 = vunpack.c.l.b16 %v7994
    %v8041 = vunpack.c.h.b16 %v7994
    %v8042 = vunpack.c.l.b16 %v7995
    %v8043 = vunpack.c.h.b16 %v7995
    %v8044 = vunpack.c.l.b16 %v7996
    %v8045 = vunpack.c.h.b16 %v7996
    %v8046 = vpack.c.b16 %v8018, %v8014
    %v8047 = vpack.c.b16 %v8019, %v8015
    %v8048 = vpack.c.b16 %v8020, %v8016
    %v8049 = vpack.c.b16 %v8021, %v8017
    %v8050 = vpack.c.b16 %v8026, %v8022
    %v8051 = vpack.c.b16 %v8027, %v8023
    %v8052 = vpack.c.b16 %v8028, %v8024
    %v8053 = vpack.c.b16 %v8029, %v8025
    %v8054 = vpack.c.b16 %v8034, %v8030
    %v8055 = vpack.c.b16 %v8035, %v8031
    %v8056 = vpack.c.b16 %v8036, %v8032
    %v8057 = vpack.c.b16 %v8037, %v8033
    %v8058 = vpack.c.b16 %v8042, %v8038
    %v8059 = vpack.c.b16 %v8043, %v8039
    %v8060 = vpack.c.b16 %v8044, %v8040
    %v8061 = vpack.c.b16 %v8045, %v8041
    %v8079 = vsel %vm526, %v7997, 0
    %8081 = vmatpush.bf16.msra.mxu0 0
    %8082 = vmatpush.bf16.msra.mxu0 0
    %8083 = vmatpush.bf16.msra.mxu0 0
    %8084 = vmatpush.bf16.msra.mxu0 0
    %8085 = vmatpush.bf16.msra.mxu0 %v8058
    %8086 = vmatpush.bf16.msra.mxu0 %v8054
    %8087 = vmatpush.bf16.msra.mxu0 %v8050
    %8088 = vmatpush.bf16.msra.mxu0 %v8046
    %8089 = vmatmul.bf16.gmra.mxu0 %v8079
    %v8090 = vpop.f32.mrf.mxu0
    %v8091 = vadd.f32 0.0, %v8090
    %v8092 = vpop.f32.mrf.mxu0
    %8093 = vdwg.mxu0
    %8094 = vmatpush.bf16.msra.mxu0 0
    %8095 = vmatpush.bf16.msra.mxu0 0
    %8096 = vmatpush.bf16.msra.mxu0 0
    %8097 = vmatpush.bf16.msra.mxu0 0
    %8098 = vmatpush.bf16.msra.mxu0 %v8059
    %8099 = vmatpush.bf16.msra.mxu0 %v8055
    %8100 = vmatpush.bf16.msra.mxu0 %v8051
    %8101 = vmatpush.bf16.msra.mxu0 %v8047
    %8102 = vmatmul.bf16.gmra.mxu0 %v8079
    %v8103 = vpop.f32.mrf.mxu0
    %v8104 = vadd.f32 0.0, %v8103
    %v8105 = vpop.f32.mrf.mxu0
    %8106 = vdwg.mxu0
    %8107 = vmatpush.bf16.msra.mxu0 0
    %8108 = vmatpush.bf16.msra.mxu0 0
    %8109 = vmatpush.bf16.msra.mxu0 0
    %8110 = vmatpush.bf16.msra.mxu0 0
    %8111 = vmatpush.bf16.msra.mxu0 %v8060
    %8112 = vmatpush.bf16.msra.mxu0 %v8056
    %8113 = vmatpush.bf16.msra.mxu0 %v8052
    %8114 = vmatpush.bf16.msra.mxu0 %v8048
    %8115 = vmatmul.bf16.gmra.mxu0 %v8079
    %v8116 = vpop.f32.mrf.mxu0
    %v8117 = vadd.f32 0.0, %v8116
    %v8118 = vpop.f32.mrf.mxu0
    %8119 = vdwg.mxu0
    %8120 = vmatpush.bf16.msra.mxu0 0
    %8121 = vmatpush.bf16.msra.mxu0 0
    %8122 = vmatpush.bf16.msra.mxu0 0
    %8123 = vmatpush.bf16.msra.mxu0 0
    %8124 = vmatpush.bf16.msra.mxu0 %v8061
    %8125 = vmatpush.bf16.msra.mxu0 %v8057
    %8126 = vmatpush.bf16.msra.mxu0 %v8053
    %8127 = vmatpush.bf16.msra.mxu0 %v8049
    %8128 = vmatmul.bf16.gmra.mxu0 %v8079
    %v8129 = vpop.f32.mrf.mxu0
    %v8130 = vadd.f32 0.0, %v8129
    %v8131 = vpop.f32.mrf.mxu0
    %8132 = vdwg.mxu0
    %v8133 = vadd.f32 %v7977, %v8091
    %v8134 = vadd.f32 %v7978, %v8104
    %v8135 = vadd.f32 %v7979, %v8117
    %v8136 = vadd.f32 %v7980, %v8130
    %v8137 = vld [vmem:[%s3 + $0x1780] sm:$0xff]
    %v8138 = vld [vmem:[%s3 + $0x1788] sm:$0xff]
    %v8139 = vld [vmem:[%s3 + $0x1790] sm:$0xff]
    %v8140 = vld [vmem:[%s3 + $0x1798] sm:$0xff]
    %v8141 = vld [vmem:[%s3 + $0x17a0] sm:$0xff]
    %v8142 = vld [vmem:[%s3 + $0x17a8] sm:$0xff]
    %v8143 = vld [vmem:[%s3 + $0x17b0] sm:$0xff]
    %v8144 = vld [vmem:[%s3 + $0x17b8] sm:$0xff]
    %v8145 = vld [vmem:[%s3 + $0x17c0] sm:$0xff]
    %v8146 = vld [vmem:[%s3 + $0x17c8] sm:$0xff]
    %v8147 = vld [vmem:[%s3 + $0x17d0] sm:$0xff]
    %v8148 = vld [vmem:[%s3 + $0x17d8] sm:$0xff]
    %v8149 = vld [vmem:[%s3 + $0x17e0] sm:$0xff]
    %v8150 = vld [vmem:[%s3 + $0x17e8] sm:$0xff]
    %v8151 = vld [vmem:[%s3 + $0x17f0] sm:$0xff]
    %v8152 = vld [vmem:[%s3 + $0x17f8] sm:$0xff]
    %v8153 = vrot.slane %v7840, 3
    %v8170 = vunpack.c.l.b16 %v8137
    %v8171 = vunpack.c.h.b16 %v8137
    %v8172 = vunpack.c.l.b16 %v8138
    %v8173 = vunpack.c.h.b16 %v8138
    %v8174 = vunpack.c.l.b16 %v8139
    %v8175 = vunpack.c.h.b16 %v8139
    %v8176 = vunpack.c.l.b16 %v8140
    %v8177 = vunpack.c.h.b16 %v8140
    %v8178 = vunpack.c.l.b16 %v8141
    %v8179 = vunpack.c.h.b16 %v8141
    %v8180 = vunpack.c.l.b16 %v8142
    %v8181 = vunpack.c.h.b16 %v8142
    %v8182 = vunpack.c.l.b16 %v8143
    %v8183 = vunpack.c.h.b16 %v8143
    %v8184 = vunpack.c.l.b16 %v8144
    %v8185 = vunpack.c.h.b16 %v8144
    %v8186 = vunpack.c.l.b16 %v8145
    %v8187 = vunpack.c.h.b16 %v8145
    %v8188 = vunpack.c.l.b16 %v8146
    %v8189 = vunpack.c.h.b16 %v8146
    %v8190 = vunpack.c.l.b16 %v8147
    %v8191 = vunpack.c.h.b16 %v8147
    %v8192 = vunpack.c.l.b16 %v8148
    %v8193 = vunpack.c.h.b16 %v8148
    %v8194 = vunpack.c.l.b16 %v8149
    %v8195 = vunpack.c.h.b16 %v8149
    %v8196 = vunpack.c.l.b16 %v8150
    %v8197 = vunpack.c.h.b16 %v8150
    %v8198 = vunpack.c.l.b16 %v8151
    %v8199 = vunpack.c.h.b16 %v8151
    %v8200 = vunpack.c.l.b16 %v8152
    %v8201 = vunpack.c.h.b16 %v8152
    %v8202 = vpack.c.b16 %v8174, %v8170
    %v8203 = vpack.c.b16 %v8175, %v8171
    %v8204 = vpack.c.b16 %v8176, %v8172
    %v8205 = vpack.c.b16 %v8177, %v8173
    %v8206 = vpack.c.b16 %v8182, %v8178
    %v8207 = vpack.c.b16 %v8183, %v8179
    %v8208 = vpack.c.b16 %v8184, %v8180
    %v8209 = vpack.c.b16 %v8185, %v8181
    %v8210 = vpack.c.b16 %v8190, %v8186
    %v8211 = vpack.c.b16 %v8191, %v8187
    %v8212 = vpack.c.b16 %v8192, %v8188
    %v8213 = vpack.c.b16 %v8193, %v8189
    %v8214 = vpack.c.b16 %v8198, %v8194
    %v8215 = vpack.c.b16 %v8199, %v8195
    %v8216 = vpack.c.b16 %v8200, %v8196
    %v8217 = vpack.c.b16 %v8201, %v8197
    %v8235 = vsel %vm526, %v8153, 0
    %8237 = vmatpush.bf16.msra.mxu0 0
    %8238 = vmatpush.bf16.msra.mxu0 0
    %8239 = vmatpush.bf16.msra.mxu0 0
    %8240 = vmatpush.bf16.msra.mxu0 0
    %8241 = vmatpush.bf16.msra.mxu0 %v8214
    %8242 = vmatpush.bf16.msra.mxu0 %v8210
    %8243 = vmatpush.bf16.msra.mxu0 %v8206
    %8244 = vmatpush.bf16.msra.mxu0 %v8202
    %8245 = vmatmul.bf16.gmra.mxu0 %v8235
    %v8246 = vpop.f32.mrf.mxu0
    %v8247 = vadd.f32 0.0, %v8246
    %v8248 = vpop.f32.mrf.mxu0
    %8249 = vdwg.mxu0
    %8250 = vmatpush.bf16.msra.mxu0 0
    %8251 = vmatpush.bf16.msra.mxu0 0
    %8252 = vmatpush.bf16.msra.mxu0 0
    %8253 = vmatpush.bf16.msra.mxu0 0
    %8254 = vmatpush.bf16.msra.mxu0 %v8215
    %8255 = vmatpush.bf16.msra.mxu0 %v8211
    %8256 = vmatpush.bf16.msra.mxu0 %v8207
    %8257 = vmatpush.bf16.msra.mxu0 %v8203
    %8258 = vmatmul.bf16.gmra.mxu0 %v8235
    %v8259 = vpop.f32.mrf.mxu0
    %v8260 = vadd.f32 0.0, %v8259
    %v8261 = vpop.f32.mrf.mxu0
    %8262 = vdwg.mxu0
    %8263 = vmatpush.bf16.msra.mxu0 0
    %8264 = vmatpush.bf16.msra.mxu0 0
    %8265 = vmatpush.bf16.msra.mxu0 0
    %8266 = vmatpush.bf16.msra.mxu0 0
    %8267 = vmatpush.bf16.msra.mxu0 %v8216
    %8268 = vmatpush.bf16.msra.mxu0 %v8212
    %8269 = vmatpush.bf16.msra.mxu0 %v8208
    %8270 = vmatpush.bf16.msra.mxu0 %v8204
    %8271 = vmatmul.bf16.gmra.mxu0 %v8235
    %v8272 = vpop.f32.mrf.mxu0
    %v8273 = vadd.f32 0.0, %v8272
    %v8274 = vpop.f32.mrf.mxu0
    %8275 = vdwg.mxu0
    %8276 = vmatpush.bf16.msra.mxu0 0
    %8277 = vmatpush.bf16.msra.mxu0 0
    %8278 = vmatpush.bf16.msra.mxu0 0
    %8279 = vmatpush.bf16.msra.mxu0 0
    %8280 = vmatpush.bf16.msra.mxu0 %v8217
    %8281 = vmatpush.bf16.msra.mxu0 %v8213
    %8282 = vmatpush.bf16.msra.mxu0 %v8209
    %8283 = vmatpush.bf16.msra.mxu0 %v8205
    %8284 = vmatmul.bf16.gmra.mxu0 %v8235
    %v8285 = vpop.f32.mrf.mxu0
    %v8286 = vadd.f32 0.0, %v8285
    %v8287 = vpop.f32.mrf.mxu0
    %8288 = vdwg.mxu0
    %v8289 = vadd.f32 %v8133, %v8247
    %v8290 = vadd.f32 %v8134, %v8260
    %v8291 = vadd.f32 %v8135, %v8273
    %v8292 = vadd.f32 %v8136, %v8286
    %v8293 = vld [vmem:[%s3 + $0x1800] sm:$0xff]
    %v8294 = vld [vmem:[%s3 + $0x1808] sm:$0xff]
    %v8295 = vld [vmem:[%s3 + $0x1810] sm:$0xff]
    %v8296 = vld [vmem:[%s3 + $0x1818] sm:$0xff]
    %v8297 = vld [vmem:[%s3 + $0x1820] sm:$0xff]
    %v8298 = vld [vmem:[%s3 + $0x1828] sm:$0xff]
    %v8299 = vld [vmem:[%s3 + $0x1830] sm:$0xff]
    %v8300 = vld [vmem:[%s3 + $0x1838] sm:$0xff]
    %v8301 = vld [vmem:[%s3 + $0x1840] sm:$0xff]
    %v8302 = vld [vmem:[%s3 + $0x1848] sm:$0xff]
    %v8303 = vld [vmem:[%s3 + $0x1850] sm:$0xff]
    %v8304 = vld [vmem:[%s3 + $0x1858] sm:$0xff]
    %v8305 = vld [vmem:[%s3 + $0x1860] sm:$0xff]
    %v8306 = vld [vmem:[%s3 + $0x1868] sm:$0xff]
    %v8307 = vld [vmem:[%s3 + $0x1870] sm:$0xff]
    %v8308 = vld [vmem:[%s3 + $0x1878] sm:$0xff]
    %v8325 = vunpack.c.l.b16 %v8293
    %v8326 = vunpack.c.h.b16 %v8293
    %v8327 = vunpack.c.l.b16 %v8294
    %v8328 = vunpack.c.h.b16 %v8294
    %v8329 = vunpack.c.l.b16 %v8295
    %v8330 = vunpack.c.h.b16 %v8295
    %v8331 = vunpack.c.l.b16 %v8296
    %v8332 = vunpack.c.h.b16 %v8296
    %v8333 = vunpack.c.l.b16 %v8297
    %v8334 = vunpack.c.h.b16 %v8297
    %v8335 = vunpack.c.l.b16 %v8298
    %v8336 = vunpack.c.h.b16 %v8298
    %v8337 = vunpack.c.l.b16 %v8299
    %v8338 = vunpack.c.h.b16 %v8299
    %v8339 = vunpack.c.l.b16 %v8300
    %v8340 = vunpack.c.h.b16 %v8300
    %v8341 = vunpack.c.l.b16 %v8301
    %v8342 = vunpack.c.h.b16 %v8301
    %v8343 = vunpack.c.l.b16 %v8302
    %v8344 = vunpack.c.h.b16 %v8302
    %v8345 = vunpack.c.l.b16 %v8303
    %v8346 = vunpack.c.h.b16 %v8303
    %v8347 = vunpack.c.l.b16 %v8304
    %v8348 = vunpack.c.h.b16 %v8304
    %v8349 = vunpack.c.l.b16 %v8305
    %v8350 = vunpack.c.h.b16 %v8305
    %v8351 = vunpack.c.l.b16 %v8306
    %v8352 = vunpack.c.h.b16 %v8306
    %v8353 = vunpack.c.l.b16 %v8307
    %v8354 = vunpack.c.h.b16 %v8307
    %v8355 = vunpack.c.l.b16 %v8308
    %v8356 = vunpack.c.h.b16 %v8308
    %v8357 = vpack.c.b16 %v8329, %v8325
    %v8358 = vpack.c.b16 %v8330, %v8326
    %v8359 = vpack.c.b16 %v8331, %v8327
    %v8360 = vpack.c.b16 %v8332, %v8328
    %v8361 = vpack.c.b16 %v8337, %v8333
    %v8362 = vpack.c.b16 %v8338, %v8334
    %v8363 = vpack.c.b16 %v8339, %v8335
    %v8364 = vpack.c.b16 %v8340, %v8336
    %v8365 = vpack.c.b16 %v8345, %v8341
    %v8366 = vpack.c.b16 %v8346, %v8342
    %v8367 = vpack.c.b16 %v8347, %v8343
    %v8368 = vpack.c.b16 %v8348, %v8344
    %v8369 = vpack.c.b16 %v8353, %v8349
    %v8370 = vpack.c.b16 %v8354, %v8350
    %v8371 = vpack.c.b16 %v8355, %v8351
    %v8372 = vpack.c.b16 %v8356, %v8352
    %v8390 = vsel %vm526, %v788, 0
    %8392 = vmatpush.bf16.msra.mxu0 0
    %8393 = vmatpush.bf16.msra.mxu0 0
    %8394 = vmatpush.bf16.msra.mxu0 0
    %8395 = vmatpush.bf16.msra.mxu0 0
    %8396 = vmatpush.bf16.msra.mxu0 %v8369
    %8397 = vmatpush.bf16.msra.mxu0 %v8365
    %8398 = vmatpush.bf16.msra.mxu0 %v8361
    %8399 = vmatpush.bf16.msra.mxu0 %v8357
    %8400 = vmatmul.bf16.gmra.mxu0 %v8390
    %v8401 = vpop.f32.mrf.mxu0
    %v8402 = vadd.f32 0.0, %v8401
    %v8403 = vpop.f32.mrf.mxu0
    %8404 = vdwg.mxu0
    %8405 = vmatpush.bf16.msra.mxu0 0
    %8406 = vmatpush.bf16.msra.mxu0 0
    %8407 = vmatpush.bf16.msra.mxu0 0
    %8408 = vmatpush.bf16.msra.mxu0 0
    %8409 = vmatpush.bf16.msra.mxu0 %v8370
    %8410 = vmatpush.bf16.msra.mxu0 %v8366
    %8411 = vmatpush.bf16.msra.mxu0 %v8362
    %8412 = vmatpush.bf16.msra.mxu0 %v8358
    %8413 = vmatmul.bf16.gmra.mxu0 %v8390
    %v8414 = vpop.f32.mrf.mxu0
    %v8415 = vadd.f32 0.0, %v8414
    %v8416 = vpop.f32.mrf.mxu0
    %8417 = vdwg.mxu0
    %8418 = vmatpush.bf16.msra.mxu0 0
    %8419 = vmatpush.bf16.msra.mxu0 0
    %8420 = vmatpush.bf16.msra.mxu0 0
    %8421 = vmatpush.bf16.msra.mxu0 0
    %8422 = vmatpush.bf16.msra.mxu0 %v8371
    %8423 = vmatpush.bf16.msra.mxu0 %v8367
    %8424 = vmatpush.bf16.msra.mxu0 %v8363
    %8425 = vmatpush.bf16.msra.mxu0 %v8359
    %8426 = vmatmul.bf16.gmra.mxu0 %v8390
    %v8427 = vpop.f32.mrf.mxu0
    %v8428 = vadd.f32 0.0, %v8427
    %v8429 = vpop.f32.mrf.mxu0
    %8430 = vdwg.mxu0
    %8431 = vmatpush.bf16.msra.mxu0 0
    %8432 = vmatpush.bf16.msra.mxu0 0
    %8433 = vmatpush.bf16.msra.mxu0 0
    %8434 = vmatpush.bf16.msra.mxu0 0
    %8435 = vmatpush.bf16.msra.mxu0 %v8372
    %8436 = vmatpush.bf16.msra.mxu0 %v8368
    %8437 = vmatpush.bf16.msra.mxu0 %v8364
    %8438 = vmatpush.bf16.msra.mxu0 %v8360
    %8439 = vmatmul.bf16.gmra.mxu0 %v8390
    %v8440 = vpop.f32.mrf.mxu0
    %v8441 = vadd.f32 0.0, %v8440
    %v8442 = vpop.f32.mrf.mxu0
    %8443 = vdwg.mxu0
    %v8444 = vadd.f32 %v8289, %v8402
    %v8445 = vadd.f32 %v8290, %v8415
    %v8446 = vadd.f32 %v8291, %v8428
    %v8447 = vadd.f32 %v8292, %v8441
    %v8448 = vld [vmem:[%s4] sm:$0xf]
    %v8450 = vperm.slane %v8448, 0
    %v8451 = vperm.slane %v8448, 1
    %v8452 = vperm.slane %v8448, 2
    %v8453 = vperm.slane %v8448, 3
    %v8458 = vadd.f32 %v8444, %v8450
    %v8459 = vadd.f32 %v8445, %v8451
    %v8460 = vadd.f32 %v8446, %v8452
    %v8461 = vadd.f32 %v8447, %v8453
    %v8462 = vmax.f32 %v8458, 0.0
    %v8463 = vmax.f32 %v8459, 0.0
    %v8464 = vmax.f32 %v8460, 0.0
    %v8465 = vmax.f32 %v8461, 0.0
    %v8466 = vpack.c.bf16 %v8462, %v8462
    %v8467 = vpack.c.bf16 %v8463, %v8463
    %v8468 = vpack.c.bf16 %v8464, %v8464
    %v8469 = vpack.c.bf16 %v8465, %v8465
    %v8470 = vld [vmem:[%s5] sm:$0xf]
    %v8471 = vld [vmem:[%s5 + $0x4] sm:$0xf]
    %v8472 = vld [vmem:[%s5 + $0x8] sm:$0xf]
    %v8473 = vld [vmem:[%s5 + $0xc] sm:$0xf]
    %v8474 = vld [vmem:[%s5 + $0x10] sm:$0xf]
    %v8475 = vld [vmem:[%s5 + $0x14] sm:$0xf]
    %v8476 = vld [vmem:[%s5 + $0x18] sm:$0xf]
    %v8477 = vld [vmem:[%s5 + $0x1c] sm:$0xf]
    %v8478 = vld [vmem:[%s5 + $0x20] sm:$0xf]
    %v8479 = vld [vmem:[%s5 + $0x24] sm:$0xf]
    %v8480 = vld [vmem:[%s5 + $0x28] sm:$0xf]
    %v8481 = vld [vmem:[%s5 + $0x2c] sm:$0xf]
    %v8482 = vld [vmem:[%s5 + $0x30] sm:$0xf]
    %v8483 = vld [vmem:[%s5 + $0x34] sm:$0xf]
    %v8484 = vld [vmem:[%s5 + $0x38] sm:$0xf]
    %v8485 = vld [vmem:[%s5 + $0x3c] sm:$0xf]
    %v8486 = vld [vmem:[%s5 + $0x40] sm:$0xf]
    %v8487 = vld [vmem:[%s5 + $0x44] sm:$0xf]
    %v8488 = vld [vmem:[%s5 + $0x48] sm:$0xf]
    %v8489 = vld [vmem:[%s5 + $0x4c] sm:$0xf]
    %v8490 = vld [vmem:[%s5 + $0x50] sm:$0xf]
    %v8491 = vld [vmem:[%s5 + $0x54] sm:$0xf]
    %v8492 = vld [vmem:[%s5 + $0x58] sm:$0xf]
    %v8493 = vld [vmem:[%s5 + $0x5c] sm:$0xf]
    %v8494 = vld [vmem:[%s5 + $0x60] sm:$0xf]
    %v8495 = vld [vmem:[%s5 + $0x64] sm:$0xf]
    %v8496 = vld [vmem:[%s5 + $0x68] sm:$0xf]
    %v8497 = vld [vmem:[%s5 + $0x6c] sm:$0xf]
    %v8498 = vld [vmem:[%s5 + $0x70] sm:$0xf]
    %v8499 = vld [vmem:[%s5 + $0x74] sm:$0xf]
    %v8500 = vld [vmem:[%s5 + $0x78] sm:$0xf]
    %v8501 = vld [vmem:[%s5 + $0x7c] sm:$0xf]
    %v8502 = vld [vmem:[%s5 + $0x80] sm:$0xf]
    %v8503 = vld [vmem:[%s5 + $0x84] sm:$0xf]
    %v8504 = vld [vmem:[%s5 + $0x88] sm:$0xf]
    %v8505 = vld [vmem:[%s5 + $0x8c] sm:$0xf]
    %v8506 = vld [vmem:[%s5 + $0x90] sm:$0xf]
    %v8507 = vld [vmem:[%s5 + $0x94] sm:$0xf]
    %v8508 = vld [vmem:[%s5 + $0x98] sm:$0xf]
    %v8509 = vld [vmem:[%s5 + $0x9c] sm:$0xf]
    %v8510 = vld [vmem:[%s5 + $0xa0] sm:$0xf]
    %v8511 = vld [vmem:[%s5 + $0xa4] sm:$0xf]
    %v8512 = vld [vmem:[%s5 + $0xa8] sm:$0xf]
    %v8513 = vld [vmem:[%s5 + $0xac] sm:$0xf]
    %v8514 = vld [vmem:[%s5 + $0xb0] sm:$0xf]
    %v8515 = vld [vmem:[%s5 + $0xb4] sm:$0xf]
    %v8516 = vld [vmem:[%s5 + $0xb8] sm:$0xf]
    %v8517 = vld [vmem:[%s5 + $0xbc] sm:$0xf]
    %v8518 = vld [vmem:[%s5 + $0xc0] sm:$0xf]
    %v8519 = vld [vmem:[%s5 + $0xc4] sm:$0xf]
    %v8520 = vld [vmem:[%s5 + $0xc8] sm:$0xf]
    %v8521 = vld [vmem:[%s5 + $0xcc] sm:$0xf]
    %v8522 = vld [vmem:[%s5 + $0xd0] sm:$0xf]
    %v8523 = vld [vmem:[%s5 + $0xd4] sm:$0xf]
    %v8524 = vld [vmem:[%s5 + $0xd8] sm:$0xf]
    %v8525 = vld [vmem:[%s5 + $0xdc] sm:$0xf]
    %v8526 = vld [vmem:[%s5 + $0xe0] sm:$0xf]
    %v8527 = vld [vmem:[%s5 + $0xe4] sm:$0xf]
    %v8528 = vld [vmem:[%s5 + $0xe8] sm:$0xf]
    %v8529 = vld [vmem:[%s5 + $0xec] sm:$0xf]
    %v8530 = vld [vmem:[%s5 + $0xf0] sm:$0xf]
    %v8531 = vld [vmem:[%s5 + $0xf4] sm:$0xf]
    %v8532 = vld [vmem:[%s5 + $0xf8] sm:$0xf]
    %v8533 = vld [vmem:[%s5 + $0xfc] sm:$0xf]
    %v8534 = vld [vmem:[%s6] sm:$0x1]
    %v8536 = vperm.slane %v8534, 0
    %v8602 = vunpack.c.l.b16 %v8470
    %v8603 = vunpack.c.l.b16 %v8471
    %v8604 = vunpack.c.l.b16 %v8472
    %v8605 = vunpack.c.l.b16 %v8473
    %v8606 = vunpack.c.l.b16 %v8474
    %v8607 = vunpack.c.l.b16 %v8475
    %v8608 = vunpack.c.l.b16 %v8476
    %v8609 = vunpack.c.l.b16 %v8477
    %v8610 = vunpack.c.l.b16 %v8478
    %v8611 = vunpack.c.l.b16 %v8479
    %v8612 = vunpack.c.l.b16 %v8480
    %v8613 = vunpack.c.l.b16 %v8481
    %v8614 = vunpack.c.l.b16 %v8482
    %v8615 = vunpack.c.l.b16 %v8483
    %v8616 = vunpack.c.l.b16 %v8484
    %v8617 = vunpack.c.l.b16 %v8485
    %v8618 = vunpack.c.l.b16 %v8486
    %v8619 = vunpack.c.l.b16 %v8487
    %v8620 = vunpack.c.l.b16 %v8488
    %v8621 = vunpack.c.l.b16 %v8489
    %v8622 = vunpack.c.l.b16 %v8490
    %v8623 = vunpack.c.l.b16 %v8491
    %v8624 = vunpack.c.l.b16 %v8492
    %v8625 = vunpack.c.l.b16 %v8493
    %v8626 = vunpack.c.l.b16 %v8494
    %v8627 = vunpack.c.l.b16 %v8495
    %v8628 = vunpack.c.l.b16 %v8496
    %v8629 = vunpack.c.l.b16 %v8497
    %v8630 = vunpack.c.l.b16 %v8498
    %v8631 = vunpack.c.l.b16 %v8499
    %v8632 = vunpack.c.l.b16 %v8500
    %v8633 = vunpack.c.l.b16 %v8501
    %v8634 = vunpack.c.l.b16 %v8502
    %v8635 = vunpack.c.l.b16 %v8503
    %v8636 = vunpack.c.l.b16 %v8504
    %v8637 = vunpack.c.l.b16 %v8505
    %v8638 = vunpack.c.l.b16 %v8506
    %v8639 = vunpack.c.l.b16 %v8507
    %v8640 = vunpack.c.l.b16 %v8508
    %v8641 = vunpack.c.l.b16 %v8509
    %v8642 = vunpack.c.l.b16 %v8510
    %v8643 = vunpack.c.l.b16 %v8511
    %v8644 = vunpack.c.l.b16 %v8512
    %v8645 = vunpack.c.l.b16 %v8513
    %v8646 = vunpack.c.l.b16 %v8514
    %v8647 = vunpack.c.l.b16 %v8515
    %v8648 = vunpack.c.l.b16 %v8516
    %v8649 = vunpack.c.l.b16 %v8517
    %v8650 = vunpack.c.l.b16 %v8518
    %v8651 = vunpack.c.l.b16 %v8519
    %v8652 = vunpack.c.l.b16 %v8520
    %v8653 = vunpack.c.l.b16 %v8521
    %v8654 = vunpack.c.l.b16 %v8522
    %v8655 = vunpack.c.l.b16 %v8523
    %v8656 = vunpack.c.l.b16 %v8524
    %v8657 = vunpack.c.l.b16 %v8525
    %v8658 = vunpack.c.l.b16 %v8526
    %v8659 = vunpack.c.l.b16 %v8527
    %v8660 = vunpack.c.l.b16 %v8528
    %v8661 = vunpack.c.l.b16 %v8529
    %v8662 = vunpack.c.l.b16 %v8530
    %v8663 = vunpack.c.l.b16 %v8531
    %v8664 = vunpack.c.l.b16 %v8532
    %v8665 = vunpack.c.l.b16 %v8533
    %v8666 = vpack.c.b16 %v8603, %v8602
    %v8667 = vpack.c.b16 %v8605, %v8604
    %v8668 = vpack.c.b16 %v8607, %v8606
    %v8669 = vpack.c.b16 %v8609, %v8608
    %v8670 = vpack.c.b16 %v8611, %v8610
    %v8671 = vpack.c.b16 %v8613, %v8612
    %v8672 = vpack.c.b16 %v8615, %v8614
    %v8673 = vpack.c.b16 %v8617, %v8616
    %v8674 = vpack.c.b16 %v8619, %v8618
    %v8675 = vpack.c.b16 %v8621, %v8620
    %v8676 = vpack.c.b16 %v8623, %v8622
    %v8677 = vpack.c.b16 %v8625, %v8624
    %v8678 = vpack.c.b16 %v8627, %v8626
    %v8679 = vpack.c.b16 %v8629, %v8628
    %v8680 = vpack.c.b16 %v8631, %v8630
    %v8681 = vpack.c.b16 %v8633, %v8632
    %v8682 = vpack.c.b16 %v8635, %v8634
    %v8683 = vpack.c.b16 %v8637, %v8636
    %v8684 = vpack.c.b16 %v8639, %v8638
    %v8685 = vpack.c.b16 %v8641, %v8640
    %v8686 = vpack.c.b16 %v8643, %v8642
    %v8687 = vpack.c.b16 %v8645, %v8644
    %v8688 = vpack.c.b16 %v8647, %v8646
    %v8689 = vpack.c.b16 %v8649, %v8648
    %v8690 = vpack.c.b16 %v8651, %v8650
    %v8691 = vpack.c.b16 %v8653, %v8652
    %v8692 = vpack.c.b16 %v8655, %v8654
    %v8693 = vpack.c.b16 %v8657, %v8656
    %v8694 = vpack.c.b16 %v8659, %v8658
    %v8695 = vpack.c.b16 %v8661, %v8660
    %v8696 = vpack.c.b16 %v8663, %v8662
    %v8697 = vpack.c.b16 %v8665, %v8664
    %8730 = vmatpush.bf16.msra.mxu0 %v8673
    %8731 = vmatpush.bf16.msra.mxu0 %v8672
    %8732 = vmatpush.bf16.msra.mxu0 %v8671
    %8733 = vmatpush.bf16.msra.mxu0 %v8670
    %8734 = vmatpush.bf16.msra.mxu0 %v8669
    %8735 = vmatpush.bf16.msra.mxu0 %v8668
    %8736 = vmatpush.bf16.msra.mxu0 %v8667
    %8737 = vmatpush.bf16.msra.mxu0 %v8666
    %8738 = vmatmul.bf16.gmra.mxu0 %v8466
    %v8739 = vpop.f32.mrf.mxu0
    %v8740 = vadd.f32 %v8536, %v8739
    %v8741 = vpop.f32.mrf.mxu0
    %8742 = vdwg.mxu0
    %8743 = vmatpush.bf16.msra.mxu0 %v8681
    %8744 = vmatpush.bf16.msra.mxu0 %v8680
    %8745 = vmatpush.bf16.msra.mxu0 %v8679
    %8746 = vmatpush.bf16.msra.mxu0 %v8678
    %8747 = vmatpush.bf16.msra.mxu0 %v8677
    %8748 = vmatpush.bf16.msra.mxu0 %v8676
    %8749 = vmatpush.bf16.msra.mxu0 %v8675
    %8750 = vmatpush.bf16.msra.mxu0 %v8674
    %8751 = vmatmul.bf16.gmra.mxu0 %v8467
    %v8752 = vpop.f32.mrf.mxu0
    %v8753 = vadd.f32 %v8740, %v8752
    %v8754 = vpop.f32.mrf.mxu0
    %8755 = vdwg.mxu0
    %8756 = vmatpush.bf16.msra.mxu0 %v8689
    %8757 = vmatpush.bf16.msra.mxu0 %v8688
    %8758 = vmatpush.bf16.msra.mxu0 %v8687
    %8759 = vmatpush.bf16.msra.mxu0 %v8686
    %8760 = vmatpush.bf16.msra.mxu0 %v8685
    %8761 = vmatpush.bf16.msra.mxu0 %v8684
    %8762 = vmatpush.bf16.msra.mxu0 %v8683
    %8763 = vmatpush.bf16.msra.mxu0 %v8682
    %8764 = vmatmul.bf16.gmra.mxu0 %v8468
    %v8765 = vpop.f32.mrf.mxu0
    %v8766 = vadd.f32 %v8753, %v8765
    %v8767 = vpop.f32.mrf.mxu0
    %8768 = vdwg.mxu0
    %8769 = vmatpush.bf16.msra.mxu0 %v8697
    %8770 = vmatpush.bf16.msra.mxu0 %v8696
    %8771 = vmatpush.bf16.msra.mxu0 %v8695
    %8772 = vmatpush.bf16.msra.mxu0 %v8694
    %8773 = vmatpush.bf16.msra.mxu0 %v8693
    %8774 = vmatpush.bf16.msra.mxu0 %v8692
    %8775 = vmatpush.bf16.msra.mxu0 %v8691
    %8776 = vmatpush.bf16.msra.mxu0 %v8690
    %8777 = vmatmul.bf16.gmra.mxu0 %v8469
    %v8778 = vpop.f32.mrf.mxu0
    %v8779 = vadd.f32 %v8766, %v8778
    %v8780 = vpop.f32.mrf.mxu0
    %8781 = vdwg.mxu0
    %8782 = vst [vmem:[#allocation2] sm:$0x3] %v8779
    // Predicated region
    $region30: #{qnetwork_forward.5} parent=1 // pred_check
      _
    $region31: #{qnetwork_forward.5} parent=1 // pred_check_branch
      %8784 = sbr.rel (0) target = $region33
    $region32: #{qnetwork_forward.5} parent=1 // pred_region
      %8786 = vsyncadd [#allocation3], 0
      %s8788 = sshll.u32 [#allocation2], 4
      %s8789 = int_to_ptr.vmem [resolvable:$true] %s8788
      %s8790 = sshll.u32 %s7, 4
      %s8791 = int_to_ptr.hbm [resolvable:$true] %s8790
      %8793 = dma.vmem_to_hbm [thread:$0]  %s8789, 32, %s8791, [#allocation3]
    $region33: #{qnetwork_forward.5} parent=1 // pred_fallthru
      _
    // Predicated region
    $region34: #{qnetwork_forward.5} parent=1 // pred_check
      _
    $region35: #{qnetwork_forward.5} parent=1 // pred_check_branch
      %8795 = sbr.rel (0) target = $region37
    $region36: #{qnetwork_forward.5} parent=1 // pred_region
      %8797 = dma.done [#allocation3], 32
    $region37: #{qnetwork_forward.5} parent=1 // pred_fallthru
      _
    %8798 = vsyncpa [#allocation3], 1

</llo_original>
